<compile_context>
chip_gen: v5e
topology: v5e:2x2
jax: 0.10.0
libtpu: 0.0.40
codegen_flags: <defaults>
</compile_context>

<pallas_src>
import functools

import jax
import jax.numpy as jnp
from jax.experimental import pallas as pl
from jax.experimental.pallas import tpu as pltpu


_TM = 256          # row tile for GEMM outputs and BN passes
_BN_EPS = 1e-5


def _round_up(x, m):
    return ((x + m - 1) // m) * m


def _pick_tile(size, candidates):
    for c in candidates:
        if size % c == 0:
            return c
    return size


# -----------------------------------------------------------------------------
# Pallas kernels
# -----------------------------------------------------------------------------
def _gemm_kernel(*refs, has_bias, activation):
    """Tiled matmul: (TM, TK) x (TK, TN) -> f32 accumulator, fused epilogue."""
    if has_bias:
        x_ref, w_ref, b_ref, o_ref, acc_ref = refs
    else:
        x_ref, w_ref, o_ref, acc_ref = refs
        b_ref = None

    @pl.when(pl.program_id(2) == 0)
    def _():
        acc_ref[...] = jnp.zeros_like(acc_ref)

    acc_ref[...] += jnp.dot(x_ref[...], w_ref[...],
                            preferred_element_type=jnp.float32)

    @pl.when(pl.program_id(2) == pl.num_programs(2) - 1)
    def _():
        out = acc_ref[...]
        if has_bias:
            out = out + b_ref[...]
        if activation == "tanh":
            out = jnp.tanh(out)
        o_ref[...] = out.astype(o_ref.dtype)


def _bn_stats_kernel(y_ref, sum_ref, sq_ref):
    """Pass 1: accumulate per-channel sum and sum-of-squares over row tiles."""
    @pl.when(pl.program_id(0) == 0)
    def _():
        sum_ref[...] = jnp.zeros_like(sum_ref)
        sq_ref[...] = jnp.zeros_like(sq_ref)

    y = y_ref[...].astype(jnp.float32)
    sum_ref[...] += jnp.sum(y, axis=0, keepdims=True)
    sq_ref[...] += jnp.sum(y * y, axis=0, keepdims=True)


def _bn_apply_kernel(*refs, inv_count, relu, has_residual):
    """Pass 2: normalize + affine (+ ReLU) (+ residual add), per row tile."""
    if has_residual:
        y_ref, sum_ref, sq_ref, g_ref, b_ref, r_ref, o_ref = refs
    else:
        y_ref, sum_ref, sq_ref, g_ref, b_ref, o_ref = refs
        r_ref = None

    mean = sum_ref[...] * inv_count                       # (1, Np)
    var = sq_ref[...] * inv_count - mean * mean
    scale = g_ref[...] * jax.lax.rsqrt(var + _BN_EPS)
    shift = b_ref[...] - mean * scale

    out = y_ref[...].astype(jnp.float32) * scale + shift
    if relu:
        out = jnp.maximum(out, 0.0)
    if has_residual:
        out = out + r_ref[...].astype(jnp.float32)
    o_ref[...] = out.astype(o_ref.dtype)


# -----------------------------------------------------------------------------
# Pallas wrappers
# -----------------------------------------------------------------------------
def pallas_gemm(x, w_pad, bias_pad=None, out_dtype=jnp.bfloat16, activation=None):
    """x: (M, K) bf16 (unpadded). w_pad: (Kp, Np) bf16 (pre-padded, hoisted).
    bias_pad: (1, Np) f32 or None. Returns the PADDED (Mp, Np) result."""
    M, K = x.shape
    Kp, Np = w_pad.shape
    Mp = _round_up(M, _TM)
    tk = _pick_tile(Kp, (512, 256, 128))
    tn = _pick_tile(Np, (256, 128))

    xp = jnp.pad(x, ((0, Mp - M), (0, Kp - K)))

    kernel = functools.partial(_gemm_kernel, has_bias=bias_pad is not None,
                               activation=activation)
    in_specs = [
        pl.BlockSpec((_TM, tk), lambda i, j, k: (i, k)),
        pl.BlockSpec((tk, tn), lambda i, j, k: (k, j)),
    ]
    args = [xp, w_pad]
    if bias_pad is not None:
        in_specs.append(pl.BlockSpec((1, tn), lambda i, j, k: (0, j)))
        args.append(bias_pad)

    return pl.pallas_call(
        kernel,
        out_shape=jax.ShapeDtypeStruct((Mp, Np), out_dtype),
        grid=(Mp // _TM, Np // tn, Kp // tk),
        in_specs=in_specs,
        out_specs=pl.BlockSpec((_TM, tn), lambda i, j, k: (i, j)),
        scratch_shapes=[pltpu.VMEM((_TM, tn), jnp.float32)],
        compiler_params=pltpu.CompilerParams(
            dimension_semantics=("parallel", "parallel", "arbitrary")),
    )(*args)


def pallas_bn(y_pad, count, gamma_pad, beta_pad, relu, residual_pad=None):
    """Training-mode BatchNorm over the first axis (true row count = `count`).
    y_pad: (Mp, Np) bf16 with zero padding rows/cols. Returns (Mp, Np) bf16."""
    Mp, Np = y_pad.shape
    grid = (Mp // _TM,)

    ssum, ssq = pl.pallas_call(
        _bn_stats_kernel,
        out_shape=(jax.ShapeDtypeStruct((1, Np), jnp.float32),
                   jax.ShapeDtypeStruct((1, Np), jnp.float32)),
        grid=grid,
        in_specs=[pl.BlockSpec((_TM, Np), lambda i: (i, 0))],
        out_specs=(pl.BlockSpec((1, Np), lambda i: (0, 0)),
                   pl.BlockSpec((1, Np), lambda i: (0, 0))),
        compiler_params=pltpu.CompilerParams(
            dimension_semantics=("arbitrary",)),
    )(y_pad)

    kernel = functools.partial(_bn_apply_kernel,
                               inv_count=1.0 / float(count),
                               relu=relu,
                               has_residual=residual_pad is not None)
    in_specs = [
        pl.BlockSpec((_TM, Np), lambda i: (i, 0)),
        pl.BlockSpec((1, Np), lambda i: (0, 0)),
        pl.BlockSpec((1, Np), lambda i: (0, 0)),
        pl.BlockSpec((1, Np), lambda i: (0, 0)),
        pl.BlockSpec((1, Np), lambda i: (0, 0)),
    ]
    args = [y_pad, ssum, ssq, gamma_pad, beta_pad]
    if residual_pad is not None:
        in_specs.append(pl.BlockSpec((_TM, Np), lambda i: (i, 0)))
        args.append(residual_pad)

    return pl.pallas_call(
        kernel,
        out_shape=jax.ShapeDtypeStruct((Mp, Np), jnp.bfloat16),
        grid=grid,
        in_specs=in_specs,
        out_specs=pl.BlockSpec((_TM, Np), lambda i: (i, 0)),
        compiler_params=pltpu.CompilerParams(
            dimension_semantics=("parallel",)),
    )(*args)


# -----------------------------------------------------------------------------
# Conv glue (im2col in XLA, GEMM in Pallas)
# -----------------------------------------------------------------------------
def _im2col(xp, kh, kw, stride):
    n, hp, wp, c = xp.shape
    ho = (hp - kh) // stride + 1
    wo = (wp - kw) // stride + 1
    cols = []
    for ih in range(kh):
        for iw in range(kw):
            cols.append(xp[:, ih:ih + stride * ho:stride,
                           iw:iw + stride * wo:stride, :])
    patches = jnp.concatenate(cols, axis=-1).reshape(n * ho * wo, kh * kw * c)
    return patches, ho, wo


def conv_gemm(x, layer, *, stride=1, pad=0, pad_mode="zero",
              activation=None, out_dtype=jnp.bfloat16):
    """x: NHWC bf16. Returns (padded (Mp, Np) GEMM output, (N, Ho, Wo))."""
    if pad > 0:
        mode = "reflect" if pad_mode == "reflect" else "constant"
        x = jnp.pad(x, ((0, 0), (pad, pad), (pad, pad), (0, 0)), mode=mode)
    patches, ho, wo = _im2col(x, layer["kh"], layer["kw"], stride)
    y_pad = pallas_gemm(patches, layer["wmat"], layer.get("bias"),
                        out_dtype=out_dtype, activation=activation)
    return y_pad, (x.shape[0], ho, wo)


def _unpad(y_pad, n, h, w, c):
    return y_pad[:n * h * w, :c].reshape(n, h, w, c)


def _pad2d(x2d):
    m, c = x2d.shape
    return jnp.pad(x2d, ((0, _round_up(m, _TM) - m), (0, _round_up(c, 128) - c)))


# -----------------------------------------------------------------------------
# Parameter construction + one-time GEMM-layout preparation (hoisted)
# -----------------------------------------------------------------------------
def init_params(key, input_nc, output_nc, ngf, n_blocks):
    """Raw torch-layout parameters (deterministic)."""
    keys = jax.random.split(key, 4 * n_blocks + 16)
    ki = iter(range(len(keys)))

    def conv_w(cout, cin, k):
        return jax.random.normal(keys[next(ki)], (cout, cin, k, k), jnp.float32) * 0.05

    def convT_w(cin, cout, k):
        return jax.random.normal(keys[next(ki)], (cin, cout, k, k), jnp.float32) * 0.05

    p = {"conv0_w": conv_w(ngf, input_nc, 7)}
    p["down"] = [conv_w(ngf * 2, ngf, 3), conv_w(ngf * 4, ngf * 2, 3)]
    dim = ngf * 4
    p["blocks"] = [(conv_w(dim, dim, 3), conv_w(dim, dim, 3)) for _ in range(n_blocks)]
    p["up"] = [convT_w(ngf * 4, ngf * 2, 3), convT_w(ngf * 2, ngf, 3)]
    p["convf_w"] = conv_w(output_nc, ngf, 7)
    p["convf_b"] = jax.random.normal(keys[next(ki)], (output_nc,), jnp.float32) * 0.05
    return p


def _bn_affine(cout):
    np_ = _round_up(cout, 128)
    gamma = jnp.pad(jnp.ones((cout,), jnp.float32), (0, np_ - cout)).reshape(1, np_)
    beta = jnp.pad(jnp.zeros((cout,), jnp.float32), (0, np_ - cout)).reshape(1, np_)
    return gamma, beta


def _prep_conv(w, bn=True, bias=None):
    """w: (Cout, Cin, KH, KW) torch layout -> padded bf16 GEMM weight + BN affine."""
    cout, cin, kh, kw = w.shape
    k = kh * kw * cin
    kp, np_ = _round_up(k, 128), _round_up(cout, 128)
    wmat = jnp.transpose(w, (2, 3, 1, 0)).reshape(k, cout)
    wmat = jnp.pad(wmat, ((0, kp - k), (0, np_ - cout))).astype(jnp.bfloat16)
    layer = {"wmat": wmat, "kh": kh, "kw": kw, "cout": cout}
    if bias is not None:
        layer["bias"] = jnp.pad(bias, (0, np_ - cout)).reshape(1, np_).astype(jnp.float32)
    if bn:
        layer["gamma"], layer["beta"] = _bn_affine(cout)
    return layer


def _prep_convT(wt):
    """wt: (Cin, Cout, 3, 3) torch ConvTranspose2d (s=2, p=1, op=1) -> sub-pixel
    2x2 stride-1 conv producing 4*Cout phase channels (pixel-shuffled later)."""
    cin, cout = wt.shape[0], wt.shape[1]
    w = jnp.transpose(wt, (2, 3, 0, 1))                  # (kh, kw, cin, cout)
    t = jnp.zeros((2, 2, 2, 2, cin, cout), jnp.float32)  # (dh, dw, a, b, c, co)
    t = t.at[0, 0, 0, 0].set(w[1, 1])
    t = t.at[0, 0, 0, 1].set(w[1, 2])
    t = t.at[0, 1, 0, 1].set(w[1, 0])
    t = t.at[0, 0, 1, 0].set(w[2, 1])
    t = t.at[1, 0, 1, 0].set(w[0, 1])
    t = t.at[0, 0, 1, 1].set(w[2, 2])
    t = t.at[0, 1, 1, 1].set(w[2, 0])
    t = t.at[1, 0, 1, 1].set(w[0, 2])
    t = t.at[1, 1, 1, 1].set(w[0, 0])
    wmat = jnp.transpose(t, (0, 1, 4, 2, 3, 5)).reshape(4 * cin, 4 * cout)
    k, n4 = 4 * cin, 4 * cout
    kp, np4 = _round_up(k, 128), _round_up(n4, 128)
    wmat = jnp.pad(wmat, ((0, kp - k), (0, np4 - n4))).astype(jnp.bfloat16)
    gamma, beta = _bn_affine(cout)
    return {"wmat": wmat, "kh": 2, "kw": 2, "cout": cout,
            "gamma": gamma, "beta": beta}


def prepare_params(raw):
    p = {"conv0": _prep_conv(raw["conv0_w"])}
    p["down"] = [_prep_conv(w) for w in raw["down"]]
    p["blocks"] = [{"c1": _prep_conv(w1), "c2": _prep_conv(w2)}
                   for (w1, w2) in raw["blocks"]]
    p["up"] = [_prep_convT(wt) for wt in raw["up"]]
    p["convf"] = _prep_conv(raw["convf_w"], bn=False, bias=raw["convf_b"])
    return p


# -----------------------------------------------------------------------------
# Forward pass (ResnetGenerator with BatchNorm2d, use_dropout=False, 'reflect')
# -----------------------------------------------------------------------------
def resnet_generator_forward(x_nchw, params):
    x = jnp.transpose(x_nchw, (0, 2, 3, 1)).astype(jnp.bfloat16)  # NCHW -> NHWC

    # initial: ReflectionPad2d(3) + Conv7x7 + BN + ReLU
    lyr = params["conv0"]
    y, (n, h, w) = conv_gemm(x, lyr, pad=3, pad_mode="reflect")
    hp = pallas_bn(y, n * h * w, lyr["gamma"], lyr["beta"], relu=True)
    hs = _unpad(hp, n, h, w, lyr["cout"])

    # downsampling: Conv3x3 stride2 pad1 + BN + ReLU
    for lyr in params["down"]:
        y, (n, h, w) = conv_gemm(hs, lyr, stride=2, pad=1, pad_mode="zero")
        hp = pallas_bn(y, n * h * w, lyr["gamma"], lyr["beta"], relu=True)
        hs = _unpad(hp, n, h, w, lyr["cout"])

    # resnet blocks: (reflect-pad conv BN ReLU, reflect-pad conv BN) + skip,
    # with the residual add fused into the second BN pass.
    for blk in params["blocks"]:
        c1, c2 = blk["c1"], blk["c2"]
        y, _ = conv_gemm(hs, c1, pad=1, pad_mode="reflect")
        a1p = pallas_bn(y, n * h * w, c1["gamma"], c1["beta"], relu=True)
        a1 = _unpad(a1p, n, h, w, c1["cout"])
        y, _ = conv_gemm(a1, c2, pad=1, pad_mode="reflect")
        hp = pallas_bn(y, n * h * w, c2["gamma"], c2["beta"],
                       relu=False, residual_pad=hp)
        hs = _unpad(hp, n, h, w, c2["cout"])

    # upsampling: ConvTranspose2d(3x3,s2,p1,op1) as sub-pixel conv + pixel
    # shuffle, then BN + ReLU
    for lyr in params["up"]:
        cout = lyr["cout"]
        xpad = jnp.pad(hs, ((0, 0), (0, 1), (0, 1), (0, 0)))
        y4, (n, h, w) = conv_gemm(xpad, lyr)              # h, w: input spatial
        y4 = _unpad(y4, n, h, w, 4 * cout).reshape(n, h, w, 2, 2, cout)
        hs = jnp.transpose(y4, (0, 1, 3, 2, 4, 5)).reshape(n, 2 * h, 2 * w, cout)
        h, w = 2 * h, 2 * w
        hp = pallas_bn(_pad2d(hs.reshape(n * h * w, cout)), n * h * w,
                       lyr["gamma"], lyr["beta"], relu=True)
        hs = _unpad(hp, n, h, w, cout)

    # final: ReflectionPad2d(3) + Conv7x7 (bias) + Tanh (fused in GEMM epilogue)
    lyr = params["convf"]
    y, (n, h, w) = conv_gemm(hs, lyr, pad=3, pad_mode="reflect",
                             activation="tanh", out_dtype=jnp.float32)
    out = _unpad(y, n, h, w, lyr["cout"])
    return jnp.transpose(out, (0, 3, 1, 2)).astype(jnp.float32)  # NHWC -> NCHW


# -----------------------------------------------------------------------------
if __name__ == "__main__":
    key = jax.random.PRNGKey(0)
    k_in, k_par = jax.random.split(key)

    # small, module-consistent shapes
    batch, input_nc, output_nc, ngf, n_blocks = 2, 3, 3, 8, 2
    H = W = 16

    x = jax.random.normal(k_in, (batch, input_nc, H, W), jnp.float32)  # NCHW
    raw = init_params(k_par, input_nc, output_nc, ngf, n_blocks)
    params = prepare_params(raw)   # one-time, hoisted weight prep (bf16, padded)

    fwd = jax.jit(lambda inp: resnet_generator_forward(inp, params))
    out = jax.block_until_ready(fwd(x))

    assert out.shape == (batch, output_nc, H, W), out.shape
    assert bool(jnp.all(jnp.isfinite(out)))
    print("KERNEL_OK")
</pallas_src>

<mosaic_0001>
module attributes {stable_mosaic.version = 11 : i64} {
  func.func @_gemm_kernel(%arg0: i32, %arg1: i32, %arg2: i32, %arg3: memref<256x256xbf16, #tpu.memory_space<vmem>>, %arg4: memref<256x128xbf16, #tpu.memory_space<vmem>>, %arg5: memref<256x128xbf16, #tpu.memory_space<vmem>>, %arg6: memref<256x128xf32, #tpu.memory_space<vmem>>) attributes {dimension_semantics = [#tpu.dimension_semantics<parallel>, #tpu.dimension_semantics<parallel>, #tpu.dimension_semantics<arbitrary>], iteration_bounds = array<i64: 2, 1, 1>, scalar_prefetch = 0 : i64, scratch_operands = 1 : i64, tpu.core_type = #tpu.core_type<tc>, window_params = [{transform_indices = @transform_0, window_bounds = array<i64: 256, 256>}, {transform_indices = @transform_1, window_bounds = array<i64: 256, 128>}, {transform_indices = @transform_2, window_bounds = array<i64: 256, 128>}]} {
    %c0_i32 = arith.constant 0 : i32
    %0 = arith.cmpi eq, %arg2, %c0_i32 : i32
    %1 = arith.extui %0 : i1 to i32
    %c0_i32_0 = arith.constant 0 : i32
    %2 = arith.cmpi ne, %1, %c0_i32_0 : i32
    scf.if %2 {
      %cst_10 = arith.constant 0.000000e+00 : f32
      %12 = vector.broadcast %cst_10 : f32 to vector<256x128xf32>
      %c0_11 = arith.constant 0 : index
      %c0_12 = arith.constant 0 : index
      %13 = vector.load %arg6[%c0_11, %c0_12] : memref<256x128xf32, #tpu.memory_space<vmem>>, vector<256x128xf32>
      tpu.vector_store %arg6[%c0_11, %c0_12], %12 {strides = array<i32>} : memref<256x128xf32, #tpu.memory_space<vmem>>, vector<256x128xf32>,
    } else {
    }
    %c0 = arith.constant 0 : index
    %c0_1 = arith.constant 0 : index
    %3 = vector.load %arg6[%c0, %c0_1] : memref<256x128xf32, #tpu.memory_space<vmem>>, vector<256x128xf32>
    %c0_2 = arith.constant 0 : index
    %c0_3 = arith.constant 0 : index
    %4 = vector.load %arg3[%c0_2, %c0_3] : memref<256x256xbf16, #tpu.memory_space<vmem>>, vector<256x256xbf16>
    %c0_4 = arith.constant 0 : index
    %c0_5 = arith.constant 0 : index
    %5 = vector.load %arg4[%c0_4, %c0_5] : memref<256x128xbf16, #tpu.memory_space<vmem>>, vector<256x128xbf16>
    %cst = arith.constant dense<0.000000e+00> : vector<256x128xf32>
    %6 = tpu.matmul %4, %5, %cst {dimension_numbers = #tpu.dot_dimension_numbers<[1], [0], [0], [1], [0, 0, 1, 1], [], []>} : vector<256x256xbf16>, vector<256x128xbf16>, vector<256x128xf32> -> vector<256x128xf32>
    %7 = arith.addf %3, %6 : vector<256x128xf32>
    %c0_6 = arith.constant 0 : index
    %c0_7 = arith.constant 0 : index
    %8 = vector.load %arg6[%c0_6, %c0_7] : memref<256x128xf32, #tpu.memory_space<vmem>>, vector<256x128xf32>
    tpu.vector_store %arg6[%c0_6, %c0_7], %7 {strides = array<i32>} : memref<256x128xf32, #tpu.memory_space<vmem>>, vector<256x128xf32>,
    %c0_i32_8 = arith.constant 0 : i32
    %9 = arith.cmpi eq, %arg2, %c0_i32_8 : i32
    %10 = arith.extui %9 : i1 to i32
    %c0_i32_9 = arith.constant 0 : i32
    %11 = arith.cmpi ne, %10, %c0_i32_9 : i32
    scf.if %11 {
      %c0_10 = arith.constant 0 : index
      %c0_11 = arith.constant 0 : index
      %12 = vector.load %arg6[%c0_10, %c0_11] : memref<256x128xf32, #tpu.memory_space<vmem>>, vector<256x128xf32>
      %13 = arith.truncf %12 : vector<256x128xf32> to vector<256x128xbf16>
      %c0_12 = arith.constant 0 : index
      %c0_13 = arith.constant 0 : index
      %14 = vector.load %arg5[%c0_12, %c0_13] : memref<256x128xbf16, #tpu.memory_space<vmem>>, vector<256x128xbf16>
      tpu.vector_store %arg5[%c0_12, %c0_13], %13 {strides = array<i32>} : memref<256x128xbf16, #tpu.memory_space<vmem>>, vector<256x128xbf16>,
    } else {
    }
    return
  }
  func.func @transform_0(%arg0: i32, %arg1: i32, %arg2: i32) -> (i32, i32) {
    %c0_i32 = arith.constant 0 : i32
    return %arg0, %arg2 : i32, i32
  }
  func.func @transform_1(%arg0: i32, %arg1: i32, %arg2: i32) -> (i32, i32) {
    %c0_i32 = arith.constant 0 : i32
    return %arg2, %arg1 : i32, i32
  }
  func.func @transform_2(%arg0: i32, %arg1: i32, %arg2: i32) -> (i32, i32) {
    %c0_i32 = arith.constant 0 : i32
    return %arg0, %arg1 : i32, i32
  }
}

module attributes {stable_mosaic.version = 11 : i64} {
  func.func @_bn_stats_kernel(%arg0: i32, %arg1: memref<256x128xbf16, #tpu.memory_space<vmem>>, %arg2: memref<1x128xf32, #tpu.memory_space<vmem>>, %arg3: memref<1x128xf32, #tpu.memory_space<vmem>>) attributes {dimension_semantics = [#tpu.dimension_semantics<arbitrary>], iteration_bounds = array<i64: 2>, scalar_prefetch = 0 : i64, scratch_operands = 0 : i64, tpu.core_type = #tpu.core_type<tc>, window_params = [{transform_indices = @transform_0, window_bounds = array<i64: 256, 128>}, {pipeline_mode = #tpu.pipeline_mode<synchronous>, transform_indices = @transform_1, window_bounds = array<i64: 1, 128>}, {pipeline_mode = #tpu.pipeline_mode<synchronous>, transform_indices = @transform_2, window_bounds = array<i64: 1, 128>}]} {
    %c0_i32 = arith.constant 0 : i32
    %0 = arith.cmpi eq, %arg0, %c0_i32 : i32
    %1 = arith.extui %0 : i1 to i32
    %c0_i32_0 = arith.constant 0 : i32
    %2 = arith.cmpi ne, %1, %c0_i32_0 : i32
    scf.if %2 {
      %cst_11 = arith.constant 0.000000e+00 : f32
      %16 = vector.broadcast %cst_11 : f32 to vector<1x128xf32>
      %c0_12 = arith.constant 0 : index
      %c0_13 = arith.constant 0 : index
      %17 = vector.load %arg2[%c0_12, %c0_13] : memref<1x128xf32, #tpu.memory_space<vmem>>, vector<1x128xf32>
      tpu.vector_store %arg2[%c0_12, %c0_13], %16 {strides = array<i32>} : memref<1x128xf32, #tpu.memory_space<vmem>>, vector<1x128xf32>,
      %cst_14 = arith.constant 0.000000e+00 : f32
      %18 = vector.broadcast %cst_14 : f32 to vector<1x128xf32>
      %c0_15 = arith.constant 0 : index
      %c0_16 = arith.constant 0 : index
      %19 = vector.load %arg3[%c0_15, %c0_16] : memref<1x128xf32, #tpu.memory_space<vmem>>, vector<1x128xf32>
      tpu.vector_store %arg3[%c0_15, %c0_16], %18 {strides = array<i32>} : memref<1x128xf32, #tpu.memory_space<vmem>>, vector<1x128xf32>,
    } else {
    }
    %c0 = arith.constant 0 : index
    %c0_1 = arith.constant 0 : index
    %3 = vector.load %arg1[%c0, %c0_1] : memref<256x128xbf16, #tpu.memory_space<vmem>>, vector<256x128xbf16>
    %4 = arith.extf %3 : vector<256x128xbf16> to vector<256x128xf32>
    %c0_2 = arith.constant 0 : index
    %c0_3 = arith.constant 0 : index
    %5 = vector.load %arg2[%c0_2, %c0_3] : memref<1x128xf32, #tpu.memory_space<vmem>>, vector<1x128xf32>
    %cst = arith.constant dense<0.000000e+00> : vector<128xf32>
    %6 = vector.multi_reduction <add>, %4, %cst [0] : vector<256x128xf32> to vector<128xf32>
    %7 = vector.shape_cast %6 : vector<128xf32> to vector<1x128xf32>
    %8 = arith.addf %5, %7 : vector<1x128xf32>
    %c0_4 = arith.constant 0 : index
    %c0_5 = arith.constant 0 : index
    %9 = vector.load %arg2[%c0_4, %c0_5] : memref<1x128xf32, #tpu.memory_space<vmem>>, vector<1x128xf32>
    tpu.vector_store %arg2[%c0_4, %c0_5], %8 {strides = array<i32>} : memref<1x128xf32, #tpu.memory_space<vmem>>, vector<1x128xf32>,
    %c0_6 = arith.constant 0 : index
    %c0_7 = arith.constant 0 : index
    %10 = vector.load %arg3[%c0_6, %c0_7] : memref<1x128xf32, #tpu.memory_space<vmem>>, vector<1x128xf32>
    %11 = arith.mulf %4, %4 : vector<256x128xf32>
    %cst_8 = arith.constant dense<0.000000e+00> : vector<128xf32>
    %12 = vector.multi_reduction <add>, %11, %cst_8 [0] : vector<256x128xf32> to vector<128xf32>
    %13 = vector.shape_cast %12 : vector<128xf32> to vector<1x128xf32>
    %14 = arith.addf %10, %13 : vector<1x128xf32>
    %c0_9 = arith.constant 0 : index
    %c0_10 = arith.constant 0 : index
    %15 = vector.load %arg3[%c0_9, %c0_10] : memref<1x128xf32, #tpu.memory_space<vmem>>, vector<1x128xf32>
    tpu.vector_store %arg3[%c0_9, %c0_10], %14 {strides = array<i32>} : memref<1x128xf32, #tpu.memory_space<vmem>>, vector<1x128xf32>,
    return
  }
  func.func @transform_0(%arg0: i32) -> (i32, i32) {
    %c0_i32 = arith.constant 0 : i32
    %c0_i32_0 = arith.constant 0 : i32
    return %arg0, %c0_i32 : i32, i32
  }
  func.func @transform_1(%arg0: i32) -> (i32, i32) {
    %c0_i32 = arith.constant 0 : i32
    %c0_i32_0 = arith.constant 0 : i32
    %c0_i32_1 = arith.constant 0 : i32
    return %c0_i32, %c0_i32_0 : i32, i32
  }
  func.func @transform_2(%arg0: i32) -> (i32, i32) {
    %c0_i32 = arith.constant 0 : i32
    %c0_i32_0 = arith.constant 0 : i32
    %c0_i32_1 = arith.constant 0 : i32
    return %c0_i32, %c0_i32_0 : i32, i32
  }
}

module attributes {stable_mosaic.version = 11 : i64} {
  func.func @_bn_apply_kernel(%arg0: i32, %arg1: memref<256x128xbf16, #tpu.memory_space<vmem>>, %arg2: memref<1x128xf32, #tpu.memory_space<vmem>>, %arg3: memref<1x128xf32, #tpu.memory_space<vmem>>, %arg4: memref<1x128xf32, #tpu.memory_space<vmem>>, %arg5: memref<1x128xf32, #tpu.memory_space<vmem>>, %arg6: memref<256x128xbf16, #tpu.memory_space<vmem>>) attributes {dimension_semantics = [#tpu.dimension_semantics<parallel>], iteration_bounds = array<i64: 2>, scalar_prefetch = 0 : i64, scratch_operands = 0 : i64, tpu.core_type = #tpu.core_type<tc>, window_params = [{transform_indices = @transform_0, window_bounds = array<i64: 256, 128>}, {pipeline_mode = #tpu.pipeline_mode<synchronous>, transform_indices = @transform_1, window_bounds = array<i64: 1, 128>}, {pipeline_mode = #tpu.pipeline_mode<synchronous>, transform_indices = @transform_2, window_bounds = array<i64: 1, 128>}, {pipeline_mode = #tpu.pipeline_mode<synchronous>, transform_indices = @transform_3, window_bounds = array<i64: 1, 128>}, {pipeline_mode = #tpu.pipeline_mode<synchronous>, transform_indices = @transform_4, window_bounds = array<i64: 1, 128>}, {transform_indices = @transform_5, window_bounds = array<i64: 256, 128>}]} {
    %c0 = arith.constant 0 : index
    %c0_0 = arith.constant 0 : index
    %0 = vector.load %arg2[%c0, %c0_0] : memref<1x128xf32, #tpu.memory_space<vmem>>, vector<1x128xf32>
    %cst = arith.constant 0.001953125 : f32
    %1 = vector.broadcast %cst : f32 to vector<1x128xf32>
    %2 = arith.mulf %0, %1 : vector<1x128xf32>
    %c0_1 = arith.constant 0 : index
    %c0_2 = arith.constant 0 : index
    %3 = vector.load %arg3[%c0_1, %c0_2] : memref<1x128xf32, #tpu.memory_space<vmem>>, vector<1x128xf32>
    %cst_3 = arith.constant 0.001953125 : f32
    %4 = vector.broadcast %cst_3 : f32 to vector<1x128xf32>
    %5 = arith.mulf %3, %4 : vector<1x128xf32>
    %6 = arith.mulf %2, %2 : vector<1x128xf32>
    %7 = arith.subf %5, %6 : vector<1x128xf32>
    %c0_4 = arith.constant 0 : index
    %c0_5 = arith.constant 0 : index
    %8 = vector.load %arg4[%c0_4, %c0_5] : memref<1x128xf32, #tpu.memory_space<vmem>>, vector<1x128xf32>
    %cst_6 = arith.constant 9.99999974E-6 : f32
    %9 = vector.broadcast %cst_6 : f32 to vector<1x128xf32>
    %10 = arith.addf %7, %9 : vector<1x128xf32>
    %11 = math.rsqrt %10 : vector<1x128xf32>
    %12 = arith.mulf %8, %11 : vector<1x128xf32>
    %c0_7 = arith.constant 0 : index
    %c0_8 = arith.constant 0 : index
    %13 = vector.load %arg5[%c0_7, %c0_8] : memref<1x128xf32, #tpu.memory_space<vmem>>, vector<1x128xf32>
    %14 = arith.mulf %2, %12 : vector<1x128xf32>
    %15 = arith.subf %13, %14 : vector<1x128xf32>
    %c0_9 = arith.constant 0 : index
    %c0_10 = arith.constant 0 : index
    %16 = vector.load %arg1[%c0_9, %c0_10] : memref<256x128xbf16, #tpu.memory_space<vmem>>, vector<256x128xbf16>
    %17 = arith.extf %16 : vector<256x128xbf16> to vector<256x128xf32>
    %18 = vector.broadcast %12 : vector<1x128xf32> to vector<256x128xf32>
    %19 = arith.mulf %17, %18 : vector<256x128xf32>
    %20 = vector.broadcast %15 : vector<1x128xf32> to vector<256x128xf32>
    %21 = arith.addf %19, %20 : vector<256x128xf32>
    %cst_11 = arith.constant 0.000000e+00 : f32
    %22 = vector.broadcast %cst_11 : f32 to vector<256x128xf32>
    %23 = arith.maximumf %21, %22 : vector<256x128xf32>
    %24 = arith.truncf %23 : vector<256x128xf32> to vector<256x128xbf16>
    %c0_12 = arith.constant 0 : index
    %c0_13 = arith.constant 0 : index
    %25 = vector.load %arg6[%c0_12, %c0_13] : memref<256x128xbf16, #tpu.memory_space<vmem>>, vector<256x128xbf16>
    tpu.vector_store %arg6[%c0_12, %c0_13], %24 {strides = array<i32>} : memref<256x128xbf16, #tpu.memory_space<vmem>>, vector<256x128xbf16>,
    return
  }
  func.func @transform_0(%arg0: i32) -> (i32, i32) {
    %c0_i32 = arith.constant 0 : i32
    %c0_i32_0 = arith.constant 0 : i32
    return %arg0, %c0_i32 : i32, i32
  }
  func.func @transform_1(%arg0: i32) -> (i32, i32) {
    %c0_i32 = arith.constant 0 : i32
    %c0_i32_0 = arith.constant 0 : i32
    %c0_i32_1 = arith.constant 0 : i32
    return %c0_i32, %c0_i32_0 : i32, i32
  }
  func.func @transform_2(%arg0: i32) -> (i32, i32) {
    %c0_i32 = arith.constant 0 : i32
    %c0_i32_0 = arith.constant 0 : i32
    %c0_i32_1 = arith.constant 0 : i32
    return %c0_i32, %c0_i32_0 : i32, i32
  }
  func.func @transform_3(%arg0: i32) -> (i32, i32) {
    %c0_i32 = arith.constant 0 : i32
    %c0_i32_0 = arith.constant 0 : i32
    %c0_i32_1 = arith.constant 0 : i32
    return %c0_i32, %c0_i32_0 : i32, i32
  }
  func.func @transform_4(%arg0: i32) -> (i32, i32) {
    %c0_i32 = arith.constant 0 : i32
    %c0_i32_0 = arith.constant 0 : i32
    %c0_i32_1 = arith.constant 0 : i32
    return %c0_i32, %c0_i32_0 : i32, i32
  }
  func.func @transform_5(%arg0: i32) -> (i32, i32) {
    %c0_i32 = arith.constant 0 : i32
    %c0_i32_0 = arith.constant 0 : i32
    return %arg0, %c0_i32 : i32, i32
  }
}

module attributes {stable_mosaic.version = 11 : i64} {
  func.func @_gemm_kernel(%arg0: i32, %arg1: i32, %arg2: i32, %arg3: memref<256x128xbf16, #tpu.memory_space<vmem>>, %arg4: memref<128x128xbf16, #tpu.memory_space<vmem>>, %arg5: memref<256x128xbf16, #tpu.memory_space<vmem>>, %arg6: memref<256x128xf32, #tpu.memory_space<vmem>>) attributes {dimension_semantics = [#tpu.dimension_semantics<parallel>, #tpu.dimension_semantics<parallel>, #tpu.dimension_semantics<arbitrary>], iteration_bounds = array<i64: 1, 1, 1>, scalar_prefetch = 0 : i64, scratch_operands = 1 : i64, tpu.core_type = #tpu.core_type<tc>, window_params = [{transform_indices = @transform_0, window_bounds = array<i64: 256, 128>}, {transform_indices = @transform_1, window_bounds = array<i64: 128, 128>}, {transform_indices = @transform_2, window_bounds = array<i64: 256, 128>}]} {
    %c0_i32 = arith.constant 0 : i32
    %0 = arith.cmpi eq, %arg2, %c0_i32 : i32
    %1 = arith.extui %0 : i1 to i32
    %c0_i32_0 = arith.constant 0 : i32
    %2 = arith.cmpi ne, %1, %c0_i32_0 : i32
    scf.if %2 {
      %cst_10 = arith.constant 0.000000e+00 : f32
      %12 = vector.broadcast %cst_10 : f32 to vector<256x128xf32>
      %c0_11 = arith.constant 0 : index
      %c0_12 = arith.constant 0 : index
      %13 = vector.load %arg6[%c0_11, %c0_12] : memref<256x128xf32, #tpu.memory_space<vmem>>, vector<256x128xf32>
      tpu.vector_store %arg6[%c0_11, %c0_12], %12 {strides = array<i32>} : memref<256x128xf32, #tpu.memory_space<vmem>>, vector<256x128xf32>,
    } else {
    }
    %c0 = arith.constant 0 : index
    %c0_1 = arith.constant 0 : index
    %3 = vector.load %arg6[%c0, %c0_1] : memref<256x128xf32, #tpu.memory_space<vmem>>, vector<256x128xf32>
    %c0_2 = arith.constant 0 : index
    %c0_3 = arith.constant 0 : index
    %4 = vector.load %arg3[%c0_2, %c0_3] : memref<256x128xbf16, #tpu.memory_space<vmem>>, vector<256x128xbf16>
    %c0_4 = arith.constant 0 : index
    %c0_5 = arith.constant 0 : index
    %5 = vector.load %arg4[%c0_4, %c0_5] : memref<128x128xbf16, #tpu.memory_space<vmem>>, vector<128x128xbf16>
    %cst = arith.constant dense<0.000000e+00> : vector<256x128xf32>
    %6 = tpu.matmul %4, %5, %cst {dimension_numbers = #tpu.dot_dimension_numbers<[1], [0], [0], [1], [0, 0, 1, 1], [], []>} : vector<256x128xbf16>, vector<128x128xbf16>, vector<256x128xf32> -> vector<256x128xf32>
    %7 = arith.addf %3, %6 : vector<256x128xf32>
    %c0_6 = arith.constant 0 : index
    %c0_7 = arith.constant 0 : index
    %8 = vector.load %arg6[%c0_6, %c0_7] : memref<256x128xf32, #tpu.memory_space<vmem>>, vector<256x128xf32>
    tpu.vector_store %arg6[%c0_6, %c0_7], %7 {strides = array<i32>} : memref<256x128xf32, #tpu.memory_space<vmem>>, vector<256x128xf32>,
    %c0_i32_8 = arith.constant 0 : i32
    %9 = arith.cmpi eq, %arg2, %c0_i32_8 : i32
    %10 = arith.extui %9 : i1 to i32
    %c0_i32_9 = arith.constant 0 : i32
    %11 = arith.cmpi ne, %10, %c0_i32_9 : i32
    scf.if %11 {
      %c0_10 = arith.constant 0 : index
      %c0_11 = arith.constant 0 : index
      %12 = vector.load %arg6[%c0_10, %c0_11] : memref<256x128xf32, #tpu.memory_space<vmem>>, vector<256x128xf32>
      %13 = arith.truncf %12 : vector<256x128xf32> to vector<256x128xbf16>
      %c0_12 = arith.constant 0 : index
      %c0_13 = arith.constant 0 : index
      %14 = vector.load %arg5[%c0_12, %c0_13] : memref<256x128xbf16, #tpu.memory_space<vmem>>, vector<256x128xbf16>
      tpu.vector_store %arg5[%c0_12, %c0_13], %13 {strides = array<i32>} : memref<256x128xbf16, #tpu.memory_space<vmem>>, vector<256x128xbf16>,
    } else {
    }
    return
  }
  func.func @transform_0(%arg0: i32, %arg1: i32, %arg2: i32) -> (i32, i32) {
    %c0_i32 = arith.constant 0 : i32
    return %arg0, %arg2 : i32, i32
  }
  func.func @transform_1(%arg0: i32, %arg1: i32, %arg2: i32) -> (i32, i32) {
    %c0_i32 = arith.constant 0 : i32
    return %arg2, %arg1 : i32, i32
  }
  func.func @transform_2(%arg0: i32, %arg1: i32, %arg2: i32) -> (i32, i32) {
    %c0_i32 = arith.constant 0 : i32
    return %arg0, %arg1 : i32, i32
  }
}

module attributes {stable_mosaic.version = 11 : i64} {
  func.func @_bn_stats_kernel(%arg0: i32, %arg1: memref<256x128xbf16, #tpu.memory_space<vmem>>, %arg2: memref<1x128xf32, #tpu.memory_space<vmem>>, %arg3: memref<1x128xf32, #tpu.memory_space<vmem>>) attributes {dimension_semantics = [#tpu.dimension_semantics<arbitrary>], iteration_bounds = array<i64: 1>, scalar_prefetch = 0 : i64, scratch_operands = 0 : i64, tpu.core_type = #tpu.core_type<tc>, window_params = [{transform_indices = @transform_0, window_bounds = array<i64: 256, 128>}, {pipeline_mode = #tpu.pipeline_mode<synchronous>, transform_indices = @transform_1, window_bounds = array<i64: 1, 128>}, {pipeline_mode = #tpu.pipeline_mode<synchronous>, transform_indices = @transform_2, window_bounds = array<i64: 1, 128>}]} {
    %c0_i32 = arith.constant 0 : i32
    %0 = arith.cmpi eq, %arg0, %c0_i32 : i32
    %1 = arith.extui %0 : i1 to i32
    %c0_i32_0 = arith.constant 0 : i32
    %2 = arith.cmpi ne, %1, %c0_i32_0 : i32
    scf.if %2 {
      %cst_11 = arith.constant 0.000000e+00 : f32
      %16 = vector.broadcast %cst_11 : f32 to vector<1x128xf32>
      %c0_12 = arith.constant 0 : index
      %c0_13 = arith.constant 0 : index
      %17 = vector.load %arg2[%c0_12, %c0_13] : memref<1x128xf32, #tpu.memory_space<vmem>>, vector<1x128xf32>
      tpu.vector_store %arg2[%c0_12, %c0_13], %16 {strides = array<i32>} : memref<1x128xf32, #tpu.memory_space<vmem>>, vector<1x128xf32>,
      %cst_14 = arith.constant 0.000000e+00 : f32
      %18 = vector.broadcast %cst_14 : f32 to vector<1x128xf32>
      %c0_15 = arith.constant 0 : index
      %c0_16 = arith.constant 0 : index
      %19 = vector.load %arg3[%c0_15, %c0_16] : memref<1x128xf32, #tpu.memory_space<vmem>>, vector<1x128xf32>
      tpu.vector_store %arg3[%c0_15, %c0_16], %18 {strides = array<i32>} : memref<1x128xf32, #tpu.memory_space<vmem>>, vector<1x128xf32>,
    } else {
    }
    %c0 = arith.constant 0 : index
    %c0_1 = arith.constant 0 : index
    %3 = vector.load %arg1[%c0, %c0_1] : memref<256x128xbf16, #tpu.memory_space<vmem>>, vector<256x128xbf16>
    %4 = arith.extf %3 : vector<256x128xbf16> to vector<256x128xf32>
    %c0_2 = arith.constant 0 : index
    %c0_3 = arith.constant 0 : index
    %5 = vector.load %arg2[%c0_2, %c0_3] : memref<1x128xf32, #tpu.memory_space<vmem>>, vector<1x128xf32>
    %cst = arith.constant dense<0.000000e+00> : vector<128xf32>
    %6 = vector.multi_reduction <add>, %4, %cst [0] : vector<256x128xf32> to vector<128xf32>
    %7 = vector.shape_cast %6 : vector<128xf32> to vector<1x128xf32>
    %8 = arith.addf %5, %7 : vector<1x128xf32>
    %c0_4 = arith.constant 0 : index
    %c0_5 = arith.constant 0 : index
    %9 = vector.load %arg2[%c0_4, %c0_5] : memref<1x128xf32, #tpu.memory_space<vmem>>, vector<1x128xf32>
    tpu.vector_store %arg2[%c0_4, %c0_5], %8 {strides = array<i32>} : memref<1x128xf32, #tpu.memory_space<vmem>>, vector<1x128xf32>,
    %c0_6 = arith.constant 0 : index
    %c0_7 = arith.constant 0 : index
    %10 = vector.load %arg3[%c0_6, %c0_7] : memref<1x128xf32, #tpu.memory_space<vmem>>, vector<1x128xf32>
    %11 = arith.mulf %4, %4 : vector<256x128xf32>
    %cst_8 = arith.constant dense<0.000000e+00> : vector<128xf32>
    %12 = vector.multi_reduction <add>, %11, %cst_8 [0] : vector<256x128xf32> to vector<128xf32>
    %13 = vector.shape_cast %12 : vector<128xf32> to vector<1x128xf32>
    %14 = arith.addf %10, %13 : vector<1x128xf32>
    %c0_9 = arith.constant 0 : index
    %c0_10 = arith.constant 0 : index
    %15 = vector.load %arg3[%c0_9, %c0_10] : memref<1x128xf32, #tpu.memory_space<vmem>>, vector<1x128xf32>
    tpu.vector_store %arg3[%c0_9, %c0_10], %14 {strides = array<i32>} : memref<1x128xf32, #tpu.memory_space<vmem>>, vector<1x128xf32>,
    return
  }
  func.func @transform_0(%arg0: i32) -> (i32, i32) {
    %c0_i32 = arith.constant 0 : i32
    %c0_i32_0 = arith.constant 0 : i32
    return %arg0, %c0_i32 : i32, i32
  }
  func.func @transform_1(%arg0: i32) -> (i32, i32) {
    %c0_i32 = arith.constant 0 : i32
    %c0_i32_0 = arith.constant 0 : i32
    %c0_i32_1 = arith.constant 0 : i32
    return %c0_i32, %c0_i32_0 : i32, i32
  }
  func.func @transform_2(%arg0: i32) -> (i32, i32) {
    %c0_i32 = arith.constant 0 : i32
    %c0_i32_0 = arith.constant 0 : i32
    %c0_i32_1 = arith.constant 0 : i32
    return %c0_i32, %c0_i32_0 : i32, i32
  }
}

module attributes {stable_mosaic.version = 11 : i64} {
  func.func @_bn_apply_kernel(%arg0: i32, %arg1: memref<256x128xbf16, #tpu.memory_space<vmem>>, %arg2: memref<1x128xf32, #tpu.memory_space<vmem>>, %arg3: memref<1x128xf32, #tpu.memory_space<vmem>>, %arg4: memref<1x128xf32, #tpu.memory_space<vmem>>, %arg5: memref<1x128xf32, #tpu.memory_space<vmem>>, %arg6: memref<256x128xbf16, #tpu.memory_space<vmem>>) attributes {dimension_semantics = [#tpu.dimension_semantics<parallel>], iteration_bounds = array<i64: 1>, scalar_prefetch = 0 : i64, scratch_operands = 0 : i64, tpu.core_type = #tpu.core_type<tc>, window_params = [{transform_indices = @transform_0, window_bounds = array<i64: 256, 128>}, {pipeline_mode = #tpu.pipeline_mode<synchronous>, transform_indices = @transform_1, window_bounds = array<i64: 1, 128>}, {pipeline_mode = #tpu.pipeline_mode<synchronous>, transform_indices = @transform_2, window_bounds = array<i64: 1, 128>}, {pipeline_mode = #tpu.pipeline_mode<synchronous>, transform_indices = @transform_3, window_bounds = array<i64: 1, 128>}, {pipeline_mode = #tpu.pipeline_mode<synchronous>, transform_indices = @transform_4, window_bounds = array<i64: 1, 128>}, {transform_indices = @transform_5, window_bounds = array<i64: 256, 128>}]} {
    %c0 = arith.constant 0 : index
    %c0_0 = arith.constant 0 : index
    %0 = vector.load %arg2[%c0, %c0_0] : memref<1x128xf32, #tpu.memory_space<vmem>>, vector<1x128xf32>
    %cst = arith.constant 7.812500e-03 : f32
    %1 = vector.broadcast %cst : f32 to vector<1x128xf32>
    %2 = arith.mulf %0, %1 : vector<1x128xf32>
    %c0_1 = arith.constant 0 : index
    %c0_2 = arith.constant 0 : index
    %3 = vector.load %arg3[%c0_1, %c0_2] : memref<1x128xf32, #tpu.memory_space<vmem>>, vector<1x128xf32>
    %cst_3 = arith.constant 7.812500e-03 : f32
    %4 = vector.broadcast %cst_3 : f32 to vector<1x128xf32>
    %5 = arith.mulf %3, %4 : vector<1x128xf32>
    %6 = arith.mulf %2, %2 : vector<1x128xf32>
    %7 = arith.subf %5, %6 : vector<1x128xf32>
    %c0_4 = arith.constant 0 : index
    %c0_5 = arith.constant 0 : index
    %8 = vector.load %arg4[%c0_4, %c0_5] : memref<1x128xf32, #tpu.memory_space<vmem>>, vector<1x128xf32>
    %cst_6 = arith.constant 9.99999974E-6 : f32
    %9 = vector.broadcast %cst_6 : f32 to vector<1x128xf32>
    %10 = arith.addf %7, %9 : vector<1x128xf32>
    %11 = math.rsqrt %10 : vector<1x128xf32>
    %12 = arith.mulf %8, %11 : vector<1x128xf32>
    %c0_7 = arith.constant 0 : index
    %c0_8 = arith.constant 0 : index
    %13 = vector.load %arg5[%c0_7, %c0_8] : memref<1x128xf32, #tpu.memory_space<vmem>>, vector<1x128xf32>
    %14 = arith.mulf %2, %12 : vector<1x128xf32>
    %15 = arith.subf %13, %14 : vector<1x128xf32>
    %c0_9 = arith.constant 0 : index
    %c0_10 = arith.constant 0 : index
    %16 = vector.load %arg1[%c0_9, %c0_10] : memref<256x128xbf16, #tpu.memory_space<vmem>>, vector<256x128xbf16>
    %17 = arith.extf %16 : vector<256x128xbf16> to vector<256x128xf32>
    %18 = vector.broadcast %12 : vector<1x128xf32> to vector<256x128xf32>
    %19 = arith.mulf %17, %18 : vector<256x128xf32>
    %20 = vector.broadcast %15 : vector<1x128xf32> to vector<256x128xf32>
    %21 = arith.addf %19, %20 : vector<256x128xf32>
    %cst_11 = arith.constant 0.000000e+00 : f32
    %22 = vector.broadcast %cst_11 : f32 to vector<256x128xf32>
    %23 = arith.maximumf %21, %22 : vector<256x128xf32>
    %24 = arith.truncf %23 : vector<256x128xf32> to vector<256x128xbf16>
    %c0_12 = arith.constant 0 : index
    %c0_13 = arith.constant 0 : index
    %25 = vector.load %arg6[%c0_12, %c0_13] : memref<256x128xbf16, #tpu.memory_space<vmem>>, vector<256x128xbf16>
    tpu.vector_store %arg6[%c0_12, %c0_13], %24 {strides = array<i32>} : memref<256x128xbf16, #tpu.memory_space<vmem>>, vector<256x128xbf16>,
    return
  }
  func.func @transform_0(%arg0: i32) -> (i32, i32) {
    %c0_i32 = arith.constant 0 : i32
    %c0_i32_0 = arith.constant 0 : i32
    return %arg0, %c0_i32 : i32, i32
  }
  func.func @transform_1(%arg0: i32) -> (i32, i32) {
    %c0_i32 = arith.constant 0 : i32
    %c0_i32_0 = arith.constant 0 : i32
    %c0_i32_1 = arith.constant 0 : i32
    return %c0_i32, %c0_i32_0 : i32, i32
  }
  func.func @transform_2(%arg0: i32) -> (i32, i32) {
    %c0_i32 = arith.constant 0 : i32
    %c0_i32_0 = arith.constant 0 : i32
    %c0_i32_1 = arith.constant 0 : i32
    return %c0_i32, %c0_i32_0 : i32, i32
  }
  func.func @transform_3(%arg0: i32) -> (i32, i32) {
    %c0_i32 = arith.constant 0 : i32
    %c0_i32_0 = arith.constant 0 : i32
    %c0_i32_1 = arith.constant 0 : i32
    return %c0_i32, %c0_i32_0 : i32, i32
  }
  func.func @transform_4(%arg0: i32) -> (i32, i32) {
    %c0_i32 = arith.constant 0 : i32
    %c0_i32_0 = arith.constant 0 : i32
    %c0_i32_1 = arith.constant 0 : i32
    return %c0_i32, %c0_i32_0 : i32, i32
  }
  func.func @transform_5(%arg0: i32) -> (i32, i32) {
    %c0_i32 = arith.constant 0 : i32
    %c0_i32_0 = arith.constant 0 : i32
    return %arg0, %c0_i32 : i32, i32
  }
}

module attributes {stable_mosaic.version = 11 : i64} {
  func.func @_bn_apply_kernel(%arg0: i32, %arg1: memref<256x128xbf16, #tpu.memory_space<vmem>>, %arg2: memref<1x128xf32, #tpu.memory_space<vmem>>, %arg3: memref<1x128xf32, #tpu.memory_space<vmem>>, %arg4: memref<1x128xf32, #tpu.memory_space<vmem>>, %arg5: memref<1x128xf32, #tpu.memory_space<vmem>>, %arg6: memref<256x128xbf16, #tpu.memory_space<vmem>>) attributes {dimension_semantics = [#tpu.dimension_semantics<parallel>], iteration_bounds = array<i64: 1>, scalar_prefetch = 0 : i64, scratch_operands = 0 : i64, tpu.core_type = #tpu.core_type<tc>, window_params = [{transform_indices = @transform_0, window_bounds = array<i64: 256, 128>}, {pipeline_mode = #tpu.pipeline_mode<synchronous>, transform_indices = @transform_1, window_bounds = array<i64: 1, 128>}, {pipeline_mode = #tpu.pipeline_mode<synchronous>, transform_indices = @transform_2, window_bounds = array<i64: 1, 128>}, {pipeline_mode = #tpu.pipeline_mode<synchronous>, transform_indices = @transform_3, window_bounds = array<i64: 1, 128>}, {pipeline_mode = #tpu.pipeline_mode<synchronous>, transform_indices = @transform_4, window_bounds = array<i64: 1, 128>}, {transform_indices = @transform_5, window_bounds = array<i64: 256, 128>}]} {
    %c0 = arith.constant 0 : index
    %c0_0 = arith.constant 0 : index
    %0 = vector.load %arg2[%c0, %c0_0] : memref<1x128xf32, #tpu.memory_space<vmem>>, vector<1x128xf32>
    %cst = arith.constant 3.125000e-02 : f32
    %1 = vector.broadcast %cst : f32 to vector<1x128xf32>
    %2 = arith.mulf %0, %1 : vector<1x128xf32>
    %c0_1 = arith.constant 0 : index
    %c0_2 = arith.constant 0 : index
    %3 = vector.load %arg3[%c0_1, %c0_2] : memref<1x128xf32, #tpu.memory_space<vmem>>, vector<1x128xf32>
    %cst_3 = arith.constant 3.125000e-02 : f32
    %4 = vector.broadcast %cst_3 : f32 to vector<1x128xf32>
    %5 = arith.mulf %3, %4 : vector<1x128xf32>
    %6 = arith.mulf %2, %2 : vector<1x128xf32>
    %7 = arith.subf %5, %6 : vector<1x128xf32>
    %c0_4 = arith.constant 0 : index
    %c0_5 = arith.constant 0 : index
    %8 = vector.load %arg4[%c0_4, %c0_5] : memref<1x128xf32, #tpu.memory_space<vmem>>, vector<1x128xf32>
    %cst_6 = arith.constant 9.99999974E-6 : f32
    %9 = vector.broadcast %cst_6 : f32 to vector<1x128xf32>
    %10 = arith.addf %7, %9 : vector<1x128xf32>
    %11 = math.rsqrt %10 : vector<1x128xf32>
    %12 = arith.mulf %8, %11 : vector<1x128xf32>
    %c0_7 = arith.constant 0 : index
    %c0_8 = arith.constant 0 : index
    %13 = vector.load %arg5[%c0_7, %c0_8] : memref<1x128xf32, #tpu.memory_space<vmem>>, vector<1x128xf32>
    %14 = arith.mulf %2, %12 : vector<1x128xf32>
    %15 = arith.subf %13, %14 : vector<1x128xf32>
    %c0_9 = arith.constant 0 : index
    %c0_10 = arith.constant 0 : index
    %16 = vector.load %arg1[%c0_9, %c0_10] : memref<256x128xbf16, #tpu.memory_space<vmem>>, vector<256x128xbf16>
    %17 = arith.extf %16 : vector<256x128xbf16> to vector<256x128xf32>
    %18 = vector.broadcast %12 : vector<1x128xf32> to vector<256x128xf32>
    %19 = arith.mulf %17, %18 : vector<256x128xf32>
    %20 = vector.broadcast %15 : vector<1x128xf32> to vector<256x128xf32>
    %21 = arith.addf %19, %20 : vector<256x128xf32>
    %cst_11 = arith.constant 0.000000e+00 : f32
    %22 = vector.broadcast %cst_11 : f32 to vector<256x128xf32>
    %23 = arith.maximumf %21, %22 : vector<256x128xf32>
    %24 = arith.truncf %23 : vector<256x128xf32> to vector<256x128xbf16>
    %c0_12 = arith.constant 0 : index
    %c0_13 = arith.constant 0 : index
    %25 = vector.load %arg6[%c0_12, %c0_13] : memref<256x128xbf16, #tpu.memory_space<vmem>>, vector<256x128xbf16>
    tpu.vector_store %arg6[%c0_12, %c0_13], %24 {strides = array<i32>} : memref<256x128xbf16, #tpu.memory_space<vmem>>, vector<256x128xbf16>,
    return
  }
  func.func @transform_0(%arg0: i32) -> (i32, i32) {
    %c0_i32 = arith.constant 0 : i32
    %c0_i32_0 = arith.constant 0 : i32
    return %arg0, %c0_i32 : i32, i32
  }
  func.func @transform_1(%arg0: i32) -> (i32, i32) {
    %c0_i32 = arith.constant 0 : i32
    %c0_i32_0 = arith.constant 0 : i32
    %c0_i32_1 = arith.constant 0 : i32
    return %c0_i32, %c0_i32_0 : i32, i32
  }
  func.func @transform_2(%arg0: i32) -> (i32, i32) {
    %c0_i32 = arith.constant 0 : i32
    %c0_i32_0 = arith.constant 0 : i32
    %c0_i32_1 = arith.constant 0 : i32
    return %c0_i32, %c0_i32_0 : i32, i32
  }
  func.func @transform_3(%arg0: i32) -> (i32, i32) {
    %c0_i32 = arith.constant 0 : i32
    %c0_i32_0 = arith.constant 0 : i32
    %c0_i32_1 = arith.constant 0 : i32
    return %c0_i32, %c0_i32_0 : i32, i32
  }
  func.func @transform_4(%arg0: i32) -> (i32, i32) {
    %c0_i32 = arith.constant 0 : i32
    %c0_i32_0 = arith.constant 0 : i32
    %c0_i32_1 = arith.constant 0 : i32
    return %c0_i32, %c0_i32_0 : i32, i32
  }
  func.func @transform_5(%arg0: i32) -> (i32, i32) {
    %c0_i32 = arith.constant 0 : i32
    %c0_i32_0 = arith.constant 0 : i32
    return %arg0, %c0_i32 : i32, i32
  }
}

module attributes {stable_mosaic.version = 11 : i64} {
  func.func @_gemm_kernel(%arg0: i32, %arg1: i32, %arg2: i32, %arg3: memref<256x256xbf16, #tpu.memory_space<vmem>>, %arg4: memref<256x128xbf16, #tpu.memory_space<vmem>>, %arg5: memref<256x128xbf16, #tpu.memory_space<vmem>>, %arg6: memref<256x128xf32, #tpu.memory_space<vmem>>) attributes {dimension_semantics = [#tpu.dimension_semantics<parallel>, #tpu.dimension_semantics<parallel>, #tpu.dimension_semantics<arbitrary>], iteration_bounds = array<i64: 1, 1, 1>, scalar_prefetch = 0 : i64, scratch_operands = 1 : i64, tpu.core_type = #tpu.core_type<tc>, window_params = [{transform_indices = @transform_0, window_bounds = array<i64: 256, 256>}, {transform_indices = @transform_1, window_bounds = array<i64: 256, 128>}, {transform_indices = @transform_2, window_bounds = array<i64: 256, 128>}]} {
    %c0_i32 = arith.constant 0 : i32
    %0 = arith.cmpi eq, %arg2, %c0_i32 : i32
    %1 = arith.extui %0 : i1 to i32
    %c0_i32_0 = arith.constant 0 : i32
    %2 = arith.cmpi ne, %1, %c0_i32_0 : i32
    scf.if %2 {
      %cst_10 = arith.constant 0.000000e+00 : f32
      %12 = vector.broadcast %cst_10 : f32 to vector<256x128xf32>
      %c0_11 = arith.constant 0 : index
      %c0_12 = arith.constant 0 : index
      %13 = vector.load %arg6[%c0_11, %c0_12] : memref<256x128xf32, #tpu.memory_space<vmem>>, vector<256x128xf32>
      tpu.vector_store %arg6[%c0_11, %c0_12], %12 {strides = array<i32>} : memref<256x128xf32, #tpu.memory_space<vmem>>, vector<256x128xf32>,
    } else {
    }
    %c0 = arith.constant 0 : index
    %c0_1 = arith.constant 0 : index
    %3 = vector.load %arg6[%c0, %c0_1] : memref<256x128xf32, #tpu.memory_space<vmem>>, vector<256x128xf32>
    %c0_2 = arith.constant 0 : index
    %c0_3 = arith.constant 0 : index
    %4 = vector.load %arg3[%c0_2, %c0_3] : memref<256x256xbf16, #tpu.memory_space<vmem>>, vector<256x256xbf16>
    %c0_4 = arith.constant 0 : index
    %c0_5 = arith.constant 0 : index
    %5 = vector.load %arg4[%c0_4, %c0_5] : memref<256x128xbf16, #tpu.memory_space<vmem>>, vector<256x128xbf16>
    %cst = arith.constant dense<0.000000e+00> : vector<256x128xf32>
    %6 = tpu.matmul %4, %5, %cst {dimension_numbers = #tpu.dot_dimension_numbers<[1], [0], [0], [1], [0, 0, 1, 1], [], []>} : vector<256x256xbf16>, vector<256x128xbf16>, vector<256x128xf32> -> vector<256x128xf32>
    %7 = arith.addf %3, %6 : vector<256x128xf32>
    %c0_6 = arith.constant 0 : index
    %c0_7 = arith.constant 0 : index
    %8 = vector.load %arg6[%c0_6, %c0_7] : memref<256x128xf32, #tpu.memory_space<vmem>>, vector<256x128xf32>
    tpu.vector_store %arg6[%c0_6, %c0_7], %7 {strides = array<i32>} : memref<256x128xf32, #tpu.memory_space<vmem>>, vector<256x128xf32>,
    %c0_i32_8 = arith.constant 0 : i32
    %9 = arith.cmpi eq, %arg2, %c0_i32_8 : i32
    %10 = arith.extui %9 : i1 to i32
    %c0_i32_9 = arith.constant 0 : i32
    %11 = arith.cmpi ne, %10, %c0_i32_9 : i32
    scf.if %11 {
      %c0_10 = arith.constant 0 : index
      %c0_11 = arith.constant 0 : index
      %12 = vector.load %arg6[%c0_10, %c0_11] : memref<256x128xf32, #tpu.memory_space<vmem>>, vector<256x128xf32>
      %13 = arith.truncf %12 : vector<256x128xf32> to vector<256x128xbf16>
      %c0_12 = arith.constant 0 : index
      %c0_13 = arith.constant 0 : index
      %14 = vector.load %arg5[%c0_12, %c0_13] : memref<256x128xbf16, #tpu.memory_space<vmem>>, vector<256x128xbf16>
      tpu.vector_store %arg5[%c0_12, %c0_13], %13 {strides = array<i32>} : memref<256x128xbf16, #tpu.memory_space<vmem>>, vector<256x128xbf16>,
    } else {
    }
    return
  }
  func.func @transform_0(%arg0: i32, %arg1: i32, %arg2: i32) -> (i32, i32) {
    %c0_i32 = arith.constant 0 : i32
    return %arg0, %arg2 : i32, i32
  }
  func.func @transform_1(%arg0: i32, %arg1: i32, %arg2: i32) -> (i32, i32) {
    %c0_i32 = arith.constant 0 : i32
    return %arg2, %arg1 : i32, i32
  }
  func.func @transform_2(%arg0: i32, %arg1: i32, %arg2: i32) -> (i32, i32) {
    %c0_i32 = arith.constant 0 : i32
    return %arg0, %arg1 : i32, i32
  }
}

module attributes {stable_mosaic.version = 11 : i64} {
  func.func @_gemm_kernel(%arg0: i32, %arg1: i32, %arg2: i32, %arg3: memref<256x128xbf16, #tpu.memory_space<vmem>>, %arg4: memref<128x128xbf16, #tpu.memory_space<vmem>>, %arg5: memref<256x128xbf16, #tpu.memory_space<vmem>>, %arg6: memref<256x128xf32, #tpu.memory_space<vmem>>) attributes {dimension_semantics = [#tpu.dimension_semantics<parallel>, #tpu.dimension_semantics<parallel>, #tpu.dimension_semantics<arbitrary>], iteration_bounds = array<i64: 1, 1, 3>, scalar_prefetch = 0 : i64, scratch_operands = 1 : i64, tpu.core_type = #tpu.core_type<tc>, window_params = [{transform_indices = @transform_0, window_bounds = array<i64: 256, 128>}, {transform_indices = @transform_1, window_bounds = array<i64: 128, 128>}, {transform_indices = @transform_2, window_bounds = array<i64: 256, 128>}]} {
    %c0_i32 = arith.constant 0 : i32
    %0 = arith.cmpi eq, %arg2, %c0_i32 : i32
    %1 = arith.extui %0 : i1 to i32
    %c0_i32_0 = arith.constant 0 : i32
    %2 = arith.cmpi ne, %1, %c0_i32_0 : i32
    scf.if %2 {
      %cst_9 = arith.constant 0.000000e+00 : f32
      %12 = vector.broadcast %cst_9 : f32 to vector<256x128xf32>
      %c0_10 = arith.constant 0 : index
      %c0_11 = arith.constant 0 : index
      %13 = vector.load %arg6[%c0_10, %c0_11] : memref<256x128xf32, #tpu.memory_space<vmem>>, vector<256x128xf32>
      tpu.vector_store %arg6[%c0_10, %c0_11], %12 {strides = array<i32>} : memref<256x128xf32, #tpu.memory_space<vmem>>, vector<256x128xf32>,
    } else {
    }
    %c0 = arith.constant 0 : index
    %c0_1 = arith.constant 0 : index
    %3 = vector.load %arg6[%c0, %c0_1] : memref<256x128xf32, #tpu.memory_space<vmem>>, vector<256x128xf32>
    %c0_2 = arith.constant 0 : index
    %c0_3 = arith.constant 0 : index
    %4 = vector.load %arg3[%c0_2, %c0_3] : memref<256x128xbf16, #tpu.memory_space<vmem>>, vector<256x128xbf16>
    %c0_4 = arith.constant 0 : index
    %c0_5 = arith.constant 0 : index
    %5 = vector.load %arg4[%c0_4, %c0_5] : memref<128x128xbf16, #tpu.memory_space<vmem>>, vector<128x128xbf16>
    %cst = arith.constant dense<0.000000e+00> : vector<256x128xf32>
    %6 = tpu.matmul %4, %5, %cst {dimension_numbers = #tpu.dot_dimension_numbers<[1], [0], [0], [1], [0, 0, 1, 1], [], []>} : vector<256x128xbf16>, vector<128x128xbf16>, vector<256x128xf32> -> vector<256x128xf32>
    %7 = arith.addf %3, %6 : vector<256x128xf32>
    %c0_6 = arith.constant 0 : index
    %c0_7 = arith.constant 0 : index
    %8 = vector.load %arg6[%c0_6, %c0_7] : memref<256x128xf32, #tpu.memory_space<vmem>>, vector<256x128xf32>
    tpu.vector_store %arg6[%c0_6, %c0_7], %7 {strides = array<i32>} : memref<256x128xf32, #tpu.memory_space<vmem>>, vector<256x128xf32>,
    %c2_i32 = arith.constant 2 : i32
    %9 = arith.cmpi eq, %arg2, %c2_i32 : i32
    %10 = arith.extui %9 : i1 to i32
    %c0_i32_8 = arith.constant 0 : i32
    %11 = arith.cmpi ne, %10, %c0_i32_8 : i32
    scf.if %11 {
      %c0_9 = arith.constant 0 : index
      %c0_10 = arith.constant 0 : index
      %12 = vector.load %arg6[%c0_9, %c0_10] : memref<256x128xf32, #tpu.memory_space<vmem>>, vector<256x128xf32>
      %13 = arith.truncf %12 : vector<256x128xf32> to vector<256x128xbf16>
      %c0_11 = arith.constant 0 : index
      %c0_12 = arith.constant 0 : index
      %14 = vector.load %arg5[%c0_11, %c0_12] : memref<256x128xbf16, #tpu.memory_space<vmem>>, vector<256x128xbf16>
      tpu.vector_store %arg5[%c0_11, %c0_12], %13 {strides = array<i32>} : memref<256x128xbf16, #tpu.memory_space<vmem>>, vector<256x128xbf16>,
    } else {
    }
    return
  }
  func.func @transform_0(%arg0: i32, %arg1: i32, %arg2: i32) -> (i32, i32) {
    %c0_i32 = arith.constant 0 : i32
    return %arg0, %arg2 : i32, i32
  }
  func.func @transform_1(%arg0: i32, %arg1: i32, %arg2: i32) -> (i32, i32) {
    %c0_i32 = arith.constant 0 : i32
    return %arg2, %arg1 : i32, i32
  }
  func.func @transform_2(%arg0: i32, %arg1: i32, %arg2: i32) -> (i32, i32) {
    %c0_i32 = arith.constant 0 : i32
    return %arg0, %arg1 : i32, i32
  }
}

module attributes {stable_mosaic.version = 11 : i64} {
  func.func @_bn_apply_kernel(%arg0: i32, %arg1: memref<256x128xbf16, #tpu.memory_space<vmem>>, %arg2: memref<1x128xf32, #tpu.memory_space<vmem>>, %arg3: memref<1x128xf32, #tpu.memory_space<vmem>>, %arg4: memref<1x128xf32, #tpu.memory_space<vmem>>, %arg5: memref<1x128xf32, #tpu.memory_space<vmem>>, %arg6: memref<256x128xbf16, #tpu.memory_space<vmem>>, %arg7: memref<256x128xbf16, #tpu.memory_space<vmem>>) attributes {dimension_semantics = [#tpu.dimension_semantics<parallel>], iteration_bounds = array<i64: 1>, scalar_prefetch = 0 : i64, scratch_operands = 0 : i64, tpu.core_type = #tpu.core_type<tc>, window_params = [{transform_indices = @transform_0, window_bounds = array<i64: 256, 128>}, {pipeline_mode = #tpu.pipeline_mode<synchronous>, transform_indices = @transform_1, window_bounds = array<i64: 1, 128>}, {pipeline_mode = #tpu.pipeline_mode<synchronous>, transform_indices = @transform_2, window_bounds = array<i64: 1, 128>}, {pipeline_mode = #tpu.pipeline_mode<synchronous>, transform_indices = @transform_3, window_bounds = array<i64: 1, 128>}, {pipeline_mode = #tpu.pipeline_mode<synchronous>, transform_indices = @transform_4, window_bounds = array<i64: 1, 128>}, {transform_indices = @transform_5, window_bounds = array<i64: 256, 128>}, {transform_indices = @transform_6, window_bounds = array<i64: 256, 128>}]} {
    %c0 = arith.constant 0 : index
    %c0_0 = arith.constant 0 : index
    %0 = vector.load %arg2[%c0, %c0_0] : memref<1x128xf32, #tpu.memory_space<vmem>>, vector<1x128xf32>
    %cst = arith.constant 3.125000e-02 : f32
    %1 = vector.broadcast %cst : f32 to vector<1x128xf32>
    %2 = arith.mulf %0, %1 : vector<1x128xf32>
    %c0_1 = arith.constant 0 : index
    %c0_2 = arith.constant 0 : index
    %3 = vector.load %arg3[%c0_1, %c0_2] : memref<1x128xf32, #tpu.memory_space<vmem>>, vector<1x128xf32>
    %cst_3 = arith.constant 3.125000e-02 : f32
    %4 = vector.broadcast %cst_3 : f32 to vector<1x128xf32>
    %5 = arith.mulf %3, %4 : vector<1x128xf32>
    %6 = arith.mulf %2, %2 : vector<1x128xf32>
    %7 = arith.subf %5, %6 : vector<1x128xf32>
    %c0_4 = arith.constant 0 : index
    %c0_5 = arith.constant 0 : index
    %8 = vector.load %arg4[%c0_4, %c0_5] : memref<1x128xf32, #tpu.memory_space<vmem>>, vector<1x128xf32>
    %cst_6 = arith.constant 9.99999974E-6 : f32
    %9 = vector.broadcast %cst_6 : f32 to vector<1x128xf32>
    %10 = arith.addf %7, %9 : vector<1x128xf32>
    %11 = math.rsqrt %10 : vector<1x128xf32>
    %12 = arith.mulf %8, %11 : vector<1x128xf32>
    %c0_7 = arith.constant 0 : index
    %c0_8 = arith.constant 0 : index
    %13 = vector.load %arg5[%c0_7, %c0_8] : memref<1x128xf32, #tpu.memory_space<vmem>>, vector<1x128xf32>
    %14 = arith.mulf %2, %12 : vector<1x128xf32>
    %15 = arith.subf %13, %14 : vector<1x128xf32>
    %c0_9 = arith.constant 0 : index
    %c0_10 = arith.constant 0 : index
    %16 = vector.load %arg1[%c0_9, %c0_10] : memref<256x128xbf16, #tpu.memory_space<vmem>>, vector<256x128xbf16>
    %17 = arith.extf %16 : vector<256x128xbf16> to vector<256x128xf32>
    %18 = vector.broadcast %12 : vector<1x128xf32> to vector<256x128xf32>
    %19 = arith.mulf %17, %18 : vector<256x128xf32>
    %20 = vector.broadcast %15 : vector<1x128xf32> to vector<256x128xf32>
    %21 = arith.addf %19, %20 : vector<256x128xf32>
    %c0_11 = arith.constant 0 : index
    %c0_12 = arith.constant 0 : index
    %22 = vector.load %arg6[%c0_11, %c0_12] : memref<256x128xbf16, #tpu.memory_space<vmem>>, vector<256x128xbf16>
    %23 = arith.extf %22 : vector<256x128xbf16> to vector<256x128xf32>
    %24 = arith.addf %21, %23 : vector<256x128xf32>
    %25 = arith.truncf %24 : vector<256x128xf32> to vector<256x128xbf16>
    %c0_13 = arith.constant 0 : index
    %c0_14 = arith.constant 0 : index
    %26 = vector.load %arg7[%c0_13, %c0_14] : memref<256x128xbf16, #tpu.memory_space<vmem>>, vector<256x128xbf16>
    tpu.vector_store %arg7[%c0_13, %c0_14], %25 {strides = array<i32>} : memref<256x128xbf16, #tpu.memory_space<vmem>>, vector<256x128xbf16>,
    return
  }
  func.func @transform_0(%arg0: i32) -> (i32, i32) {
    %c0_i32 = arith.constant 0 : i32
    %c0_i32_0 = arith.constant 0 : i32
    return %arg0, %c0_i32 : i32, i32
  }
  func.func @transform_1(%arg0: i32) -> (i32, i32) {
    %c0_i32 = arith.constant 0 : i32
    %c0_i32_0 = arith.constant 0 : i32
    %c0_i32_1 = arith.constant 0 : i32
    return %c0_i32, %c0_i32_0 : i32, i32
  }
  func.func @transform_2(%arg0: i32) -> (i32, i32) {
    %c0_i32 = arith.constant 0 : i32
    %c0_i32_0 = arith.constant 0 : i32
    %c0_i32_1 = arith.constant 0 : i32
    return %c0_i32, %c0_i32_0 : i32, i32
  }
  func.func @transform_3(%arg0: i32) -> (i32, i32) {
    %c0_i32 = arith.constant 0 : i32
    %c0_i32_0 = arith.constant 0 : i32
    %c0_i32_1 = arith.constant 0 : i32
    return %c0_i32, %c0_i32_0 : i32, i32
  }
  func.func @transform_4(%arg0: i32) -> (i32, i32) {
    %c0_i32 = arith.constant 0 : i32
    %c0_i32_0 = arith.constant 0 : i32
    %c0_i32_1 = arith.constant 0 : i32
    return %c0_i32, %c0_i32_0 : i32, i32
  }
  func.func @transform_5(%arg0: i32) -> (i32, i32) {
    %c0_i32 = arith.constant 0 : i32
    %c0_i32_0 = arith.constant 0 : i32
    return %arg0, %c0_i32 : i32, i32
  }
  func.func @transform_6(%arg0: i32) -> (i32, i32) {
    %c0_i32 = arith.constant 0 : i32
    %c0_i32_0 = arith.constant 0 : i32
    return %arg0, %c0_i32 : i32, i32
  }
}

module attributes {stable_mosaic.version = 11 : i64} {
  func.func @_gemm_kernel(%arg0: i32, %arg1: i32, %arg2: i32, %arg3: memref<256x512xbf16, #tpu.memory_space<vmem>>, %arg4: memref<512x128xbf16, #tpu.memory_space<vmem>>, %arg5: memref<1x128xf32, #tpu.memory_space<vmem>>, %arg6: memref<256x128xf32, #tpu.memory_space<vmem>>, %arg7: memref<256x128xf32, #tpu.memory_space<vmem>>) attributes {dimension_semantics = [#tpu.dimension_semantics<parallel>, #tpu.dimension_semantics<parallel>, #tpu.dimension_semantics<arbitrary>], iteration_bounds = array<i64: 2, 1, 1>, scalar_prefetch = 0 : i64, scratch_operands = 1 : i64, tpu.core_type = #tpu.core_type<tc>, window_params = [{transform_indices = @transform_0, window_bounds = array<i64: 256, 512>}, {transform_indices = @transform_1, window_bounds = array<i64: 512, 128>}, {transform_indices = @transform_2, window_bounds = array<i64: 1, 128>}, {transform_indices = @transform_3, window_bounds = array<i64: 256, 128>}]} {
    %c0_i32 = arith.constant 0 : i32
    %0 = arith.cmpi eq, %arg2, %c0_i32 : i32
    %1 = arith.extui %0 : i1 to i32
    %c0_i32_0 = arith.constant 0 : i32
    %2 = arith.cmpi ne, %1, %c0_i32_0 : i32
    scf.if %2 {
      %cst_10 = arith.constant 0.000000e+00 : f32
      %12 = vector.broadcast %cst_10 : f32 to vector<256x128xf32>
      %c0_11 = arith.constant 0 : index
      %c0_12 = arith.constant 0 : index
      %13 = vector.load %arg7[%c0_11, %c0_12] : memref<256x128xf32, #tpu.memory_space<vmem>>, vector<256x128xf32>
      tpu.vector_store %arg7[%c0_11, %c0_12], %12 {strides = array<i32>} : memref<256x128xf32, #tpu.memory_space<vmem>>, vector<256x128xf32>,
    } else {
    }
    %c0 = arith.constant 0 : index
    %c0_1 = arith.constant 0 : index
    %3 = vector.load %arg7[%c0, %c0_1] : memref<256x128xf32, #tpu.memory_space<vmem>>, vector<256x128xf32>
    %c0_2 = arith.constant 0 : index
    %c0_3 = arith.constant 0 : index
    %4 = vector.load %arg3[%c0_2, %c0_3] : memref<256x512xbf16, #tpu.memory_space<vmem>>, vector<256x512xbf16>
    %c0_4 = arith.constant 0 : index
    %c0_5 = arith.constant 0 : index
    %5 = vector.load %arg4[%c0_4, %c0_5] : memref<512x128xbf16, #tpu.memory_space<vmem>>, vector<512x128xbf16>
    %cst = arith.constant dense<0.000000e+00> : vector<256x128xf32>
    %6 = tpu.matmul %4, %5, %cst {dimension_numbers = #tpu.dot_dimension_numbers<[1], [0], [0], [1], [0, 0, 1, 1], [], []>} : vector<256x512xbf16>, vector<512x128xbf16>, vector<256x128xf32> -> vector<256x128xf32>
    %7 = arith.addf %3, %6 : vector<256x128xf32>
    %c0_6 = arith.constant 0 : index
    %c0_7 = arith.constant 0 : index
    %8 = vector.load %arg7[%c0_6, %c0_7] : memref<256x128xf32, #tpu.memory_space<vmem>>, vector<256x128xf32>
    tpu.vector_store %arg7[%c0_6, %c0_7], %7 {strides = array<i32>} : memref<256x128xf32, #tpu.memory_space<vmem>>, vector<256x128xf32>,
    %c0_i32_8 = arith.constant 0 : i32
    %9 = arith.cmpi eq, %arg2, %c0_i32_8 : i32
    %10 = arith.extui %9 : i1 to i32
    %c0_i32_9 = arith.constant 0 : i32
    %11 = arith.cmpi ne, %10, %c0_i32_9 : i32
    scf.if %11 {
      %c0_10 = arith.constant 0 : index
      %c0_11 = arith.constant 0 : index
      %12 = vector.load %arg7[%c0_10, %c0_11] : memref<256x128xf32, #tpu.memory_space<vmem>>, vector<256x128xf32>
      %c0_12 = arith.constant 0 : index
      %c0_13 = arith.constant 0 : index
      %13 = vector.load %arg5[%c0_12, %c0_13] : memref<1x128xf32, #tpu.memory_space<vmem>>, vector<1x128xf32>
      %14 = vector.broadcast %13 : vector<1x128xf32> to vector<256x128xf32>
      %15 = arith.addf %12, %14 : vector<256x128xf32>
      %16 = math.tanh %15 : vector<256x128xf32>
      %c0_14 = arith.constant 0 : index
      %c0_15 = arith.constant 0 : index
      %17 = vector.load %arg6[%c0_14, %c0_15] : memref<256x128xf32, #tpu.memory_space<vmem>>, vector<256x128xf32>
      tpu.vector_store %arg6[%c0_14, %c0_15], %16 {strides = array<i32>} : memref<256x128xf32, #tpu.memory_space<vmem>>, vector<256x128xf32>,
    } else {
    }
    return
  }
  func.func @transform_0(%arg0: i32, %arg1: i32, %arg2: i32) -> (i32, i32) {
    %c0_i32 = arith.constant 0 : i32
    return %arg0, %arg2 : i32, i32
  }
  func.func @transform_1(%arg0: i32, %arg1: i32, %arg2: i32) -> (i32, i32) {
    %c0_i32 = arith.constant 0 : i32
    return %arg2, %arg1 : i32, i32
  }
  func.func @transform_2(%arg0: i32, %arg1: i32, %arg2: i32) -> (i32, i32) {
    %c0_i32 = arith.constant 0 : i32
    %c0_i32_0 = arith.constant 0 : i32
    return %c0_i32, %arg1 : i32, i32
  }
  func.func @transform_3(%arg0: i32, %arg1: i32, %arg2: i32) -> (i32, i32) {
    %c0_i32 = arith.constant 0 : i32
    return %arg0, %arg1 : i32, i32
  }
}

</mosaic_0001>

<llo_original>
// kernel: _lambda_.29
$region0: #{_lambda_.29}
  #allocation0 [shape = 'u32[]', space=smem, size = 0x4, offset = 0x4, fixed_abs, tag = 'smem constant byte address 0x4 - core index']
  #allocation1 [shape = 'u32[72,128]{1,0:T(1,128)}', space=vmem, size = 0x9000, scoped, tag = 'internal scratch']
  %s0 = inlined_call_operand.vmem [shape: bf16[512,128], index: 0, kind: input, shape index: {}]
  %s1 = inlined_call_operand.vmem [shape: f32[1,128], index: 1, kind: output, shape index: {0}]
  %s2 = inlined_call_operand.vmem [shape: f32[1,128], index: 2, kind: output, shape index: {1}]
  %3 = xla_tuple %s1, %s2
  %s4 = sld [smem:[#allocation0]]
  $region49: #{_lambda_.29} parent=0
    _
  %s6 = ssub.s32 1, %s4
  %s7 = scalar_select 0, %s6, %s4
  loop: start=0, step=1, limit=4
  $region2: #{_lambda_.29} parent=0 // loop_pre_header
    _
  $region3: #{_lambda_.29} parent=0 // loop_header
    %s9 = sphi 0, %s13
    %p10 = scmp.ge.s32.totalorder %s9, 4
    %s19 = sphi 0, %s21
    %s22 = sphi 0, %s19
    %s23 = sphi 0, %s22
    %s39 = sphi 0, %s23
    %s43 = sphi 0, %s43
    %s45 = sphi 0, %s43
    %s46 = sphi 0, %s45
    %s60 = sphi 0, %s46
    %s64 = sphi 0, %s64
    %s66 = sphi 0, %s64
    %s67 = sphi 0, %s66
    %s81 = sphi 0, %s67
  $region4: #{_lambda_.29} parent=0 // loop_header_branch
    %12 = sbr.rel (%p10) target = $region8
  $region5: #{_lambda_.29} parent=0 // loop_body
    %s14 = ssub.s32 %s9, 1
    %s15 = ssub.s32 %s9, 2
    %s16 = sadd.s32 %s9, 1
    %s17 = ssub.s32 %s9, %s16
    %p18 = scmp.eq.s32.totalorder %s17, 0
    %s20 = sadd.s32 %s19, 1
    %s21 = scalar_select %p18, %s19, %s20
    %p24 = pneg %p18
    %p25 = scmp.eq.s32.totalorder %s9, 1
    %p26 = por %p24, %p25
    %p27 = scmp.ne.s32.totalorder %s19, %s22
    %p28 = scmp.eq.s32.totalorder %s9, 0
    %p29 = por %p27, %p28
    %p30 = scmp.ne.s32.totalorder %s19, %s22
    %p31 = scmp.eq.s32.totalorder %s14, 1
    %p32 = por %p30, %p31
    %p33 = scmp.ne.s32.totalorder %s22, %s23
    %p34 = scmp.eq.s32.totalorder %s14, 0
    %p35 = por %p33, %p34
    %p36 = scmp.ne.s32.totalorder %s22, %s23
    %p37 = scmp.eq.s32.totalorder %s15, 1
    %p38 = por %p36, %p37
    %p40 = scmp.ne.s32.totalorder %s23, %s39
    %p41 = scmp.eq.s32.totalorder %s15, 0
    %p42 = por %p40, %p41
    %s44 = sadd.s32 %s43, 1
    %p47 = scmp.eq.s32.totalorder %s9, 1
    %p48 = scmp.ne.s32.totalorder %s43, %s45
    %p49 = scmp.eq.s32.totalorder %s9, 0
    %p50 = por %p48, %p49
    %p51 = scmp.ne.s32.totalorder %s43, %s45
    %p52 = scmp.eq.s32.totalorder %s14, 1
    %p53 = por %p51, %p52
    %p54 = scmp.ne.s32.totalorder %s45, %s46
    %p55 = scmp.eq.s32.totalorder %s14, 0
    %p56 = por %p54, %p55
    %p57 = scmp.ne.s32.totalorder %s45, %s46
    %p58 = scmp.eq.s32.totalorder %s15, 1
    %p59 = por %p57, %p58
    %p61 = scmp.ne.s32.totalorder %s46, %s60
    %p62 = scmp.eq.s32.totalorder %s15, 0
    %p63 = por %p61, %p62
    %s65 = sadd.s32 %s64, 1
    %p68 = scmp.eq.s32.totalorder %s9, 1
    %p69 = scmp.ne.s32.totalorder %s64, %s66
    %p70 = scmp.eq.s32.totalorder %s9, 0
    %p71 = por %p69, %p70
    %p72 = scmp.ne.s32.totalorder %s64, %s66
    %p73 = scmp.eq.s32.totalorder %s14, 1
    %p74 = por %p72, %p73
    %p75 = scmp.ne.s32.totalorder %s66, %s67
    %p76 = scmp.eq.s32.totalorder %s14, 0
    %p77 = por %p75, %p76
    %p78 = scmp.ne.s32.totalorder %s66, %s67
    %p79 = scmp.eq.s32.totalorder %s15, 1
    %p80 = por %p78, %p79
    %p82 = scmp.ne.s32.totalorder %s67, %s81
    %p83 = scmp.eq.s32.totalorder %s15, 0
    %p84 = por %p82, %p83
    %p85 = scmp.le.s32.totalorder 1, %s9
    %p86 = scmp.lt.s32.totalorder %s9, 3
    %p87 = pnand %p85, %p86
    %p88 = pneg %p87
    // Predicated region
    $region9: #{_lambda_.29} parent=5 // pred_check
      _
    $region10: #{_lambda_.29} parent=5 // pred_check_branch
      %90 = sbr.rel (%p87) target = $region12
    $region11: #{_lambda_.29} parent=5 // pred_region
      %s91 = ssub.s32 %s9, 1
    $region12: #{_lambda_.29} parent=5 // pred_fallthru
      _
    %p92 = scmp.lt.s32.totalorder %s9, 2
    // Predicated region
    $region13: #{_lambda_.29} parent=5 // pred_check
      %p93 = pneg %p92
    $region14: #{_lambda_.29} parent=5 // pred_check_branch
      %95 = sbr.rel (%p93) target = $region16
    $region15: #{_lambda_.29} parent=5 // pred_region
      // Predicated region
      $region17: #{_lambda_.29} parent=15 // pred_check
        %p96 = pneg %p29
      $region18: #{_lambda_.29} parent=15 // pred_check_branch
        %98 = sbr.rel (%p96) target = $region20
      $region19: #{_lambda_.29} parent=15 // pred_region
        %s99 = smul.u32 32, %s9
        %p100 = scmp.lt.s32.totalorder %s99, 63
        %s101 = scalar_select %p100, %s99, 63
        %s102 = smul.addr %s101, 4
        %s103 = scalar_lea.vmem %s0, %s102
        %s104 = smul.u32 32, %s9
      $region20: #{_lambda_.29} parent=15 // pred_fallthru
        _
    $region16: #{_lambda_.29} parent=5 // pred_fallthru
      _
    %p105 = scmp.le.s32.totalorder 1, %s9
    %p106 = scmp.lt.s32.totalorder %s9, 3
    %p107 = pnand %p105, %p106
    %p108 = pneg %p107
    // Predicated region
    $region21: #{_lambda_.29} parent=5 // pred_check
      _
    $region22: #{_lambda_.29} parent=5 // pred_check_branch
      %110 = sbr.rel (%p107) target = $region24
    $region23: #{_lambda_.29} parent=5 // pred_region
      %s111 = ssub.s32 %s9, 1
      %s112 = smul.u32 32, %s14
      %p113 = scmp.lt.s32.totalorder %s112, 63
      %s114 = scalar_select %p113, %s112, 63
      %s115 = smul.addr %s114, 4
      %s116 = scalar_lea.vmem %s0, %s115
      %p117 = pneg %p35
      %p118 = pneg %p32
      %p119 = pneg %p56
      %p120 = pneg %p53
      %p121 = pneg %p77
      %p122 = pneg %p74
      %s123 = smul.u32 32, %s14
      %p124 = scmp.lt.s32.totalorder %s123, 63
      %s125 = scalar_select %p124, %s123, 63
      %s126 = smul.addr %s125, 4
      %s127 = scalar_lea.vmem %s0, %s126
      %s128 = smul.u32 32, %s14
      %p129 = scmp.eq.s32.totalorder %s14, 0
      // Predicated region
      $region25: #{_lambda_.29} parent=23 // pred_check
        %p130 = pneg %p129
      $region26: #{_lambda_.29} parent=23 // pred_check_branch
        %132 = sbr.rel (%p130) target = $region28
      $region27: #{_lambda_.29} parent=23 // pred_region
        %133 = vst [vmem:[%s1] sm:$0x1] 0.0
        %134 = vst [vmem:[%s2] sm:$0x1] 0.0
      $region28: #{_lambda_.29} parent=23 // pred_fallthru
        _
      %v135 = vld [vmem:[%s127] sm:$0xf]
      %v136 = vld [vmem:[%s127 + $0x4] sm:$0xf]
      %v137 = vld [vmem:[%s127 + $0x8] sm:$0xf]
      %v138 = vld [vmem:[%s127 + $0xc] sm:$0xf]
      %v139 = vld [vmem:[%s127 + $0x10] sm:$0xf]
      %v140 = vld [vmem:[%s127 + $0x14] sm:$0xf]
      %v141 = vld [vmem:[%s127 + $0x18] sm:$0xf]
      %v142 = vld [vmem:[%s127 + $0x1c] sm:$0xf]
      %v143 = vld [vmem:[%s127 + $0x20] sm:$0xf]
      %v144 = vld [vmem:[%s127 + $0x24] sm:$0xf]
      %v145 = vld [vmem:[%s127 + $0x28] sm:$0xf]
      %v146 = vld [vmem:[%s127 + $0x2c] sm:$0xf]
      %v147 = vld [vmem:[%s127 + $0x30] sm:$0xf]
      %v148 = vld [vmem:[%s127 + $0x34] sm:$0xf]
      %v149 = vld [vmem:[%s127 + $0x38] sm:$0xf]
      %v150 = vld [vmem:[%s127 + $0x3c] sm:$0xf]
      %v151 = vld [vmem:[%s127 + $0x40] sm:$0xf]
      %v152 = vld [vmem:[%s127 + $0x44] sm:$0xf]
      %v153 = vld [vmem:[%s127 + $0x48] sm:$0xf]
      %v154 = vld [vmem:[%s127 + $0x4c] sm:$0xf]
      %v155 = vld [vmem:[%s127 + $0x50] sm:$0xf]
      %v156 = vld [vmem:[%s127 + $0x54] sm:$0xf]
      %v157 = vld [vmem:[%s127 + $0x58] sm:$0xf]
      %v158 = vld [vmem:[%s127 + $0x5c] sm:$0xf]
      %v159 = vld [vmem:[%s127 + $0x60] sm:$0xf]
      %v160 = vld [vmem:[%s127 + $0x64] sm:$0xf]
      %v161 = vld [vmem:[%s127 + $0x68] sm:$0xf]
      %v162 = vld [vmem:[%s127 + $0x6c] sm:$0xf]
      %v163 = vld [vmem:[%s127 + $0x70] sm:$0xf]
      %v164 = vld [vmem:[%s127 + $0x74] sm:$0xf]
      %v165 = vld [vmem:[%s127 + $0x78] sm:$0xf]
      %v166 = vld [vmem:[%s127 + $0x7c] sm:$0xf]
      %v167 = vunpack.c.l.bf16 %v135
      %v168 = vunpack.c.l.bf16 %v136
      %v169 = vunpack.c.l.bf16 %v137
      %v170 = vunpack.c.l.bf16 %v138
      %v171 = vunpack.c.l.bf16 %v139
      %v172 = vunpack.c.l.bf16 %v140
      %v173 = vunpack.c.l.bf16 %v141
      %v174 = vunpack.c.l.bf16 %v142
      %v175 = vunpack.c.l.bf16 %v143
      %v176 = vunpack.c.l.bf16 %v144
      %v177 = vunpack.c.l.bf16 %v145
      %v178 = vunpack.c.l.bf16 %v146
      %v179 = vunpack.c.l.bf16 %v147
      %v180 = vunpack.c.l.bf16 %v148
      %v181 = vunpack.c.l.bf16 %v149
      %v182 = vunpack.c.l.bf16 %v150
      %v183 = vunpack.c.l.bf16 %v151
      %v184 = vunpack.c.l.bf16 %v152
      %v185 = vunpack.c.l.bf16 %v153
      %v186 = vunpack.c.l.bf16 %v154
      %v187 = vunpack.c.l.bf16 %v155
      %v188 = vunpack.c.l.bf16 %v156
      %v189 = vunpack.c.l.bf16 %v157
      %v190 = vunpack.c.l.bf16 %v158
      %v191 = vunpack.c.l.bf16 %v159
      %v192 = vunpack.c.l.bf16 %v160
      %v193 = vunpack.c.l.bf16 %v161
      %v194 = vunpack.c.l.bf16 %v162
      %v195 = vunpack.c.l.bf16 %v163
      %v196 = vunpack.c.l.bf16 %v164
      %v197 = vunpack.c.l.bf16 %v165
      %v198 = vunpack.c.l.bf16 %v166
      %v199 = vld [vmem:[%s1] sm:$0x1]
      %v200 = vadd.f32 %v167, %v168
      %v201 = vadd.f32 %v200, %v169
      %v202 = vadd.f32 %v201, %v170
      %v203 = vadd.f32 %v202, %v171
      %v204 = vadd.f32 %v203, %v172
      %v205 = vadd.f32 %v204, %v173
      %v206 = vadd.f32 %v205, %v174
      %v207 = vadd.f32 %v206, %v175
      %v208 = vadd.f32 %v207, %v176
      %v209 = vadd.f32 %v208, %v177
      %v210 = vadd.f32 %v209, %v178
      %v211 = vadd.f32 %v210, %v179
      %v212 = vadd.f32 %v211, %v180
      %v213 = vadd.f32 %v212, %v181
      %v214 = vadd.f32 %v213, %v182
      %v215 = vadd.f32 %v214, %v183
      %v216 = vadd.f32 %v215, %v184
      %v217 = vadd.f32 %v216, %v185
      %v218 = vadd.f32 %v217, %v186
      %v219 = vadd.f32 %v218, %v187
      %v220 = vadd.f32 %v219, %v188
      %v221 = vadd.f32 %v220, %v189
      %v222 = vadd.f32 %v221, %v190
      %v223 = vadd.f32 %v222, %v191
      %v224 = vadd.f32 %v223, %v192
      %v225 = vadd.f32 %v224, %v193
      %v226 = vadd.f32 %v225, %v194
      %v227 = vadd.f32 %v226, %v195
      %v228 = vadd.f32 %v227, %v196
      %v229 = vadd.f32 %v228, %v197
      %v230 = vadd.f32 %v229, %v198
      %v231 = vrot.slane %v230, 4
      %v232 = vadd.f32 %v230, %v231
      %v233 = vrot.slane %v232, 2
      %v234 = vadd.f32 %v232, %v233
      %v235 = vrot.slane %v234, 1
      %v236 = vadd.f32 %v234, %v235
      %v237 = vadd.f32 %v199, %v236
      %238 = vst [vmem:[%s1] sm:$0x1] %v237
      %v239 = vld [vmem:[%s2] sm:$0x1]
      %v240 = vmul.f32 %v167, %v167
      %v241 = vmul.f32 %v168, %v168
      %v242 = vmul.f32 %v169, %v169
      %v243 = vmul.f32 %v170, %v170
      %v244 = vmul.f32 %v171, %v171
      %v245 = vmul.f32 %v172, %v172
      %v246 = vmul.f32 %v173, %v173
      %v247 = vmul.f32 %v174, %v174
      %v248 = vmul.f32 %v175, %v175
      %v249 = vmul.f32 %v176, %v176
      %v250 = vmul.f32 %v177, %v177
      %v251 = vmul.f32 %v178, %v178
      %v252 = vmul.f32 %v179, %v179
      %v253 = vmul.f32 %v180, %v180
      %v254 = vmul.f32 %v181, %v181
      %v255 = vmul.f32 %v182, %v182
      %v256 = vmul.f32 %v183, %v183
      %v257 = vmul.f32 %v184, %v184
      %v258 = vmul.f32 %v185, %v185
      %v259 = vmul.f32 %v186, %v186
      %v260 = vmul.f32 %v187, %v187
      %v261 = vmul.f32 %v188, %v188
      %v262 = vmul.f32 %v189, %v189
      %v263 = vmul.f32 %v190, %v190
      %v264 = vmul.f32 %v191, %v191
      %v265 = vmul.f32 %v192, %v192
      %v266 = vmul.f32 %v193, %v193
      %v267 = vmul.f32 %v194, %v194
      %v268 = vmul.f32 %v195, %v195
      %v269 = vmul.f32 %v196, %v196
      %v270 = vmul.f32 %v197, %v197
      %v271 = vmul.f32 %v198, %v198
      %v272 = vadd.f32 %v240, %v241
      %v273 = vadd.f32 %v272, %v242
      %v274 = vadd.f32 %v273, %v243
      %v275 = vadd.f32 %v274, %v244
      %v276 = vadd.f32 %v275, %v245
      %v277 = vadd.f32 %v276, %v246
      %v278 = vadd.f32 %v277, %v247
      %v279 = vadd.f32 %v278, %v248
      %v280 = vadd.f32 %v279, %v249
      %v281 = vadd.f32 %v280, %v250
      %v282 = vadd.f32 %v281, %v251
      %v283 = vadd.f32 %v282, %v252
      %v284 = vadd.f32 %v283, %v253
      %v285 = vadd.f32 %v284, %v254
      %v286 = vadd.f32 %v285, %v255
      %v287 = vadd.f32 %v286, %v256
      %v288 = vadd.f32 %v287, %v257
      %v289 = vadd.f32 %v288, %v258
      %v290 = vadd.f32 %v289, %v259
      %v291 = vadd.f32 %v290, %v260
      %v292 = vadd.f32 %v291, %v261
      %v293 = vadd.f32 %v292, %v262
      %v294 = vadd.f32 %v293, %v263
      %v295 = vadd.f32 %v294, %v264
      %v296 = vadd.f32 %v295, %v265
      %v297 = vadd.f32 %v296, %v266
      %v298 = vadd.f32 %v297, %v267
      %v299 = vadd.f32 %v298, %v268
      %v300 = vadd.f32 %v299, %v269
      %v301 = vadd.f32 %v300, %v270
      %v302 = vadd.f32 %v301, %v271
      %v303 = vrot.slane %v302, 4
      %v304 = vadd.f32 %v302, %v303
      %v305 = vrot.slane %v304, 2
      %v306 = vadd.f32 %v304, %v305
      %v307 = vrot.slane %v306, 1
      %v308 = vadd.f32 %v306, %v307
      %v309 = vadd.f32 %v239, %v308
      %310 = vst [vmem:[%s2] sm:$0x1] %v309
      // Predicated region
      $region29: #{_lambda_.29} parent=23 // pred_check
        %p311 = pneg %p53
      $region30: #{_lambda_.29} parent=23 // pred_check_branch
        %313 = sbr.rel (%p311) target = $region32
      $region31: #{_lambda_.29} parent=23 // pred_region
        _
      $region32: #{_lambda_.29} parent=23 // pred_fallthru
        _
      // Predicated region
      $region33: #{_lambda_.29} parent=23 // pred_check
        %p314 = pneg %p74
      $region34: #{_lambda_.29} parent=23 // pred_check_branch
        %316 = sbr.rel (%p314) target = $region36
      $region35: #{_lambda_.29} parent=23 // pred_region
        _
      $region36: #{_lambda_.29} parent=23 // pred_fallthru
        _
      // Predicated region
      $region37: #{_lambda_.29} parent=23 // pred_check
        %p317 = pneg %p53
      $region38: #{_lambda_.29} parent=23 // pred_check_branch
        %319 = sbr.rel (%p317) target = $region40
      $region39: #{_lambda_.29} parent=23 // pred_region
        _
      $region40: #{_lambda_.29} parent=23 // pred_fallthru
        _
      // Predicated region
      $region41: #{_lambda_.29} parent=23 // pred_check
        %p320 = pneg %p74
      $region42: #{_lambda_.29} parent=23 // pred_check_branch
        %322 = sbr.rel (%p320) target = $region44
      $region43: #{_lambda_.29} parent=23 // pred_region
        _
      $region44: #{_lambda_.29} parent=23 // pred_fallthru
        _
    $region24: #{_lambda_.29} parent=5 // pred_fallthru
      _
    %p323 = scmp.le.s32.totalorder 2, %s9
    // Predicated region
    $region45: #{_lambda_.29} parent=5 // pred_check
      %p324 = pneg %p323
    $region46: #{_lambda_.29} parent=5 // pred_check_branch
      %326 = sbr.rel (%p324) target = $region48
    $region47: #{_lambda_.29} parent=5 // pred_region
      %s327 = ssub.s32 %s9, 2
    $region48: #{_lambda_.29} parent=5 // pred_fallthru
      _
  $region6: #{_lambda_.29} parent=0 // loop_footer
    %s13 = sadd.s32 1, %s9
  $region7: #{_lambda_.29} parent=0 // loop_footer_branch
    %8 = sbr.rel target = $region3
  $region8: #{_lambda_.29} parent=0 // loop_exit
    _

// kernel: _lambda_.28
$region0: #{_lambda_.28}
  #allocation0 [shape = 'u32[]', space=smem, size = 0x4, offset = 0x4, fixed_abs, tag = 'smem constant byte address 0x4 - core index']
  #allocation1 [shape = 'u32[72,128]{1,0:T(1,128)}', space=vmem, size = 0x9000, scoped, tag = 'internal scratch']
  #allocation2 [shape = 'f32[256,128]{1,0:T(8,128)}', space=vmem, size = 0x20000, scoped, tag = 'scratch operand']
  %s0 = inlined_call_operand.vmem [shape: bf16[512,256], index: 0, kind: input, shape index: {}]
  %s1 = inlined_call_operand.vmem [shape: bf16[256,128], index: 1, kind: input, shape index: {}]
  %s2 = inlined_call_operand.vmem [shape: bf16[512,128], index: 2, kind: output, shape index: {}]
  %s3 = sld [smem:[#allocation0]]
  $region49: #{_lambda_.28} parent=0
    _
  %s5 = ssub.s32 1, %s3
  %s6 = scalar_select 0, %s5, %s3
  loop: start=0, step=1, limit=4
  $region2: #{_lambda_.28} parent=0 // loop_pre_header
    _
  $region3: #{_lambda_.28} parent=0 // loop_header
    %s8 = sphi 0, %s12
    %p9 = scmp.ge.s32.totalorder %s8, 4
    %s15 = sphi 0, %s34
    %s16 = sphi 0, %s30
    %s17 = sphi 0, %s26
    %s18 = sphi 0, %s15
    %s19 = sphi 0, %s16
    %s20 = sphi 0, %s17
    %s21 = sphi 0, %s18
    %s22 = sphi 0, %s19
    %s23 = sphi 0, %s20
    %s39 = sphi 0, %s41
    %s42 = sphi 0, %s39
    %s43 = sphi 0, %s42
    %s59 = sphi 0, %s43
    %s67 = sphi 0, %s69
    %s70 = sphi 0, %s67
    %s71 = sphi 0, %s70
    %s87 = sphi 0, %s71
    %s95 = sphi 0, %s97
    %s98 = sphi 0, %s95
    %s99 = sphi 0, %s98
    %s115 = sphi 0, %s99
  $region4: #{_lambda_.28} parent=0 // loop_header_branch
    %11 = sbr.rel (%p9) target = $region8
  $region5: #{_lambda_.28} parent=0 // loop_body
    %s13 = ssub.s32 %s8, 1
    %s14 = ssub.s32 %s8, 2
    %s24 = sadd.s32 1, %s17
    %p25 = scmp.ge.s32.totalorder %s24, 1
    %s26 = scalar_select %p25, 0, %s24
    %s27 = sadd.s32 1, %s16
    %s28 = scalar_select %p25, %s27, %s16
    %p29 = scmp.ge.s32.totalorder %s28, 1
    %s30 = scalar_select %p29, 0, %s28
    %s31 = sadd.s32 1, %s15
    %s32 = scalar_select %p29, %s31, %s15
    %p33 = scmp.ge.s32.totalorder %s32, 2
    %s34 = scalar_select %p33, 0, %s32
    %s35 = ssub.s32 %s15, %s34
    %s36 = ssub.s32 %s17, %s26
    %s37 = sor.u32 %s35, %s36
    %p38 = scmp.eq.s32.totalorder %s37, 0
    %s40 = sadd.s32 %s39, 1
    %s41 = scalar_select %p38, %s39, %s40
    %p44 = pneg %p38
    %p45 = scmp.eq.s32.totalorder %s8, 1
    %p46 = por %p44, %p45
    %p47 = scmp.ne.s32.totalorder %s39, %s42
    %p48 = scmp.eq.s32.totalorder %s8, 0
    %p49 = por %p47, %p48
    %p50 = scmp.ne.s32.totalorder %s39, %s42
    %p51 = scmp.eq.s32.totalorder %s13, 1
    %p52 = por %p50, %p51
    %p53 = scmp.ne.s32.totalorder %s42, %s43
    %p54 = scmp.eq.s32.totalorder %s13, 0
    %p55 = por %p53, %p54
    %p56 = scmp.ne.s32.totalorder %s42, %s43
    %p57 = scmp.eq.s32.totalorder %s14, 1
    %p58 = por %p56, %p57
    %p60 = scmp.ne.s32.totalorder %s43, %s59
    %p61 = scmp.eq.s32.totalorder %s14, 0
    %p62 = por %p60, %p61
    %s63 = ssub.s32 %s17, %s26
    %s64 = ssub.s32 %s16, %s30
    %s65 = sor.u32 %s63, %s64
    %p66 = scmp.eq.s32.totalorder %s65, 0
    %s68 = sadd.s32 %s67, 1
    %s69 = scalar_select %p66, %s67, %s68
    %p72 = pneg %p66
    %p73 = scmp.eq.s32.totalorder %s8, 1
    %p74 = por %p72, %p73
    %p75 = scmp.ne.s32.totalorder %s67, %s70
    %p76 = scmp.eq.s32.totalorder %s8, 0
    %p77 = por %p75, %p76
    %p78 = scmp.ne.s32.totalorder %s67, %s70
    %p79 = scmp.eq.s32.totalorder %s13, 1
    %p80 = por %p78, %p79
    %p81 = scmp.ne.s32.totalorder %s70, %s71
    %p82 = scmp.eq.s32.totalorder %s13, 0
    %p83 = por %p81, %p82
    %p84 = scmp.ne.s32.totalorder %s70, %s71
    %p85 = scmp.eq.s32.totalorder %s14, 1
    %p86 = por %p84, %p85
    %p88 = scmp.ne.s32.totalorder %s71, %s87
    %p89 = scmp.eq.s32.totalorder %s14, 0
    %p90 = por %p88, %p89
    %s91 = ssub.s32 %s15, %s34
    %s92 = ssub.s32 %s16, %s30
    %s93 = sor.u32 %s91, %s92
    %p94 = scmp.eq.s32.totalorder %s93, 0
    %s96 = sadd.s32 %s95, 1
    %s97 = scalar_select %p94, %s95, %s96
    %p100 = pneg %p94
    %p101 = scmp.eq.s32.totalorder %s8, 1
    %p102 = por %p100, %p101
    %p103 = scmp.ne.s32.totalorder %s95, %s98
    %p104 = scmp.eq.s32.totalorder %s8, 0
    %p105 = por %p103, %p104
    %p106 = scmp.ne.s32.totalorder %s95, %s98
    %p107 = scmp.eq.s32.totalorder %s13, 1
    %p108 = por %p106, %p107
    %p109 = scmp.ne.s32.totalorder %s98, %s99
    %p110 = scmp.eq.s32.totalorder %s13, 0
    %p111 = por %p109, %p110
    %p112 = scmp.ne.s32.totalorder %s98, %s99
    %p113 = scmp.eq.s32.totalorder %s14, 1
    %p114 = por %p112, %p113
    %p116 = scmp.ne.s32.totalorder %s99, %s115
    %p117 = scmp.eq.s32.totalorder %s14, 0
    %p118 = por %p116, %p117
    %p119 = scmp.le.s32.totalorder 1, %s8
    %p120 = scmp.lt.s32.totalorder %s8, 3
    %p121 = pnand %p119, %p120
    %p122 = pneg %p121
    // Predicated region
    $region9: #{_lambda_.28} parent=5 // pred_check
      _
    $region10: #{_lambda_.28} parent=5 // pred_check_branch
      %124 = sbr.rel (%p121) target = $region12
    $region11: #{_lambda_.28} parent=5 // pred_region
      %s125 = ssub.s32 %s8, 1
      // Predicated region
      $region13: #{_lambda_.28} parent=11 // pred_check
        %p126 = pneg %p83
      $region14: #{_lambda_.28} parent=11 // pred_check_branch
        %128 = sbr.rel (%p126) target = $region16
      $region15: #{_lambda_.28} parent=11 // pred_region
        %s129 = smul.u32 32, %s20
        %p130 = scmp.lt.s32.totalorder %s129, 31
        %s131 = scalar_select %p130, %s129, 31
        %p132 = scmp.lt.s32.totalorder %s19, 0
        %s133 = scalar_select %p132, %s19, 0
        %s134 = sadd.s32 %s133, %s131
        %s135 = smul.addr %s134, 4
        %s136 = scalar_lea.vmem %s1, %s135
        %s137 = smul.u32 32, %s20
      $region16: #{_lambda_.28} parent=11 // pred_fallthru
        _
    $region12: #{_lambda_.28} parent=5 // pred_fallthru
      _
    %p138 = scmp.lt.s32.totalorder %s8, 2
    // Predicated region
    $region17: #{_lambda_.28} parent=5 // pred_check
      %p139 = pneg %p138
    $region18: #{_lambda_.28} parent=5 // pred_check_branch
      %141 = sbr.rel (%p139) target = $region20
    $region19: #{_lambda_.28} parent=5 // pred_region
      // Predicated region
      $region21: #{_lambda_.28} parent=19 // pred_check
        %p142 = pneg %p49
      $region22: #{_lambda_.28} parent=19 // pred_check_branch
        %144 = sbr.rel (%p142) target = $region24
      $region23: #{_lambda_.28} parent=19 // pred_region
        %s145 = smul.u32 32, %s15
        %s146 = smul.u32 2, %s17
        %p147 = scmp.lt.s32.totalorder %s145, 63
        %s148 = scalar_select %p147, %s145, 63
        %p149 = scmp.lt.s32.totalorder %s146, 1
        %s150 = scalar_select %p149, %s146, 1
        %s151 = smul.addr %s148, 2
        %s152 = sadd.s32 %s150, %s151
        %s153 = smul.addr %s152, 4
        %s154 = scalar_lea.vmem %s0, %s153
        %s155 = smul.u32 32, %s15
        %s156 = smul.u32 2, %s17
      $region24: #{_lambda_.28} parent=19 // pred_fallthru
        _
    $region20: #{_lambda_.28} parent=5 // pred_fallthru
      _
    %p157 = scmp.le.s32.totalorder 1, %s8
    %p158 = scmp.lt.s32.totalorder %s8, 3
    %p159 = pnand %p157, %p158
    %p160 = pneg %p159
    // Predicated region
    $region25: #{_lambda_.28} parent=5 // pred_check
      _
    $region26: #{_lambda_.28} parent=5 // pred_check_branch
      %162 = sbr.rel (%p159) target = $region28
    $region27: #{_lambda_.28} parent=5 // pred_region
      %s163 = ssub.s32 %s8, 1
      %s164 = smul.u32 32, %s18
      %s165 = smul.u32 2, %s20
      %p166 = scmp.lt.s32.totalorder %s164, 63
      %s167 = scalar_select %p166, %s164, 63
      %p168 = scmp.lt.s32.totalorder %s165, 1
      %s169 = scalar_select %p168, %s165, 1
      %s170 = smul.addr %s167, 2
      %s171 = sadd.s32 %s169, %s170
      %s172 = smul.addr %s171, 4
      %s173 = scalar_lea.vmem %s0, %s172
      %p174 = pneg %p55
      %p175 = pneg %p52
      %s176 = smul.u32 32, %s20
      %p177 = scmp.lt.s32.totalorder %s176, 31
      %s178 = scalar_select %p177, %s176, 31
      %p179 = scmp.lt.s32.totalorder %s19, 0
      %s180 = scalar_select %p179, %s19, 0
      %s181 = sadd.s32 %s180, %s178
      %s182 = smul.addr %s181, 4
      %s183 = scalar_lea.vmem %s1, %s182
      %p184 = pneg %p83
      %p185 = pneg %p80
      %p186 = pneg %p111
      %p187 = pneg %p108
      %s188 = smul.u32 32, %s18
      %p189 = scmp.lt.s32.totalorder %s188, 63
      %s190 = scalar_select %p189, %s188, 63
      %p191 = scmp.lt.s32.totalorder %s19, 0
      %s192 = scalar_select %p191, %s19, 0
      %s193 = sadd.s32 %s192, %s190
      %s194 = smul.addr %s193, 4
      %s195 = scalar_lea.vmem %s2, %s194
      %s196 = smul.u32 32, %s18
      %s197 = smul.u32 2, %s20
      %p198 = scmp.lt.s32.totalorder %s196, 63
      %s199 = scalar_select %p198, %s196, 63
      %p200 = scmp.lt.s32.totalorder %s197, 1
      %s201 = scalar_select %p200, %s197, 1
      %s202 = smul.addr %s199, 2
      %s203 = sadd.s32 %s201, %s202
      %s204 = smul.addr %s203, 4
      %s205 = scalar_lea.vmem %s0, %s204
      %s206 = smul.u32 32, %s18
      %s207 = smul.u32 2, %s20
      %s208 = smul.u32 32, %s20
      %p209 = scmp.lt.s32.totalorder %s208, 31
      %s210 = scalar_select %p209, %s208, 31
      %p211 = scmp.lt.s32.totalorder %s19, 0
      %s212 = scalar_select %p211, %s19, 0
      %s213 = sadd.s32 %s212, %s210
      %s214 = smul.addr %s213, 4
      %s215 = scalar_lea.vmem %s1, %s214
      %s216 = smul.u32 32, %s20
      %s217 = smul.u32 32, %s18
      %p218 = scmp.lt.s32.totalorder %s217, 63
      %s219 = scalar_select %p218, %s217, 63
      %p220 = scmp.lt.s32.totalorder %s19, 0
      %s221 = scalar_select %p220, %s19, 0
      %s222 = sadd.s32 %s221, %s219
      %s223 = smul.addr %s222, 4
      %s224 = scalar_lea.vmem %s2, %s223
      %s225 = smul.u32 32, %s18
      %p226 = scmp.eq.s32.totalorder %s20, 0
      // Predicated region
      $region29: #{_lambda_.28} parent=27 // pred_check
        %p227 = pneg %p226
      $region30: #{_lambda_.28} parent=27 // pred_check_branch
        %229 = sbr.rel (%p227) target = $region32
      $region31: #{_lambda_.28} parent=27 // pred_region
        %230 = vst [vmem:[#allocation2] sm:$0xff] 0.0
        %231 = vst [vmem:[#allocation2 + $0x8] sm:$0xff] 0.0
        %232 = vst [vmem:[#allocation2 + $0x10] sm:$0xff] 0.0
        %233 = vst [vmem:[#allocation2 + $0x18] sm:$0xff] 0.0
        %234 = vst [vmem:[#allocation2 + $0x20] sm:$0xff] 0.0
        %235 = vst [vmem:[#allocation2 + $0x28] sm:$0xff] 0.0
        %236 = vst [vmem:[#allocation2 + $0x30] sm:$0xff] 0.0
        %237 = vst [vmem:[#allocation2 + $0x38] sm:$0xff] 0.0
        %238 = vst [vmem:[#allocation2 + $0x40] sm:$0xff] 0.0
        %239 = vst [vmem:[#allocation2 + $0x48] sm:$0xff] 0.0
        %240 = vst [vmem:[#allocation2 + $0x50] sm:$0xff] 0.0
        %241 = vst [vmem:[#allocation2 + $0x58] sm:$0xff] 0.0
        %242 = vst [vmem:[#allocation2 + $0x60] sm:$0xff] 0.0
        %243 = vst [vmem:[#allocation2 + $0x68] sm:$0xff] 0.0
        %244 = vst [vmem:[#allocation2 + $0x70] sm:$0xff] 0.0
        %245 = vst [vmem:[#allocation2 + $0x78] sm:$0xff] 0.0
        %246 = vst [vmem:[#allocation2 + $0x80] sm:$0xff] 0.0
        %247 = vst [vmem:[#allocation2 + $0x88] sm:$0xff] 0.0
        %248 = vst [vmem:[#allocation2 + $0x90] sm:$0xff] 0.0
        %249 = vst [vmem:[#allocation2 + $0x98] sm:$0xff] 0.0
        %250 = vst [vmem:[#allocation2 + $0xa0] sm:$0xff] 0.0
        %251 = vst [vmem:[#allocation2 + $0xa8] sm:$0xff] 0.0
        %252 = vst [vmem:[#allocation2 + $0xb0] sm:$0xff] 0.0
        %253 = vst [vmem:[#allocation2 + $0xb8] sm:$0xff] 0.0
        %254 = vst [vmem:[#allocation2 + $0xc0] sm:$0xff] 0.0
        %255 = vst [vmem:[#allocation2 + $0xc8] sm:$0xff] 0.0
        %256 = vst [vmem:[#allocation2 + $0xd0] sm:$0xff] 0.0
        %257 = vst [vmem:[#allocation2 + $0xd8] sm:$0xff] 0.0
        %258 = vst [vmem:[#allocation2 + $0xe0] sm:$0xff] 0.0
        %259 = vst [vmem:[#allocation2 + $0xe8] sm:$0xff] 0.0
        %260 = vst [vmem:[#allocation2 + $0xf0] sm:$0xff] 0.0
        %261 = vst [vmem:[#allocation2 + $0xf8] sm:$0xff] 0.0
      $region32: #{_lambda_.28} parent=27 // pred_fallthru
        _
      %v262 = vld [vmem:[#allocation2] sm:$0xff]
      %v263 = vld [vmem:[#allocation2 + $0x8] sm:$0xff]
      %v264 = vld [vmem:[#allocation2 + $0x10] sm:$0xff]
      %v265 = vld [vmem:[#allocation2 + $0x18] sm:$0xff]
      %v266 = vld [vmem:[#allocation2 + $0x20] sm:$0xff]
      %v267 = vld [vmem:[#allocation2 + $0x28] sm:$0xff]
      %v268 = vld [vmem:[#allocation2 + $0x30] sm:$0xff]
      %v269 = vld [vmem:[#allocation2 + $0x38] sm:$0xff]
      %v270 = vld [vmem:[#allocation2 + $0x40] sm:$0xff]
      %v271 = vld [vmem:[#allocation2 + $0x48] sm:$0xff]
      %v272 = vld [vmem:[#allocation2 + $0x50] sm:$0xff]
      %v273 = vld [vmem:[#allocation2 + $0x58] sm:$0xff]
      %v274 = vld [vmem:[#allocation2 + $0x60] sm:$0xff]
      %v275 = vld [vmem:[#allocation2 + $0x68] sm:$0xff]
      %v276 = vld [vmem:[#allocation2 + $0x70] sm:$0xff]
      %v277 = vld [vmem:[#allocation2 + $0x78] sm:$0xff]
      %v278 = vld [vmem:[#allocation2 + $0x80] sm:$0xff]
      %v279 = vld [vmem:[#allocation2 + $0x88] sm:$0xff]
      %v280 = vld [vmem:[#allocation2 + $0x90] sm:$0xff]
      %v281 = vld [vmem:[#allocation2 + $0x98] sm:$0xff]
      %v282 = vld [vmem:[#allocation2 + $0xa0] sm:$0xff]
      %v283 = vld [vmem:[#allocation2 + $0xa8] sm:$0xff]
      %v284 = vld [vmem:[#allocation2 + $0xb0] sm:$0xff]
      %v285 = vld [vmem:[#allocation2 + $0xb8] sm:$0xff]
      %v286 = vld [vmem:[#allocation2 + $0xc0] sm:$0xff]
      %v287 = vld [vmem:[#allocation2 + $0xc8] sm:$0xff]
      %v288 = vld [vmem:[#allocation2 + $0xd0] sm:$0xff]
      %v289 = vld [vmem:[#allocation2 + $0xd8] sm:$0xff]
      %v290 = vld [vmem:[#allocation2 + $0xe0] sm:$0xff]
      %v291 = vld [vmem:[#allocation2 + $0xe8] sm:$0xff]
      %v292 = vld [vmem:[#allocation2 + $0xf0] sm:$0xff]
      %v293 = vld [vmem:[#allocation2 + $0xf8] sm:$0xff]
      %v294 = vld [vmem:[%s205] sm:$0xff]
      %v295 = vld [vmem:[%s205 + $0x8] sm:$0xff]
      %v296 = vld [vmem:[%s205 + $0x10] sm:$0xff]
      %v297 = vld [vmem:[%s205 + $0x18] sm:$0xff]
      %v298 = vld [vmem:[%s205 + $0x20] sm:$0xff]
      %v299 = vld [vmem:[%s205 + $0x28] sm:$0xff]
      %v300 = vld [vmem:[%s205 + $0x30] sm:$0xff]
      %v301 = vld [vmem:[%s205 + $0x38] sm:$0xff]
      %v302 = vld [vmem:[%s205 + $0x40] sm:$0xff]
      %v303 = vld [vmem:[%s205 + $0x48] sm:$0xff]
      %v304 = vld [vmem:[%s205 + $0x50] sm:$0xff]
      %v305 = vld [vmem:[%s205 + $0x58] sm:$0xff]
      %v306 = vld [vmem:[%s205 + $0x60] sm:$0xff]
      %v307 = vld [vmem:[%s205 + $0x68] sm:$0xff]
      %v308 = vld [vmem:[%s205 + $0x70] sm:$0xff]
      %v309 = vld [vmem:[%s205 + $0x78] sm:$0xff]
      %v310 = vld [vmem:[%s205 + $0x80] sm:$0xff]
      %v311 = vld [vmem:[%s205 + $0x88] sm:$0xff]
      %v312 = vld [vmem:[%s205 + $0x90] sm:$0xff]
      %v313 = vld [vmem:[%s205 + $0x98] sm:$0xff]
      %v314 = vld [vmem:[%s205 + $0xa0] sm:$0xff]
      %v315 = vld [vmem:[%s205 + $0xa8] sm:$0xff]
      %v316 = vld [vmem:[%s205 + $0xb0] sm:$0xff]
      %v317 = vld [vmem:[%s205 + $0xb8] sm:$0xff]
      %v318 = vld [vmem:[%s205 + $0xc0] sm:$0xff]
      %v319 = vld [vmem:[%s205 + $0xc8] sm:$0xff]
      %v320 = vld [vmem:[%s205 + $0xd0] sm:$0xff]
      %v321 = vld [vmem:[%s205 + $0xd8] sm:$0xff]
      %v322 = vld [vmem:[%s205 + $0xe0] sm:$0xff]
      %v323 = vld [vmem:[%s205 + $0xe8] sm:$0xff]
      %v324 = vld [vmem:[%s205 + $0xf0] sm:$0xff]
      %v325 = vld [vmem:[%s205 + $0xf8] sm:$0xff]
      %v326 = vld [vmem:[%s215] sm:$0xf]
      %v327 = vld [vmem:[%s215 + $0x4] sm:$0xf]
      %v328 = vld [vmem:[%s215 + $0x8] sm:$0xf]
      %v329 = vld [vmem:[%s215 + $0xc] sm:$0xf]
      %v330 = vld [vmem:[%s215 + $0x10] sm:$0xf]
      %v331 = vld [vmem:[%s215 + $0x14] sm:$0xf]
      %v332 = vld [vmem:[%s215 + $0x18] sm:$0xf]
      %v333 = vld [vmem:[%s215 + $0x1c] sm:$0xf]
      %v334 = vld [vmem:[%s215 + $0x20] sm:$0xf]
      %v335 = vld [vmem:[%s215 + $0x24] sm:$0xf]
      %v336 = vld [vmem:[%s215 + $0x28] sm:$0xf]
      %v337 = vld [vmem:[%s215 + $0x2c] sm:$0xf]
      %v338 = vld [vmem:[%s215 + $0x30] sm:$0xf]
      %v339 = vld [vmem:[%s215 + $0x34] sm:$0xf]
      %v340 = vld [vmem:[%s215 + $0x38] sm:$0xf]
      %v341 = vld [vmem:[%s215 + $0x3c] sm:$0xf]
      %v342 = vld [vmem:[%s215 + $0x40] sm:$0xf]
      %v343 = vld [vmem:[%s215 + $0x44] sm:$0xf]
      %v344 = vld [vmem:[%s215 + $0x48] sm:$0xf]
      %v345 = vld [vmem:[%s215 + $0x4c] sm:$0xf]
      %v346 = vld [vmem:[%s215 + $0x50] sm:$0xf]
      %v347 = vld [vmem:[%s215 + $0x54] sm:$0xf]
      %v348 = vld [vmem:[%s215 + $0x58] sm:$0xf]
      %v349 = vld [vmem:[%s215 + $0x5c] sm:$0xf]
      %v350 = vld [vmem:[%s215 + $0x60] sm:$0xf]
      %v351 = vld [vmem:[%s215 + $0x64] sm:$0xf]
      %v352 = vld [vmem:[%s215 + $0x68] sm:$0xf]
      %v353 = vld [vmem:[%s215 + $0x6c] sm:$0xf]
      %v354 = vld [vmem:[%s215 + $0x70] sm:$0xf]
      %v355 = vld [vmem:[%s215 + $0x74] sm:$0xf]
      %v356 = vld [vmem:[%s215 + $0x78] sm:$0xf]
      %v357 = vld [vmem:[%s215 + $0x7c] sm:$0xf]
      %v390 = vunpack.c.l.b16 %v294
      %v391 = vunpack.c.h.b16 %v294
      %v392 = vunpack.c.l.b16 %v295
      %v393 = vunpack.c.h.b16 %v295
      %v394 = vunpack.c.l.b16 %v296
      %v395 = vunpack.c.h.b16 %v296
      %v396 = vunpack.c.l.b16 %v297
      %v397 = vunpack.c.h.b16 %v297
      %v398 = vunpack.c.l.b16 %v298
      %v399 = vunpack.c.h.b16 %v298
      %v400 = vunpack.c.l.b16 %v299
      %v401 = vunpack.c.h.b16 %v299
      %v402 = vunpack.c.l.b16 %v300
      %v403 = vunpack.c.h.b16 %v300
      %v404 = vunpack.c.l.b16 %v301
      %v405 = vunpack.c.h.b16 %v301
      %v406 = vunpack.c.l.b16 %v302
      %v407 = vunpack.c.h.b16 %v302
      %v408 = vunpack.c.l.b16 %v303
      %v409 = vunpack.c.h.b16 %v303
      %v410 = vunpack.c.l.b16 %v304
      %v411 = vunpack.c.h.b16 %v304
      %v412 = vunpack.c.l.b16 %v305
      %v413 = vunpack.c.h.b16 %v305
      %v414 = vunpack.c.l.b16 %v306
      %v415 = vunpack.c.h.b16 %v306
      %v416 = vunpack.c.l.b16 %v307
      %v417 = vunpack.c.h.b16 %v307
      %v418 = vunpack.c.l.b16 %v308
      %v419 = vunpack.c.h.b16 %v308
      %v420 = vunpack.c.l.b16 %v309
      %v421 = vunpack.c.h.b16 %v309
      %v422 = vunpack.c.l.b16 %v310
      %v423 = vunpack.c.h.b16 %v310
      %v424 = vunpack.c.l.b16 %v311
      %v425 = vunpack.c.h.b16 %v311
      %v426 = vunpack.c.l.b16 %v312
      %v427 = vunpack.c.h.b16 %v312
      %v428 = vunpack.c.l.b16 %v313
      %v429 = vunpack.c.h.b16 %v313
      %v430 = vunpack.c.l.b16 %v314
      %v431 = vunpack.c.h.b16 %v314
      %v432 = vunpack.c.l.b16 %v315
      %v433 = vunpack.c.h.b16 %v315
      %v434 = vunpack.c.l.b16 %v316
      %v435 = vunpack.c.h.b16 %v316
      %v436 = vunpack.c.l.b16 %v317
      %v437 = vunpack.c.h.b16 %v317
      %v438 = vunpack.c.l.b16 %v318
      %v439 = vunpack.c.h.b16 %v318
      %v440 = vunpack.c.l.b16 %v319
      %v441 = vunpack.c.h.b16 %v319
      %v442 = vunpack.c.l.b16 %v320
      %v443 = vunpack.c.h.b16 %v320
      %v444 = vunpack.c.l.b16 %v321
      %v445 = vunpack.c.h.b16 %v321
      %v446 = vunpack.c.l.b16 %v322
      %v447 = vunpack.c.h.b16 %v322
      %v448 = vunpack.c.l.b16 %v323
      %v449 = vunpack.c.h.b16 %v323
      %v450 = vunpack.c.l.b16 %v324
      %v451 = vunpack.c.h.b16 %v324
      %v452 = vunpack.c.l.b16 %v325
      %v453 = vunpack.c.h.b16 %v325
      %v454 = vpack.c.b16 %v392, %v390
      %v455 = vpack.c.b16 %v393, %v391
      %v456 = vpack.c.b16 %v396, %v394
      %v457 = vpack.c.b16 %v397, %v395
      %v458 = vpack.c.b16 %v400, %v398
      %v459 = vpack.c.b16 %v401, %v399
      %v460 = vpack.c.b16 %v404, %v402
      %v461 = vpack.c.b16 %v405, %v403
      %v462 = vpack.c.b16 %v408, %v406
      %v463 = vpack.c.b16 %v409, %v407
      %v464 = vpack.c.b16 %v412, %v410
      %v465 = vpack.c.b16 %v413, %v411
      %v466 = vpack.c.b16 %v416, %v414
      %v467 = vpack.c.b16 %v417, %v415
      %v468 = vpack.c.b16 %v420, %v418
      %v469 = vpack.c.b16 %v421, %v419
      %v470 = vpack.c.b16 %v424, %v422
      %v471 = vpack.c.b16 %v425, %v423
      %v472 = vpack.c.b16 %v428, %v426
      %v473 = vpack.c.b16 %v429, %v427
      %v474 = vpack.c.b16 %v432, %v430
      %v475 = vpack.c.b16 %v433, %v431
      %v476 = vpack.c.b16 %v436, %v434
      %v477 = vpack.c.b16 %v437, %v435
      %v478 = vpack.c.b16 %v440, %v438
      %v479 = vpack.c.b16 %v441, %v439
      %v480 = vpack.c.b16 %v444, %v442
      %v481 = vpack.c.b16 %v445, %v443
      %v482 = vpack.c.b16 %v448, %v446
      %v483 = vpack.c.b16 %v449, %v447
      %v484 = vpack.c.b16 %v452, %v450
      %v485 = vpack.c.b16 %v453, %v451
      %v550 = vunpack.c.l.b16 %v326
      %v551 = vunpack.c.l.b16 %v327
      %v552 = vunpack.c.l.b16 %v328
      %v553 = vunpack.c.l.b16 %v329
      %v554 = vunpack.c.l.b16 %v330
      %v555 = vunpack.c.l.b16 %v331
      %v556 = vunpack.c.l.b16 %v332
      %v557 = vunpack.c.l.b16 %v333
      %v558 = vunpack.c.l.b16 %v334
      %v559 = vunpack.c.l.b16 %v335
      %v560 = vunpack.c.l.b16 %v336
      %v561 = vunpack.c.l.b16 %v337
      %v562 = vunpack.c.l.b16 %v338
      %v563 = vunpack.c.l.b16 %v339
      %v564 = vunpack.c.l.b16 %v340
      %v565 = vunpack.c.l.b16 %v341
      %v566 = vunpack.c.l.b16 %v342
      %v567 = vunpack.c.l.b16 %v343
      %v568 = vunpack.c.l.b16 %v344
      %v569 = vunpack.c.l.b16 %v345
      %v570 = vunpack.c.l.b16 %v346
      %v571 = vunpack.c.l.b16 %v347
      %v572 = vunpack.c.l.b16 %v348
      %v573 = vunpack.c.l.b16 %v349
      %v574 = vunpack.c.l.b16 %v350
      %v575 = vunpack.c.l.b16 %v351
      %v576 = vunpack.c.l.b16 %v352
      %v577 = vunpack.c.l.b16 %v353
      %v578 = vunpack.c.l.b16 %v354
      %v579 = vunpack.c.l.b16 %v355
      %v580 = vunpack.c.l.b16 %v356
      %v581 = vunpack.c.l.b16 %v357
      %v582 = vpack.c.b16 %v551, %v550
      %v583 = vpack.c.b16 %v553, %v552
      %v584 = vpack.c.b16 %v555, %v554
      %v585 = vpack.c.b16 %v557, %v556
      %v586 = vpack.c.b16 %v559, %v558
      %v587 = vpack.c.b16 %v561, %v560
      %v588 = vpack.c.b16 %v563, %v562
      %v589 = vpack.c.b16 %v565, %v564
      %v590 = vpack.c.b16 %v567, %v566
      %v591 = vpack.c.b16 %v569, %v568
      %v592 = vpack.c.b16 %v571, %v570
      %v593 = vpack.c.b16 %v573, %v572
      %v594 = vpack.c.b16 %v575, %v574
      %v595 = vpack.c.b16 %v577, %v576
      %v596 = vpack.c.b16 %v579, %v578
      %v597 = vpack.c.b16 %v581, %v580
      %614 = vmatpush.bf16.msra.mxu0 %v589
      %615 = vmatpush.bf16.msra.mxu0 %v588
      %616 = vmatpush.bf16.msra.mxu0 %v587
      %617 = vmatpush.bf16.msra.mxu0 %v586
      %618 = vmatpush.bf16.msra.mxu0 %v585
      %619 = vmatpush.bf16.msra.mxu0 %v584
      %620 = vmatpush.bf16.msra.mxu0 %v583
      %621 = vmatpush.bf16.msra.mxu0 %v582
      %622 = vmatmul.bf16.gmra.mxu0 %v454
      %v623 = vpop.f32.mrf.mxu0
      %v624 = vadd.f32 0.0, %v623
      %v625 = vpop.f32.mrf.mxu0
      %v626 = vadd.f32 0.0, %v625
      %627 = vmatmul.bf16.gmra.mxu0 %v456
      %v628 = vpop.f32.mrf.mxu0
      %v629 = vadd.f32 0.0, %v628
      %v630 = vpop.f32.mrf.mxu0
      %v631 = vadd.f32 0.0, %v630
      %632 = vmatmul.bf16.gmra.mxu0 %v458
      %v633 = vpop.f32.mrf.mxu0
      %v634 = vadd.f32 0.0, %v633
      %v635 = vpop.f32.mrf.mxu0
      %v636 = vadd.f32 0.0, %v635
      %637 = vmatmul.bf16.gmra.mxu0 %v460
      %v638 = vpop.f32.mrf.mxu0
      %v639 = vadd.f32 0.0, %v638
      %v640 = vpop.f32.mrf.mxu0
      %v641 = vadd.f32 0.0, %v640
      %642 = vmatmul.bf16.gmra.mxu0 %v462
      %v643 = vpop.f32.mrf.mxu0
      %v644 = vadd.f32 0.0, %v643
      %v645 = vpop.f32.mrf.mxu0
      %v646 = vadd.f32 0.0, %v645
      %647 = vmatmul.bf16.gmra.mxu0 %v464
      %v648 = vpop.f32.mrf.mxu0
      %v649 = vadd.f32 0.0, %v648
      %v650 = vpop.f32.mrf.mxu0
      %v651 = vadd.f32 0.0, %v650
      %652 = vmatmul.bf16.gmra.mxu0 %v466
      %v653 = vpop.f32.mrf.mxu0
      %v654 = vadd.f32 0.0, %v653
      %v655 = vpop.f32.mrf.mxu0
      %v656 = vadd.f32 0.0, %v655
      %657 = vmatmul.bf16.gmra.mxu0 %v468
      %v658 = vpop.f32.mrf.mxu0
      %v659 = vadd.f32 0.0, %v658
      %v660 = vpop.f32.mrf.mxu0
      %v661 = vadd.f32 0.0, %v660
      %662 = vmatmul.bf16.gmra.mxu0 %v470
      %v663 = vpop.f32.mrf.mxu0
      %v664 = vadd.f32 0.0, %v663
      %v665 = vpop.f32.mrf.mxu0
      %v666 = vadd.f32 0.0, %v665
      %667 = vmatmul.bf16.gmra.mxu0 %v472
      %v668 = vpop.f32.mrf.mxu0
      %v669 = vadd.f32 0.0, %v668
      %v670 = vpop.f32.mrf.mxu0
      %v671 = vadd.f32 0.0, %v670
      %672 = vmatmul.bf16.gmra.mxu0 %v474
      %v673 = vpop.f32.mrf.mxu0
      %v674 = vadd.f32 0.0, %v673
      %v675 = vpop.f32.mrf.mxu0
      %v676 = vadd.f32 0.0, %v675
      %677 = vmatmul.bf16.gmra.mxu0 %v476
      %v678 = vpop.f32.mrf.mxu0
      %v679 = vadd.f32 0.0, %v678
      %v680 = vpop.f32.mrf.mxu0
      %v681 = vadd.f32 0.0, %v680
      %682 = vmatmul.bf16.gmra.mxu0 %v478
      %v683 = vpop.f32.mrf.mxu0
      %v684 = vadd.f32 0.0, %v683
      %v685 = vpop.f32.mrf.mxu0
      %v686 = vadd.f32 0.0, %v685
      %687 = vmatmul.bf16.gmra.mxu0 %v480
      %v688 = vpop.f32.mrf.mxu0
      %v689 = vadd.f32 0.0, %v688
      %v690 = vpop.f32.mrf.mxu0
      %v691 = vadd.f32 0.0, %v690
      %692 = vmatmul.bf16.gmra.mxu0 %v482
      %v693 = vpop.f32.mrf.mxu0
      %v694 = vadd.f32 0.0, %v693
      %v695 = vpop.f32.mrf.mxu0
      %v696 = vadd.f32 0.0, %v695
      %697 = vmatmul.bf16.gmra.mxu0 %v484
      %v698 = vpop.f32.mrf.mxu0
      %v699 = vadd.f32 0.0, %v698
      %v700 = vpop.f32.mrf.mxu0
      %v701 = vadd.f32 0.0, %v700
      %702 = vdwg.mxu0
      %703 = vmatpush.bf16.msra.mxu0 %v597
      %704 = vmatpush.bf16.msra.mxu0 %v596
      %705 = vmatpush.bf16.msra.mxu0 %v595
      %706 = vmatpush.bf16.msra.mxu0 %v594
      %707 = vmatpush.bf16.msra.mxu0 %v593
      %708 = vmatpush.bf16.msra.mxu0 %v592
      %709 = vmatpush.bf16.msra.mxu0 %v591
      %710 = vmatpush.bf16.msra.mxu0 %v590
      %711 = vmatmul.bf16.gmra.mxu0 %v455
      %v712 = vpop.f32.mrf.mxu0
      %v713 = vadd.f32 %v624, %v712
      %v714 = vpop.f32.mrf.mxu0
      %v715 = vadd.f32 %v626, %v714
      %716 = vmatmul.bf16.gmra.mxu0 %v457
      %v717 = vpop.f32.mrf.mxu0
      %v718 = vadd.f32 %v629, %v717
      %v719 = vpop.f32.mrf.mxu0
      %v720 = vadd.f32 %v631, %v719
      %721 = vmatmul.bf16.gmra.mxu0 %v459
      %v722 = vpop.f32.mrf.mxu0
      %v723 = vadd.f32 %v634, %v722
      %v724 = vpop.f32.mrf.mxu0
      %v725 = vadd.f32 %v636, %v724
      %726 = vmatmul.bf16.gmra.mxu0 %v461
      %v727 = vpop.f32.mrf.mxu0
      %v728 = vadd.f32 %v639, %v727
      %v729 = vpop.f32.mrf.mxu0
      %v730 = vadd.f32 %v641, %v729
      %731 = vmatmul.bf16.gmra.mxu0 %v463
      %v732 = vpop.f32.mrf.mxu0
      %v733 = vadd.f32 %v644, %v732
      %v734 = vpop.f32.mrf.mxu0
      %v735 = vadd.f32 %v646, %v734
      %736 = vmatmul.bf16.gmra.mxu0 %v465
      %v737 = vpop.f32.mrf.mxu0
      %v738 = vadd.f32 %v649, %v737
      %v739 = vpop.f32.mrf.mxu0
      %v740 = vadd.f32 %v651, %v739
      %741 = vmatmul.bf16.gmra.mxu0 %v467
      %v742 = vpop.f32.mrf.mxu0
      %v743 = vadd.f32 %v654, %v742
      %v744 = vpop.f32.mrf.mxu0
      %v745 = vadd.f32 %v656, %v744
      %746 = vmatmul.bf16.gmra.mxu0 %v469
      %v747 = vpop.f32.mrf.mxu0
      %v748 = vadd.f32 %v659, %v747
      %v749 = vpop.f32.mrf.mxu0
      %v750 = vadd.f32 %v661, %v749
      %751 = vmatmul.bf16.gmra.mxu0 %v471
      %v752 = vpop.f32.mrf.mxu0
      %v753 = vadd.f32 %v664, %v752
      %v754 = vpop.f32.mrf.mxu0
      %v755 = vadd.f32 %v666, %v754
      %756 = vmatmul.bf16.gmra.mxu0 %v473
      %v757 = vpop.f32.mrf.mxu0
      %v758 = vadd.f32 %v669, %v757
      %v759 = vpop.f32.mrf.mxu0
      %v760 = vadd.f32 %v671, %v759
      %761 = vmatmul.bf16.gmra.mxu0 %v475
      %v762 = vpop.f32.mrf.mxu0
      %v763 = vadd.f32 %v674, %v762
      %v764 = vpop.f32.mrf.mxu0
      %v765 = vadd.f32 %v676, %v764
      %766 = vmatmul.bf16.gmra.mxu0 %v477
      %v767 = vpop.f32.mrf.mxu0
      %v768 = vadd.f32 %v679, %v767
      %v769 = vpop.f32.mrf.mxu0
      %v770 = vadd.f32 %v681, %v769
      %771 = vmatmul.bf16.gmra.mxu0 %v479
      %v772 = vpop.f32.mrf.mxu0
      %v773 = vadd.f32 %v684, %v772
      %v774 = vpop.f32.mrf.mxu0
      %v775 = vadd.f32 %v686, %v774
      %776 = vmatmul.bf16.gmra.mxu0 %v481
      %v777 = vpop.f32.mrf.mxu0
      %v778 = vadd.f32 %v689, %v777
      %v779 = vpop.f32.mrf.mxu0
      %v780 = vadd.f32 %v691, %v779
      %781 = vmatmul.bf16.gmra.mxu0 %v483
      %v782 = vpop.f32.mrf.mxu0
      %v783 = vadd.f32 %v694, %v782
      %v784 = vpop.f32.mrf.mxu0
      %v785 = vadd.f32 %v696, %v784
      %786 = vmatmul.bf16.gmra.mxu0 %v485
      %v787 = vpop.f32.mrf.mxu0
      %v788 = vadd.f32 %v699, %v787
      %v789 = vpop.f32.mrf.mxu0
      %v790 = vadd.f32 %v701, %v789
      %791 = vdwg.mxu0
      %v792 = vadd.f32 %v262, %v713
      %v793 = vadd.f32 %v263, %v715
      %v794 = vadd.f32 %v264, %v718
      %v795 = vadd.f32 %v265, %v720
      %v796 = vadd.f32 %v266, %v723
      %v797 = vadd.f32 %v267, %v725
      %v798 = vadd.f32 %v268, %v728
      %v799 = vadd.f32 %v269, %v730
      %v800 = vadd.f32 %v270, %v733
      %v801 = vadd.f32 %v271, %v735
      %v802 = vadd.f32 %v272, %v738
      %v803 = vadd.f32 %v273, %v740
      %v804 = vadd.f32 %v274, %v743
      %v805 = vadd.f32 %v275, %v745
      %v806 = vadd.f32 %v276, %v748
      %v807 = vadd.f32 %v277, %v750
      %v808 = vadd.f32 %v278, %v753
      %v809 = vadd.f32 %v279, %v755
      %v810 = vadd.f32 %v280, %v758
      %v811 = vadd.f32 %v281, %v760
      %v812 = vadd.f32 %v282, %v763
      %v813 = vadd.f32 %v283, %v765
      %v814 = vadd.f32 %v284, %v768
      %v815 = vadd.f32 %v285, %v770
      %v816 = vadd.f32 %v286, %v773
      %v817 = vadd.f32 %v287, %v775
      %v818 = vadd.f32 %v288, %v778
      %v819 = vadd.f32 %v289, %v780
      %v820 = vadd.f32 %v290, %v783
      %v821 = vadd.f32 %v291, %v785
      %v822 = vadd.f32 %v292, %v788
      %v823 = vadd.f32 %v293, %v790
      %824 = vst [vmem:[#allocation2] sm:$0xff] %v792
      %825 = vst [vmem:[#allocation2 + $0x8] sm:$0xff] %v793
      %826 = vst [vmem:[#allocation2 + $0x10] sm:$0xff] %v794
      %827 = vst [vmem:[#allocation2 + $0x18] sm:$0xff] %v795
      %828 = vst [vmem:[#allocation2 + $0x20] sm:$0xff] %v796
      %829 = vst [vmem:[#allocation2 + $0x28] sm:$0xff] %v797
      %830 = vst [vmem:[#allocation2 + $0x30] sm:$0xff] %v798
      %831 = vst [vmem:[#allocation2 + $0x38] sm:$0xff] %v799
      %832 = vst [vmem:[#allocation2 + $0x40] sm:$0xff] %v800
      %833 = vst [vmem:[#allocation2 + $0x48] sm:$0xff] %v801
      %834 = vst [vmem:[#allocation2 + $0x50] sm:$0xff] %v802
      %835 = vst [vmem:[#allocation2 + $0x58] sm:$0xff] %v803
      %836 = vst [vmem:[#allocation2 + $0x60] sm:$0xff] %v804
      %837 = vst [vmem:[#allocation2 + $0x68] sm:$0xff] %v805
      %838 = vst [vmem:[#allocation2 + $0x70] sm:$0xff] %v806
      %839 = vst [vmem:[#allocation2 + $0x78] sm:$0xff] %v807
      %840 = vst [vmem:[#allocation2 + $0x80] sm:$0xff] %v808
      %841 = vst [vmem:[#allocation2 + $0x88] sm:$0xff] %v809
      %842 = vst [vmem:[#allocation2 + $0x90] sm:$0xff] %v810
      %843 = vst [vmem:[#allocation2 + $0x98] sm:$0xff] %v811
      %844 = vst [vmem:[#allocation2 + $0xa0] sm:$0xff] %v812
      %845 = vst [vmem:[#allocation2 + $0xa8] sm:$0xff] %v813
      %846 = vst [vmem:[#allocation2 + $0xb0] sm:$0xff] %v814
      %847 = vst [vmem:[#allocation2 + $0xb8] sm:$0xff] %v815
      %848 = vst [vmem:[#allocation2 + $0xc0] sm:$0xff] %v816
      %849 = vst [vmem:[#allocation2 + $0xc8] sm:$0xff] %v817
      %850 = vst [vmem:[#allocation2 + $0xd0] sm:$0xff] %v818
      %851 = vst [vmem:[#allocation2 + $0xd8] sm:$0xff] %v819
      %852 = vst [vmem:[#allocation2 + $0xe0] sm:$0xff] %v820
      %853 = vst [vmem:[#allocation2 + $0xe8] sm:$0xff] %v821
      %854 = vst [vmem:[#allocation2 + $0xf0] sm:$0xff] %v822
      %855 = vst [vmem:[#allocation2 + $0xf8] sm:$0xff] %v823
      // Predicated region
      $region33: #{_lambda_.28} parent=27 // pred_check
        %p856 = pneg %p226
      $region34: #{_lambda_.28} parent=27 // pred_check_branch
        %858 = sbr.rel (%p856) target = $region36
      $region35: #{_lambda_.28} parent=27 // pred_region
        %v859 = vld [vmem:[#allocation2] sm:$0xff]
        %v860 = vld [vmem:[#allocation2 + $0x8] sm:$0xff]
        %v861 = vld [vmem:[#allocation2 + $0x10] sm:$0xff]
        %v862 = vld [vmem:[#allocation2 + $0x18] sm:$0xff]
        %v863 = vld [vmem:[#allocation2 + $0x20] sm:$0xff]
        %v864 = vld [vmem:[#allocation2 + $0x28] sm:$0xff]
        %v865 = vld [vmem:[#allocation2 + $0x30] sm:$0xff]
        %v866 = vld [vmem:[#allocation2 + $0x38] sm:$0xff]
        %v867 = vld [vmem:[#allocation2 + $0x40] sm:$0xff]
        %v868 = vld [vmem:[#allocation2 + $0x48] sm:$0xff]
        %v869 = vld [vmem:[#allocation2 + $0x50] sm:$0xff]
        %v870 = vld [vmem:[#allocation2 + $0x58] sm:$0xff]
        %v871 = vld [vmem:[#allocation2 + $0x60] sm:$0xff]
        %v872 = vld [vmem:[#allocation2 + $0x68] sm:$0xff]
        %v873 = vld [vmem:[#allocation2 + $0x70] sm:$0xff]
        %v874 = vld [vmem:[#allocation2 + $0x78] sm:$0xff]
        %v875 = vld [vmem:[#allocation2 + $0x80] sm:$0xff]
        %v876 = vld [vmem:[#allocation2 + $0x88] sm:$0xff]
        %v877 = vld [vmem:[#allocation2 + $0x90] sm:$0xff]
        %v878 = vld [vmem:[#allocation2 + $0x98] sm:$0xff]
        %v879 = vld [vmem:[#allocation2 + $0xa0] sm:$0xff]
        %v880 = vld [vmem:[#allocation2 + $0xa8] sm:$0xff]
        %v881 = vld [vmem:[#allocation2 + $0xb0] sm:$0xff]
        %v882 = vld [vmem:[#allocation2 + $0xb8] sm:$0xff]
        %v883 = vld [vmem:[#allocation2 + $0xc0] sm:$0xff]
        %v884 = vld [vmem:[#allocation2 + $0xc8] sm:$0xff]
        %v885 = vld [vmem:[#allocation2 + $0xd0] sm:$0xff]
        %v886 = vld [vmem:[#allocation2 + $0xd8] sm:$0xff]
        %v887 = vld [vmem:[#allocation2 + $0xe0] sm:$0xff]
        %v888 = vld [vmem:[#allocation2 + $0xe8] sm:$0xff]
        %v889 = vld [vmem:[#allocation2 + $0xf0] sm:$0xff]
        %v890 = vld [vmem:[#allocation2 + $0xf8] sm:$0xff]
        %v891 = vpack.c.bf16 %v859, %v859
        %v892 = vpack.c.bf16 %v860, %v860
        %v893 = vpack.c.bf16 %v861, %v861
        %v894 = vpack.c.bf16 %v862, %v862
        %v895 = vpack.c.bf16 %v863, %v863
        %v896 = vpack.c.bf16 %v864, %v864
        %v897 = vpack.c.bf16 %v865, %v865
        %v898 = vpack.c.bf16 %v866, %v866
        %v899 = vpack.c.bf16 %v867, %v867
        %v900 = vpack.c.bf16 %v868, %v868
        %v901 = vpack.c.bf16 %v869, %v869
        %v902 = vpack.c.bf16 %v870, %v870
        %v903 = vpack.c.bf16 %v871, %v871
        %v904 = vpack.c.bf16 %v872, %v872
        %v905 = vpack.c.bf16 %v873, %v873
        %v906 = vpack.c.bf16 %v874, %v874
        %v907 = vpack.c.bf16 %v875, %v875
        %v908 = vpack.c.bf16 %v876, %v876
        %v909 = vpack.c.bf16 %v877, %v877
        %v910 = vpack.c.bf16 %v878, %v878
        %v911 = vpack.c.bf16 %v879, %v879
        %v912 = vpack.c.bf16 %v880, %v880
        %v913 = vpack.c.bf16 %v881, %v881
        %v914 = vpack.c.bf16 %v882, %v882
        %v915 = vpack.c.bf16 %v883, %v883
        %v916 = vpack.c.bf16 %v884, %v884
        %v917 = vpack.c.bf16 %v885, %v885
        %v918 = vpack.c.bf16 %v886, %v886
        %v919 = vpack.c.bf16 %v887, %v887
        %v920 = vpack.c.bf16 %v888, %v888
        %v921 = vpack.c.bf16 %v889, %v889
        %v922 = vpack.c.bf16 %v890, %v890
        %923 = vst [vmem:[%s224] sm:$0xf] %v891
        %924 = vst [vmem:[%s224 + $0x4] sm:$0xf] %v892
        %925 = vst [vmem:[%s224 + $0x8] sm:$0xf] %v893
        %926 = vst [vmem:[%s224 + $0xc] sm:$0xf] %v894
        %927 = vst [vmem:[%s224 + $0x10] sm:$0xf] %v895
        %928 = vst [vmem:[%s224 + $0x14] sm:$0xf] %v896
        %929 = vst [vmem:[%s224 + $0x18] sm:$0xf] %v897
        %930 = vst [vmem:[%s224 + $0x1c] sm:$0xf] %v898
        %931 = vst [vmem:[%s224 + $0x20] sm:$0xf] %v899
        %932 = vst [vmem:[%s224 + $0x24] sm:$0xf] %v900
        %933 = vst [vmem:[%s224 + $0x28] sm:$0xf] %v901
        %934 = vst [vmem:[%s224 + $0x2c] sm:$0xf] %v902
        %935 = vst [vmem:[%s224 + $0x30] sm:$0xf] %v903
        %936 = vst [vmem:[%s224 + $0x34] sm:$0xf] %v904
        %937 = vst [vmem:[%s224 + $0x38] sm:$0xf] %v905
        %938 = vst [vmem:[%s224 + $0x3c] sm:$0xf] %v906
        %939 = vst [vmem:[%s224 + $0x40] sm:$0xf] %v907
        %940 = vst [vmem:[%s224 + $0x44] sm:$0xf] %v908
        %941 = vst [vmem:[%s224 + $0x48] sm:$0xf] %v909
        %942 = vst [vmem:[%s224 + $0x4c] sm:$0xf] %v910
        %943 = vst [vmem:[%s224 + $0x50] sm:$0xf] %v911
        %944 = vst [vmem:[%s224 + $0x54] sm:$0xf] %v912
        %945 = vst [vmem:[%s224 + $0x58] sm:$0xf] %v913
        %946 = vst [vmem:[%s224 + $0x5c] sm:$0xf] %v914
        %947 = vst [vmem:[%s224 + $0x60] sm:$0xf] %v915
        %948 = vst [vmem:[%s224 + $0x64] sm:$0xf] %v916
        %949 = vst [vmem:[%s224 + $0x68] sm:$0xf] %v917
        %950 = vst [vmem:[%s224 + $0x6c] sm:$0xf] %v918
        %951 = vst [vmem:[%s224 + $0x70] sm:$0xf] %v919
        %952 = vst [vmem:[%s224 + $0x74] sm:$0xf] %v920
        %953 = vst [vmem:[%s224 + $0x78] sm:$0xf] %v921
        %954 = vst [vmem:[%s224 + $0x7c] sm:$0xf] %v922
      $region36: #{_lambda_.28} parent=27 // pred_fallthru
        _
      %s955 = smul.u32 32, %s18
      %p956 = scmp.lt.s32.totalorder %s955, 63
      %s957 = scalar_select %p956, %s955, 63
      %p958 = scmp.lt.s32.totalorder %s19, 0
      %s959 = scalar_select %p958, %s19, 0
      %s960 = sadd.s32 %s959, %s957
      %s961 = smul.addr %s960, 4
      %s962 = scalar_lea.vmem %s2, %s961
      // Predicated region
      $region37: #{_lambda_.28} parent=27 // pred_check
        %p963 = pneg %p108
      $region38: #{_lambda_.28} parent=27 // pred_check_branch
        %965 = sbr.rel (%p963) target = $region40
      $region39: #{_lambda_.28} parent=27 // pred_region
        %s966 = smul.u32 32, %s18
      $region40: #{_lambda_.28} parent=27 // pred_fallthru
        _
    $region28: #{_lambda_.28} parent=5 // pred_fallthru
      _
    %p967 = scmp.le.s32.totalorder 2, %s8
    // Predicated region
    $region41: #{_lambda_.28} parent=5 // pred_check
      %p968 = pneg %p967
    $region42: #{_lambda_.28} parent=5 // pred_check_branch
      %970 = sbr.rel (%p968) target = $region44
    $region43: #{_lambda_.28} parent=5 // pred_region
      %s971 = ssub.s32 %s8, 2
      // Predicated region
      $region45: #{_lambda_.28} parent=43 // pred_check
        %p972 = pneg %p114
      $region46: #{_lambda_.28} parent=43 // pred_check_branch
        %974 = sbr.rel (%p972) target = $region48
      $region47: #{_lambda_.28} parent=43 // pred_region
        %s975 = smul.u32 32, %s21
        %p976 = scmp.lt.s32.totalorder %s975, 63
        %s977 = scalar_select %p976, %s975, 63
        %p978 = scmp.lt.s32.totalorder %s22, 0
        %s979 = scalar_select %p978, %s22, 0
        %s980 = sadd.s32 %s979, %s977
        %s981 = smul.addr %s980, 4
        %s982 = scalar_lea.vmem %s2, %s981
      $region48: #{_lambda_.28} parent=43 // pred_fallthru
        _
    $region44: #{_lambda_.28} parent=5 // pred_fallthru
      _
  $region6: #{_lambda_.28} parent=0 // loop_footer
    %s12 = sadd.s32 1, %s8
  $region7: #{_lambda_.28} parent=0 // loop_footer_branch
    %7 = sbr.rel target = $region3
  $region8: #{_lambda_.28} parent=0 // loop_exit
    _

// kernel: _lambda_.30
$region0: #{_lambda_.30}
  #allocation0 [shape = 'u32[]', space=smem, size = 0x4, offset = 0x4, fixed_abs, tag = 'smem constant byte address 0x4 - core index']
  #allocation1 [shape = 'u32[72,128]{1,0:T(1,128)}', space=vmem, size = 0x9000, scoped, tag = 'internal scratch']
  %s0 = inlined_call_operand.vmem [shape: bf16[512,128], index: 0, kind: input, shape index: {}]
  %s1 = inlined_call_operand.vmem [shape: f32[1,128], index: 1, kind: input, shape index: {}]
  %s2 = inlined_call_operand.vmem [shape: f32[1,128], index: 2, kind: input, shape index: {}]
  %s3 = inlined_call_operand.vmem [shape: f32[1,128], index: 3, kind: input, shape index: {}]
  %s4 = inlined_call_operand.vmem [shape: f32[1,128], index: 4, kind: input, shape index: {}]
  %s5 = inlined_call_operand.vmem [shape: bf16[512,128], index: 5, kind: output, shape index: {}]
  %s6 = sld [smem:[#allocation0]]
  $region53: #{_lambda_.30} parent=0
    _
  %s8 = ssub.s32 1, %s6
  %s9 = scalar_select 0, %s8, %s6
  loop: start=0, step=1, limit=4
  $region2: #{_lambda_.30} parent=0 // loop_pre_header
    _
  $region3: #{_lambda_.30} parent=0 // loop_header
    %s11 = sphi 0, %s15
    %p12 = scmp.ge.s32.totalorder %s11, 4
    %s21 = sphi 0, %s23
    %s24 = sphi 0, %s21
    %s25 = sphi 0, %s24
    %s41 = sphi 0, %s25
    %s45 = sphi 0, %s45
    %s47 = sphi 0, %s45
    %s48 = sphi 0, %s47
    %s62 = sphi 0, %s48
    %s66 = sphi 0, %s66
    %s68 = sphi 0, %s66
    %s69 = sphi 0, %s68
    %s83 = sphi 0, %s69
    %s87 = sphi 0, %s87
    %s89 = sphi 0, %s87
    %s90 = sphi 0, %s89
    %s104 = sphi 0, %s90
    %s108 = sphi 0, %s108
    %s110 = sphi 0, %s108
    %s111 = sphi 0, %s110
    %s125 = sphi 0, %s111
    %s131 = sphi 0, %s133
    %s134 = sphi 0, %s131
    %s135 = sphi 0, %s134
    %s151 = sphi 0, %s135
  $region4: #{_lambda_.30} parent=0 // loop_header_branch
    %14 = sbr.rel (%p12) target = $region8
  $region5: #{_lambda_.30} parent=0 // loop_body
    %s16 = ssub.s32 %s11, 1
    %s17 = ssub.s32 %s11, 2
    %s18 = sadd.s32 %s11, 1
    %s19 = ssub.s32 %s11, %s18
    %p20 = scmp.eq.s32.totalorder %s19, 0
    %s22 = sadd.s32 %s21, 1
    %s23 = scalar_select %p20, %s21, %s22
    %p26 = pneg %p20
    %p27 = scmp.eq.s32.totalorder %s11, 1
    %p28 = por %p26, %p27
    %p29 = scmp.ne.s32.totalorder %s21, %s24
    %p30 = scmp.eq.s32.totalorder %s11, 0
    %p31 = por %p29, %p30
    %p32 = scmp.ne.s32.totalorder %s21, %s24
    %p33 = scmp.eq.s32.totalorder %s16, 1
    %p34 = por %p32, %p33
    %p35 = scmp.ne.s32.totalorder %s24, %s25
    %p36 = scmp.eq.s32.totalorder %s16, 0
    %p37 = por %p35, %p36
    %p38 = scmp.ne.s32.totalorder %s24, %s25
    %p39 = scmp.eq.s32.totalorder %s17, 1
    %p40 = por %p38, %p39
    %p42 = scmp.ne.s32.totalorder %s25, %s41
    %p43 = scmp.eq.s32.totalorder %s17, 0
    %p44 = por %p42, %p43
    %s46 = sadd.s32 %s45, 1
    %p49 = scmp.eq.s32.totalorder %s11, 1
    %p50 = scmp.ne.s32.totalorder %s45, %s47
    %p51 = scmp.eq.s32.totalorder %s11, 0
    %p52 = por %p50, %p51
    %p53 = scmp.ne.s32.totalorder %s45, %s47
    %p54 = scmp.eq.s32.totalorder %s16, 1
    %p55 = por %p53, %p54
    %p56 = scmp.ne.s32.totalorder %s47, %s48
    %p57 = scmp.eq.s32.totalorder %s16, 0
    %p58 = por %p56, %p57
    %p59 = scmp.ne.s32.totalorder %s47, %s48
    %p60 = scmp.eq.s32.totalorder %s17, 1
    %p61 = por %p59, %p60
    %p63 = scmp.ne.s32.totalorder %s48, %s62
    %p64 = scmp.eq.s32.totalorder %s17, 0
    %p65 = por %p63, %p64
    %s67 = sadd.s32 %s66, 1
    %p70 = scmp.eq.s32.totalorder %s11, 1
    %p71 = scmp.ne.s32.totalorder %s66, %s68
    %p72 = scmp.eq.s32.totalorder %s11, 0
    %p73 = por %p71, %p72
    %p74 = scmp.ne.s32.totalorder %s66, %s68
    %p75 = scmp.eq.s32.totalorder %s16, 1
    %p76 = por %p74, %p75
    %p77 = scmp.ne.s32.totalorder %s68, %s69
    %p78 = scmp.eq.s32.totalorder %s16, 0
    %p79 = por %p77, %p78
    %p80 = scmp.ne.s32.totalorder %s68, %s69
    %p81 = scmp.eq.s32.totalorder %s17, 1
    %p82 = por %p80, %p81
    %p84 = scmp.ne.s32.totalorder %s69, %s83
    %p85 = scmp.eq.s32.totalorder %s17, 0
    %p86 = por %p84, %p85
    %s88 = sadd.s32 %s87, 1
    %p91 = scmp.eq.s32.totalorder %s11, 1
    %p92 = scmp.ne.s32.totalorder %s87, %s89
    %p93 = scmp.eq.s32.totalorder %s11, 0
    %p94 = por %p92, %p93
    %p95 = scmp.ne.s32.totalorder %s87, %s89
    %p96 = scmp.eq.s32.totalorder %s16, 1
    %p97 = por %p95, %p96
    %p98 = scmp.ne.s32.totalorder %s89, %s90
    %p99 = scmp.eq.s32.totalorder %s16, 0
    %p100 = por %p98, %p99
    %p101 = scmp.ne.s32.totalorder %s89, %s90
    %p102 = scmp.eq.s32.totalorder %s17, 1
    %p103 = por %p101, %p102
    %p105 = scmp.ne.s32.totalorder %s90, %s104
    %p106 = scmp.eq.s32.totalorder %s17, 0
    %p107 = por %p105, %p106
    %s109 = sadd.s32 %s108, 1
    %p112 = scmp.eq.s32.totalorder %s11, 1
    %p113 = scmp.ne.s32.totalorder %s108, %s110
    %p114 = scmp.eq.s32.totalorder %s11, 0
    %p115 = por %p113, %p114
    %p116 = scmp.ne.s32.totalorder %s108, %s110
    %p117 = scmp.eq.s32.totalorder %s16, 1
    %p118 = por %p116, %p117
    %p119 = scmp.ne.s32.totalorder %s110, %s111
    %p120 = scmp.eq.s32.totalorder %s16, 0
    %p121 = por %p119, %p120
    %p122 = scmp.ne.s32.totalorder %s110, %s111
    %p123 = scmp.eq.s32.totalorder %s17, 1
    %p124 = por %p122, %p123
    %p126 = scmp.ne.s32.totalorder %s111, %s125
    %p127 = scmp.eq.s32.totalorder %s17, 0
    %p128 = por %p126, %p127
    %s129 = ssub.s32 %s11, %s18
    %p130 = scmp.eq.s32.totalorder %s129, 0
    %s132 = sadd.s32 %s131, 1
    %s133 = scalar_select %p130, %s131, %s132
    %p136 = pneg %p130
    %p137 = scmp.eq.s32.totalorder %s11, 1
    %p138 = por %p136, %p137
    %p139 = scmp.ne.s32.totalorder %s131, %s134
    %p140 = scmp.eq.s32.totalorder %s11, 0
    %p141 = por %p139, %p140
    %p142 = scmp.ne.s32.totalorder %s131, %s134
    %p143 = scmp.eq.s32.totalorder %s16, 1
    %p144 = por %p142, %p143
    %p145 = scmp.ne.s32.totalorder %s134, %s135
    %p146 = scmp.eq.s32.totalorder %s16, 0
    %p147 = por %p145, %p146
    %p148 = scmp.ne.s32.totalorder %s134, %s135
    %p149 = scmp.eq.s32.totalorder %s17, 1
    %p150 = por %p148, %p149
    %p152 = scmp.ne.s32.totalorder %s135, %s151
    %p153 = scmp.eq.s32.totalorder %s17, 0
    %p154 = por %p152, %p153
    %p155 = scmp.le.s32.totalorder 1, %s11
    %p156 = scmp.lt.s32.totalorder %s11, 3
    %p157 = pnand %p155, %p156
    %p158 = pneg %p157
    // Predicated region
    $region9: #{_lambda_.30} parent=5 // pred_check
      _
    $region10: #{_lambda_.30} parent=5 // pred_check_branch
      %160 = sbr.rel (%p157) target = $region12
    $region11: #{_lambda_.30} parent=5 // pred_region
      %s161 = ssub.s32 %s11, 1
      // Predicated region
      $region13: #{_lambda_.30} parent=11 // pred_check
        %p162 = pneg %p58
      $region14: #{_lambda_.30} parent=11 // pred_check_branch
        %164 = sbr.rel (%p162) target = $region16
      $region15: #{_lambda_.30} parent=11 // pred_region
        _
      $region16: #{_lambda_.30} parent=11 // pred_fallthru
        _
      // Predicated region
      $region17: #{_lambda_.30} parent=11 // pred_check
        %p165 = pneg %p79
      $region18: #{_lambda_.30} parent=11 // pred_check_branch
        %167 = sbr.rel (%p165) target = $region20
      $region19: #{_lambda_.30} parent=11 // pred_region
        _
      $region20: #{_lambda_.30} parent=11 // pred_fallthru
        _
      // Predicated region
      $region21: #{_lambda_.30} parent=11 // pred_check
        %p168 = pneg %p100
      $region22: #{_lambda_.30} parent=11 // pred_check_branch
        %170 = sbr.rel (%p168) target = $region24
      $region23: #{_lambda_.30} parent=11 // pred_region
        _
      $region24: #{_lambda_.30} parent=11 // pred_fallthru
        _
      // Predicated region
      $region25: #{_lambda_.30} parent=11 // pred_check
        %p171 = pneg %p121
      $region26: #{_lambda_.30} parent=11 // pred_check_branch
        %173 = sbr.rel (%p171) target = $region28
      $region27: #{_lambda_.30} parent=11 // pred_region
        _
      $region28: #{_lambda_.30} parent=11 // pred_fallthru
        _
    $region12: #{_lambda_.30} parent=5 // pred_fallthru
      _
    %p174 = scmp.lt.s32.totalorder %s11, 2
    // Predicated region
    $region29: #{_lambda_.30} parent=5 // pred_check
      %p175 = pneg %p174
    $region30: #{_lambda_.30} parent=5 // pred_check_branch
      %177 = sbr.rel (%p175) target = $region32
    $region31: #{_lambda_.30} parent=5 // pred_region
      // Predicated region
      $region33: #{_lambda_.30} parent=31 // pred_check
        %p178 = pneg %p31
      $region34: #{_lambda_.30} parent=31 // pred_check_branch
        %180 = sbr.rel (%p178) target = $region36
      $region35: #{_lambda_.30} parent=31 // pred_region
        %s181 = smul.u32 32, %s11
        %p182 = scmp.lt.s32.totalorder %s181, 63
        %s183 = scalar_select %p182, %s181, 63
        %s184 = smul.addr %s183, 4
        %s185 = scalar_lea.vmem %s0, %s184
        %s186 = smul.u32 32, %s11
      $region36: #{_lambda_.30} parent=31 // pred_fallthru
        _
    $region32: #{_lambda_.30} parent=5 // pred_fallthru
      _
    %p187 = scmp.le.s32.totalorder 1, %s11
    %p188 = scmp.lt.s32.totalorder %s11, 3
    %p189 = pnand %p187, %p188
    %p190 = pneg %p189
    // Predicated region
    $region37: #{_lambda_.30} parent=5 // pred_check
      _
    $region38: #{_lambda_.30} parent=5 // pred_check_branch
      %192 = sbr.rel (%p189) target = $region40
    $region39: #{_lambda_.30} parent=5 // pred_region
      %s193 = ssub.s32 %s11, 1
      %s194 = smul.u32 32, %s16
      %p195 = scmp.lt.s32.totalorder %s194, 63
      %s196 = scalar_select %p195, %s194, 63
      %s197 = smul.addr %s196, 4
      %s198 = scalar_lea.vmem %s0, %s197
      %p199 = pneg %p37
      %p200 = pneg %p34
      %p201 = pneg %p58
      %p202 = pneg %p55
      %p203 = pneg %p79
      %p204 = pneg %p76
      %p205 = pneg %p100
      %p206 = pneg %p97
      %p207 = pneg %p121
      %p208 = pneg %p118
      %p209 = pneg %p147
      %p210 = pneg %p144
      %s211 = smul.u32 32, %s16
      %p212 = scmp.lt.s32.totalorder %s211, 63
      %s213 = scalar_select %p212, %s211, 63
      %s214 = smul.addr %s213, 4
      %s215 = scalar_lea.vmem %s5, %s214
      %s216 = smul.u32 32, %s16
      %p217 = scmp.lt.s32.totalorder %s216, 63
      %s218 = scalar_select %p217, %s216, 63
      %s219 = smul.addr %s218, 4
      %s220 = scalar_lea.vmem %s0, %s219
      %s221 = smul.u32 32, %s16
      %s222 = smul.u32 32, %s16
      %p223 = scmp.lt.s32.totalorder %s222, 63
      %s224 = scalar_select %p223, %s222, 63
      %s225 = smul.addr %s224, 4
      %s226 = scalar_lea.vmem %s5, %s225
      %s227 = smul.u32 32, %s16
      %v228 = vld [vmem:[%s1] sm:$0x1]
      %v229 = vmul.f32 %v228, 0.001953125
      %v230 = vld [vmem:[%s2] sm:$0x1]
      %v231 = vmul.f32 %v230, 0.001953125
      %v232 = vmul.f32 %v229, %v229
      %v233 = vsub.f32 %v231, %v232
      %v234 = vld [vmem:[%s3] sm:$0x1]
      %v235 = vadd.f32 %v233, 1e-05
      %v236 = vrsqrt.pop %v235
      %v237 = vmul.f32 %v236, %v235
      %v238 = vmul.f32 %v237, %v236
      %v239 = vmul.f32 0.5, %v238
      %v240 = vsub.f32 1.5, %v239
      %v241 = vmul.f32 %v236, %v240
      %vm242 = vweird.f32 %v235
      %vm243 = vweird.f32 %v236
      %vm244 = vmor %vm242, %vm243
      %v245 = vsel %vm244, %v236, %v241
      %v246 = vmul.f32 %v234, %v245
      %v247 = vld [vmem:[%s4] sm:$0x1]
      %v248 = vmul.f32 %v229, %v246
      %v249 = vsub.f32 %v247, %v248
      %v250 = vld [vmem:[%s220] sm:$0xf]
      %v251 = vld [vmem:[%s220 + $0x4] sm:$0xf]
      %v252 = vld [vmem:[%s220 + $0x8] sm:$0xf]
      %v253 = vld [vmem:[%s220 + $0xc] sm:$0xf]
      %v254 = vld [vmem:[%s220 + $0x10] sm:$0xf]
      %v255 = vld [vmem:[%s220 + $0x14] sm:$0xf]
      %v256 = vld [vmem:[%s220 + $0x18] sm:$0xf]
      %v257 = vld [vmem:[%s220 + $0x1c] sm:$0xf]
      %v258 = vld [vmem:[%s220 + $0x20] sm:$0xf]
      %v259 = vld [vmem:[%s220 + $0x24] sm:$0xf]
      %v260 = vld [vmem:[%s220 + $0x28] sm:$0xf]
      %v261 = vld [vmem:[%s220 + $0x2c] sm:$0xf]
      %v262 = vld [vmem:[%s220 + $0x30] sm:$0xf]
      %v263 = vld [vmem:[%s220 + $0x34] sm:$0xf]
      %v264 = vld [vmem:[%s220 + $0x38] sm:$0xf]
      %v265 = vld [vmem:[%s220 + $0x3c] sm:$0xf]
      %v266 = vld [vmem:[%s220 + $0x40] sm:$0xf]
      %v267 = vld [vmem:[%s220 + $0x44] sm:$0xf]
      %v268 = vld [vmem:[%s220 + $0x48] sm:$0xf]
      %v269 = vld [vmem:[%s220 + $0x4c] sm:$0xf]
      %v270 = vld [vmem:[%s220 + $0x50] sm:$0xf]
      %v271 = vld [vmem:[%s220 + $0x54] sm:$0xf]
      %v272 = vld [vmem:[%s220 + $0x58] sm:$0xf]
      %v273 = vld [vmem:[%s220 + $0x5c] sm:$0xf]
      %v274 = vld [vmem:[%s220 + $0x60] sm:$0xf]
      %v275 = vld [vmem:[%s220 + $0x64] sm:$0xf]
      %v276 = vld [vmem:[%s220 + $0x68] sm:$0xf]
      %v277 = vld [vmem:[%s220 + $0x6c] sm:$0xf]
      %v278 = vld [vmem:[%s220 + $0x70] sm:$0xf]
      %v279 = vld [vmem:[%s220 + $0x74] sm:$0xf]
      %v280 = vld [vmem:[%s220 + $0x78] sm:$0xf]
      %v281 = vld [vmem:[%s220 + $0x7c] sm:$0xf]
      %v282 = vunpack.c.l.bf16 %v250
      %v283 = vunpack.c.l.bf16 %v251
      %v284 = vunpack.c.l.bf16 %v252
      %v285 = vunpack.c.l.bf16 %v253
      %v286 = vunpack.c.l.bf16 %v254
      %v287 = vunpack.c.l.bf16 %v255
      %v288 = vunpack.c.l.bf16 %v256
      %v289 = vunpack.c.l.bf16 %v257
      %v290 = vunpack.c.l.bf16 %v258
      %v291 = vunpack.c.l.bf16 %v259
      %v292 = vunpack.c.l.bf16 %v260
      %v293 = vunpack.c.l.bf16 %v261
      %v294 = vunpack.c.l.bf16 %v262
      %v295 = vunpack.c.l.bf16 %v263
      %v296 = vunpack.c.l.bf16 %v264
      %v297 = vunpack.c.l.bf16 %v265
      %v298 = vunpack.c.l.bf16 %v266
      %v299 = vunpack.c.l.bf16 %v267
      %v300 = vunpack.c.l.bf16 %v268
      %v301 = vunpack.c.l.bf16 %v269
      %v302 = vunpack.c.l.bf16 %v270
      %v303 = vunpack.c.l.bf16 %v271
      %v304 = vunpack.c.l.bf16 %v272
      %v305 = vunpack.c.l.bf16 %v273
      %v306 = vunpack.c.l.bf16 %v274
      %v307 = vunpack.c.l.bf16 %v275
      %v308 = vunpack.c.l.bf16 %v276
      %v309 = vunpack.c.l.bf16 %v277
      %v310 = vunpack.c.l.bf16 %v278
      %v311 = vunpack.c.l.bf16 %v279
      %v312 = vunpack.c.l.bf16 %v280
      %v313 = vunpack.c.l.bf16 %v281
      %v315 = vperm.slane %v246, 0
      %v317 = vmul.f32 %v282, %v315
      %v318 = vmul.f32 %v283, %v315
      %v319 = vmul.f32 %v284, %v315
      %v320 = vmul.f32 %v285, %v315
      %v321 = vmul.f32 %v286, %v315
      %v322 = vmul.f32 %v287, %v315
      %v323 = vmul.f32 %v288, %v315
      %v324 = vmul.f32 %v289, %v315
      %v325 = vmul.f32 %v290, %v315
      %v326 = vmul.f32 %v291, %v315
      %v327 = vmul.f32 %v292, %v315
      %v328 = vmul.f32 %v293, %v315
      %v329 = vmul.f32 %v294, %v315
      %v330 = vmul.f32 %v295, %v315
      %v331 = vmul.f32 %v296, %v315
      %v332 = vmul.f32 %v297, %v315
      %v333 = vmul.f32 %v298, %v315
      %v334 = vmul.f32 %v299, %v315
      %v335 = vmul.f32 %v300, %v315
      %v336 = vmul.f32 %v301, %v315
      %v337 = vmul.f32 %v302, %v315
      %v338 = vmul.f32 %v303, %v315
      %v339 = vmul.f32 %v304, %v315
      %v340 = vmul.f32 %v305, %v315
      %v341 = vmul.f32 %v306, %v315
      %v342 = vmul.f32 %v307, %v315
      %v343 = vmul.f32 %v308, %v315
      %v344 = vmul.f32 %v309, %v315
      %v345 = vmul.f32 %v310, %v315
      %v346 = vmul.f32 %v311, %v315
      %v347 = vmul.f32 %v312, %v315
      %v348 = vmul.f32 %v313, %v315
      %v350 = vperm.slane %v249, 0
      %v352 = vadd.f32 %v317, %v350
      %v353 = vadd.f32 %v318, %v350
      %v354 = vadd.f32 %v319, %v350
      %v355 = vadd.f32 %v320, %v350
      %v356 = vadd.f32 %v321, %v350
      %v357 = vadd.f32 %v322, %v350
      %v358 = vadd.f32 %v323, %v350
      %v359 = vadd.f32 %v324, %v350
      %v360 = vadd.f32 %v325, %v350
      %v361 = vadd.f32 %v326, %v350
      %v362 = vadd.f32 %v327, %v350
      %v363 = vadd.f32 %v328, %v350
      %v364 = vadd.f32 %v329, %v350
      %v365 = vadd.f32 %v330, %v350
      %v366 = vadd.f32 %v331, %v350
      %v367 = vadd.f32 %v332, %v350
      %v368 = vadd.f32 %v333, %v350
      %v369 = vadd.f32 %v334, %v350
      %v370 = vadd.f32 %v335, %v350
      %v371 = vadd.f32 %v336, %v350
      %v372 = vadd.f32 %v337, %v350
      %v373 = vadd.f32 %v338, %v350
      %v374 = vadd.f32 %v339, %v350
      %v375 = vadd.f32 %v340, %v350
      %v376 = vadd.f32 %v341, %v350
      %v377 = vadd.f32 %v342, %v350
      %v378 = vadd.f32 %v343, %v350
      %v379 = vadd.f32 %v344, %v350
      %v380 = vadd.f32 %v345, %v350
      %v381 = vadd.f32 %v346, %v350
      %v382 = vadd.f32 %v347, %v350
      %v383 = vadd.f32 %v348, %v350
      %v384 = vmax.f32 %v352, 0.0
      %v385 = vmax.f32 %v353, 0.0
      %v386 = vmax.f32 %v354, 0.0
      %v387 = vmax.f32 %v355, 0.0
      %v388 = vmax.f32 %v356, 0.0
      %v389 = vmax.f32 %v357, 0.0
      %v390 = vmax.f32 %v358, 0.0
      %v391 = vmax.f32 %v359, 0.0
      %v392 = vmax.f32 %v360, 0.0
      %v393 = vmax.f32 %v361, 0.0
      %v394 = vmax.f32 %v362, 0.0
      %v395 = vmax.f32 %v363, 0.0
      %v396 = vmax.f32 %v364, 0.0
      %v397 = vmax.f32 %v365, 0.0
      %v398 = vmax.f32 %v366, 0.0
      %v399 = vmax.f32 %v367, 0.0
      %v400 = vmax.f32 %v368, 0.0
      %v401 = vmax.f32 %v369, 0.0
      %v402 = vmax.f32 %v370, 0.0
      %v403 = vmax.f32 %v371, 0.0
      %v404 = vmax.f32 %v372, 0.0
      %v405 = vmax.f32 %v373, 0.0
      %v406 = vmax.f32 %v374, 0.0
      %v407 = vmax.f32 %v375, 0.0
      %v408 = vmax.f32 %v376, 0.0
      %v409 = vmax.f32 %v377, 0.0
      %v410 = vmax.f32 %v378, 0.0
      %v411 = vmax.f32 %v379, 0.0
      %v412 = vmax.f32 %v380, 0.0
      %v413 = vmax.f32 %v381, 0.0
      %v414 = vmax.f32 %v382, 0.0
      %v415 = vmax.f32 %v383, 0.0
      %v416 = vpack.c.bf16 %v384, %v384
      %v417 = vpack.c.bf16 %v385, %v385
      %v418 = vpack.c.bf16 %v386, %v386
      %v419 = vpack.c.bf16 %v387, %v387
      %v420 = vpack.c.bf16 %v388, %v388
      %v421 = vpack.c.bf16 %v389, %v389
      %v422 = vpack.c.bf16 %v390, %v390
      %v423 = vpack.c.bf16 %v391, %v391
      %v424 = vpack.c.bf16 %v392, %v392
      %v425 = vpack.c.bf16 %v393, %v393
      %v426 = vpack.c.bf16 %v394, %v394
      %v427 = vpack.c.bf16 %v395, %v395
      %v428 = vpack.c.bf16 %v396, %v396
      %v429 = vpack.c.bf16 %v397, %v397
      %v430 = vpack.c.bf16 %v398, %v398
      %v431 = vpack.c.bf16 %v399, %v399
      %v432 = vpack.c.bf16 %v400, %v400
      %v433 = vpack.c.bf16 %v401, %v401
      %v434 = vpack.c.bf16 %v402, %v402
      %v435 = vpack.c.bf16 %v403, %v403
      %v436 = vpack.c.bf16 %v404, %v404
      %v437 = vpack.c.bf16 %v405, %v405
      %v438 = vpack.c.bf16 %v406, %v406
      %v439 = vpack.c.bf16 %v407, %v407
      %v440 = vpack.c.bf16 %v408, %v408
      %v441 = vpack.c.bf16 %v409, %v409
      %v442 = vpack.c.bf16 %v410, %v410
      %v443 = vpack.c.bf16 %v411, %v411
      %v444 = vpack.c.bf16 %v412, %v412
      %v445 = vpack.c.bf16 %v413, %v413
      %v446 = vpack.c.bf16 %v414, %v414
      %v447 = vpack.c.bf16 %v415, %v415
      %448 = vst [vmem:[%s226] sm:$0xf] %v416
      %449 = vst [vmem:[%s226 + $0x4] sm:$0xf] %v417
      %450 = vst [vmem:[%s226 + $0x8] sm:$0xf] %v418
      %451 = vst [vmem:[%s226 + $0xc] sm:$0xf] %v419
      %452 = vst [vmem:[%s226 + $0x10] sm:$0xf] %v420
      %453 = vst [vmem:[%s226 + $0x14] sm:$0xf] %v421
      %454 = vst [vmem:[%s226 + $0x18] sm:$0xf] %v422
      %455 = vst [vmem:[%s226 + $0x1c] sm:$0xf] %v423
      %456 = vst [vmem:[%s226 + $0x20] sm:$0xf] %v424
      %457 = vst [vmem:[%s226 + $0x24] sm:$0xf] %v425
      %458 = vst [vmem:[%s226 + $0x28] sm:$0xf] %v426
      %459 = vst [vmem:[%s226 + $0x2c] sm:$0xf] %v427
      %460 = vst [vmem:[%s226 + $0x30] sm:$0xf] %v428
      %461 = vst [vmem:[%s226 + $0x34] sm:$0xf] %v429
      %462 = vst [vmem:[%s226 + $0x38] sm:$0xf] %v430
      %463 = vst [vmem:[%s226 + $0x3c] sm:$0xf] %v431
      %464 = vst [vmem:[%s226 + $0x40] sm:$0xf] %v432
      %465 = vst [vmem:[%s226 + $0x44] sm:$0xf] %v433
      %466 = vst [vmem:[%s226 + $0x48] sm:$0xf] %v434
      %467 = vst [vmem:[%s226 + $0x4c] sm:$0xf] %v435
      %468 = vst [vmem:[%s226 + $0x50] sm:$0xf] %v436
      %469 = vst [vmem:[%s226 + $0x54] sm:$0xf] %v437
      %470 = vst [vmem:[%s226 + $0x58] sm:$0xf] %v438
      %471 = vst [vmem:[%s226 + $0x5c] sm:$0xf] %v439
      %472 = vst [vmem:[%s226 + $0x60] sm:$0xf] %v440
      %473 = vst [vmem:[%s226 + $0x64] sm:$0xf] %v441
      %474 = vst [vmem:[%s226 + $0x68] sm:$0xf] %v442
      %475 = vst [vmem:[%s226 + $0x6c] sm:$0xf] %v443
      %476 = vst [vmem:[%s226 + $0x70] sm:$0xf] %v444
      %477 = vst [vmem:[%s226 + $0x74] sm:$0xf] %v445
      %478 = vst [vmem:[%s226 + $0x78] sm:$0xf] %v446
      %479 = vst [vmem:[%s226 + $0x7c] sm:$0xf] %v447
      %s480 = smul.u32 32, %s16
      %p481 = scmp.lt.s32.totalorder %s480, 63
      %s482 = scalar_select %p481, %s480, 63
      %s483 = smul.addr %s482, 4
      %s484 = scalar_lea.vmem %s5, %s483
      // Predicated region
      $region41: #{_lambda_.30} parent=39 // pred_check
        %p485 = pneg %p144
      $region42: #{_lambda_.30} parent=39 // pred_check_branch
        %487 = sbr.rel (%p485) target = $region44
      $region43: #{_lambda_.30} parent=39 // pred_region
        %s488 = smul.u32 32, %s16
      $region44: #{_lambda_.30} parent=39 // pred_fallthru
        _
    $region40: #{_lambda_.30} parent=5 // pred_fallthru
      _
    %p489 = scmp.le.s32.totalorder 2, %s11
    // Predicated region
    $region45: #{_lambda_.30} parent=5 // pred_check
      %p490 = pneg %p489
    $region46: #{_lambda_.30} parent=5 // pred_check_branch
      %492 = sbr.rel (%p490) target = $region48
    $region47: #{_lambda_.30} parent=5 // pred_region
      %s493 = ssub.s32 %s11, 2
      // Predicated region
      $region49: #{_lambda_.30} parent=47 // pred_check
        %p494 = pneg %p150
      $region50: #{_lambda_.30} parent=47 // pred_check_branch
        %496 = sbr.rel (%p494) target = $region52
      $region51: #{_lambda_.30} parent=47 // pred_region
        %s497 = smul.u32 32, %s17
        %p498 = scmp.lt.s32.totalorder %s497, 63
        %s499 = scalar_select %p498, %s497, 63
        %s500 = smul.addr %s499, 4
        %s501 = scalar_lea.vmem %s5, %s500
      $region52: #{_lambda_.30} parent=47 // pred_fallthru
        _
    $region48: #{_lambda_.30} parent=5 // pred_fallthru
      _
  $region6: #{_lambda_.30} parent=0 // loop_footer
    %s15 = sadd.s32 1, %s11
  $region7: #{_lambda_.30} parent=0 // loop_footer_branch
    %10 = sbr.rel target = $region3
  $region8: #{_lambda_.30} parent=0 // loop_exit
    _

// kernel: _lambda_.32
$region0: #{_lambda_.32}
  #allocation0 [shape = 'u32[]', space=smem, size = 0x4, offset = 0x4, fixed_abs, tag = 'smem constant byte address 0x4 - core index']
  #allocation1 [shape = 'u32[72,128]{1,0:T(1,128)}', space=vmem, size = 0x9000, scoped, tag = 'internal scratch']
  %s0 = inlined_call_operand.vmem [shape: bf16[256,128], index: 0, kind: input, shape index: {}]
  %s1 = inlined_call_operand.vmem [shape: f32[1,128], index: 1, kind: output, shape index: {0}]
  %s2 = inlined_call_operand.vmem [shape: f32[1,128], index: 2, kind: output, shape index: {1}]
  %3 = xla_tuple %s1, %s2
  %s4 = sld [smem:[#allocation0]]
  $region26: #{_lambda_.32} parent=0
    _
  %s6 = ssub.s32 1, %s4
  %s7 = scalar_select 0, %s6, %s4
  // Predicated region
  $region2: #{_lambda_.32} parent=0 // pred_check
    _
  $region3: #{_lambda_.32} parent=0 // pred_check_branch
    %9 = sbr.rel (0) target = $region5
  $region4: #{_lambda_.32} parent=0 // pred_region
    _
  $region5: #{_lambda_.32} parent=0 // pred_fallthru
    _
  %p10 = scmp.eq.s32.totalorder 0, 0
  // Predicated region
  $region6: #{_lambda_.32} parent=0 // pred_check
    %p11 = pneg %p10
  $region7: #{_lambda_.32} parent=0 // pred_check_branch
    %13 = sbr.rel (%p11) target = $region9
  $region8: #{_lambda_.32} parent=0 // pred_region
    %14 = vst [vmem:[%s1] sm:$0x1] 0.0
    %15 = vst [vmem:[%s2] sm:$0x1] 0.0
  $region9: #{_lambda_.32} parent=0 // pred_fallthru
    _
  %v16 = vld [vmem:[%s0] sm:$0xf]
  %v17 = vld [vmem:[%s0 + $0x4] sm:$0xf]
  %v18 = vld [vmem:[%s0 + $0x8] sm:$0xf]
  %v19 = vld [vmem:[%s0 + $0xc] sm:$0xf]
  %v20 = vld [vmem:[%s0 + $0x10] sm:$0xf]
  %v21 = vld [vmem:[%s0 + $0x14] sm:$0xf]
  %v22 = vld [vmem:[%s0 + $0x18] sm:$0xf]
  %v23 = vld [vmem:[%s0 + $0x1c] sm:$0xf]
  %v24 = vld [vmem:[%s0 + $0x20] sm:$0xf]
  %v25 = vld [vmem:[%s0 + $0x24] sm:$0xf]
  %v26 = vld [vmem:[%s0 + $0x28] sm:$0xf]
  %v27 = vld [vmem:[%s0 + $0x2c] sm:$0xf]
  %v28 = vld [vmem:[%s0 + $0x30] sm:$0xf]
  %v29 = vld [vmem:[%s0 + $0x34] sm:$0xf]
  %v30 = vld [vmem:[%s0 + $0x38] sm:$0xf]
  %v31 = vld [vmem:[%s0 + $0x3c] sm:$0xf]
  %v32 = vld [vmem:[%s0 + $0x40] sm:$0xf]
  %v33 = vld [vmem:[%s0 + $0x44] sm:$0xf]
  %v34 = vld [vmem:[%s0 + $0x48] sm:$0xf]
  %v35 = vld [vmem:[%s0 + $0x4c] sm:$0xf]
  %v36 = vld [vmem:[%s0 + $0x50] sm:$0xf]
  %v37 = vld [vmem:[%s0 + $0x54] sm:$0xf]
  %v38 = vld [vmem:[%s0 + $0x58] sm:$0xf]
  %v39 = vld [vmem:[%s0 + $0x5c] sm:$0xf]
  %v40 = vld [vmem:[%s0 + $0x60] sm:$0xf]
  %v41 = vld [vmem:[%s0 + $0x64] sm:$0xf]
  %v42 = vld [vmem:[%s0 + $0x68] sm:$0xf]
  %v43 = vld [vmem:[%s0 + $0x6c] sm:$0xf]
  %v44 = vld [vmem:[%s0 + $0x70] sm:$0xf]
  %v45 = vld [vmem:[%s0 + $0x74] sm:$0xf]
  %v46 = vld [vmem:[%s0 + $0x78] sm:$0xf]
  %v47 = vld [vmem:[%s0 + $0x7c] sm:$0xf]
  %v48 = vunpack.c.l.bf16 %v16
  %v49 = vunpack.c.l.bf16 %v17
  %v50 = vunpack.c.l.bf16 %v18
  %v51 = vunpack.c.l.bf16 %v19
  %v52 = vunpack.c.l.bf16 %v20
  %v53 = vunpack.c.l.bf16 %v21
  %v54 = vunpack.c.l.bf16 %v22
  %v55 = vunpack.c.l.bf16 %v23
  %v56 = vunpack.c.l.bf16 %v24
  %v57 = vunpack.c.l.bf16 %v25
  %v58 = vunpack.c.l.bf16 %v26
  %v59 = vunpack.c.l.bf16 %v27
  %v60 = vunpack.c.l.bf16 %v28
  %v61 = vunpack.c.l.bf16 %v29
  %v62 = vunpack.c.l.bf16 %v30
  %v63 = vunpack.c.l.bf16 %v31
  %v64 = vunpack.c.l.bf16 %v32
  %v65 = vunpack.c.l.bf16 %v33
  %v66 = vunpack.c.l.bf16 %v34
  %v67 = vunpack.c.l.bf16 %v35
  %v68 = vunpack.c.l.bf16 %v36
  %v69 = vunpack.c.l.bf16 %v37
  %v70 = vunpack.c.l.bf16 %v38
  %v71 = vunpack.c.l.bf16 %v39
  %v72 = vunpack.c.l.bf16 %v40
  %v73 = vunpack.c.l.bf16 %v41
  %v74 = vunpack.c.l.bf16 %v42
  %v75 = vunpack.c.l.bf16 %v43
  %v76 = vunpack.c.l.bf16 %v44
  %v77 = vunpack.c.l.bf16 %v45
  %v78 = vunpack.c.l.bf16 %v46
  %v79 = vunpack.c.l.bf16 %v47
  %v80 = vld [vmem:[%s1] sm:$0x1]
  %v81 = vadd.f32 %v48, %v49
  %v82 = vadd.f32 %v81, %v50
  %v83 = vadd.f32 %v82, %v51
  %v84 = vadd.f32 %v83, %v52
  %v85 = vadd.f32 %v84, %v53
  %v86 = vadd.f32 %v85, %v54
  %v87 = vadd.f32 %v86, %v55
  %v88 = vadd.f32 %v87, %v56
  %v89 = vadd.f32 %v88, %v57
  %v90 = vadd.f32 %v89, %v58
  %v91 = vadd.f32 %v90, %v59
  %v92 = vadd.f32 %v91, %v60
  %v93 = vadd.f32 %v92, %v61
  %v94 = vadd.f32 %v93, %v62
  %v95 = vadd.f32 %v94, %v63
  %v96 = vadd.f32 %v95, %v64
  %v97 = vadd.f32 %v96, %v65
  %v98 = vadd.f32 %v97, %v66
  %v99 = vadd.f32 %v98, %v67
  %v100 = vadd.f32 %v99, %v68
  %v101 = vadd.f32 %v100, %v69
  %v102 = vadd.f32 %v101, %v70
  %v103 = vadd.f32 %v102, %v71
  %v104 = vadd.f32 %v103, %v72
  %v105 = vadd.f32 %v104, %v73
  %v106 = vadd.f32 %v105, %v74
  %v107 = vadd.f32 %v106, %v75
  %v108 = vadd.f32 %v107, %v76
  %v109 = vadd.f32 %v108, %v77
  %v110 = vadd.f32 %v109, %v78
  %v111 = vadd.f32 %v110, %v79
  %v112 = vrot.slane %v111, 4
  %v113 = vadd.f32 %v111, %v112
  %v114 = vrot.slane %v113, 2
  %v115 = vadd.f32 %v113, %v114
  %v116 = vrot.slane %v115, 1
  %v117 = vadd.f32 %v115, %v116
  %v118 = vadd.f32 %v80, %v117
  %119 = vst [vmem:[%s1] sm:$0x1] %v118
  %v120 = vld [vmem:[%s2] sm:$0x1]
  %v121 = vmul.f32 %v48, %v48
  %v122 = vmul.f32 %v49, %v49
  %v123 = vmul.f32 %v50, %v50
  %v124 = vmul.f32 %v51, %v51
  %v125 = vmul.f32 %v52, %v52
  %v126 = vmul.f32 %v53, %v53
  %v127 = vmul.f32 %v54, %v54
  %v128 = vmul.f32 %v55, %v55
  %v129 = vmul.f32 %v56, %v56
  %v130 = vmul.f32 %v57, %v57
  %v131 = vmul.f32 %v58, %v58
  %v132 = vmul.f32 %v59, %v59
  %v133 = vmul.f32 %v60, %v60
  %v134 = vmul.f32 %v61, %v61
  %v135 = vmul.f32 %v62, %v62
  %v136 = vmul.f32 %v63, %v63
  %v137 = vmul.f32 %v64, %v64
  %v138 = vmul.f32 %v65, %v65
  %v139 = vmul.f32 %v66, %v66
  %v140 = vmul.f32 %v67, %v67
  %v141 = vmul.f32 %v68, %v68
  %v142 = vmul.f32 %v69, %v69
  %v143 = vmul.f32 %v70, %v70
  %v144 = vmul.f32 %v71, %v71
  %v145 = vmul.f32 %v72, %v72
  %v146 = vmul.f32 %v73, %v73
  %v147 = vmul.f32 %v74, %v74
  %v148 = vmul.f32 %v75, %v75
  %v149 = vmul.f32 %v76, %v76
  %v150 = vmul.f32 %v77, %v77
  %v151 = vmul.f32 %v78, %v78
  %v152 = vmul.f32 %v79, %v79
  %v153 = vadd.f32 %v121, %v122
  %v154 = vadd.f32 %v153, %v123
  %v155 = vadd.f32 %v154, %v124
  %v156 = vadd.f32 %v155, %v125
  %v157 = vadd.f32 %v156, %v126
  %v158 = vadd.f32 %v157, %v127
  %v159 = vadd.f32 %v158, %v128
  %v160 = vadd.f32 %v159, %v129
  %v161 = vadd.f32 %v160, %v130
  %v162 = vadd.f32 %v161, %v131
  %v163 = vadd.f32 %v162, %v132
  %v164 = vadd.f32 %v163, %v133
  %v165 = vadd.f32 %v164, %v134
  %v166 = vadd.f32 %v165, %v135
  %v167 = vadd.f32 %v166, %v136
  %v168 = vadd.f32 %v167, %v137
  %v169 = vadd.f32 %v168, %v138
  %v170 = vadd.f32 %v169, %v139
  %v171 = vadd.f32 %v170, %v140
  %v172 = vadd.f32 %v171, %v141
  %v173 = vadd.f32 %v172, %v142
  %v174 = vadd.f32 %v173, %v143
  %v175 = vadd.f32 %v174, %v144
  %v176 = vadd.f32 %v175, %v145
  %v177 = vadd.f32 %v176, %v146
  %v178 = vadd.f32 %v177, %v147
  %v179 = vadd.f32 %v178, %v148
  %v180 = vadd.f32 %v179, %v149
  %v181 = vadd.f32 %v180, %v150
  %v182 = vadd.f32 %v181, %v151
  %v183 = vadd.f32 %v182, %v152
  %v184 = vrot.slane %v183, 4
  %v185 = vadd.f32 %v183, %v184
  %v186 = vrot.slane %v185, 2
  %v187 = vadd.f32 %v185, %v186
  %v188 = vrot.slane %v187, 1
  %v189 = vadd.f32 %v187, %v188
  %v190 = vadd.f32 %v120, %v189
  %191 = vst [vmem:[%s2] sm:$0x1] %v190
  // Predicated region
  $region10: #{_lambda_.32} parent=0 // pred_check
    _
  $region11: #{_lambda_.32} parent=0 // pred_check_branch
    %193 = sbr.rel (0) target = $region13
  $region12: #{_lambda_.32} parent=0 // pred_region
    _
  $region13: #{_lambda_.32} parent=0 // pred_fallthru
    _
  // Predicated region
  $region14: #{_lambda_.32} parent=0 // pred_check
    _
  $region15: #{_lambda_.32} parent=0 // pred_check_branch
    %195 = sbr.rel (0) target = $region17
  $region16: #{_lambda_.32} parent=0 // pred_region
    _
  $region17: #{_lambda_.32} parent=0 // pred_fallthru
    _
  // Predicated region
  $region18: #{_lambda_.32} parent=0 // pred_check
    _
  $region19: #{_lambda_.32} parent=0 // pred_check_branch
    %197 = sbr.rel (0) target = $region21
  $region20: #{_lambda_.32} parent=0 // pred_region
    _
  $region21: #{_lambda_.32} parent=0 // pred_fallthru
    _
  // Predicated region
  $region22: #{_lambda_.32} parent=0 // pred_check
    _
  $region23: #{_lambda_.32} parent=0 // pred_check_branch
    %199 = sbr.rel (0) target = $region25
  $region24: #{_lambda_.32} parent=0 // pred_region
    _
  $region25: #{_lambda_.32} parent=0 // pred_fallthru
    _

// kernel: _lambda_.31
$region0: #{_lambda_.31}
  #allocation0 [shape = 'u32[]', space=smem, size = 0x4, offset = 0x4, fixed_abs, tag = 'smem constant byte address 0x4 - core index']
  #allocation1 [shape = 'u32[72,128]{1,0:T(1,128)}', space=vmem, size = 0x9000, scoped, tag = 'internal scratch']
  #allocation2 [shape = 'f32[256,128]{1,0:T(8,128)}', space=vmem, size = 0x20000, scoped, tag = 'scratch operand']
  %s0 = inlined_call_operand.vmem [shape: bf16[256,128], index: 0, kind: input, shape index: {}]
  %s1 = inlined_call_operand.vmem [shape: bf16[128,128], index: 1, kind: input, shape index: {}]
  %s2 = inlined_call_operand.vmem [shape: bf16[256,128], index: 2, kind: output, shape index: {}]
  %s3 = sld [smem:[#allocation0]]
  $region26: #{_lambda_.31} parent=0
    _
  %s5 = ssub.s32 1, %s3
  %s6 = scalar_select 0, %s5, %s3
  // Predicated region
  $region2: #{_lambda_.31} parent=0 // pred_check
    _
  $region3: #{_lambda_.31} parent=0 // pred_check_branch
    %8 = sbr.rel (0) target = $region5
  $region4: #{_lambda_.31} parent=0 // pred_region
    _
  $region5: #{_lambda_.31} parent=0 // pred_fallthru
    _
  // Predicated region
  $region6: #{_lambda_.31} parent=0 // pred_check
    _
  $region7: #{_lambda_.31} parent=0 // pred_check_branch
    %10 = sbr.rel (0) target = $region9
  $region8: #{_lambda_.31} parent=0 // pred_region
    _
  $region9: #{_lambda_.31} parent=0 // pred_fallthru
    _
  %p11 = scmp.eq.s32.totalorder 0, 0
  // Predicated region
  $region10: #{_lambda_.31} parent=0 // pred_check
    %p12 = pneg %p11
  $region11: #{_lambda_.31} parent=0 // pred_check_branch
    %14 = sbr.rel (%p12) target = $region13
  $region12: #{_lambda_.31} parent=0 // pred_region
    %15 = vst [vmem:[#allocation2] sm:$0xff] 0.0
    %16 = vst [vmem:[#allocation2 + $0x8] sm:$0xff] 0.0
    %17 = vst [vmem:[#allocation2 + $0x10] sm:$0xff] 0.0
    %18 = vst [vmem:[#allocation2 + $0x18] sm:$0xff] 0.0
    %19 = vst [vmem:[#allocation2 + $0x20] sm:$0xff] 0.0
    %20 = vst [vmem:[#allocation2 + $0x28] sm:$0xff] 0.0
    %21 = vst [vmem:[#allocation2 + $0x30] sm:$0xff] 0.0
    %22 = vst [vmem:[#allocation2 + $0x38] sm:$0xff] 0.0
    %23 = vst [vmem:[#allocation2 + $0x40] sm:$0xff] 0.0
    %24 = vst [vmem:[#allocation2 + $0x48] sm:$0xff] 0.0
    %25 = vst [vmem:[#allocation2 + $0x50] sm:$0xff] 0.0
    %26 = vst [vmem:[#allocation2 + $0x58] sm:$0xff] 0.0
    %27 = vst [vmem:[#allocation2 + $0x60] sm:$0xff] 0.0
    %28 = vst [vmem:[#allocation2 + $0x68] sm:$0xff] 0.0
    %29 = vst [vmem:[#allocation2 + $0x70] sm:$0xff] 0.0
    %30 = vst [vmem:[#allocation2 + $0x78] sm:$0xff] 0.0
    %31 = vst [vmem:[#allocation2 + $0x80] sm:$0xff] 0.0
    %32 = vst [vmem:[#allocation2 + $0x88] sm:$0xff] 0.0
    %33 = vst [vmem:[#allocation2 + $0x90] sm:$0xff] 0.0
    %34 = vst [vmem:[#allocation2 + $0x98] sm:$0xff] 0.0
    %35 = vst [vmem:[#allocation2 + $0xa0] sm:$0xff] 0.0
    %36 = vst [vmem:[#allocation2 + $0xa8] sm:$0xff] 0.0
    %37 = vst [vmem:[#allocation2 + $0xb0] sm:$0xff] 0.0
    %38 = vst [vmem:[#allocation2 + $0xb8] sm:$0xff] 0.0
    %39 = vst [vmem:[#allocation2 + $0xc0] sm:$0xff] 0.0
    %40 = vst [vmem:[#allocation2 + $0xc8] sm:$0xff] 0.0
    %41 = vst [vmem:[#allocation2 + $0xd0] sm:$0xff] 0.0
    %42 = vst [vmem:[#allocation2 + $0xd8] sm:$0xff] 0.0
    %43 = vst [vmem:[#allocation2 + $0xe0] sm:$0xff] 0.0
    %44 = vst [vmem:[#allocation2 + $0xe8] sm:$0xff] 0.0
    %45 = vst [vmem:[#allocation2 + $0xf0] sm:$0xff] 0.0
    %46 = vst [vmem:[#allocation2 + $0xf8] sm:$0xff] 0.0
  $region13: #{_lambda_.31} parent=0 // pred_fallthru
    _
  %v47 = vld [vmem:[#allocation2] sm:$0xff]
  %v48 = vld [vmem:[#allocation2 + $0x8] sm:$0xff]
  %v49 = vld [vmem:[#allocation2 + $0x10] sm:$0xff]
  %v50 = vld [vmem:[#allocation2 + $0x18] sm:$0xff]
  %v51 = vld [vmem:[#allocation2 + $0x20] sm:$0xff]
  %v52 = vld [vmem:[#allocation2 + $0x28] sm:$0xff]
  %v53 = vld [vmem:[#allocation2 + $0x30] sm:$0xff]
  %v54 = vld [vmem:[#allocation2 + $0x38] sm:$0xff]
  %v55 = vld [vmem:[#allocation2 + $0x40] sm:$0xff]
  %v56 = vld [vmem:[#allocation2 + $0x48] sm:$0xff]
  %v57 = vld [vmem:[#allocation2 + $0x50] sm:$0xff]
  %v58 = vld [vmem:[#allocation2 + $0x58] sm:$0xff]
  %v59 = vld [vmem:[#allocation2 + $0x60] sm:$0xff]
  %v60 = vld [vmem:[#allocation2 + $0x68] sm:$0xff]
  %v61 = vld [vmem:[#allocation2 + $0x70] sm:$0xff]
  %v62 = vld [vmem:[#allocation2 + $0x78] sm:$0xff]
  %v63 = vld [vmem:[#allocation2 + $0x80] sm:$0xff]
  %v64 = vld [vmem:[#allocation2 + $0x88] sm:$0xff]
  %v65 = vld [vmem:[#allocation2 + $0x90] sm:$0xff]
  %v66 = vld [vmem:[#allocation2 + $0x98] sm:$0xff]
  %v67 = vld [vmem:[#allocation2 + $0xa0] sm:$0xff]
  %v68 = vld [vmem:[#allocation2 + $0xa8] sm:$0xff]
  %v69 = vld [vmem:[#allocation2 + $0xb0] sm:$0xff]
  %v70 = vld [vmem:[#allocation2 + $0xb8] sm:$0xff]
  %v71 = vld [vmem:[#allocation2 + $0xc0] sm:$0xff]
  %v72 = vld [vmem:[#allocation2 + $0xc8] sm:$0xff]
  %v73 = vld [vmem:[#allocation2 + $0xd0] sm:$0xff]
  %v74 = vld [vmem:[#allocation2 + $0xd8] sm:$0xff]
  %v75 = vld [vmem:[#allocation2 + $0xe0] sm:$0xff]
  %v76 = vld [vmem:[#allocation2 + $0xe8] sm:$0xff]
  %v77 = vld [vmem:[#allocation2 + $0xf0] sm:$0xff]
  %v78 = vld [vmem:[#allocation2 + $0xf8] sm:$0xff]
  %v79 = vld [vmem:[%s0] sm:$0xf]
  %v80 = vld [vmem:[%s0 + $0x4] sm:$0xf]
  %v81 = vld [vmem:[%s0 + $0x8] sm:$0xf]
  %v82 = vld [vmem:[%s0 + $0xc] sm:$0xf]
  %v83 = vld [vmem:[%s0 + $0x10] sm:$0xf]
  %v84 = vld [vmem:[%s0 + $0x14] sm:$0xf]
  %v85 = vld [vmem:[%s0 + $0x18] sm:$0xf]
  %v86 = vld [vmem:[%s0 + $0x1c] sm:$0xf]
  %v87 = vld [vmem:[%s0 + $0x20] sm:$0xf]
  %v88 = vld [vmem:[%s0 + $0x24] sm:$0xf]
  %v89 = vld [vmem:[%s0 + $0x28] sm:$0xf]
  %v90 = vld [vmem:[%s0 + $0x2c] sm:$0xf]
  %v91 = vld [vmem:[%s0 + $0x30] sm:$0xf]
  %v92 = vld [vmem:[%s0 + $0x34] sm:$0xf]
  %v93 = vld [vmem:[%s0 + $0x38] sm:$0xf]
  %v94 = vld [vmem:[%s0 + $0x3c] sm:$0xf]
  %v95 = vld [vmem:[%s0 + $0x40] sm:$0xf]
  %v96 = vld [vmem:[%s0 + $0x44] sm:$0xf]
  %v97 = vld [vmem:[%s0 + $0x48] sm:$0xf]
  %v98 = vld [vmem:[%s0 + $0x4c] sm:$0xf]
  %v99 = vld [vmem:[%s0 + $0x50] sm:$0xf]
  %v100 = vld [vmem:[%s0 + $0x54] sm:$0xf]
  %v101 = vld [vmem:[%s0 + $0x58] sm:$0xf]
  %v102 = vld [vmem:[%s0 + $0x5c] sm:$0xf]
  %v103 = vld [vmem:[%s0 + $0x60] sm:$0xf]
  %v104 = vld [vmem:[%s0 + $0x64] sm:$0xf]
  %v105 = vld [vmem:[%s0 + $0x68] sm:$0xf]
  %v106 = vld [vmem:[%s0 + $0x6c] sm:$0xf]
  %v107 = vld [vmem:[%s0 + $0x70] sm:$0xf]
  %v108 = vld [vmem:[%s0 + $0x74] sm:$0xf]
  %v109 = vld [vmem:[%s0 + $0x78] sm:$0xf]
  %v110 = vld [vmem:[%s0 + $0x7c] sm:$0xf]
  %v111 = vld [vmem:[%s1] sm:$0xf]
  %v112 = vld [vmem:[%s1 + $0x4] sm:$0xf]
  %v113 = vld [vmem:[%s1 + $0x8] sm:$0xf]
  %v114 = vld [vmem:[%s1 + $0xc] sm:$0xf]
  %v115 = vld [vmem:[%s1 + $0x10] sm:$0xf]
  %v116 = vld [vmem:[%s1 + $0x14] sm:$0xf]
  %v117 = vld [vmem:[%s1 + $0x18] sm:$0xf]
  %v118 = vld [vmem:[%s1 + $0x1c] sm:$0xf]
  %v119 = vld [vmem:[%s1 + $0x20] sm:$0xf]
  %v120 = vld [vmem:[%s1 + $0x24] sm:$0xf]
  %v121 = vld [vmem:[%s1 + $0x28] sm:$0xf]
  %v122 = vld [vmem:[%s1 + $0x2c] sm:$0xf]
  %v123 = vld [vmem:[%s1 + $0x30] sm:$0xf]
  %v124 = vld [vmem:[%s1 + $0x34] sm:$0xf]
  %v125 = vld [vmem:[%s1 + $0x38] sm:$0xf]
  %v126 = vld [vmem:[%s1 + $0x3c] sm:$0xf]
  %v159 = vunpack.c.l.b16 %v79
  %v160 = vunpack.c.l.b16 %v80
  %v161 = vunpack.c.l.b16 %v81
  %v162 = vunpack.c.l.b16 %v82
  %v163 = vunpack.c.l.b16 %v83
  %v164 = vunpack.c.l.b16 %v84
  %v165 = vunpack.c.l.b16 %v85
  %v166 = vunpack.c.l.b16 %v86
  %v167 = vunpack.c.l.b16 %v87
  %v168 = vunpack.c.l.b16 %v88
  %v169 = vunpack.c.l.b16 %v89
  %v170 = vunpack.c.l.b16 %v90
  %v171 = vunpack.c.l.b16 %v91
  %v172 = vunpack.c.l.b16 %v92
  %v173 = vunpack.c.l.b16 %v93
  %v174 = vunpack.c.l.b16 %v94
  %v175 = vunpack.c.l.b16 %v95
  %v176 = vunpack.c.l.b16 %v96
  %v177 = vunpack.c.l.b16 %v97
  %v178 = vunpack.c.l.b16 %v98
  %v179 = vunpack.c.l.b16 %v99
  %v180 = vunpack.c.l.b16 %v100
  %v181 = vunpack.c.l.b16 %v101
  %v182 = vunpack.c.l.b16 %v102
  %v183 = vunpack.c.l.b16 %v103
  %v184 = vunpack.c.l.b16 %v104
  %v185 = vunpack.c.l.b16 %v105
  %v186 = vunpack.c.l.b16 %v106
  %v187 = vunpack.c.l.b16 %v107
  %v188 = vunpack.c.l.b16 %v108
  %v189 = vunpack.c.l.b16 %v109
  %v190 = vunpack.c.l.b16 %v110
  %v191 = vpack.c.b16 %v160, %v159
  %v192 = vpack.c.b16 %v162, %v161
  %v193 = vpack.c.b16 %v164, %v163
  %v194 = vpack.c.b16 %v166, %v165
  %v195 = vpack.c.b16 %v168, %v167
  %v196 = vpack.c.b16 %v170, %v169
  %v197 = vpack.c.b16 %v172, %v171
  %v198 = vpack.c.b16 %v174, %v173
  %v199 = vpack.c.b16 %v176, %v175
  %v200 = vpack.c.b16 %v178, %v177
  %v201 = vpack.c.b16 %v180, %v179
  %v202 = vpack.c.b16 %v182, %v181
  %v203 = vpack.c.b16 %v184, %v183
  %v204 = vpack.c.b16 %v186, %v185
  %v205 = vpack.c.b16 %v188, %v187
  %v206 = vpack.c.b16 %v190, %v189
  %v239 = vunpack.c.l.b16 %v111
  %v240 = vunpack.c.l.b16 %v112
  %v241 = vunpack.c.l.b16 %v113
  %v242 = vunpack.c.l.b16 %v114
  %v243 = vunpack.c.l.b16 %v115
  %v244 = vunpack.c.l.b16 %v116
  %v245 = vunpack.c.l.b16 %v117
  %v246 = vunpack.c.l.b16 %v118
  %v247 = vunpack.c.l.b16 %v119
  %v248 = vunpack.c.l.b16 %v120
  %v249 = vunpack.c.l.b16 %v121
  %v250 = vunpack.c.l.b16 %v122
  %v251 = vunpack.c.l.b16 %v123
  %v252 = vunpack.c.l.b16 %v124
  %v253 = vunpack.c.l.b16 %v125
  %v254 = vunpack.c.l.b16 %v126
  %v255 = vpack.c.b16 %v240, %v239
  %v256 = vpack.c.b16 %v242, %v241
  %v257 = vpack.c.b16 %v244, %v243
  %v258 = vpack.c.b16 %v246, %v245
  %v259 = vpack.c.b16 %v248, %v247
  %v260 = vpack.c.b16 %v250, %v249
  %v261 = vpack.c.b16 %v252, %v251
  %v262 = vpack.c.b16 %v254, %v253
  %271 = vmatpush.bf16.msra.mxu0 %v262
  %272 = vmatpush.bf16.msra.mxu0 %v261
  %273 = vmatpush.bf16.msra.mxu0 %v260
  %274 = vmatpush.bf16.msra.mxu0 %v259
  %275 = vmatpush.bf16.msra.mxu0 %v258
  %276 = vmatpush.bf16.msra.mxu0 %v257
  %277 = vmatpush.bf16.msra.mxu0 %v256
  %278 = vmatpush.bf16.msra.mxu0 %v255
  %279 = vmatmul.bf16.gmra.mxu0 %v191
  %v280 = vpop.f32.mrf.mxu0
  %v281 = vadd.f32 0.0, %v280
  %v282 = vpop.f32.mrf.mxu0
  %v283 = vadd.f32 0.0, %v282
  %284 = vmatmul.bf16.gmra.mxu0 %v192
  %v285 = vpop.f32.mrf.mxu0
  %v286 = vadd.f32 0.0, %v285
  %v287 = vpop.f32.mrf.mxu0
  %v288 = vadd.f32 0.0, %v287
  %289 = vmatmul.bf16.gmra.mxu0 %v193
  %v290 = vpop.f32.mrf.mxu0
  %v291 = vadd.f32 0.0, %v290
  %v292 = vpop.f32.mrf.mxu0
  %v293 = vadd.f32 0.0, %v292
  %294 = vmatmul.bf16.gmra.mxu0 %v194
  %v295 = vpop.f32.mrf.mxu0
  %v296 = vadd.f32 0.0, %v295
  %v297 = vpop.f32.mrf.mxu0
  %v298 = vadd.f32 0.0, %v297
  %299 = vmatmul.bf16.gmra.mxu0 %v195
  %v300 = vpop.f32.mrf.mxu0
  %v301 = vadd.f32 0.0, %v300
  %v302 = vpop.f32.mrf.mxu0
  %v303 = vadd.f32 0.0, %v302
  %304 = vmatmul.bf16.gmra.mxu0 %v196
  %v305 = vpop.f32.mrf.mxu0
  %v306 = vadd.f32 0.0, %v305
  %v307 = vpop.f32.mrf.mxu0
  %v308 = vadd.f32 0.0, %v307
  %309 = vmatmul.bf16.gmra.mxu0 %v197
  %v310 = vpop.f32.mrf.mxu0
  %v311 = vadd.f32 0.0, %v310
  %v312 = vpop.f32.mrf.mxu0
  %v313 = vadd.f32 0.0, %v312
  %314 = vmatmul.bf16.gmra.mxu0 %v198
  %v315 = vpop.f32.mrf.mxu0
  %v316 = vadd.f32 0.0, %v315
  %v317 = vpop.f32.mrf.mxu0
  %v318 = vadd.f32 0.0, %v317
  %319 = vmatmul.bf16.gmra.mxu0 %v199
  %v320 = vpop.f32.mrf.mxu0
  %v321 = vadd.f32 0.0, %v320
  %v322 = vpop.f32.mrf.mxu0
  %v323 = vadd.f32 0.0, %v322
  %324 = vmatmul.bf16.gmra.mxu0 %v200
  %v325 = vpop.f32.mrf.mxu0
  %v326 = vadd.f32 0.0, %v325
  %v327 = vpop.f32.mrf.mxu0
  %v328 = vadd.f32 0.0, %v327
  %329 = vmatmul.bf16.gmra.mxu0 %v201
  %v330 = vpop.f32.mrf.mxu0
  %v331 = vadd.f32 0.0, %v330
  %v332 = vpop.f32.mrf.mxu0
  %v333 = vadd.f32 0.0, %v332
  %334 = vmatmul.bf16.gmra.mxu0 %v202
  %v335 = vpop.f32.mrf.mxu0
  %v336 = vadd.f32 0.0, %v335
  %v337 = vpop.f32.mrf.mxu0
  %v338 = vadd.f32 0.0, %v337
  %339 = vmatmul.bf16.gmra.mxu0 %v203
  %v340 = vpop.f32.mrf.mxu0
  %v341 = vadd.f32 0.0, %v340
  %v342 = vpop.f32.mrf.mxu0
  %v343 = vadd.f32 0.0, %v342
  %344 = vmatmul.bf16.gmra.mxu0 %v204
  %v345 = vpop.f32.mrf.mxu0
  %v346 = vadd.f32 0.0, %v345
  %v347 = vpop.f32.mrf.mxu0
  %v348 = vadd.f32 0.0, %v347
  %349 = vmatmul.bf16.gmra.mxu0 %v205
  %v350 = vpop.f32.mrf.mxu0
  %v351 = vadd.f32 0.0, %v350
  %v352 = vpop.f32.mrf.mxu0
  %v353 = vadd.f32 0.0, %v352
  %354 = vmatmul.bf16.gmra.mxu0 %v206
  %v355 = vpop.f32.mrf.mxu0
  %v356 = vadd.f32 0.0, %v355
  %v357 = vpop.f32.mrf.mxu0
  %v358 = vadd.f32 0.0, %v357
  %359 = vdwg.mxu0
  %v360 = vadd.f32 %v47, %v281
  %v361 = vadd.f32 %v48, %v283
  %v362 = vadd.f32 %v49, %v286
  %v363 = vadd.f32 %v50, %v288
  %v364 = vadd.f32 %v51, %v291
  %v365 = vadd.f32 %v52, %v293
  %v366 = vadd.f32 %v53, %v296
  %v367 = vadd.f32 %v54, %v298
  %v368 = vadd.f32 %v55, %v301
  %v369 = vadd.f32 %v56, %v303
  %v370 = vadd.f32 %v57, %v306
  %v371 = vadd.f32 %v58, %v308
  %v372 = vadd.f32 %v59, %v311
  %v373 = vadd.f32 %v60, %v313
  %v374 = vadd.f32 %v61, %v316
  %v375 = vadd.f32 %v62, %v318
  %v376 = vadd.f32 %v63, %v321
  %v377 = vadd.f32 %v64, %v323
  %v378 = vadd.f32 %v65, %v326
  %v379 = vadd.f32 %v66, %v328
  %v380 = vadd.f32 %v67, %v331
  %v381 = vadd.f32 %v68, %v333
  %v382 = vadd.f32 %v69, %v336
  %v383 = vadd.f32 %v70, %v338
  %v384 = vadd.f32 %v71, %v341
  %v385 = vadd.f32 %v72, %v343
  %v386 = vadd.f32 %v73, %v346
  %v387 = vadd.f32 %v74, %v348
  %v388 = vadd.f32 %v75, %v351
  %v389 = vadd.f32 %v76, %v353
  %v390 = vadd.f32 %v77, %v356
  %v391 = vadd.f32 %v78, %v358
  %392 = vst [vmem:[#allocation2] sm:$0xff] %v360
  %393 = vst [vmem:[#allocation2 + $0x8] sm:$0xff] %v361
  %394 = vst [vmem:[#allocation2 + $0x10] sm:$0xff] %v362
  %395 = vst [vmem:[#allocation2 + $0x18] sm:$0xff] %v363
  %396 = vst [vmem:[#allocation2 + $0x20] sm:$0xff] %v364
  %397 = vst [vmem:[#allocation2 + $0x28] sm:$0xff] %v365
  %398 = vst [vmem:[#allocation2 + $0x30] sm:$0xff] %v366
  %399 = vst [vmem:[#allocation2 + $0x38] sm:$0xff] %v367
  %400 = vst [vmem:[#allocation2 + $0x40] sm:$0xff] %v368
  %401 = vst [vmem:[#allocation2 + $0x48] sm:$0xff] %v369
  %402 = vst [vmem:[#allocation2 + $0x50] sm:$0xff] %v370
  %403 = vst [vmem:[#allocation2 + $0x58] sm:$0xff] %v371
  %404 = vst [vmem:[#allocation2 + $0x60] sm:$0xff] %v372
  %405 = vst [vmem:[#allocation2 + $0x68] sm:$0xff] %v373
  %406 = vst [vmem:[#allocation2 + $0x70] sm:$0xff] %v374
  %407 = vst [vmem:[#allocation2 + $0x78] sm:$0xff] %v375
  %408 = vst [vmem:[#allocation2 + $0x80] sm:$0xff] %v376
  %409 = vst [vmem:[#allocation2 + $0x88] sm:$0xff] %v377
  %410 = vst [vmem:[#allocation2 + $0x90] sm:$0xff] %v378
  %411 = vst [vmem:[#allocation2 + $0x98] sm:$0xff] %v379
  %412 = vst [vmem:[#allocation2 + $0xa0] sm:$0xff] %v380
  %413 = vst [vmem:[#allocation2 + $0xa8] sm:$0xff] %v381
  %414 = vst [vmem:[#allocation2 + $0xb0] sm:$0xff] %v382
  %415 = vst [vmem:[#allocation2 + $0xb8] sm:$0xff] %v383
  %416 = vst [vmem:[#allocation2 + $0xc0] sm:$0xff] %v384
  %417 = vst [vmem:[#allocation2 + $0xc8] sm:$0xff] %v385
  %418 = vst [vmem:[#allocation2 + $0xd0] sm:$0xff] %v386
  %419 = vst [vmem:[#allocation2 + $0xd8] sm:$0xff] %v387
  %420 = vst [vmem:[#allocation2 + $0xe0] sm:$0xff] %v388
  %421 = vst [vmem:[#allocation2 + $0xe8] sm:$0xff] %v389
  %422 = vst [vmem:[#allocation2 + $0xf0] sm:$0xff] %v390
  %423 = vst [vmem:[#allocation2 + $0xf8] sm:$0xff] %v391
  // Predicated region
  $region14: #{_lambda_.31} parent=0 // pred_check
    %p424 = pneg %p11
  $region15: #{_lambda_.31} parent=0 // pred_check_branch
    %426 = sbr.rel (%p424) target = $region17
  $region16: #{_lambda_.31} parent=0 // pred_region
    %v427 = vld [vmem:[#allocation2] sm:$0xff]
    %v428 = vld [vmem:[#allocation2 + $0x8] sm:$0xff]
    %v429 = vld [vmem:[#allocation2 + $0x10] sm:$0xff]
    %v430 = vld [vmem:[#allocation2 + $0x18] sm:$0xff]
    %v431 = vld [vmem:[#allocation2 + $0x20] sm:$0xff]
    %v432 = vld [vmem:[#allocation2 + $0x28] sm:$0xff]
    %v433 = vld [vmem:[#allocation2 + $0x30] sm:$0xff]
    %v434 = vld [vmem:[#allocation2 + $0x38] sm:$0xff]
    %v435 = vld [vmem:[#allocation2 + $0x40] sm:$0xff]
    %v436 = vld [vmem:[#allocation2 + $0x48] sm:$0xff]
    %v437 = vld [vmem:[#allocation2 + $0x50] sm:$0xff]
    %v438 = vld [vmem:[#allocation2 + $0x58] sm:$0xff]
    %v439 = vld [vmem:[#allocation2 + $0x60] sm:$0xff]
    %v440 = vld [vmem:[#allocation2 + $0x68] sm:$0xff]
    %v441 = vld [vmem:[#allocation2 + $0x70] sm:$0xff]
    %v442 = vld [vmem:[#allocation2 + $0x78] sm:$0xff]
    %v443 = vld [vmem:[#allocation2 + $0x80] sm:$0xff]
    %v444 = vld [vmem:[#allocation2 + $0x88] sm:$0xff]
    %v445 = vld [vmem:[#allocation2 + $0x90] sm:$0xff]
    %v446 = vld [vmem:[#allocation2 + $0x98] sm:$0xff]
    %v447 = vld [vmem:[#allocation2 + $0xa0] sm:$0xff]
    %v448 = vld [vmem:[#allocation2 + $0xa8] sm:$0xff]
    %v449 = vld [vmem:[#allocation2 + $0xb0] sm:$0xff]
    %v450 = vld [vmem:[#allocation2 + $0xb8] sm:$0xff]
    %v451 = vld [vmem:[#allocation2 + $0xc0] sm:$0xff]
    %v452 = vld [vmem:[#allocation2 + $0xc8] sm:$0xff]
    %v453 = vld [vmem:[#allocation2 + $0xd0] sm:$0xff]
    %v454 = vld [vmem:[#allocation2 + $0xd8] sm:$0xff]
    %v455 = vld [vmem:[#allocation2 + $0xe0] sm:$0xff]
    %v456 = vld [vmem:[#allocation2 + $0xe8] sm:$0xff]
    %v457 = vld [vmem:[#allocation2 + $0xf0] sm:$0xff]
    %v458 = vld [vmem:[#allocation2 + $0xf8] sm:$0xff]
    %v459 = vpack.c.bf16 %v427, %v427
    %v460 = vpack.c.bf16 %v428, %v428
    %v461 = vpack.c.bf16 %v429, %v429
    %v462 = vpack.c.bf16 %v430, %v430
    %v463 = vpack.c.bf16 %v431, %v431
    %v464 = vpack.c.bf16 %v432, %v432
    %v465 = vpack.c.bf16 %v433, %v433
    %v466 = vpack.c.bf16 %v434, %v434
    %v467 = vpack.c.bf16 %v435, %v435
    %v468 = vpack.c.bf16 %v436, %v436
    %v469 = vpack.c.bf16 %v437, %v437
    %v470 = vpack.c.bf16 %v438, %v438
    %v471 = vpack.c.bf16 %v439, %v439
    %v472 = vpack.c.bf16 %v440, %v440
    %v473 = vpack.c.bf16 %v441, %v441
    %v474 = vpack.c.bf16 %v442, %v442
    %v475 = vpack.c.bf16 %v443, %v443
    %v476 = vpack.c.bf16 %v444, %v444
    %v477 = vpack.c.bf16 %v445, %v445
    %v478 = vpack.c.bf16 %v446, %v446
    %v479 = vpack.c.bf16 %v447, %v447
    %v480 = vpack.c.bf16 %v448, %v448
    %v481 = vpack.c.bf16 %v449, %v449
    %v482 = vpack.c.bf16 %v450, %v450
    %v483 = vpack.c.bf16 %v451, %v451
    %v484 = vpack.c.bf16 %v452, %v452
    %v485 = vpack.c.bf16 %v453, %v453
    %v486 = vpack.c.bf16 %v454, %v454
    %v487 = vpack.c.bf16 %v455, %v455
    %v488 = vpack.c.bf16 %v456, %v456
    %v489 = vpack.c.bf16 %v457, %v457
    %v490 = vpack.c.bf16 %v458, %v458
    %491 = vst [vmem:[%s2] sm:$0xf] %v459
    %492 = vst [vmem:[%s2 + $0x4] sm:$0xf] %v460
    %493 = vst [vmem:[%s2 + $0x8] sm:$0xf] %v461
    %494 = vst [vmem:[%s2 + $0xc] sm:$0xf] %v462
    %495 = vst [vmem:[%s2 + $0x10] sm:$0xf] %v463
    %496 = vst [vmem:[%s2 + $0x14] sm:$0xf] %v464
    %497 = vst [vmem:[%s2 + $0x18] sm:$0xf] %v465
    %498 = vst [vmem:[%s2 + $0x1c] sm:$0xf] %v466
    %499 = vst [vmem:[%s2 + $0x20] sm:$0xf] %v467
    %500 = vst [vmem:[%s2 + $0x24] sm:$0xf] %v468
    %501 = vst [vmem:[%s2 + $0x28] sm:$0xf] %v469
    %502 = vst [vmem:[%s2 + $0x2c] sm:$0xf] %v470
    %503 = vst [vmem:[%s2 + $0x30] sm:$0xf] %v471
    %504 = vst [vmem:[%s2 + $0x34] sm:$0xf] %v472
    %505 = vst [vmem:[%s2 + $0x38] sm:$0xf] %v473
    %506 = vst [vmem:[%s2 + $0x3c] sm:$0xf] %v474
    %507 = vst [vmem:[%s2 + $0x40] sm:$0xf] %v475
    %508 = vst [vmem:[%s2 + $0x44] sm:$0xf] %v476
    %509 = vst [vmem:[%s2 + $0x48] sm:$0xf] %v477
    %510 = vst [vmem:[%s2 + $0x4c] sm:$0xf] %v478
    %511 = vst [vmem:[%s2 + $0x50] sm:$0xf] %v479
    %512 = vst [vmem:[%s2 + $0x54] sm:$0xf] %v480
    %513 = vst [vmem:[%s2 + $0x58] sm:$0xf] %v481
    %514 = vst [vmem:[%s2 + $0x5c] sm:$0xf] %v482
    %515 = vst [vmem:[%s2 + $0x60] sm:$0xf] %v483
    %516 = vst [vmem:[%s2 + $0x64] sm:$0xf] %v484
    %517 = vst [vmem:[%s2 + $0x68] sm:$0xf] %v485
    %518 = vst [vmem:[%s2 + $0x6c] sm:$0xf] %v486
    %519 = vst [vmem:[%s2 + $0x70] sm:$0xf] %v487
    %520 = vst [vmem:[%s2 + $0x74] sm:$0xf] %v488
    %521 = vst [vmem:[%s2 + $0x78] sm:$0xf] %v489
    %522 = vst [vmem:[%s2 + $0x7c] sm:$0xf] %v490
  $region17: #{_lambda_.31} parent=0 // pred_fallthru
    _
  // Predicated region
  $region18: #{_lambda_.31} parent=0 // pred_check
    _
  $region19: #{_lambda_.31} parent=0 // pred_check_branch
    %524 = sbr.rel (0) target = $region21
  $region20: #{_lambda_.31} parent=0 // pred_region
    _
  $region21: #{_lambda_.31} parent=0 // pred_fallthru
    _
  // Predicated region
  $region22: #{_lambda_.31} parent=0 // pred_check
    _
  $region23: #{_lambda_.31} parent=0 // pred_check_branch
    %526 = sbr.rel (0) target = $region25
  $region24: #{_lambda_.31} parent=0 // pred_region
    _
  $region25: #{_lambda_.31} parent=0 // pred_fallthru
    _

// kernel: _lambda_.33
$region0: #{_lambda_.33}
  #allocation0 [shape = 'u32[]', space=smem, size = 0x4, offset = 0x4, fixed_abs, tag = 'smem constant byte address 0x4 - core index']
  #allocation1 [shape = 'u32[72,128]{1,0:T(1,128)}', space=vmem, size = 0x9000, scoped, tag = 'internal scratch']
  %s0 = inlined_call_operand.vmem [shape: bf16[256,128], index: 0, kind: input, shape index: {}]
  %s1 = inlined_call_operand.vmem [shape: f32[1,128], index: 1, kind: input, shape index: {}]
  %s2 = inlined_call_operand.vmem [shape: f32[1,128], index: 2, kind: input, shape index: {}]
  %s3 = inlined_call_operand.vmem [shape: f32[1,128], index: 3, kind: input, shape index: {}]
  %s4 = inlined_call_operand.vmem [shape: f32[1,128], index: 4, kind: input, shape index: {}]
  %s5 = inlined_call_operand.vmem [shape: bf16[256,128], index: 5, kind: output, shape index: {}]
  %s6 = sld [smem:[#allocation0]]
  $region30: #{_lambda_.33} parent=0
    _
  %s8 = ssub.s32 1, %s6
  %s9 = scalar_select 0, %s8, %s6
  // Predicated region
  $region2: #{_lambda_.33} parent=0 // pred_check
    _
  $region3: #{_lambda_.33} parent=0 // pred_check_branch
    %11 = sbr.rel (0) target = $region5
  $region4: #{_lambda_.33} parent=0 // pred_region
    _
  $region5: #{_lambda_.33} parent=0 // pred_fallthru
    _
  // Predicated region
  $region6: #{_lambda_.33} parent=0 // pred_check
    _
  $region7: #{_lambda_.33} parent=0 // pred_check_branch
    %13 = sbr.rel (0) target = $region9
  $region8: #{_lambda_.33} parent=0 // pred_region
    _
  $region9: #{_lambda_.33} parent=0 // pred_fallthru
    _
  // Predicated region
  $region10: #{_lambda_.33} parent=0 // pred_check
    _
  $region11: #{_lambda_.33} parent=0 // pred_check_branch
    %15 = sbr.rel (0) target = $region13
  $region12: #{_lambda_.33} parent=0 // pred_region
    _
  $region13: #{_lambda_.33} parent=0 // pred_fallthru
    _
  // Predicated region
  $region14: #{_lambda_.33} parent=0 // pred_check
    _
  $region15: #{_lambda_.33} parent=0 // pred_check_branch
    %17 = sbr.rel (0) target = $region17
  $region16: #{_lambda_.33} parent=0 // pred_region
    _
  $region17: #{_lambda_.33} parent=0 // pred_fallthru
    _
  // Predicated region
  $region18: #{_lambda_.33} parent=0 // pred_check
    _
  $region19: #{_lambda_.33} parent=0 // pred_check_branch
    %19 = sbr.rel (0) target = $region21
  $region20: #{_lambda_.33} parent=0 // pred_region
    _
  $region21: #{_lambda_.33} parent=0 // pred_fallthru
    _
  %v20 = vld [vmem:[%s1] sm:$0x1]
  %v21 = vmul.f32 %v20, 0.0078125
  %v22 = vld [vmem:[%s2] sm:$0x1]
  %v23 = vmul.f32 %v22, 0.0078125
  %v24 = vmul.f32 %v21, %v21
  %v25 = vsub.f32 %v23, %v24
  %v26 = vld [vmem:[%s3] sm:$0x1]
  %v27 = vadd.f32 %v25, 1e-05
  %v28 = vrsqrt.pop %v27
  %v29 = vmul.f32 %v28, %v27
  %v30 = vmul.f32 %v29, %v28
  %v31 = vmul.f32 0.5, %v30
  %v32 = vsub.f32 1.5, %v31
  %v33 = vmul.f32 %v28, %v32
  %vm34 = vweird.f32 %v27
  %vm35 = vweird.f32 %v28
  %vm36 = vmor %vm34, %vm35
  %v37 = vsel %vm36, %v28, %v33
  %v38 = vmul.f32 %v26, %v37
  %v39 = vld [vmem:[%s4] sm:$0x1]
  %v40 = vmul.f32 %v21, %v38
  %v41 = vsub.f32 %v39, %v40
  %v42 = vld [vmem:[%s0] sm:$0xf]
  %v43 = vld [vmem:[%s0 + $0x4] sm:$0xf]
  %v44 = vld [vmem:[%s0 + $0x8] sm:$0xf]
  %v45 = vld [vmem:[%s0 + $0xc] sm:$0xf]
  %v46 = vld [vmem:[%s0 + $0x10] sm:$0xf]
  %v47 = vld [vmem:[%s0 + $0x14] sm:$0xf]
  %v48 = vld [vmem:[%s0 + $0x18] sm:$0xf]
  %v49 = vld [vmem:[%s0 + $0x1c] sm:$0xf]
  %v50 = vld [vmem:[%s0 + $0x20] sm:$0xf]
  %v51 = vld [vmem:[%s0 + $0x24] sm:$0xf]
  %v52 = vld [vmem:[%s0 + $0x28] sm:$0xf]
  %v53 = vld [vmem:[%s0 + $0x2c] sm:$0xf]
  %v54 = vld [vmem:[%s0 + $0x30] sm:$0xf]
  %v55 = vld [vmem:[%s0 + $0x34] sm:$0xf]
  %v56 = vld [vmem:[%s0 + $0x38] sm:$0xf]
  %v57 = vld [vmem:[%s0 + $0x3c] sm:$0xf]
  %v58 = vld [vmem:[%s0 + $0x40] sm:$0xf]
  %v59 = vld [vmem:[%s0 + $0x44] sm:$0xf]
  %v60 = vld [vmem:[%s0 + $0x48] sm:$0xf]
  %v61 = vld [vmem:[%s0 + $0x4c] sm:$0xf]
  %v62 = vld [vmem:[%s0 + $0x50] sm:$0xf]
  %v63 = vld [vmem:[%s0 + $0x54] sm:$0xf]
  %v64 = vld [vmem:[%s0 + $0x58] sm:$0xf]
  %v65 = vld [vmem:[%s0 + $0x5c] sm:$0xf]
  %v66 = vld [vmem:[%s0 + $0x60] sm:$0xf]
  %v67 = vld [vmem:[%s0 + $0x64] sm:$0xf]
  %v68 = vld [vmem:[%s0 + $0x68] sm:$0xf]
  %v69 = vld [vmem:[%s0 + $0x6c] sm:$0xf]
  %v70 = vld [vmem:[%s0 + $0x70] sm:$0xf]
  %v71 = vld [vmem:[%s0 + $0x74] sm:$0xf]
  %v72 = vld [vmem:[%s0 + $0x78] sm:$0xf]
  %v73 = vld [vmem:[%s0 + $0x7c] sm:$0xf]
  %v74 = vunpack.c.l.bf16 %v42
  %v75 = vunpack.c.l.bf16 %v43
  %v76 = vunpack.c.l.bf16 %v44
  %v77 = vunpack.c.l.bf16 %v45
  %v78 = vunpack.c.l.bf16 %v46
  %v79 = vunpack.c.l.bf16 %v47
  %v80 = vunpack.c.l.bf16 %v48
  %v81 = vunpack.c.l.bf16 %v49
  %v82 = vunpack.c.l.bf16 %v50
  %v83 = vunpack.c.l.bf16 %v51
  %v84 = vunpack.c.l.bf16 %v52
  %v85 = vunpack.c.l.bf16 %v53
  %v86 = vunpack.c.l.bf16 %v54
  %v87 = vunpack.c.l.bf16 %v55
  %v88 = vunpack.c.l.bf16 %v56
  %v89 = vunpack.c.l.bf16 %v57
  %v90 = vunpack.c.l.bf16 %v58
  %v91 = vunpack.c.l.bf16 %v59
  %v92 = vunpack.c.l.bf16 %v60
  %v93 = vunpack.c.l.bf16 %v61
  %v94 = vunpack.c.l.bf16 %v62
  %v95 = vunpack.c.l.bf16 %v63
  %v96 = vunpack.c.l.bf16 %v64
  %v97 = vunpack.c.l.bf16 %v65
  %v98 = vunpack.c.l.bf16 %v66
  %v99 = vunpack.c.l.bf16 %v67
  %v100 = vunpack.c.l.bf16 %v68
  %v101 = vunpack.c.l.bf16 %v69
  %v102 = vunpack.c.l.bf16 %v70
  %v103 = vunpack.c.l.bf16 %v71
  %v104 = vunpack.c.l.bf16 %v72
  %v105 = vunpack.c.l.bf16 %v73
  %v107 = vperm.slane %v38, 0
  %v109 = vmul.f32 %v74, %v107
  %v110 = vmul.f32 %v75, %v107
  %v111 = vmul.f32 %v76, %v107
  %v112 = vmul.f32 %v77, %v107
  %v113 = vmul.f32 %v78, %v107
  %v114 = vmul.f32 %v79, %v107
  %v115 = vmul.f32 %v80, %v107
  %v116 = vmul.f32 %v81, %v107
  %v117 = vmul.f32 %v82, %v107
  %v118 = vmul.f32 %v83, %v107
  %v119 = vmul.f32 %v84, %v107
  %v120 = vmul.f32 %v85, %v107
  %v121 = vmul.f32 %v86, %v107
  %v122 = vmul.f32 %v87, %v107
  %v123 = vmul.f32 %v88, %v107
  %v124 = vmul.f32 %v89, %v107
  %v125 = vmul.f32 %v90, %v107
  %v126 = vmul.f32 %v91, %v107
  %v127 = vmul.f32 %v92, %v107
  %v128 = vmul.f32 %v93, %v107
  %v129 = vmul.f32 %v94, %v107
  %v130 = vmul.f32 %v95, %v107
  %v131 = vmul.f32 %v96, %v107
  %v132 = vmul.f32 %v97, %v107
  %v133 = vmul.f32 %v98, %v107
  %v134 = vmul.f32 %v99, %v107
  %v135 = vmul.f32 %v100, %v107
  %v136 = vmul.f32 %v101, %v107
  %v137 = vmul.f32 %v102, %v107
  %v138 = vmul.f32 %v103, %v107
  %v139 = vmul.f32 %v104, %v107
  %v140 = vmul.f32 %v105, %v107
  %v142 = vperm.slane %v41, 0
  %v144 = vadd.f32 %v109, %v142
  %v145 = vadd.f32 %v110, %v142
  %v146 = vadd.f32 %v111, %v142
  %v147 = vadd.f32 %v112, %v142
  %v148 = vadd.f32 %v113, %v142
  %v149 = vadd.f32 %v114, %v142
  %v150 = vadd.f32 %v115, %v142
  %v151 = vadd.f32 %v116, %v142
  %v152 = vadd.f32 %v117, %v142
  %v153 = vadd.f32 %v118, %v142
  %v154 = vadd.f32 %v119, %v142
  %v155 = vadd.f32 %v120, %v142
  %v156 = vadd.f32 %v121, %v142
  %v157 = vadd.f32 %v122, %v142
  %v158 = vadd.f32 %v123, %v142
  %v159 = vadd.f32 %v124, %v142
  %v160 = vadd.f32 %v125, %v142
  %v161 = vadd.f32 %v126, %v142
  %v162 = vadd.f32 %v127, %v142
  %v163 = vadd.f32 %v128, %v142
  %v164 = vadd.f32 %v129, %v142
  %v165 = vadd.f32 %v130, %v142
  %v166 = vadd.f32 %v131, %v142
  %v167 = vadd.f32 %v132, %v142
  %v168 = vadd.f32 %v133, %v142
  %v169 = vadd.f32 %v134, %v142
  %v170 = vadd.f32 %v135, %v142
  %v171 = vadd.f32 %v136, %v142
  %v172 = vadd.f32 %v137, %v142
  %v173 = vadd.f32 %v138, %v142
  %v174 = vadd.f32 %v139, %v142
  %v175 = vadd.f32 %v140, %v142
  %v176 = vmax.f32 %v144, 0.0
  %v177 = vmax.f32 %v145, 0.0
  %v178 = vmax.f32 %v146, 0.0
  %v179 = vmax.f32 %v147, 0.0
  %v180 = vmax.f32 %v148, 0.0
  %v181 = vmax.f32 %v149, 0.0
  %v182 = vmax.f32 %v150, 0.0
  %v183 = vmax.f32 %v151, 0.0
  %v184 = vmax.f32 %v152, 0.0
  %v185 = vmax.f32 %v153, 0.0
  %v186 = vmax.f32 %v154, 0.0
  %v187 = vmax.f32 %v155, 0.0
  %v188 = vmax.f32 %v156, 0.0
  %v189 = vmax.f32 %v157, 0.0
  %v190 = vmax.f32 %v158, 0.0
  %v191 = vmax.f32 %v159, 0.0
  %v192 = vmax.f32 %v160, 0.0
  %v193 = vmax.f32 %v161, 0.0
  %v194 = vmax.f32 %v162, 0.0
  %v195 = vmax.f32 %v163, 0.0
  %v196 = vmax.f32 %v164, 0.0
  %v197 = vmax.f32 %v165, 0.0
  %v198 = vmax.f32 %v166, 0.0
  %v199 = vmax.f32 %v167, 0.0
  %v200 = vmax.f32 %v168, 0.0
  %v201 = vmax.f32 %v169, 0.0
  %v202 = vmax.f32 %v170, 0.0
  %v203 = vmax.f32 %v171, 0.0
  %v204 = vmax.f32 %v172, 0.0
  %v205 = vmax.f32 %v173, 0.0
  %v206 = vmax.f32 %v174, 0.0
  %v207 = vmax.f32 %v175, 0.0
  %v208 = vpack.c.bf16 %v176, %v176
  %v209 = vpack.c.bf16 %v177, %v177
  %v210 = vpack.c.bf16 %v178, %v178
  %v211 = vpack.c.bf16 %v179, %v179
  %v212 = vpack.c.bf16 %v180, %v180
  %v213 = vpack.c.bf16 %v181, %v181
  %v214 = vpack.c.bf16 %v182, %v182
  %v215 = vpack.c.bf16 %v183, %v183
  %v216 = vpack.c.bf16 %v184, %v184
  %v217 = vpack.c.bf16 %v185, %v185
  %v218 = vpack.c.bf16 %v186, %v186
  %v219 = vpack.c.bf16 %v187, %v187
  %v220 = vpack.c.bf16 %v188, %v188
  %v221 = vpack.c.bf16 %v189, %v189
  %v222 = vpack.c.bf16 %v190, %v190
  %v223 = vpack.c.bf16 %v191, %v191
  %v224 = vpack.c.bf16 %v192, %v192
  %v225 = vpack.c.bf16 %v193, %v193
  %v226 = vpack.c.bf16 %v194, %v194
  %v227 = vpack.c.bf16 %v195, %v195
  %v228 = vpack.c.bf16 %v196, %v196
  %v229 = vpack.c.bf16 %v197, %v197
  %v230 = vpack.c.bf16 %v198, %v198
  %v231 = vpack.c.bf16 %v199, %v199
  %v232 = vpack.c.bf16 %v200, %v200
  %v233 = vpack.c.bf16 %v201, %v201
  %v234 = vpack.c.bf16 %v202, %v202
  %v235 = vpack.c.bf16 %v203, %v203
  %v236 = vpack.c.bf16 %v204, %v204
  %v237 = vpack.c.bf16 %v205, %v205
  %v238 = vpack.c.bf16 %v206, %v206
  %v239 = vpack.c.bf16 %v207, %v207
  %240 = vst [vmem:[%s5] sm:$0xf] %v208
  %241 = vst [vmem:[%s5 + $0x4] sm:$0xf] %v209
  %242 = vst [vmem:[%s5 + $0x8] sm:$0xf] %v210
  %243 = vst [vmem:[%s5 + $0xc] sm:$0xf] %v211
  %244 = vst [vmem:[%s5 + $0x10] sm:$0xf] %v212
  %245 = vst [vmem:[%s5 + $0x14] sm:$0xf] %v213
  %246 = vst [vmem:[%s5 + $0x18] sm:$0xf] %v214
  %247 = vst [vmem:[%s5 + $0x1c] sm:$0xf] %v215
  %248 = vst [vmem:[%s5 + $0x20] sm:$0xf] %v216
  %249 = vst [vmem:[%s5 + $0x24] sm:$0xf] %v217
  %250 = vst [vmem:[%s5 + $0x28] sm:$0xf] %v218
  %251 = vst [vmem:[%s5 + $0x2c] sm:$0xf] %v219
  %252 = vst [vmem:[%s5 + $0x30] sm:$0xf] %v220
  %253 = vst [vmem:[%s5 + $0x34] sm:$0xf] %v221
  %254 = vst [vmem:[%s5 + $0x38] sm:$0xf] %v222
  %255 = vst [vmem:[%s5 + $0x3c] sm:$0xf] %v223
  %256 = vst [vmem:[%s5 + $0x40] sm:$0xf] %v224
  %257 = vst [vmem:[%s5 + $0x44] sm:$0xf] %v225
  %258 = vst [vmem:[%s5 + $0x48] sm:$0xf] %v226
  %259 = vst [vmem:[%s5 + $0x4c] sm:$0xf] %v227
  %260 = vst [vmem:[%s5 + $0x50] sm:$0xf] %v228
  %261 = vst [vmem:[%s5 + $0x54] sm:$0xf] %v229
  %262 = vst [vmem:[%s5 + $0x58] sm:$0xf] %v230
  %263 = vst [vmem:[%s5 + $0x5c] sm:$0xf] %v231
  %264 = vst [vmem:[%s5 + $0x60] sm:$0xf] %v232
  %265 = vst [vmem:[%s5 + $0x64] sm:$0xf] %v233
  %266 = vst [vmem:[%s5 + $0x68] sm:$0xf] %v234
  %267 = vst [vmem:[%s5 + $0x6c] sm:$0xf] %v235
  %268 = vst [vmem:[%s5 + $0x70] sm:$0xf] %v236
  %269 = vst [vmem:[%s5 + $0x74] sm:$0xf] %v237
  %270 = vst [vmem:[%s5 + $0x78] sm:$0xf] %v238
  %271 = vst [vmem:[%s5 + $0x7c] sm:$0xf] %v239
  // Predicated region
  $region22: #{_lambda_.33} parent=0 // pred_check
    _
  $region23: #{_lambda_.33} parent=0 // pred_check_branch
    %273 = sbr.rel (0) target = $region25
  $region24: #{_lambda_.33} parent=0 // pred_region
    _
  $region25: #{_lambda_.33} parent=0 // pred_fallthru
    _
  // Predicated region
  $region26: #{_lambda_.33} parent=0 // pred_check
    _
  $region27: #{_lambda_.33} parent=0 // pred_check_branch
    %275 = sbr.rel (0) target = $region29
  $region28: #{_lambda_.33} parent=0 // pred_region
    _
  $region29: #{_lambda_.33} parent=0 // pred_fallthru
    _

// kernel: _lambda_.36
$region0: #{_lambda_.36}
  #allocation0 [shape = 'u32[]', space=smem, size = 0x4, offset = 0x4, fixed_abs, tag = 'smem constant byte address 0x4 - core index']
  #allocation1 [shape = 'u32[72,128]{1,0:T(1,128)}', space=vmem, size = 0x9000, scoped, tag = 'internal scratch']
  %s0 = inlined_call_operand.vmem [shape: bf16[256,128], index: 0, kind: input, shape index: {}]
  %s1 = inlined_call_operand.vmem [shape: f32[1,128], index: 1, kind: input, shape index: {}]
  %s2 = inlined_call_operand.vmem [shape: f32[1,128], index: 2, kind: input, shape index: {}]
  %s3 = inlined_call_operand.vmem [shape: f32[1,128], index: 3, kind: input, shape index: {}]
  %s4 = inlined_call_operand.vmem [shape: f32[1,128], index: 4, kind: input, shape index: {}]
  %s5 = inlined_call_operand.vmem [shape: bf16[256,128], index: 5, kind: output, shape index: {}]
  %s6 = sld [smem:[#allocation0]]
  $region30: #{_lambda_.36} parent=0
    _
  %s8 = ssub.s32 1, %s6
  %s9 = scalar_select 0, %s8, %s6
  // Predicated region
  $region2: #{_lambda_.36} parent=0 // pred_check
    _
  $region3: #{_lambda_.36} parent=0 // pred_check_branch
    %11 = sbr.rel (0) target = $region5
  $region4: #{_lambda_.36} parent=0 // pred_region
    _
  $region5: #{_lambda_.36} parent=0 // pred_fallthru
    _
  // Predicated region
  $region6: #{_lambda_.36} parent=0 // pred_check
    _
  $region7: #{_lambda_.36} parent=0 // pred_check_branch
    %13 = sbr.rel (0) target = $region9
  $region8: #{_lambda_.36} parent=0 // pred_region
    _
  $region9: #{_lambda_.36} parent=0 // pred_fallthru
    _
  // Predicated region
  $region10: #{_lambda_.36} parent=0 // pred_check
    _
  $region11: #{_lambda_.36} parent=0 // pred_check_branch
    %15 = sbr.rel (0) target = $region13
  $region12: #{_lambda_.36} parent=0 // pred_region
    _
  $region13: #{_lambda_.36} parent=0 // pred_fallthru
    _
  // Predicated region
  $region14: #{_lambda_.36} parent=0 // pred_check
    _
  $region15: #{_lambda_.36} parent=0 // pred_check_branch
    %17 = sbr.rel (0) target = $region17
  $region16: #{_lambda_.36} parent=0 // pred_region
    _
  $region17: #{_lambda_.36} parent=0 // pred_fallthru
    _
  // Predicated region
  $region18: #{_lambda_.36} parent=0 // pred_check
    _
  $region19: #{_lambda_.36} parent=0 // pred_check_branch
    %19 = sbr.rel (0) target = $region21
  $region20: #{_lambda_.36} parent=0 // pred_region
    _
  $region21: #{_lambda_.36} parent=0 // pred_fallthru
    _
  %v20 = vld [vmem:[%s1] sm:$0x1]
  %v21 = vmul.f32 %v20, 0.03125
  %v22 = vld [vmem:[%s2] sm:$0x1]
  %v23 = vmul.f32 %v22, 0.03125
  %v24 = vmul.f32 %v21, %v21
  %v25 = vsub.f32 %v23, %v24
  %v26 = vld [vmem:[%s3] sm:$0x1]
  %v27 = vadd.f32 %v25, 1e-05
  %v28 = vrsqrt.pop %v27
  %v29 = vmul.f32 %v28, %v27
  %v30 = vmul.f32 %v29, %v28
  %v31 = vmul.f32 0.5, %v30
  %v32 = vsub.f32 1.5, %v31
  %v33 = vmul.f32 %v28, %v32
  %vm34 = vweird.f32 %v27
  %vm35 = vweird.f32 %v28
  %vm36 = vmor %vm34, %vm35
  %v37 = vsel %vm36, %v28, %v33
  %v38 = vmul.f32 %v26, %v37
  %v39 = vld [vmem:[%s4] sm:$0x1]
  %v40 = vmul.f32 %v21, %v38
  %v41 = vsub.f32 %v39, %v40
  %v42 = vld [vmem:[%s0] sm:$0xf]
  %v43 = vld [vmem:[%s0 + $0x4] sm:$0xf]
  %v44 = vld [vmem:[%s0 + $0x8] sm:$0xf]
  %v45 = vld [vmem:[%s0 + $0xc] sm:$0xf]
  %v46 = vld [vmem:[%s0 + $0x10] sm:$0xf]
  %v47 = vld [vmem:[%s0 + $0x14] sm:$0xf]
  %v48 = vld [vmem:[%s0 + $0x18] sm:$0xf]
  %v49 = vld [vmem:[%s0 + $0x1c] sm:$0xf]
  %v50 = vld [vmem:[%s0 + $0x20] sm:$0xf]
  %v51 = vld [vmem:[%s0 + $0x24] sm:$0xf]
  %v52 = vld [vmem:[%s0 + $0x28] sm:$0xf]
  %v53 = vld [vmem:[%s0 + $0x2c] sm:$0xf]
  %v54 = vld [vmem:[%s0 + $0x30] sm:$0xf]
  %v55 = vld [vmem:[%s0 + $0x34] sm:$0xf]
  %v56 = vld [vmem:[%s0 + $0x38] sm:$0xf]
  %v57 = vld [vmem:[%s0 + $0x3c] sm:$0xf]
  %v58 = vld [vmem:[%s0 + $0x40] sm:$0xf]
  %v59 = vld [vmem:[%s0 + $0x44] sm:$0xf]
  %v60 = vld [vmem:[%s0 + $0x48] sm:$0xf]
  %v61 = vld [vmem:[%s0 + $0x4c] sm:$0xf]
  %v62 = vld [vmem:[%s0 + $0x50] sm:$0xf]
  %v63 = vld [vmem:[%s0 + $0x54] sm:$0xf]
  %v64 = vld [vmem:[%s0 + $0x58] sm:$0xf]
  %v65 = vld [vmem:[%s0 + $0x5c] sm:$0xf]
  %v66 = vld [vmem:[%s0 + $0x60] sm:$0xf]
  %v67 = vld [vmem:[%s0 + $0x64] sm:$0xf]
  %v68 = vld [vmem:[%s0 + $0x68] sm:$0xf]
  %v69 = vld [vmem:[%s0 + $0x6c] sm:$0xf]
  %v70 = vld [vmem:[%s0 + $0x70] sm:$0xf]
  %v71 = vld [vmem:[%s0 + $0x74] sm:$0xf]
  %v72 = vld [vmem:[%s0 + $0x78] sm:$0xf]
  %v73 = vld [vmem:[%s0 + $0x7c] sm:$0xf]
  %v74 = vunpack.c.l.bf16 %v42
  %v75 = vunpack.c.l.bf16 %v43
  %v76 = vunpack.c.l.bf16 %v44
  %v77 = vunpack.c.l.bf16 %v45
  %v78 = vunpack.c.l.bf16 %v46
  %v79 = vunpack.c.l.bf16 %v47
  %v80 = vunpack.c.l.bf16 %v48
  %v81 = vunpack.c.l.bf16 %v49
  %v82 = vunpack.c.l.bf16 %v50
  %v83 = vunpack.c.l.bf16 %v51
  %v84 = vunpack.c.l.bf16 %v52
  %v85 = vunpack.c.l.bf16 %v53
  %v86 = vunpack.c.l.bf16 %v54
  %v87 = vunpack.c.l.bf16 %v55
  %v88 = vunpack.c.l.bf16 %v56
  %v89 = vunpack.c.l.bf16 %v57
  %v90 = vunpack.c.l.bf16 %v58
  %v91 = vunpack.c.l.bf16 %v59
  %v92 = vunpack.c.l.bf16 %v60
  %v93 = vunpack.c.l.bf16 %v61
  %v94 = vunpack.c.l.bf16 %v62
  %v95 = vunpack.c.l.bf16 %v63
  %v96 = vunpack.c.l.bf16 %v64
  %v97 = vunpack.c.l.bf16 %v65
  %v98 = vunpack.c.l.bf16 %v66
  %v99 = vunpack.c.l.bf16 %v67
  %v100 = vunpack.c.l.bf16 %v68
  %v101 = vunpack.c.l.bf16 %v69
  %v102 = vunpack.c.l.bf16 %v70
  %v103 = vunpack.c.l.bf16 %v71
  %v104 = vunpack.c.l.bf16 %v72
  %v105 = vunpack.c.l.bf16 %v73
  %v107 = vperm.slane %v38, 0
  %v109 = vmul.f32 %v74, %v107
  %v110 = vmul.f32 %v75, %v107
  %v111 = vmul.f32 %v76, %v107
  %v112 = vmul.f32 %v77, %v107
  %v113 = vmul.f32 %v78, %v107
  %v114 = vmul.f32 %v79, %v107
  %v115 = vmul.f32 %v80, %v107
  %v116 = vmul.f32 %v81, %v107
  %v117 = vmul.f32 %v82, %v107
  %v118 = vmul.f32 %v83, %v107
  %v119 = vmul.f32 %v84, %v107
  %v120 = vmul.f32 %v85, %v107
  %v121 = vmul.f32 %v86, %v107
  %v122 = vmul.f32 %v87, %v107
  %v123 = vmul.f32 %v88, %v107
  %v124 = vmul.f32 %v89, %v107
  %v125 = vmul.f32 %v90, %v107
  %v126 = vmul.f32 %v91, %v107
  %v127 = vmul.f32 %v92, %v107
  %v128 = vmul.f32 %v93, %v107
  %v129 = vmul.f32 %v94, %v107
  %v130 = vmul.f32 %v95, %v107
  %v131 = vmul.f32 %v96, %v107
  %v132 = vmul.f32 %v97, %v107
  %v133 = vmul.f32 %v98, %v107
  %v134 = vmul.f32 %v99, %v107
  %v135 = vmul.f32 %v100, %v107
  %v136 = vmul.f32 %v101, %v107
  %v137 = vmul.f32 %v102, %v107
  %v138 = vmul.f32 %v103, %v107
  %v139 = vmul.f32 %v104, %v107
  %v140 = vmul.f32 %v105, %v107
  %v142 = vperm.slane %v41, 0
  %v144 = vadd.f32 %v109, %v142
  %v145 = vadd.f32 %v110, %v142
  %v146 = vadd.f32 %v111, %v142
  %v147 = vadd.f32 %v112, %v142
  %v148 = vadd.f32 %v113, %v142
  %v149 = vadd.f32 %v114, %v142
  %v150 = vadd.f32 %v115, %v142
  %v151 = vadd.f32 %v116, %v142
  %v152 = vadd.f32 %v117, %v142
  %v153 = vadd.f32 %v118, %v142
  %v154 = vadd.f32 %v119, %v142
  %v155 = vadd.f32 %v120, %v142
  %v156 = vadd.f32 %v121, %v142
  %v157 = vadd.f32 %v122, %v142
  %v158 = vadd.f32 %v123, %v142
  %v159 = vadd.f32 %v124, %v142
  %v160 = vadd.f32 %v125, %v142
  %v161 = vadd.f32 %v126, %v142
  %v162 = vadd.f32 %v127, %v142
  %v163 = vadd.f32 %v128, %v142
  %v164 = vadd.f32 %v129, %v142
  %v165 = vadd.f32 %v130, %v142
  %v166 = vadd.f32 %v131, %v142
  %v167 = vadd.f32 %v132, %v142
  %v168 = vadd.f32 %v133, %v142
  %v169 = vadd.f32 %v134, %v142
  %v170 = vadd.f32 %v135, %v142
  %v171 = vadd.f32 %v136, %v142
  %v172 = vadd.f32 %v137, %v142
  %v173 = vadd.f32 %v138, %v142
  %v174 = vadd.f32 %v139, %v142
  %v175 = vadd.f32 %v140, %v142
  %v176 = vmax.f32 %v144, 0.0
  %v177 = vmax.f32 %v145, 0.0
  %v178 = vmax.f32 %v146, 0.0
  %v179 = vmax.f32 %v147, 0.0
  %v180 = vmax.f32 %v148, 0.0
  %v181 = vmax.f32 %v149, 0.0
  %v182 = vmax.f32 %v150, 0.0
  %v183 = vmax.f32 %v151, 0.0
  %v184 = vmax.f32 %v152, 0.0
  %v185 = vmax.f32 %v153, 0.0
  %v186 = vmax.f32 %v154, 0.0
  %v187 = vmax.f32 %v155, 0.0
  %v188 = vmax.f32 %v156, 0.0
  %v189 = vmax.f32 %v157, 0.0
  %v190 = vmax.f32 %v158, 0.0
  %v191 = vmax.f32 %v159, 0.0
  %v192 = vmax.f32 %v160, 0.0
  %v193 = vmax.f32 %v161, 0.0
  %v194 = vmax.f32 %v162, 0.0
  %v195 = vmax.f32 %v163, 0.0
  %v196 = vmax.f32 %v164, 0.0
  %v197 = vmax.f32 %v165, 0.0
  %v198 = vmax.f32 %v166, 0.0
  %v199 = vmax.f32 %v167, 0.0
  %v200 = vmax.f32 %v168, 0.0
  %v201 = vmax.f32 %v169, 0.0
  %v202 = vmax.f32 %v170, 0.0
  %v203 = vmax.f32 %v171, 0.0
  %v204 = vmax.f32 %v172, 0.0
  %v205 = vmax.f32 %v173, 0.0
  %v206 = vmax.f32 %v174, 0.0
  %v207 = vmax.f32 %v175, 0.0
  %v208 = vpack.c.bf16 %v176, %v176
  %v209 = vpack.c.bf16 %v177, %v177
  %v210 = vpack.c.bf16 %v178, %v178
  %v211 = vpack.c.bf16 %v179, %v179
  %v212 = vpack.c.bf16 %v180, %v180
  %v213 = vpack.c.bf16 %v181, %v181
  %v214 = vpack.c.bf16 %v182, %v182
  %v215 = vpack.c.bf16 %v183, %v183
  %v216 = vpack.c.bf16 %v184, %v184
  %v217 = vpack.c.bf16 %v185, %v185
  %v218 = vpack.c.bf16 %v186, %v186
  %v219 = vpack.c.bf16 %v187, %v187
  %v220 = vpack.c.bf16 %v188, %v188
  %v221 = vpack.c.bf16 %v189, %v189
  %v222 = vpack.c.bf16 %v190, %v190
  %v223 = vpack.c.bf16 %v191, %v191
  %v224 = vpack.c.bf16 %v192, %v192
  %v225 = vpack.c.bf16 %v193, %v193
  %v226 = vpack.c.bf16 %v194, %v194
  %v227 = vpack.c.bf16 %v195, %v195
  %v228 = vpack.c.bf16 %v196, %v196
  %v229 = vpack.c.bf16 %v197, %v197
  %v230 = vpack.c.bf16 %v198, %v198
  %v231 = vpack.c.bf16 %v199, %v199
  %v232 = vpack.c.bf16 %v200, %v200
  %v233 = vpack.c.bf16 %v201, %v201
  %v234 = vpack.c.bf16 %v202, %v202
  %v235 = vpack.c.bf16 %v203, %v203
  %v236 = vpack.c.bf16 %v204, %v204
  %v237 = vpack.c.bf16 %v205, %v205
  %v238 = vpack.c.bf16 %v206, %v206
  %v239 = vpack.c.bf16 %v207, %v207
  %240 = vst [vmem:[%s5] sm:$0xf] %v208
  %241 = vst [vmem:[%s5 + $0x4] sm:$0xf] %v209
  %242 = vst [vmem:[%s5 + $0x8] sm:$0xf] %v210
  %243 = vst [vmem:[%s5 + $0xc] sm:$0xf] %v211
  %244 = vst [vmem:[%s5 + $0x10] sm:$0xf] %v212
  %245 = vst [vmem:[%s5 + $0x14] sm:$0xf] %v213
  %246 = vst [vmem:[%s5 + $0x18] sm:$0xf] %v214
  %247 = vst [vmem:[%s5 + $0x1c] sm:$0xf] %v215
  %248 = vst [vmem:[%s5 + $0x20] sm:$0xf] %v216
  %249 = vst [vmem:[%s5 + $0x24] sm:$0xf] %v217
  %250 = vst [vmem:[%s5 + $0x28] sm:$0xf] %v218
  %251 = vst [vmem:[%s5 + $0x2c] sm:$0xf] %v219
  %252 = vst [vmem:[%s5 + $0x30] sm:$0xf] %v220
  %253 = vst [vmem:[%s5 + $0x34] sm:$0xf] %v221
  %254 = vst [vmem:[%s5 + $0x38] sm:$0xf] %v222
  %255 = vst [vmem:[%s5 + $0x3c] sm:$0xf] %v223
  %256 = vst [vmem:[%s5 + $0x40] sm:$0xf] %v224
  %257 = vst [vmem:[%s5 + $0x44] sm:$0xf] %v225
  %258 = vst [vmem:[%s5 + $0x48] sm:$0xf] %v226
  %259 = vst [vmem:[%s5 + $0x4c] sm:$0xf] %v227
  %260 = vst [vmem:[%s5 + $0x50] sm:$0xf] %v228
  %261 = vst [vmem:[%s5 + $0x54] sm:$0xf] %v229
  %262 = vst [vmem:[%s5 + $0x58] sm:$0xf] %v230
  %263 = vst [vmem:[%s5 + $0x5c] sm:$0xf] %v231
  %264 = vst [vmem:[%s5 + $0x60] sm:$0xf] %v232
  %265 = vst [vmem:[%s5 + $0x64] sm:$0xf] %v233
  %266 = vst [vmem:[%s5 + $0x68] sm:$0xf] %v234
  %267 = vst [vmem:[%s5 + $0x6c] sm:$0xf] %v235
  %268 = vst [vmem:[%s5 + $0x70] sm:$0xf] %v236
  %269 = vst [vmem:[%s5 + $0x74] sm:$0xf] %v237
  %270 = vst [vmem:[%s5 + $0x78] sm:$0xf] %v238
  %271 = vst [vmem:[%s5 + $0x7c] sm:$0xf] %v239
  // Predicated region
  $region22: #{_lambda_.36} parent=0 // pred_check
    _
  $region23: #{_lambda_.36} parent=0 // pred_check_branch
    %273 = sbr.rel (0) target = $region25
  $region24: #{_lambda_.36} parent=0 // pred_region
    _
  $region25: #{_lambda_.36} parent=0 // pred_fallthru
    _
  // Predicated region
  $region26: #{_lambda_.36} parent=0 // pred_check
    _
  $region27: #{_lambda_.36} parent=0 // pred_check_branch
    %275 = sbr.rel (0) target = $region29
  $region28: #{_lambda_.36} parent=0 // pred_region
    _
  $region29: #{_lambda_.36} parent=0 // pred_fallthru
    _

// kernel: _lambda_.34
$region0: #{_lambda_.34}
  #allocation0 [shape = 'u32[]', space=smem, size = 0x4, offset = 0x4, fixed_abs, tag = 'smem constant byte address 0x4 - core index']
  #allocation1 [shape = 'u32[72,128]{1,0:T(1,128)}', space=vmem, size = 0x9000, scoped, tag = 'internal scratch']
  #allocation2 [shape = 'f32[256,128]{1,0:T(8,128)}', space=vmem, size = 0x20000, scoped, tag = 'scratch operand']
  %s0 = inlined_call_operand.vmem [shape: bf16[256,256], index: 0, kind: input, shape index: {}]
  %s1 = inlined_call_operand.vmem [shape: bf16[256,128], index: 1, kind: input, shape index: {}]
  %s2 = inlined_call_operand.vmem [shape: bf16[256,128], index: 2, kind: output, shape index: {}]
  %s3 = sld [smem:[#allocation0]]
  $region26: #{_lambda_.34} parent=0
    _
  %s5 = ssub.s32 1, %s3
  %s6 = scalar_select 0, %s5, %s3
  // Predicated region
  $region2: #{_lambda_.34} parent=0 // pred_check
    _
  $region3: #{_lambda_.34} parent=0 // pred_check_branch
    %8 = sbr.rel (0) target = $region5
  $region4: #{_lambda_.34} parent=0 // pred_region
    _
  $region5: #{_lambda_.34} parent=0 // pred_fallthru
    _
  // Predicated region
  $region6: #{_lambda_.34} parent=0 // pred_check
    _
  $region7: #{_lambda_.34} parent=0 // pred_check_branch
    %10 = sbr.rel (0) target = $region9
  $region8: #{_lambda_.34} parent=0 // pred_region
    _
  $region9: #{_lambda_.34} parent=0 // pred_fallthru
    _
  %p11 = scmp.eq.s32.totalorder 0, 0
  // Predicated region
  $region10: #{_lambda_.34} parent=0 // pred_check
    %p12 = pneg %p11
  $region11: #{_lambda_.34} parent=0 // pred_check_branch
    %14 = sbr.rel (%p12) target = $region13
  $region12: #{_lambda_.34} parent=0 // pred_region
    %15 = vst [vmem:[#allocation2] sm:$0xff] 0.0
    %16 = vst [vmem:[#allocation2 + $0x8] sm:$0xff] 0.0
    %17 = vst [vmem:[#allocation2 + $0x10] sm:$0xff] 0.0
    %18 = vst [vmem:[#allocation2 + $0x18] sm:$0xff] 0.0
    %19 = vst [vmem:[#allocation2 + $0x20] sm:$0xff] 0.0
    %20 = vst [vmem:[#allocation2 + $0x28] sm:$0xff] 0.0
    %21 = vst [vmem:[#allocation2 + $0x30] sm:$0xff] 0.0
    %22 = vst [vmem:[#allocation2 + $0x38] sm:$0xff] 0.0
    %23 = vst [vmem:[#allocation2 + $0x40] sm:$0xff] 0.0
    %24 = vst [vmem:[#allocation2 + $0x48] sm:$0xff] 0.0
    %25 = vst [vmem:[#allocation2 + $0x50] sm:$0xff] 0.0
    %26 = vst [vmem:[#allocation2 + $0x58] sm:$0xff] 0.0
    %27 = vst [vmem:[#allocation2 + $0x60] sm:$0xff] 0.0
    %28 = vst [vmem:[#allocation2 + $0x68] sm:$0xff] 0.0
    %29 = vst [vmem:[#allocation2 + $0x70] sm:$0xff] 0.0
    %30 = vst [vmem:[#allocation2 + $0x78] sm:$0xff] 0.0
    %31 = vst [vmem:[#allocation2 + $0x80] sm:$0xff] 0.0
    %32 = vst [vmem:[#allocation2 + $0x88] sm:$0xff] 0.0
    %33 = vst [vmem:[#allocation2 + $0x90] sm:$0xff] 0.0
    %34 = vst [vmem:[#allocation2 + $0x98] sm:$0xff] 0.0
    %35 = vst [vmem:[#allocation2 + $0xa0] sm:$0xff] 0.0
    %36 = vst [vmem:[#allocation2 + $0xa8] sm:$0xff] 0.0
    %37 = vst [vmem:[#allocation2 + $0xb0] sm:$0xff] 0.0
    %38 = vst [vmem:[#allocation2 + $0xb8] sm:$0xff] 0.0
    %39 = vst [vmem:[#allocation2 + $0xc0] sm:$0xff] 0.0
    %40 = vst [vmem:[#allocation2 + $0xc8] sm:$0xff] 0.0
    %41 = vst [vmem:[#allocation2 + $0xd0] sm:$0xff] 0.0
    %42 = vst [vmem:[#allocation2 + $0xd8] sm:$0xff] 0.0
    %43 = vst [vmem:[#allocation2 + $0xe0] sm:$0xff] 0.0
    %44 = vst [vmem:[#allocation2 + $0xe8] sm:$0xff] 0.0
    %45 = vst [vmem:[#allocation2 + $0xf0] sm:$0xff] 0.0
    %46 = vst [vmem:[#allocation2 + $0xf8] sm:$0xff] 0.0
  $region13: #{_lambda_.34} parent=0 // pred_fallthru
    _
  %v47 = vld [vmem:[#allocation2] sm:$0xff]
  %v48 = vld [vmem:[#allocation2 + $0x8] sm:$0xff]
  %v49 = vld [vmem:[#allocation2 + $0x10] sm:$0xff]
  %v50 = vld [vmem:[#allocation2 + $0x18] sm:$0xff]
  %v51 = vld [vmem:[#allocation2 + $0x20] sm:$0xff]
  %v52 = vld [vmem:[#allocation2 + $0x28] sm:$0xff]
  %v53 = vld [vmem:[#allocation2 + $0x30] sm:$0xff]
  %v54 = vld [vmem:[#allocation2 + $0x38] sm:$0xff]
  %v55 = vld [vmem:[#allocation2 + $0x40] sm:$0xff]
  %v56 = vld [vmem:[#allocation2 + $0x48] sm:$0xff]
  %v57 = vld [vmem:[#allocation2 + $0x50] sm:$0xff]
  %v58 = vld [vmem:[#allocation2 + $0x58] sm:$0xff]
  %v59 = vld [vmem:[#allocation2 + $0x60] sm:$0xff]
  %v60 = vld [vmem:[#allocation2 + $0x68] sm:$0xff]
  %v61 = vld [vmem:[#allocation2 + $0x70] sm:$0xff]
  %v62 = vld [vmem:[#allocation2 + $0x78] sm:$0xff]
  %v63 = vld [vmem:[#allocation2 + $0x80] sm:$0xff]
  %v64 = vld [vmem:[#allocation2 + $0x88] sm:$0xff]
  %v65 = vld [vmem:[#allocation2 + $0x90] sm:$0xff]
  %v66 = vld [vmem:[#allocation2 + $0x98] sm:$0xff]
  %v67 = vld [vmem:[#allocation2 + $0xa0] sm:$0xff]
  %v68 = vld [vmem:[#allocation2 + $0xa8] sm:$0xff]
  %v69 = vld [vmem:[#allocation2 + $0xb0] sm:$0xff]
  %v70 = vld [vmem:[#allocation2 + $0xb8] sm:$0xff]
  %v71 = vld [vmem:[#allocation2 + $0xc0] sm:$0xff]
  %v72 = vld [vmem:[#allocation2 + $0xc8] sm:$0xff]
  %v73 = vld [vmem:[#allocation2 + $0xd0] sm:$0xff]
  %v74 = vld [vmem:[#allocation2 + $0xd8] sm:$0xff]
  %v75 = vld [vmem:[#allocation2 + $0xe0] sm:$0xff]
  %v76 = vld [vmem:[#allocation2 + $0xe8] sm:$0xff]
  %v77 = vld [vmem:[#allocation2 + $0xf0] sm:$0xff]
  %v78 = vld [vmem:[#allocation2 + $0xf8] sm:$0xff]
  %v79 = vld [vmem:[%s0] sm:$0xff]
  %v80 = vld [vmem:[%s0 + $0x8] sm:$0xff]
  %v81 = vld [vmem:[%s0 + $0x10] sm:$0xff]
  %v82 = vld [vmem:[%s0 + $0x18] sm:$0xff]
  %v83 = vld [vmem:[%s0 + $0x20] sm:$0xff]
  %v84 = vld [vmem:[%s0 + $0x28] sm:$0xff]
  %v85 = vld [vmem:[%s0 + $0x30] sm:$0xff]
  %v86 = vld [vmem:[%s0 + $0x38] sm:$0xff]
  %v87 = vld [vmem:[%s0 + $0x40] sm:$0xff]
  %v88 = vld [vmem:[%s0 + $0x48] sm:$0xff]
  %v89 = vld [vmem:[%s0 + $0x50] sm:$0xff]
  %v90 = vld [vmem:[%s0 + $0x58] sm:$0xff]
  %v91 = vld [vmem:[%s0 + $0x60] sm:$0xff]
  %v92 = vld [vmem:[%s0 + $0x68] sm:$0xff]
  %v93 = vld [vmem:[%s0 + $0x70] sm:$0xff]
  %v94 = vld [vmem:[%s0 + $0x78] sm:$0xff]
  %v95 = vld [vmem:[%s0 + $0x80] sm:$0xff]
  %v96 = vld [vmem:[%s0 + $0x88] sm:$0xff]
  %v97 = vld [vmem:[%s0 + $0x90] sm:$0xff]
  %v98 = vld [vmem:[%s0 + $0x98] sm:$0xff]
  %v99 = vld [vmem:[%s0 + $0xa0] sm:$0xff]
  %v100 = vld [vmem:[%s0 + $0xa8] sm:$0xff]
  %v101 = vld [vmem:[%s0 + $0xb0] sm:$0xff]
  %v102 = vld [vmem:[%s0 + $0xb8] sm:$0xff]
  %v103 = vld [vmem:[%s0 + $0xc0] sm:$0xff]
  %v104 = vld [vmem:[%s0 + $0xc8] sm:$0xff]
  %v105 = vld [vmem:[%s0 + $0xd0] sm:$0xff]
  %v106 = vld [vmem:[%s0 + $0xd8] sm:$0xff]
  %v107 = vld [vmem:[%s0 + $0xe0] sm:$0xff]
  %v108 = vld [vmem:[%s0 + $0xe8] sm:$0xff]
  %v109 = vld [vmem:[%s0 + $0xf0] sm:$0xff]
  %v110 = vld [vmem:[%s0 + $0xf8] sm:$0xff]
  %v111 = vld [vmem:[%s1] sm:$0xf]
  %v112 = vld [vmem:[%s1 + $0x4] sm:$0xf]
  %v113 = vld [vmem:[%s1 + $0x8] sm:$0xf]
  %v114 = vld [vmem:[%s1 + $0xc] sm:$0xf]
  %v115 = vld [vmem:[%s1 + $0x10] sm:$0xf]
  %v116 = vld [vmem:[%s1 + $0x14] sm:$0xf]
  %v117 = vld [vmem:[%s1 + $0x18] sm:$0xf]
  %v118 = vld [vmem:[%s1 + $0x1c] sm:$0xf]
  %v119 = vld [vmem:[%s1 + $0x20] sm:$0xf]
  %v120 = vld [vmem:[%s1 + $0x24] sm:$0xf]
  %v121 = vld [vmem:[%s1 + $0x28] sm:$0xf]
  %v122 = vld [vmem:[%s1 + $0x2c] sm:$0xf]
  %v123 = vld [vmem:[%s1 + $0x30] sm:$0xf]
  %v124 = vld [vmem:[%s1 + $0x34] sm:$0xf]
  %v125 = vld [vmem:[%s1 + $0x38] sm:$0xf]
  %v126 = vld [vmem:[%s1 + $0x3c] sm:$0xf]
  %v127 = vld [vmem:[%s1 + $0x40] sm:$0xf]
  %v128 = vld [vmem:[%s1 + $0x44] sm:$0xf]
  %v129 = vld [vmem:[%s1 + $0x48] sm:$0xf]
  %v130 = vld [vmem:[%s1 + $0x4c] sm:$0xf]
  %v131 = vld [vmem:[%s1 + $0x50] sm:$0xf]
  %v132 = vld [vmem:[%s1 + $0x54] sm:$0xf]
  %v133 = vld [vmem:[%s1 + $0x58] sm:$0xf]
  %v134 = vld [vmem:[%s1 + $0x5c] sm:$0xf]
  %v135 = vld [vmem:[%s1 + $0x60] sm:$0xf]
  %v136 = vld [vmem:[%s1 + $0x64] sm:$0xf]
  %v137 = vld [vmem:[%s1 + $0x68] sm:$0xf]
  %v138 = vld [vmem:[%s1 + $0x6c] sm:$0xf]
  %v139 = vld [vmem:[%s1 + $0x70] sm:$0xf]
  %v140 = vld [vmem:[%s1 + $0x74] sm:$0xf]
  %v141 = vld [vmem:[%s1 + $0x78] sm:$0xf]
  %v142 = vld [vmem:[%s1 + $0x7c] sm:$0xf]
  %v175 = vunpack.c.l.b16 %v79
  %v176 = vunpack.c.h.b16 %v79
  %v177 = vunpack.c.l.b16 %v80
  %v178 = vunpack.c.h.b16 %v80
  %v179 = vunpack.c.l.b16 %v81
  %v180 = vunpack.c.h.b16 %v81
  %v181 = vunpack.c.l.b16 %v82
  %v182 = vunpack.c.h.b16 %v82
  %v183 = vunpack.c.l.b16 %v83
  %v184 = vunpack.c.h.b16 %v83
  %v185 = vunpack.c.l.b16 %v84
  %v186 = vunpack.c.h.b16 %v84
  %v187 = vunpack.c.l.b16 %v85
  %v188 = vunpack.c.h.b16 %v85
  %v189 = vunpack.c.l.b16 %v86
  %v190 = vunpack.c.h.b16 %v86
  %v191 = vunpack.c.l.b16 %v87
  %v192 = vunpack.c.h.b16 %v87
  %v193 = vunpack.c.l.b16 %v88
  %v194 = vunpack.c.h.b16 %v88
  %v195 = vunpack.c.l.b16 %v89
  %v196 = vunpack.c.h.b16 %v89
  %v197 = vunpack.c.l.b16 %v90
  %v198 = vunpack.c.h.b16 %v90
  %v199 = vunpack.c.l.b16 %v91
  %v200 = vunpack.c.h.b16 %v91
  %v201 = vunpack.c.l.b16 %v92
  %v202 = vunpack.c.h.b16 %v92
  %v203 = vunpack.c.l.b16 %v93
  %v204 = vunpack.c.h.b16 %v93
  %v205 = vunpack.c.l.b16 %v94
  %v206 = vunpack.c.h.b16 %v94
  %v207 = vunpack.c.l.b16 %v95
  %v208 = vunpack.c.h.b16 %v95
  %v209 = vunpack.c.l.b16 %v96
  %v210 = vunpack.c.h.b16 %v96
  %v211 = vunpack.c.l.b16 %v97
  %v212 = vunpack.c.h.b16 %v97
  %v213 = vunpack.c.l.b16 %v98
  %v214 = vunpack.c.h.b16 %v98
  %v215 = vunpack.c.l.b16 %v99
  %v216 = vunpack.c.h.b16 %v99
  %v217 = vunpack.c.l.b16 %v100
  %v218 = vunpack.c.h.b16 %v100
  %v219 = vunpack.c.l.b16 %v101
  %v220 = vunpack.c.h.b16 %v101
  %v221 = vunpack.c.l.b16 %v102
  %v222 = vunpack.c.h.b16 %v102
  %v223 = vunpack.c.l.b16 %v103
  %v224 = vunpack.c.h.b16 %v103
  %v225 = vunpack.c.l.b16 %v104
  %v226 = vunpack.c.h.b16 %v104
  %v227 = vunpack.c.l.b16 %v105
  %v228 = vunpack.c.h.b16 %v105
  %v229 = vunpack.c.l.b16 %v106
  %v230 = vunpack.c.h.b16 %v106
  %v231 = vunpack.c.l.b16 %v107
  %v232 = vunpack.c.h.b16 %v107
  %v233 = vunpack.c.l.b16 %v108
  %v234 = vunpack.c.h.b16 %v108
  %v235 = vunpack.c.l.b16 %v109
  %v236 = vunpack.c.h.b16 %v109
  %v237 = vunpack.c.l.b16 %v110
  %v238 = vunpack.c.h.b16 %v110
  %v239 = vpack.c.b16 %v177, %v175
  %v240 = vpack.c.b16 %v178, %v176
  %v241 = vpack.c.b16 %v181, %v179
  %v242 = vpack.c.b16 %v182, %v180
  %v243 = vpack.c.b16 %v185, %v183
  %v244 = vpack.c.b16 %v186, %v184
  %v245 = vpack.c.b16 %v189, %v187
  %v246 = vpack.c.b16 %v190, %v188
  %v247 = vpack.c.b16 %v193, %v191
  %v248 = vpack.c.b16 %v194, %v192
  %v249 = vpack.c.b16 %v197, %v195
  %v250 = vpack.c.b16 %v198, %v196
  %v251 = vpack.c.b16 %v201, %v199
  %v252 = vpack.c.b16 %v202, %v200
  %v253 = vpack.c.b16 %v205, %v203
  %v254 = vpack.c.b16 %v206, %v204
  %v255 = vpack.c.b16 %v209, %v207
  %v256 = vpack.c.b16 %v210, %v208
  %v257 = vpack.c.b16 %v213, %v211
  %v258 = vpack.c.b16 %v214, %v212
  %v259 = vpack.c.b16 %v217, %v215
  %v260 = vpack.c.b16 %v218, %v216
  %v261 = vpack.c.b16 %v221, %v219
  %v262 = vpack.c.b16 %v222, %v220
  %v263 = vpack.c.b16 %v225, %v223
  %v264 = vpack.c.b16 %v226, %v224
  %v265 = vpack.c.b16 %v229, %v227
  %v266 = vpack.c.b16 %v230, %v228
  %v267 = vpack.c.b16 %v233, %v231
  %v268 = vpack.c.b16 %v234, %v232
  %v269 = vpack.c.b16 %v237, %v235
  %v270 = vpack.c.b16 %v238, %v236
  %v335 = vunpack.c.l.b16 %v111
  %v336 = vunpack.c.l.b16 %v112
  %v337 = vunpack.c.l.b16 %v113
  %v338 = vunpack.c.l.b16 %v114
  %v339 = vunpack.c.l.b16 %v115
  %v340 = vunpack.c.l.b16 %v116
  %v341 = vunpack.c.l.b16 %v117
  %v342 = vunpack.c.l.b16 %v118
  %v343 = vunpack.c.l.b16 %v119
  %v344 = vunpack.c.l.b16 %v120
  %v345 = vunpack.c.l.b16 %v121
  %v346 = vunpack.c.l.b16 %v122
  %v347 = vunpack.c.l.b16 %v123
  %v348 = vunpack.c.l.b16 %v124
  %v349 = vunpack.c.l.b16 %v125
  %v350 = vunpack.c.l.b16 %v126
  %v351 = vunpack.c.l.b16 %v127
  %v352 = vunpack.c.l.b16 %v128
  %v353 = vunpack.c.l.b16 %v129
  %v354 = vunpack.c.l.b16 %v130
  %v355 = vunpack.c.l.b16 %v131
  %v356 = vunpack.c.l.b16 %v132
  %v357 = vunpack.c.l.b16 %v133
  %v358 = vunpack.c.l.b16 %v134
  %v359 = vunpack.c.l.b16 %v135
  %v360 = vunpack.c.l.b16 %v136
  %v361 = vunpack.c.l.b16 %v137
  %v362 = vunpack.c.l.b16 %v138
  %v363 = vunpack.c.l.b16 %v139
  %v364 = vunpack.c.l.b16 %v140
  %v365 = vunpack.c.l.b16 %v141
  %v366 = vunpack.c.l.b16 %v142
  %v367 = vpack.c.b16 %v336, %v335
  %v368 = vpack.c.b16 %v338, %v337
  %v369 = vpack.c.b16 %v340, %v339
  %v370 = vpack.c.b16 %v342, %v341
  %v371 = vpack.c.b16 %v344, %v343
  %v372 = vpack.c.b16 %v346, %v345
  %v373 = vpack.c.b16 %v348, %v347
  %v374 = vpack.c.b16 %v350, %v349
  %v375 = vpack.c.b16 %v352, %v351
  %v376 = vpack.c.b16 %v354, %v353
  %v377 = vpack.c.b16 %v356, %v355
  %v378 = vpack.c.b16 %v358, %v357
  %v379 = vpack.c.b16 %v360, %v359
  %v380 = vpack.c.b16 %v362, %v361
  %v381 = vpack.c.b16 %v364, %v363
  %v382 = vpack.c.b16 %v366, %v365
  %399 = vmatpush.bf16.msra.mxu0 %v374
  %400 = vmatpush.bf16.msra.mxu0 %v373
  %401 = vmatpush.bf16.msra.mxu0 %v372
  %402 = vmatpush.bf16.msra.mxu0 %v371
  %403 = vmatpush.bf16.msra.mxu0 %v370
  %404 = vmatpush.bf16.msra.mxu0 %v369
  %405 = vmatpush.bf16.msra.mxu0 %v368
  %406 = vmatpush.bf16.msra.mxu0 %v367
  %407 = vmatmul.bf16.gmra.mxu0 %v239
  %v408 = vpop.f32.mrf.mxu0
  %v409 = vadd.f32 0.0, %v408
  %v410 = vpop.f32.mrf.mxu0
  %v411 = vadd.f32 0.0, %v410
  %412 = vmatmul.bf16.gmra.mxu0 %v241
  %v413 = vpop.f32.mrf.mxu0
  %v414 = vadd.f32 0.0, %v413
  %v415 = vpop.f32.mrf.mxu0
  %v416 = vadd.f32 0.0, %v415
  %417 = vmatmul.bf16.gmra.mxu0 %v243
  %v418 = vpop.f32.mrf.mxu0
  %v419 = vadd.f32 0.0, %v418
  %v420 = vpop.f32.mrf.mxu0
  %v421 = vadd.f32 0.0, %v420
  %422 = vmatmul.bf16.gmra.mxu0 %v245
  %v423 = vpop.f32.mrf.mxu0
  %v424 = vadd.f32 0.0, %v423
  %v425 = vpop.f32.mrf.mxu0
  %v426 = vadd.f32 0.0, %v425
  %427 = vmatmul.bf16.gmra.mxu0 %v247
  %v428 = vpop.f32.mrf.mxu0
  %v429 = vadd.f32 0.0, %v428
  %v430 = vpop.f32.mrf.mxu0
  %v431 = vadd.f32 0.0, %v430
  %432 = vmatmul.bf16.gmra.mxu0 %v249
  %v433 = vpop.f32.mrf.mxu0
  %v434 = vadd.f32 0.0, %v433
  %v435 = vpop.f32.mrf.mxu0
  %v436 = vadd.f32 0.0, %v435
  %437 = vmatmul.bf16.gmra.mxu0 %v251
  %v438 = vpop.f32.mrf.mxu0
  %v439 = vadd.f32 0.0, %v438
  %v440 = vpop.f32.mrf.mxu0
  %v441 = vadd.f32 0.0, %v440
  %442 = vmatmul.bf16.gmra.mxu0 %v253
  %v443 = vpop.f32.mrf.mxu0
  %v444 = vadd.f32 0.0, %v443
  %v445 = vpop.f32.mrf.mxu0
  %v446 = vadd.f32 0.0, %v445
  %447 = vmatmul.bf16.gmra.mxu0 %v255
  %v448 = vpop.f32.mrf.mxu0
  %v449 = vadd.f32 0.0, %v448
  %v450 = vpop.f32.mrf.mxu0
  %v451 = vadd.f32 0.0, %v450
  %452 = vmatmul.bf16.gmra.mxu0 %v257
  %v453 = vpop.f32.mrf.mxu0
  %v454 = vadd.f32 0.0, %v453
  %v455 = vpop.f32.mrf.mxu0
  %v456 = vadd.f32 0.0, %v455
  %457 = vmatmul.bf16.gmra.mxu0 %v259
  %v458 = vpop.f32.mrf.mxu0
  %v459 = vadd.f32 0.0, %v458
  %v460 = vpop.f32.mrf.mxu0
  %v461 = vadd.f32 0.0, %v460
  %462 = vmatmul.bf16.gmra.mxu0 %v261
  %v463 = vpop.f32.mrf.mxu0
  %v464 = vadd.f32 0.0, %v463
  %v465 = vpop.f32.mrf.mxu0
  %v466 = vadd.f32 0.0, %v465
  %467 = vmatmul.bf16.gmra.mxu0 %v263
  %v468 = vpop.f32.mrf.mxu0
  %v469 = vadd.f32 0.0, %v468
  %v470 = vpop.f32.mrf.mxu0
  %v471 = vadd.f32 0.0, %v470
  %472 = vmatmul.bf16.gmra.mxu0 %v265
  %v473 = vpop.f32.mrf.mxu0
  %v474 = vadd.f32 0.0, %v473
  %v475 = vpop.f32.mrf.mxu0
  %v476 = vadd.f32 0.0, %v475
  %477 = vmatmul.bf16.gmra.mxu0 %v267
  %v478 = vpop.f32.mrf.mxu0
  %v479 = vadd.f32 0.0, %v478
  %v480 = vpop.f32.mrf.mxu0
  %v481 = vadd.f32 0.0, %v480
  %482 = vmatmul.bf16.gmra.mxu0 %v269
  %v483 = vpop.f32.mrf.mxu0
  %v484 = vadd.f32 0.0, %v483
  %v485 = vpop.f32.mrf.mxu0
  %v486 = vadd.f32 0.0, %v485
  %487 = vdwg.mxu0
  %488 = vmatpush.bf16.msra.mxu0 %v382
  %489 = vmatpush.bf16.msra.mxu0 %v381
  %490 = vmatpush.bf16.msra.mxu0 %v380
  %491 = vmatpush.bf16.msra.mxu0 %v379
  %492 = vmatpush.bf16.msra.mxu0 %v378
  %493 = vmatpush.bf16.msra.mxu0 %v377
  %494 = vmatpush.bf16.msra.mxu0 %v376
  %495 = vmatpush.bf16.msra.mxu0 %v375
  %496 = vmatmul.bf16.gmra.mxu0 %v240
  %v497 = vpop.f32.mrf.mxu0
  %v498 = vadd.f32 %v409, %v497
  %v499 = vpop.f32.mrf.mxu0
  %v500 = vadd.f32 %v411, %v499
  %501 = vmatmul.bf16.gmra.mxu0 %v242
  %v502 = vpop.f32.mrf.mxu0
  %v503 = vadd.f32 %v414, %v502
  %v504 = vpop.f32.mrf.mxu0
  %v505 = vadd.f32 %v416, %v504
  %506 = vmatmul.bf16.gmra.mxu0 %v244
  %v507 = vpop.f32.mrf.mxu0
  %v508 = vadd.f32 %v419, %v507
  %v509 = vpop.f32.mrf.mxu0
  %v510 = vadd.f32 %v421, %v509
  %511 = vmatmul.bf16.gmra.mxu0 %v246
  %v512 = vpop.f32.mrf.mxu0
  %v513 = vadd.f32 %v424, %v512
  %v514 = vpop.f32.mrf.mxu0
  %v515 = vadd.f32 %v426, %v514
  %516 = vmatmul.bf16.gmra.mxu0 %v248
  %v517 = vpop.f32.mrf.mxu0
  %v518 = vadd.f32 %v429, %v517
  %v519 = vpop.f32.mrf.mxu0
  %v520 = vadd.f32 %v431, %v519
  %521 = vmatmul.bf16.gmra.mxu0 %v250
  %v522 = vpop.f32.mrf.mxu0
  %v523 = vadd.f32 %v434, %v522
  %v524 = vpop.f32.mrf.mxu0
  %v525 = vadd.f32 %v436, %v524
  %526 = vmatmul.bf16.gmra.mxu0 %v252
  %v527 = vpop.f32.mrf.mxu0
  %v528 = vadd.f32 %v439, %v527
  %v529 = vpop.f32.mrf.mxu0
  %v530 = vadd.f32 %v441, %v529
  %531 = vmatmul.bf16.gmra.mxu0 %v254
  %v532 = vpop.f32.mrf.mxu0
  %v533 = vadd.f32 %v444, %v532
  %v534 = vpop.f32.mrf.mxu0
  %v535 = vadd.f32 %v446, %v534
  %536 = vmatmul.bf16.gmra.mxu0 %v256
  %v537 = vpop.f32.mrf.mxu0
  %v538 = vadd.f32 %v449, %v537
  %v539 = vpop.f32.mrf.mxu0
  %v540 = vadd.f32 %v451, %v539
  %541 = vmatmul.bf16.gmra.mxu0 %v258
  %v542 = vpop.f32.mrf.mxu0
  %v543 = vadd.f32 %v454, %v542
  %v544 = vpop.f32.mrf.mxu0
  %v545 = vadd.f32 %v456, %v544
  %546 = vmatmul.bf16.gmra.mxu0 %v260
  %v547 = vpop.f32.mrf.mxu0
  %v548 = vadd.f32 %v459, %v547
  %v549 = vpop.f32.mrf.mxu0
  %v550 = vadd.f32 %v461, %v549
  %551 = vmatmul.bf16.gmra.mxu0 %v262
  %v552 = vpop.f32.mrf.mxu0
  %v553 = vadd.f32 %v464, %v552
  %v554 = vpop.f32.mrf.mxu0
  %v555 = vadd.f32 %v466, %v554
  %556 = vmatmul.bf16.gmra.mxu0 %v264
  %v557 = vpop.f32.mrf.mxu0
  %v558 = vadd.f32 %v469, %v557
  %v559 = vpop.f32.mrf.mxu0
  %v560 = vadd.f32 %v471, %v559
  %561 = vmatmul.bf16.gmra.mxu0 %v266
  %v562 = vpop.f32.mrf.mxu0
  %v563 = vadd.f32 %v474, %v562
  %v564 = vpop.f32.mrf.mxu0
  %v565 = vadd.f32 %v476, %v564
  %566 = vmatmul.bf16.gmra.mxu0 %v268
  %v567 = vpop.f32.mrf.mxu0
  %v568 = vadd.f32 %v479, %v567
  %v569 = vpop.f32.mrf.mxu0
  %v570 = vadd.f32 %v481, %v569
  %571 = vmatmul.bf16.gmra.mxu0 %v270
  %v572 = vpop.f32.mrf.mxu0
  %v573 = vadd.f32 %v484, %v572
  %v574 = vpop.f32.mrf.mxu0
  %v575 = vadd.f32 %v486, %v574
  %576 = vdwg.mxu0
  %v577 = vadd.f32 %v47, %v498
  %v578 = vadd.f32 %v48, %v500
  %v579 = vadd.f32 %v49, %v503
  %v580 = vadd.f32 %v50, %v505
  %v581 = vadd.f32 %v51, %v508
  %v582 = vadd.f32 %v52, %v510
  %v583 = vadd.f32 %v53, %v513
  %v584 = vadd.f32 %v54, %v515
  %v585 = vadd.f32 %v55, %v518
  %v586 = vadd.f32 %v56, %v520
  %v587 = vadd.f32 %v57, %v523
  %v588 = vadd.f32 %v58, %v525
  %v589 = vadd.f32 %v59, %v528
  %v590 = vadd.f32 %v60, %v530
  %v591 = vadd.f32 %v61, %v533
  %v592 = vadd.f32 %v62, %v535
  %v593 = vadd.f32 %v63, %v538
  %v594 = vadd.f32 %v64, %v540
  %v595 = vadd.f32 %v65, %v543
  %v596 = vadd.f32 %v66, %v545
  %v597 = vadd.f32 %v67, %v548
  %v598 = vadd.f32 %v68, %v550
  %v599 = vadd.f32 %v69, %v553
  %v600 = vadd.f32 %v70, %v555
  %v601 = vadd.f32 %v71, %v558
  %v602 = vadd.f32 %v72, %v560
  %v603 = vadd.f32 %v73, %v563
  %v604 = vadd.f32 %v74, %v565
  %v605 = vadd.f32 %v75, %v568
  %v606 = vadd.f32 %v76, %v570
  %v607 = vadd.f32 %v77, %v573
  %v608 = vadd.f32 %v78, %v575
  %609 = vst [vmem:[#allocation2] sm:$0xff] %v577
  %610 = vst [vmem:[#allocation2 + $0x8] sm:$0xff] %v578
  %611 = vst [vmem:[#allocation2 + $0x10] sm:$0xff] %v579
  %612 = vst [vmem:[#allocation2 + $0x18] sm:$0xff] %v580
  %613 = vst [vmem:[#allocation2 + $0x20] sm:$0xff] %v581
  %614 = vst [vmem:[#allocation2 + $0x28] sm:$0xff] %v582
  %615 = vst [vmem:[#allocation2 + $0x30] sm:$0xff] %v583
  %616 = vst [vmem:[#allocation2 + $0x38] sm:$0xff] %v584
  %617 = vst [vmem:[#allocation2 + $0x40] sm:$0xff] %v585
  %618 = vst [vmem:[#allocation2 + $0x48] sm:$0xff] %v586
  %619 = vst [vmem:[#allocation2 + $0x50] sm:$0xff] %v587
  %620 = vst [vmem:[#allocation2 + $0x58] sm:$0xff] %v588
  %621 = vst [vmem:[#allocation2 + $0x60] sm:$0xff] %v589
  %622 = vst [vmem:[#allocation2 + $0x68] sm:$0xff] %v590
  %623 = vst [vmem:[#allocation2 + $0x70] sm:$0xff] %v591
  %624 = vst [vmem:[#allocation2 + $0x78] sm:$0xff] %v592
  %625 = vst [vmem:[#allocation2 + $0x80] sm:$0xff] %v593
  %626 = vst [vmem:[#allocation2 + $0x88] sm:$0xff] %v594
  %627 = vst [vmem:[#allocation2 + $0x90] sm:$0xff] %v595
  %628 = vst [vmem:[#allocation2 + $0x98] sm:$0xff] %v596
  %629 = vst [vmem:[#allocation2 + $0xa0] sm:$0xff] %v597
  %630 = vst [vmem:[#allocation2 + $0xa8] sm:$0xff] %v598
  %631 = vst [vmem:[#allocation2 + $0xb0] sm:$0xff] %v599
  %632 = vst [vmem:[#allocation2 + $0xb8] sm:$0xff] %v600
  %633 = vst [vmem:[#allocation2 + $0xc0] sm:$0xff] %v601
  %634 = vst [vmem:[#allocation2 + $0xc8] sm:$0xff] %v602
  %635 = vst [vmem:[#allocation2 + $0xd0] sm:$0xff] %v603
  %636 = vst [vmem:[#allocation2 + $0xd8] sm:$0xff] %v604
  %637 = vst [vmem:[#allocation2 + $0xe0] sm:$0xff] %v605
  %638 = vst [vmem:[#allocation2 + $0xe8] sm:$0xff] %v606
  %639 = vst [vmem:[#allocation2 + $0xf0] sm:$0xff] %v607
  %640 = vst [vmem:[#allocation2 + $0xf8] sm:$0xff] %v608
  // Predicated region
  $region14: #{_lambda_.34} parent=0 // pred_check
    %p641 = pneg %p11
  $region15: #{_lambda_.34} parent=0 // pred_check_branch
    %643 = sbr.rel (%p641) target = $region17
  $region16: #{_lambda_.34} parent=0 // pred_region
    %v644 = vld [vmem:[#allocation2] sm:$0xff]
    %v645 = vld [vmem:[#allocation2 + $0x8] sm:$0xff]
    %v646 = vld [vmem:[#allocation2 + $0x10] sm:$0xff]
    %v647 = vld [vmem:[#allocation2 + $0x18] sm:$0xff]
    %v648 = vld [vmem:[#allocation2 + $0x20] sm:$0xff]
    %v649 = vld [vmem:[#allocation2 + $0x28] sm:$0xff]
    %v650 = vld [vmem:[#allocation2 + $0x30] sm:$0xff]
    %v651 = vld [vmem:[#allocation2 + $0x38] sm:$0xff]
    %v652 = vld [vmem:[#allocation2 + $0x40] sm:$0xff]
    %v653 = vld [vmem:[#allocation2 + $0x48] sm:$0xff]
    %v654 = vld [vmem:[#allocation2 + $0x50] sm:$0xff]
    %v655 = vld [vmem:[#allocation2 + $0x58] sm:$0xff]
    %v656 = vld [vmem:[#allocation2 + $0x60] sm:$0xff]
    %v657 = vld [vmem:[#allocation2 + $0x68] sm:$0xff]
    %v658 = vld [vmem:[#allocation2 + $0x70] sm:$0xff]
    %v659 = vld [vmem:[#allocation2 + $0x78] sm:$0xff]
    %v660 = vld [vmem:[#allocation2 + $0x80] sm:$0xff]
    %v661 = vld [vmem:[#allocation2 + $0x88] sm:$0xff]
    %v662 = vld [vmem:[#allocation2 + $0x90] sm:$0xff]
    %v663 = vld [vmem:[#allocation2 + $0x98] sm:$0xff]
    %v664 = vld [vmem:[#allocation2 + $0xa0] sm:$0xff]
    %v665 = vld [vmem:[#allocation2 + $0xa8] sm:$0xff]
    %v666 = vld [vmem:[#allocation2 + $0xb0] sm:$0xff]
    %v667 = vld [vmem:[#allocation2 + $0xb8] sm:$0xff]
    %v668 = vld [vmem:[#allocation2 + $0xc0] sm:$0xff]
    %v669 = vld [vmem:[#allocation2 + $0xc8] sm:$0xff]
    %v670 = vld [vmem:[#allocation2 + $0xd0] sm:$0xff]
    %v671 = vld [vmem:[#allocation2 + $0xd8] sm:$0xff]
    %v672 = vld [vmem:[#allocation2 + $0xe0] sm:$0xff]
    %v673 = vld [vmem:[#allocation2 + $0xe8] sm:$0xff]
    %v674 = vld [vmem:[#allocation2 + $0xf0] sm:$0xff]
    %v675 = vld [vmem:[#allocation2 + $0xf8] sm:$0xff]
    %v676 = vpack.c.bf16 %v644, %v644
    %v677 = vpack.c.bf16 %v645, %v645
    %v678 = vpack.c.bf16 %v646, %v646
    %v679 = vpack.c.bf16 %v647, %v647
    %v680 = vpack.c.bf16 %v648, %v648
    %v681 = vpack.c.bf16 %v649, %v649
    %v682 = vpack.c.bf16 %v650, %v650
    %v683 = vpack.c.bf16 %v651, %v651
    %v684 = vpack.c.bf16 %v652, %v652
    %v685 = vpack.c.bf16 %v653, %v653
    %v686 = vpack.c.bf16 %v654, %v654
    %v687 = vpack.c.bf16 %v655, %v655
    %v688 = vpack.c.bf16 %v656, %v656
    %v689 = vpack.c.bf16 %v657, %v657
    %v690 = vpack.c.bf16 %v658, %v658
    %v691 = vpack.c.bf16 %v659, %v659
    %v692 = vpack.c.bf16 %v660, %v660
    %v693 = vpack.c.bf16 %v661, %v661
    %v694 = vpack.c.bf16 %v662, %v662
    %v695 = vpack.c.bf16 %v663, %v663
    %v696 = vpack.c.bf16 %v664, %v664
    %v697 = vpack.c.bf16 %v665, %v665
    %v698 = vpack.c.bf16 %v666, %v666
    %v699 = vpack.c.bf16 %v667, %v667
    %v700 = vpack.c.bf16 %v668, %v668
    %v701 = vpack.c.bf16 %v669, %v669
    %v702 = vpack.c.bf16 %v670, %v670
    %v703 = vpack.c.bf16 %v671, %v671
    %v704 = vpack.c.bf16 %v672, %v672
    %v705 = vpack.c.bf16 %v673, %v673
    %v706 = vpack.c.bf16 %v674, %v674
    %v707 = vpack.c.bf16 %v675, %v675
    %708 = vst [vmem:[%s2] sm:$0xf] %v676
    %709 = vst [vmem:[%s2 + $0x4] sm:$0xf] %v677
    %710 = vst [vmem:[%s2 + $0x8] sm:$0xf] %v678
    %711 = vst [vmem:[%s2 + $0xc] sm:$0xf] %v679
    %712 = vst [vmem:[%s2 + $0x10] sm:$0xf] %v680
    %713 = vst [vmem:[%s2 + $0x14] sm:$0xf] %v681
    %714 = vst [vmem:[%s2 + $0x18] sm:$0xf] %v682
    %715 = vst [vmem:[%s2 + $0x1c] sm:$0xf] %v683
    %716 = vst [vmem:[%s2 + $0x20] sm:$0xf] %v684
    %717 = vst [vmem:[%s2 + $0x24] sm:$0xf] %v685
    %718 = vst [vmem:[%s2 + $0x28] sm:$0xf] %v686
    %719 = vst [vmem:[%s2 + $0x2c] sm:$0xf] %v687
    %720 = vst [vmem:[%s2 + $0x30] sm:$0xf] %v688
    %721 = vst [vmem:[%s2 + $0x34] sm:$0xf] %v689
    %722 = vst [vmem:[%s2 + $0x38] sm:$0xf] %v690
    %723 = vst [vmem:[%s2 + $0x3c] sm:$0xf] %v691
    %724 = vst [vmem:[%s2 + $0x40] sm:$0xf] %v692
    %725 = vst [vmem:[%s2 + $0x44] sm:$0xf] %v693
    %726 = vst [vmem:[%s2 + $0x48] sm:$0xf] %v694
    %727 = vst [vmem:[%s2 + $0x4c] sm:$0xf] %v695
    %728 = vst [vmem:[%s2 + $0x50] sm:$0xf] %v696
    %729 = vst [vmem:[%s2 + $0x54] sm:$0xf] %v697
    %730 = vst [vmem:[%s2 + $0x58] sm:$0xf] %v698
    %731 = vst [vmem:[%s2 + $0x5c] sm:$0xf] %v699
    %732 = vst [vmem:[%s2 + $0x60] sm:$0xf] %v700
    %733 = vst [vmem:[%s2 + $0x64] sm:$0xf] %v701
    %734 = vst [vmem:[%s2 + $0x68] sm:$0xf] %v702
    %735 = vst [vmem:[%s2 + $0x6c] sm:$0xf] %v703
    %736 = vst [vmem:[%s2 + $0x70] sm:$0xf] %v704
    %737 = vst [vmem:[%s2 + $0x74] sm:$0xf] %v705
    %738 = vst [vmem:[%s2 + $0x78] sm:$0xf] %v706
    %739 = vst [vmem:[%s2 + $0x7c] sm:$0xf] %v707
  $region17: #{_lambda_.34} parent=0 // pred_fallthru
    _
  // Predicated region
  $region18: #{_lambda_.34} parent=0 // pred_check
    _
  $region19: #{_lambda_.34} parent=0 // pred_check_branch
    %741 = sbr.rel (0) target = $region21
  $region20: #{_lambda_.34} parent=0 // pred_region
    _
  $region21: #{_lambda_.34} parent=0 // pred_fallthru
    _
  // Predicated region
  $region22: #{_lambda_.34} parent=0 // pred_check
    _
  $region23: #{_lambda_.34} parent=0 // pred_check_branch
    %743 = sbr.rel (0) target = $region25
  $region24: #{_lambda_.34} parent=0 // pred_region
    _
  $region25: #{_lambda_.34} parent=0 // pred_fallthru
    _

// kernel: _lambda_.37
$region0: #{_lambda_.37}
  #allocation0 [shape = 'u32[]', space=smem, size = 0x4, offset = 0x4, fixed_abs, tag = 'smem constant byte address 0x4 - core index']
  #allocation1 [shape = 'u32[72,128]{1,0:T(1,128)}', space=vmem, size = 0x9000, scoped, tag = 'internal scratch']
  #allocation2 [shape = 'f32[256,128]{1,0:T(8,128)}', space=vmem, size = 0x20000, scoped, tag = 'scratch operand']
  %s0 = inlined_call_operand.vmem [shape: bf16[256,384], index: 0, kind: input, shape index: {}]
  %s1 = inlined_call_operand.vmem [shape: bf16[384,128], index: 1, kind: input, shape index: {}]
  %s2 = inlined_call_operand.vmem [shape: bf16[256,128], index: 2, kind: output, shape index: {}]
  %s3 = sld [smem:[#allocation0]]
  $region90: #{_lambda_.37} parent=0
    _
  %s5 = ssub.s32 1, %s3
  %s6 = scalar_select 0, %s5, %s3
  $region1: #{_lambda_.37} parent=0
    #allocation3 [shape = 'u8[131072]{0}', space=vmem, size = 0x20000, scoped, tag = 'input window, operand 0']
    loop: start=0, step=1, limit=5
    $region2: #{_lambda_.37} parent=1 // loop_pre_header
      _
    $region3: #{_lambda_.37} parent=1 // loop_header
      %s8 = sphi 0, %s12
      %p9 = scmp.ge.s32.totalorder %s8, 5
      %s15 = sphi 0, %s34
      %s16 = sphi 0, %s30
      %s17 = sphi 0, %s26
      %s18 = sphi 0, %s15
      %s19 = sphi 0, %s16
      %s20 = sphi 0, %s17
      %s21 = sphi 0, %s18
      %s22 = sphi 0, %s19
      %s23 = sphi 0, %s20
      %s39 = sphi 0, %s41
      %s42 = sphi 0, %s39
      %s43 = sphi 0, %s42
      %s59 = sphi 0, %s43
      %s67 = sphi 0, %s69
      %s70 = sphi 0, %s67
      %s71 = sphi 0, %s70
      %s87 = sphi 0, %s71
      %s95 = sphi 0, %s97
      %s98 = sphi 0, %s95
      %s99 = sphi 0, %s98
      %s115 = sphi 0, %s99
    $region4: #{_lambda_.37} parent=1 // loop_header_branch
      %11 = sbr.rel (%p9) target = $region8
    $region5: #{_lambda_.37} parent=1 // loop_body
      %s13 = ssub.s32 %s8, 1
      %s14 = ssub.s32 %s8, 2
      %s24 = sadd.s32 1, %s17
      %p25 = scmp.ge.s32.totalorder %s24, 3
      %s26 = scalar_select %p25, 0, %s24
      %s27 = sadd.s32 1, %s16
      %s28 = scalar_select %p25, %s27, %s16
      %p29 = scmp.ge.s32.totalorder %s28, 1
      %s30 = scalar_select %p29, 0, %s28
      %s31 = sadd.s32 1, %s15
      %s32 = scalar_select %p29, %s31, %s15
      %p33 = scmp.ge.s32.totalorder %s32, 1
      %s34 = scalar_select %p33, 0, %s32
      %s35 = ssub.s32 %s15, %s34
      %s36 = ssub.s32 %s17, %s26
      %s37 = sor.u32 %s35, %s36
      %p38 = scmp.eq.s32.totalorder %s37, 0
      %s40 = sadd.s32 %s39, 1
      %s41 = scalar_select %p38, %s39, %s40
      %p44 = pneg %p38
      %p45 = scmp.eq.s32.totalorder %s8, 2
      %p46 = por %p44, %p45
      %p47 = scmp.ne.s32.totalorder %s39, %s42
      %p48 = scmp.eq.s32.totalorder %s8, 0
      %p49 = por %p47, %p48
      %p50 = scmp.ne.s32.totalorder %s39, %s42
      %p51 = scmp.eq.s32.totalorder %s13, 2
      %p52 = por %p50, %p51
      %p53 = scmp.ne.s32.totalorder %s42, %s43
      %p54 = scmp.eq.s32.totalorder %s13, 0
      %p55 = por %p53, %p54
      %p56 = scmp.ne.s32.totalorder %s42, %s43
      %p57 = scmp.eq.s32.totalorder %s14, 2
      %p58 = por %p56, %p57
      %p60 = scmp.ne.s32.totalorder %s43, %s59
      %p61 = scmp.eq.s32.totalorder %s14, 0
      %p62 = por %p60, %p61
      %s63 = ssub.s32 %s17, %s26
      %s64 = ssub.s32 %s16, %s30
      %s65 = sor.u32 %s63, %s64
      %p66 = scmp.eq.s32.totalorder %s65, 0
      %s68 = sadd.s32 %s67, 1
      %s69 = scalar_select %p66, %s67, %s68
      %p72 = pneg %p66
      %p73 = scmp.eq.s32.totalorder %s8, 2
      %p74 = por %p72, %p73
      %p75 = scmp.ne.s32.totalorder %s67, %s70
      %p76 = scmp.eq.s32.totalorder %s8, 0
      %p77 = por %p75, %p76
      %p78 = scmp.ne.s32.totalorder %s67, %s70
      %p79 = scmp.eq.s32.totalorder %s13, 2
      %p80 = por %p78, %p79
      %p81 = scmp.ne.s32.totalorder %s70, %s71
      %p82 = scmp.eq.s32.totalorder %s13, 0
      %p83 = por %p81, %p82
      %p84 = scmp.ne.s32.totalorder %s70, %s71
      %p85 = scmp.eq.s32.totalorder %s14, 2
      %p86 = por %p84, %p85
      %p88 = scmp.ne.s32.totalorder %s71, %s87
      %p89 = scmp.eq.s32.totalorder %s14, 0
      %p90 = por %p88, %p89
      %s91 = ssub.s32 %s15, %s34
      %s92 = ssub.s32 %s16, %s30
      %s93 = sor.u32 %s91, %s92
      %p94 = scmp.eq.s32.totalorder %s93, 0
      %s96 = sadd.s32 %s95, 1
      %s97 = scalar_select %p94, %s95, %s96
      %p100 = pneg %p94
      %p101 = scmp.eq.s32.totalorder %s8, 2
      %p102 = por %p100, %p101
      %p103 = scmp.ne.s32.totalorder %s95, %s98
      %p104 = scmp.eq.s32.totalorder %s8, 0
      %p105 = por %p103, %p104
      %p106 = scmp.ne.s32.totalorder %s95, %s98
      %p107 = scmp.eq.s32.totalorder %s13, 2
      %p108 = por %p106, %p107
      %p109 = scmp.ne.s32.totalorder %s98, %s99
      %p110 = scmp.eq.s32.totalorder %s13, 0
      %p111 = por %p109, %p110
      %p112 = scmp.ne.s32.totalorder %s98, %s99
      %p113 = scmp.eq.s32.totalorder %s14, 2
      %p114 = por %p112, %p113
      %p116 = scmp.ne.s32.totalorder %s99, %s115
      %p117 = scmp.eq.s32.totalorder %s14, 0
      %p118 = por %p116, %p117
      %p119 = scmp.le.s32.totalorder 1, %s8
      %p120 = scmp.lt.s32.totalorder %s8, 4
      %p121 = pnand %p119, %p120
      %p122 = pneg %p121
      // Predicated region
      $region9: #{_lambda_.37} parent=5 // pred_check
        _
      $region10: #{_lambda_.37} parent=5 // pred_check_branch
        %124 = sbr.rel (%p121) target = $region12
      $region11: #{_lambda_.37} parent=5 // pred_region
        %s125 = ssub.s32 %s8, 1
      $region12: #{_lambda_.37} parent=5 // pred_fallthru
        _
      %p126 = scmp.lt.s32.totalorder %s8, 3
      // Predicated region
      $region13: #{_lambda_.37} parent=5 // pred_check
        %p127 = pneg %p126
      $region14: #{_lambda_.37} parent=5 // pred_check_branch
        %129 = sbr.rel (%p127) target = $region16
      $region15: #{_lambda_.37} parent=5 // pred_region
        // Predicated region
        $region17: #{_lambda_.37} parent=15 // pred_check
          %p130 = pneg %p49
        $region18: #{_lambda_.37} parent=15 // pred_check_branch
          %132 = sbr.rel (%p130) target = $region20
        $region19: #{_lambda_.37} parent=15 // pred_region
          %s133 = sand.u32 %s39, 1
          %s134 = sand.u32 %s39, 1
          %s135 = smul.addr %s134, 128
          %s136 = scalar_lea.vmem [#allocation3], %s135
          %s137 = smul.u32 32, %s15
          %s138 = smul.addr %s137, 3
          %s139 = sadd.s32 %s17, %s138
          %s140 = smul.addr %s139, 4
          %s141 = scalar_lea.vmem %s0, %s140
          // Predicated region
          $region21: #{_lambda_.37} parent=19 // pred_check
            _
          $region22: #{_lambda_.37} parent=19 // pred_check_branch
            %143 = sbr.rel (0) target = $region24
          $region23: #{_lambda_.37} parent=19 // pred_region
            // Predicated region
            $region25: #{_lambda_.37} parent=23 // pred_check
              _
            $region26: #{_lambda_.37} parent=23 // pred_check_branch
              %145 = sbr.rel target = $region28
            $region27: #{_lambda_.37} parent=23 // pred_region
              // Predicated region
              $region40: #{_lambda_.37} parent=27 // pred_check
                _
              $region41: #{_lambda_.37} parent=27 // pred_check_branch
                %223 = sbr.rel (0) target = $region43
              $region42: #{_lambda_.37} parent=27 // pred_region
                loop: start=0, step=1, limit=1
                $region44: #{_lambda_.37} parent=42 // loop_pre_header
                  _
                $region45: #{_lambda_.37} parent=42 // loop_header
                  %s225 = sphi 0, %s229
                  %p226 = scmp.ge.s32.totalorder %s225, 1
                  %s230 = sphi %s141, %s141
                  %s231 = sphi %s136, %s136
                $region46: #{_lambda_.37} parent=42 // loop_header_branch
                  %228 = sbr.rel (%p226) target = $region50
                $region47: #{_lambda_.37} parent=42 // loop_body
                  _
                $region48: #{_lambda_.37} parent=42 // loop_footer
                  %s229 = sadd.s32 1, %s225
                $region49: #{_lambda_.37} parent=42 // loop_footer_branch
                  %224 = sbr.rel target = $region45
                $region50: #{_lambda_.37} parent=42 // loop_exit
                  _
                %s233 = ssub.s32 16, 1
                loop: start=0, step=1, limit=1
                $region51: #{_lambda_.37} parent=42 // loop_pre_header
                  _
                $region52: #{_lambda_.37} parent=42 // loop_header
                  %s235 = sphi 0, %s239
                  %p236 = scmp.ge.s32.totalorder %s235, 1
                  %s240 = sphi %s141, %s141
                  %s241 = sphi %s136, %s136
                $region53: #{_lambda_.37} parent=42 // loop_header_branch
                  %238 = sbr.rel (%p236) target = $region57
                $region54: #{_lambda_.37} parent=42 // loop_body
                  %v242 = vld [vmem:[%s240] sm:%s233]
                  %243 = vst [vmem:[%s241] sm:%s233] %v242
                  %v244 = vld [vmem:[%s240 + $0xc] sm:%s233]
                  %245 = vst [vmem:[%s241 + $0x4] sm:%s233] %v244
                  %v246 = vld [vmem:[%s240 + $0x18] sm:%s233]
                  %247 = vst [vmem:[%s241 + $0x8] sm:%s233] %v246
                  %v248 = vld [vmem:[%s240 + $0x24] sm:%s233]
                  %249 = vst [vmem:[%s241 + $0xc] sm:%s233] %v248
                  %v250 = vld [vmem:[%s240 + $0x30] sm:%s233]
                  %251 = vst [vmem:[%s241 + $0x10] sm:%s233] %v250
                  %v252 = vld [vmem:[%s240 + $0x3c] sm:%s233]
                  %253 = vst [vmem:[%s241 + $0x14] sm:%s233] %v252
                  %v254 = vld [vmem:[%s240 + $0x48] sm:%s233]
                  %255 = vst [vmem:[%s241 + $0x18] sm:%s233] %v254
                  %v256 = vld [vmem:[%s240 + $0x54] sm:%s233]
                  %257 = vst [vmem:[%s241 + $0x1c] sm:%s233] %v256
                  %v258 = vld [vmem:[%s240 + $0x60] sm:%s233]
                  %259 = vst [vmem:[%s241 + $0x20] sm:%s233] %v258
                  %v260 = vld [vmem:[%s240 + $0x6c] sm:%s233]
                  %261 = vst [vmem:[%s241 + $0x24] sm:%s233] %v260
                  %v262 = vld [vmem:[%s240 + $0x78] sm:%s233]
                  %263 = vst [vmem:[%s241 + $0x28] sm:%s233] %v262
                  %v264 = vld [vmem:[%s240 + $0x84] sm:%s233]
                  %265 = vst [vmem:[%s241 + $0x2c] sm:%s233] %v264
                  %v266 = vld [vmem:[%s240 + $0x90] sm:%s233]
                  %267 = vst [vmem:[%s241 + $0x30] sm:%s233] %v266
                  %v268 = vld [vmem:[%s240 + $0x9c] sm:%s233]
                  %269 = vst [vmem:[%s241 + $0x34] sm:%s233] %v268
                  %v270 = vld [vmem:[%s240 + $0xa8] sm:%s233]
                  %271 = vst [vmem:[%s241 + $0x38] sm:%s233] %v270
                  %v272 = vld [vmem:[%s240 + $0xb4] sm:%s233]
                  %273 = vst [vmem:[%s241 + $0x3c] sm:%s233] %v272
                  %v274 = vld [vmem:[%s240 + $0xc0] sm:%s233]
                  %275 = vst [vmem:[%s241 + $0x40] sm:%s233] %v274
                  %v276 = vld [vmem:[%s240 + $0xcc] sm:%s233]
                  %277 = vst [vmem:[%s241 + $0x44] sm:%s233] %v276
                  %v278 = vld [vmem:[%s240 + $0xd8] sm:%s233]
                  %279 = vst [vmem:[%s241 + $0x48] sm:%s233] %v278
                  %v280 = vld [vmem:[%s240 + $0xe4] sm:%s233]
                  %281 = vst [vmem:[%s241 + $0x4c] sm:%s233] %v280
                  %v282 = vld [vmem:[%s240 + $0xf0] sm:%s233]
                  %283 = vst [vmem:[%s241 + $0x50] sm:%s233] %v282
                  %v284 = vld [vmem:[%s240 + $0xfc] sm:%s233]
                  %285 = vst [vmem:[%s241 + $0x54] sm:%s233] %v284
                  %v286 = vld [vmem:[%s240 + $0x108] sm:%s233]
                  %287 = vst [vmem:[%s241 + $0x58] sm:%s233] %v286
                  %v288 = vld [vmem:[%s240 + $0x114] sm:%s233]
                  %289 = vst [vmem:[%s241 + $0x5c] sm:%s233] %v288
                  %v290 = vld [vmem:[%s240 + $0x120] sm:%s233]
                  %291 = vst [vmem:[%s241 + $0x60] sm:%s233] %v290
                  %v292 = vld [vmem:[%s240 + $0x12c] sm:%s233]
                  %293 = vst [vmem:[%s241 + $0x64] sm:%s233] %v292
                  %v294 = vld [vmem:[%s240 + $0x138] sm:%s233]
                  %295 = vst [vmem:[%s241 + $0x68] sm:%s233] %v294
                  %v296 = vld [vmem:[%s240 + $0x144] sm:%s233]
                  %297 = vst [vmem:[%s241 + $0x6c] sm:%s233] %v296
                  %v298 = vld [vmem:[%s240 + $0x150] sm:%s233]
                  %299 = vst [vmem:[%s241 + $0x70] sm:%s233] %v298
                  %v300 = vld [vmem:[%s240 + $0x15c] sm:%s233]
                  %301 = vst [vmem:[%s241 + $0x74] sm:%s233] %v300
                  %v302 = vld [vmem:[%s240 + $0x168] sm:%s233]
                  %303 = vst [vmem:[%s241 + $0x78] sm:%s233] %v302
                  %v304 = vld [vmem:[%s240 + $0x174] sm:%s233]
                  %305 = vst [vmem:[%s241 + $0x7c] sm:%s233] %v304
                $region55: #{_lambda_.37} parent=42 // loop_footer
                  %s239 = sadd.s32 1, %s235
                $region56: #{_lambda_.37} parent=42 // loop_footer_branch
                  %234 = sbr.rel target = $region52
                $region57: #{_lambda_.37} parent=42 // loop_exit
                  _
              $region43: #{_lambda_.37} parent=27 // pred_fallthru
                _
            $region28: #{_lambda_.37} parent=23 // pred_fallthru
              _
            // Predicated region
            $region29: #{_lambda_.37} parent=23 // pred_check
              _
            $region30: #{_lambda_.37} parent=23 // pred_check_branch
              %147 = sbr.rel (0) target = $region32
            $region31: #{_lambda_.37} parent=23 // pred_region
              %s149 = ssub.s32 16, 1
              loop: start=0, step=1, limit=1
              $region33: #{_lambda_.37} parent=31 // loop_pre_header
                _
              $region34: #{_lambda_.37} parent=31 // loop_header
                %s151 = sphi 0, %s155
                %p152 = scmp.ge.s32.totalorder %s151, 1
                %s156 = sphi %s141, %s141
                %s157 = sphi %s136, %s136
              $region35: #{_lambda_.37} parent=31 // loop_header_branch
                %154 = sbr.rel (%p152) target = $region39
              $region36: #{_lambda_.37} parent=31 // loop_body
                %v158 = vld [vmem:[%s156] sm:%s149]
                %159 = vst [vmem:[%s157] sm:%s149] %v158
                %v160 = vld [vmem:[%s156 + $0xc] sm:%s149]
                %161 = vst [vmem:[%s157 + $0x4] sm:%s149] %v160
                %v162 = vld [vmem:[%s156 + $0x18] sm:%s149]
                %163 = vst [vmem:[%s157 + $0x8] sm:%s149] %v162
                %v164 = vld [vmem:[%s156 + $0x24] sm:%s149]
                %165 = vst [vmem:[%s157 + $0xc] sm:%s149] %v164
                %v166 = vld [vmem:[%s156 + $0x30] sm:%s149]
                %167 = vst [vmem:[%s157 + $0x10] sm:%s149] %v166
                %v168 = vld [vmem:[%s156 + $0x3c] sm:%s149]
                %169 = vst [vmem:[%s157 + $0x14] sm:%s149] %v168
                %v170 = vld [vmem:[%s156 + $0x48] sm:%s149]
                %171 = vst [vmem:[%s157 + $0x18] sm:%s149] %v170
                %v172 = vld [vmem:[%s156 + $0x54] sm:%s149]
                %173 = vst [vmem:[%s157 + $0x1c] sm:%s149] %v172
                %v174 = vld [vmem:[%s156 + $0x60] sm:%s149]
                %175 = vst [vmem:[%s157 + $0x20] sm:%s149] %v174
                %v176 = vld [vmem:[%s156 + $0x6c] sm:%s149]
                %177 = vst [vmem:[%s157 + $0x24] sm:%s149] %v176
                %v178 = vld [vmem:[%s156 + $0x78] sm:%s149]
                %179 = vst [vmem:[%s157 + $0x28] sm:%s149] %v178
                %v180 = vld [vmem:[%s156 + $0x84] sm:%s149]
                %181 = vst [vmem:[%s157 + $0x2c] sm:%s149] %v180
                %v182 = vld [vmem:[%s156 + $0x90] sm:%s149]
                %183 = vst [vmem:[%s157 + $0x30] sm:%s149] %v182
                %v184 = vld [vmem:[%s156 + $0x9c] sm:%s149]
                %185 = vst [vmem:[%s157 + $0x34] sm:%s149] %v184
                %v186 = vld [vmem:[%s156 + $0xa8] sm:%s149]
                %187 = vst [vmem:[%s157 + $0x38] sm:%s149] %v186
                %v188 = vld [vmem:[%s156 + $0xb4] sm:%s149]
                %189 = vst [vmem:[%s157 + $0x3c] sm:%s149] %v188
                %v190 = vld [vmem:[%s156 + $0xc0] sm:%s149]
                %191 = vst [vmem:[%s157 + $0x40] sm:%s149] %v190
                %v192 = vld [vmem:[%s156 + $0xcc] sm:%s149]
                %193 = vst [vmem:[%s157 + $0x44] sm:%s149] %v192
                %v194 = vld [vmem:[%s156 + $0xd8] sm:%s149]
                %195 = vst [vmem:[%s157 + $0x48] sm:%s149] %v194
                %v196 = vld [vmem:[%s156 + $0xe4] sm:%s149]
                %197 = vst [vmem:[%s157 + $0x4c] sm:%s149] %v196
                %v198 = vld [vmem:[%s156 + $0xf0] sm:%s149]
                %199 = vst [vmem:[%s157 + $0x50] sm:%s149] %v198
                %v200 = vld [vmem:[%s156 + $0xfc] sm:%s149]
                %201 = vst [vmem:[%s157 + $0x54] sm:%s149] %v200
                %v202 = vld [vmem:[%s156 + $0x108] sm:%s149]
                %203 = vst [vmem:[%s157 + $0x58] sm:%s149] %v202
                %v204 = vld [vmem:[%s156 + $0x114] sm:%s149]
                %205 = vst [vmem:[%s157 + $0x5c] sm:%s149] %v204
                %v206 = vld [vmem:[%s156 + $0x120] sm:%s149]
                %207 = vst [vmem:[%s157 + $0x60] sm:%s149] %v206
                %v208 = vld [vmem:[%s156 + $0x12c] sm:%s149]
                %209 = vst [vmem:[%s157 + $0x64] sm:%s149] %v208
                %v210 = vld [vmem:[%s156 + $0x138] sm:%s149]
                %211 = vst [vmem:[%s157 + $0x68] sm:%s149] %v210
                %v212 = vld [vmem:[%s156 + $0x144] sm:%s149]
                %213 = vst [vmem:[%s157 + $0x6c] sm:%s149] %v212
                %v214 = vld [vmem:[%s156 + $0x150] sm:%s149]
                %215 = vst [vmem:[%s157 + $0x70] sm:%s149] %v214
                %v216 = vld [vmem:[%s156 + $0x15c] sm:%s149]
                %217 = vst [vmem:[%s157 + $0x74] sm:%s149] %v216
                %v218 = vld [vmem:[%s156 + $0x168] sm:%s149]
                %219 = vst [vmem:[%s157 + $0x78] sm:%s149] %v218
                %v220 = vld [vmem:[%s156 + $0x174] sm:%s149]
                %221 = vst [vmem:[%s157 + $0x7c] sm:%s149] %v220
              $region37: #{_lambda_.37} parent=31 // loop_footer
                %s155 = sadd.s32 1, %s151
              $region38: #{_lambda_.37} parent=31 // loop_footer_branch
                %150 = sbr.rel target = $region34
              $region39: #{_lambda_.37} parent=31 // loop_exit
                _
            $region32: #{_lambda_.37} parent=23 // pred_fallthru
              _
          $region24: #{_lambda_.37} parent=19 // pred_fallthru
            _
          %306 = vnop
        $region20: #{_lambda_.37} parent=15 // pred_fallthru
          _
        // Predicated region
        $region58: #{_lambda_.37} parent=15 // pred_check
          %p307 = pneg %p77
        $region59: #{_lambda_.37} parent=15 // pred_check_branch
          %309 = sbr.rel (%p307) target = $region61
        $region60: #{_lambda_.37} parent=15 // pred_region
          %s310 = smul.u32 16, %s17
          %p311 = scmp.lt.s32.totalorder %s310, 47
          %s312 = scalar_select %p311, %s310, 47
          %p313 = scmp.lt.s32.totalorder %s16, 0
          %s314 = scalar_select %p313, %s16, 0
          %s315 = sadd.s32 %s314, %s312
          %s316 = smul.addr %s315, 4
          %s317 = scalar_lea.vmem %s1, %s316
          %s318 = smul.u32 16, %s17
        $region61: #{_lambda_.37} parent=15 // pred_fallthru
          _
      $region16: #{_lambda_.37} parent=5 // pred_fallthru
        _
      %p319 = scmp.le.s32.totalorder 1, %s8
      %p320 = scmp.lt.s32.totalorder %s8, 4
      %p321 = pnand %p319, %p320
      %p322 = pneg %p321
      // Predicated region
      $region62: #{_lambda_.37} parent=5 // pred_check
        _
      $region63: #{_lambda_.37} parent=5 // pred_check_branch
        %324 = sbr.rel (%p321) target = $region65
      $region64: #{_lambda_.37} parent=5 // pred_region
        %s325 = ssub.s32 %s8, 1
        %s326 = sand.u32 %s42, 1
        %s327 = sand.u32 %s42, 1
        %s328 = smul.addr %s327, 128
        %s329 = scalar_lea.vmem [#allocation3], %s328
        // Predicated region
        $region66: #{_lambda_.37} parent=64 // pred_check
          %p330 = pneg %p55
        $region67: #{_lambda_.37} parent=64 // pred_check_branch
          %332 = sbr.rel (%p330) target = $region69
        $region68: #{_lambda_.37} parent=64 // pred_region
          _
        $region69: #{_lambda_.37} parent=64 // pred_fallthru
          _
        %s333 = sand.u32 %s42, 1
        %s334 = sand.u32 %s42, 1
        %s335 = smul.addr %s334, 128
        %s336 = scalar_lea.vmem [#allocation3], %s335
        %p337 = pneg %p55
        %p338 = pneg %p52
        %s339 = smul.u32 16, %s20
        %p340 = scmp.lt.s32.totalorder %s339, 47
        %s341 = scalar_select %p340, %s339, 47
        %p342 = scmp.lt.s32.totalorder %s19, 0
        %s343 = scalar_select %p342, %s19, 0
        %s344 = sadd.s32 %s343, %s341
        %s345 = smul.addr %s344, 4
        %s346 = scalar_lea.vmem %s1, %s345
        %p347 = pneg %p83
        %p348 = pneg %p80
        %p349 = pneg %p111
        %p350 = pneg %p108
        %s351 = smul.u32 32, %s18
        %p352 = scmp.lt.s32.totalorder %s351, 31
        %s353 = scalar_select %p352, %s351, 31
        %p354 = scmp.lt.s32.totalorder %s19, 0
        %s355 = scalar_select %p354, %s19, 0
        %s356 = sadd.s32 %s355, %s353
        %s357 = smul.addr %s356, 4
        %s358 = scalar_lea.vmem %s2, %s357
        %s359 = smul.u32 32, %s18
        %s360 = smul.u32 16, %s20
        %p361 = scmp.lt.s32.totalorder %s360, 47
        %s362 = scalar_select %p361, %s360, 47
        %p363 = scmp.lt.s32.totalorder %s19, 0
        %s364 = scalar_select %p363, %s19, 0
        %s365 = sadd.s32 %s364, %s362
        %s366 = smul.addr %s365, 4
        %s367 = scalar_lea.vmem %s1, %s366
        %s368 = smul.u32 16, %s20
        %s369 = smul.u32 32, %s18
        %p370 = scmp.lt.s32.totalorder %s369, 31
        %s371 = scalar_select %p370, %s369, 31
        %p372 = scmp.lt.s32.totalorder %s19, 0
        %s373 = scalar_select %p372, %s19, 0
        %s374 = sadd.s32 %s373, %s371
        %s375 = smul.addr %s374, 4
        %s376 = scalar_lea.vmem %s2, %s375
        %s377 = smul.u32 32, %s18
        %p378 = scmp.eq.s32.totalorder %s20, 0
        // Predicated region
        $region70: #{_lambda_.37} parent=64 // pred_check
          %p379 = pneg %p378
        $region71: #{_lambda_.37} parent=64 // pred_check_branch
          %381 = sbr.rel (%p379) target = $region73
        $region72: #{_lambda_.37} parent=64 // pred_region
          %382 = vst [vmem:[#allocation2] sm:$0xff] 0.0
          %383 = vst [vmem:[#allocation2 + $0x8] sm:$0xff] 0.0
          %384 = vst [vmem:[#allocation2 + $0x10] sm:$0xff] 0.0
          %385 = vst [vmem:[#allocation2 + $0x18] sm:$0xff] 0.0
          %386 = vst [vmem:[#allocation2 + $0x20] sm:$0xff] 0.0
          %387 = vst [vmem:[#allocation2 + $0x28] sm:$0xff] 0.0
          %388 = vst [vmem:[#allocation2 + $0x30] sm:$0xff] 0.0
          %389 = vst [vmem:[#allocation2 + $0x38] sm:$0xff] 0.0
          %390 = vst [vmem:[#allocation2 + $0x40] sm:$0xff] 0.0
          %391 = vst [vmem:[#allocation2 + $0x48] sm:$0xff] 0.0
          %392 = vst [vmem:[#allocation2 + $0x50] sm:$0xff] 0.0
          %393 = vst [vmem:[#allocation2 + $0x58] sm:$0xff] 0.0
          %394 = vst [vmem:[#allocation2 + $0x60] sm:$0xff] 0.0
          %395 = vst [vmem:[#allocation2 + $0x68] sm:$0xff] 0.0
          %396 = vst [vmem:[#allocation2 + $0x70] sm:$0xff] 0.0
          %397 = vst [vmem:[#allocation2 + $0x78] sm:$0xff] 0.0
          %398 = vst [vmem:[#allocation2 + $0x80] sm:$0xff] 0.0
          %399 = vst [vmem:[#allocation2 + $0x88] sm:$0xff] 0.0
          %400 = vst [vmem:[#allocation2 + $0x90] sm:$0xff] 0.0
          %401 = vst [vmem:[#allocation2 + $0x98] sm:$0xff] 0.0
          %402 = vst [vmem:[#allocation2 + $0xa0] sm:$0xff] 0.0
          %403 = vst [vmem:[#allocation2 + $0xa8] sm:$0xff] 0.0
          %404 = vst [vmem:[#allocation2 + $0xb0] sm:$0xff] 0.0
          %405 = vst [vmem:[#allocation2 + $0xb8] sm:$0xff] 0.0
          %406 = vst [vmem:[#allocation2 + $0xc0] sm:$0xff] 0.0
          %407 = vst [vmem:[#allocation2 + $0xc8] sm:$0xff] 0.0
          %408 = vst [vmem:[#allocation2 + $0xd0] sm:$0xff] 0.0
          %409 = vst [vmem:[#allocation2 + $0xd8] sm:$0xff] 0.0
          %410 = vst [vmem:[#allocation2 + $0xe0] sm:$0xff] 0.0
          %411 = vst [vmem:[#allocation2 + $0xe8] sm:$0xff] 0.0
          %412 = vst [vmem:[#allocation2 + $0xf0] sm:$0xff] 0.0
          %413 = vst [vmem:[#allocation2 + $0xf8] sm:$0xff] 0.0
        $region73: #{_lambda_.37} parent=64 // pred_fallthru
          _
        %v414 = vld [vmem:[#allocation2] sm:$0xff]
        %v415 = vld [vmem:[#allocation2 + $0x8] sm:$0xff]
        %v416 = vld [vmem:[#allocation2 + $0x10] sm:$0xff]
        %v417 = vld [vmem:[#allocation2 + $0x18] sm:$0xff]
        %v418 = vld [vmem:[#allocation2 + $0x20] sm:$0xff]
        %v419 = vld [vmem:[#allocation2 + $0x28] sm:$0xff]
        %v420 = vld [vmem:[#allocation2 + $0x30] sm:$0xff]
        %v421 = vld [vmem:[#allocation2 + $0x38] sm:$0xff]
        %v422 = vld [vmem:[#allocation2 + $0x40] sm:$0xff]
        %v423 = vld [vmem:[#allocation2 + $0x48] sm:$0xff]
        %v424 = vld [vmem:[#allocation2 + $0x50] sm:$0xff]
        %v425 = vld [vmem:[#allocation2 + $0x58] sm:$0xff]
        %v426 = vld [vmem:[#allocation2 + $0x60] sm:$0xff]
        %v427 = vld [vmem:[#allocation2 + $0x68] sm:$0xff]
        %v428 = vld [vmem:[#allocation2 + $0x70] sm:$0xff]
        %v429 = vld [vmem:[#allocation2 + $0x78] sm:$0xff]
        %v430 = vld [vmem:[#allocation2 + $0x80] sm:$0xff]
        %v431 = vld [vmem:[#allocation2 + $0x88] sm:$0xff]
        %v432 = vld [vmem:[#allocation2 + $0x90] sm:$0xff]
        %v433 = vld [vmem:[#allocation2 + $0x98] sm:$0xff]
        %v434 = vld [vmem:[#allocation2 + $0xa0] sm:$0xff]
        %v435 = vld [vmem:[#allocation2 + $0xa8] sm:$0xff]
        %v436 = vld [vmem:[#allocation2 + $0xb0] sm:$0xff]
        %v437 = vld [vmem:[#allocation2 + $0xb8] sm:$0xff]
        %v438 = vld [vmem:[#allocation2 + $0xc0] sm:$0xff]
        %v439 = vld [vmem:[#allocation2 + $0xc8] sm:$0xff]
        %v440 = vld [vmem:[#allocation2 + $0xd0] sm:$0xff]
        %v441 = vld [vmem:[#allocation2 + $0xd8] sm:$0xff]
        %v442 = vld [vmem:[#allocation2 + $0xe0] sm:$0xff]
        %v443 = vld [vmem:[#allocation2 + $0xe8] sm:$0xff]
        %v444 = vld [vmem:[#allocation2 + $0xf0] sm:$0xff]
        %v445 = vld [vmem:[#allocation2 + $0xf8] sm:$0xff]
        %v446 = vld [vmem:[%s329] sm:$0xf]
        %v447 = vld [vmem:[%s329 + $0x4] sm:$0xf]
        %v448 = vld [vmem:[%s329 + $0x8] sm:$0xf]
        %v449 = vld [vmem:[%s329 + $0xc] sm:$0xf]
        %v450 = vld [vmem:[%s329 + $0x10] sm:$0xf]
        %v451 = vld [vmem:[%s329 + $0x14] sm:$0xf]
        %v452 = vld [vmem:[%s329 + $0x18] sm:$0xf]
        %v453 = vld [vmem:[%s329 + $0x1c] sm:$0xf]
        %v454 = vld [vmem:[%s329 + $0x20] sm:$0xf]
        %v455 = vld [vmem:[%s329 + $0x24] sm:$0xf]
        %v456 = vld [vmem:[%s329 + $0x28] sm:$0xf]
        %v457 = vld [vmem:[%s329 + $0x2c] sm:$0xf]
        %v458 = vld [vmem:[%s329 + $0x30] sm:$0xf]
        %v459 = vld [vmem:[%s329 + $0x34] sm:$0xf]
        %v460 = vld [vmem:[%s329 + $0x38] sm:$0xf]
        %v461 = vld [vmem:[%s329 + $0x3c] sm:$0xf]
        %v462 = vld [vmem:[%s329 + $0x40] sm:$0xf]
        %v463 = vld [vmem:[%s329 + $0x44] sm:$0xf]
        %v464 = vld [vmem:[%s329 + $0x48] sm:$0xf]
        %v465 = vld [vmem:[%s329 + $0x4c] sm:$0xf]
        %v466 = vld [vmem:[%s329 + $0x50] sm:$0xf]
        %v467 = vld [vmem:[%s329 + $0x54] sm:$0xf]
        %v468 = vld [vmem:[%s329 + $0x58] sm:$0xf]
        %v469 = vld [vmem:[%s329 + $0x5c] sm:$0xf]
        %v470 = vld [vmem:[%s329 + $0x60] sm:$0xf]
        %v471 = vld [vmem:[%s329 + $0x64] sm:$0xf]
        %v472 = vld [vmem:[%s329 + $0x68] sm:$0xf]
        %v473 = vld [vmem:[%s329 + $0x6c] sm:$0xf]
        %v474 = vld [vmem:[%s329 + $0x70] sm:$0xf]
        %v475 = vld [vmem:[%s329 + $0x74] sm:$0xf]
        %v476 = vld [vmem:[%s329 + $0x78] sm:$0xf]
        %v477 = vld [vmem:[%s329 + $0x7c] sm:$0xf]
        %v478 = vld [vmem:[%s367] sm:$0xf]
        %v479 = vld [vmem:[%s367 + $0x4] sm:$0xf]
        %v480 = vld [vmem:[%s367 + $0x8] sm:$0xf]
        %v481 = vld [vmem:[%s367 + $0xc] sm:$0xf]
        %v482 = vld [vmem:[%s367 + $0x10] sm:$0xf]
        %v483 = vld [vmem:[%s367 + $0x14] sm:$0xf]
        %v484 = vld [vmem:[%s367 + $0x18] sm:$0xf]
        %v485 = vld [vmem:[%s367 + $0x1c] sm:$0xf]
        %v486 = vld [vmem:[%s367 + $0x20] sm:$0xf]
        %v487 = vld [vmem:[%s367 + $0x24] sm:$0xf]
        %v488 = vld [vmem:[%s367 + $0x28] sm:$0xf]
        %v489 = vld [vmem:[%s367 + $0x2c] sm:$0xf]
        %v490 = vld [vmem:[%s367 + $0x30] sm:$0xf]
        %v491 = vld [vmem:[%s367 + $0x34] sm:$0xf]
        %v492 = vld [vmem:[%s367 + $0x38] sm:$0xf]
        %v493 = vld [vmem:[%s367 + $0x3c] sm:$0xf]
        %v526 = vunpack.c.l.b16 %v446
        %v527 = vunpack.c.l.b16 %v447
        %v528 = vunpack.c.l.b16 %v448
        %v529 = vunpack.c.l.b16 %v449
        %v530 = vunpack.c.l.b16 %v450
        %v531 = vunpack.c.l.b16 %v451
        %v532 = vunpack.c.l.b16 %v452
        %v533 = vunpack.c.l.b16 %v453
        %v534 = vunpack.c.l.b16 %v454
        %v535 = vunpack.c.l.b16 %v455
        %v536 = vunpack.c.l.b16 %v456
        %v537 = vunpack.c.l.b16 %v457
        %v538 = vunpack.c.l.b16 %v458
        %v539 = vunpack.c.l.b16 %v459
        %v540 = vunpack.c.l.b16 %v460
        %v541 = vunpack.c.l.b16 %v461
        %v542 = vunpack.c.l.b16 %v462
        %v543 = vunpack.c.l.b16 %v463
        %v544 = vunpack.c.l.b16 %v464
        %v545 = vunpack.c.l.b16 %v465
        %v546 = vunpack.c.l.b16 %v466
        %v547 = vunpack.c.l.b16 %v467
        %v548 = vunpack.c.l.b16 %v468
        %v549 = vunpack.c.l.b16 %v469
        %v550 = vunpack.c.l.b16 %v470
        %v551 = vunpack.c.l.b16 %v471
        %v552 = vunpack.c.l.b16 %v472
        %v553 = vunpack.c.l.b16 %v473
        %v554 = vunpack.c.l.b16 %v474
        %v555 = vunpack.c.l.b16 %v475
        %v556 = vunpack.c.l.b16 %v476
        %v557 = vunpack.c.l.b16 %v477
        %v558 = vpack.c.b16 %v527, %v526
        %v559 = vpack.c.b16 %v529, %v528
        %v560 = vpack.c.b16 %v531, %v530
        %v561 = vpack.c.b16 %v533, %v532
        %v562 = vpack.c.b16 %v535, %v534
        %v563 = vpack.c.b16 %v537, %v536
        %v564 = vpack.c.b16 %v539, %v538
        %v565 = vpack.c.b16 %v541, %v540
        %v566 = vpack.c.b16 %v543, %v542
        %v567 = vpack.c.b16 %v545, %v544
        %v568 = vpack.c.b16 %v547, %v546
        %v569 = vpack.c.b16 %v549, %v548
        %v570 = vpack.c.b16 %v551, %v550
        %v571 = vpack.c.b16 %v553, %v552
        %v572 = vpack.c.b16 %v555, %v554
        %v573 = vpack.c.b16 %v557, %v556
        %v606 = vunpack.c.l.b16 %v478
        %v607 = vunpack.c.l.b16 %v479
        %v608 = vunpack.c.l.b16 %v480
        %v609 = vunpack.c.l.b16 %v481
        %v610 = vunpack.c.l.b16 %v482
        %v611 = vunpack.c.l.b16 %v483
        %v612 = vunpack.c.l.b16 %v484
        %v613 = vunpack.c.l.b16 %v485
        %v614 = vunpack.c.l.b16 %v486
        %v615 = vunpack.c.l.b16 %v487
        %v616 = vunpack.c.l.b16 %v488
        %v617 = vunpack.c.l.b16 %v489
        %v618 = vunpack.c.l.b16 %v490
        %v619 = vunpack.c.l.b16 %v491
        %v620 = vunpack.c.l.b16 %v492
        %v621 = vunpack.c.l.b16 %v493
        %v622 = vpack.c.b16 %v607, %v606
        %v623 = vpack.c.b16 %v609, %v608
        %v624 = vpack.c.b16 %v611, %v610
        %v625 = vpack.c.b16 %v613, %v612
        %v626 = vpack.c.b16 %v615, %v614
        %v627 = vpack.c.b16 %v617, %v616
        %v628 = vpack.c.b16 %v619, %v618
        %v629 = vpack.c.b16 %v621, %v620
        %638 = vmatpush.bf16.msra.mxu0 %v629
        %639 = vmatpush.bf16.msra.mxu0 %v628
        %640 = vmatpush.bf16.msra.mxu0 %v627
        %641 = vmatpush.bf16.msra.mxu0 %v626
        %642 = vmatpush.bf16.msra.mxu0 %v625
        %643 = vmatpush.bf16.msra.mxu0 %v624
        %644 = vmatpush.bf16.msra.mxu0 %v623
        %645 = vmatpush.bf16.msra.mxu0 %v622
        %646 = vmatmul.bf16.gmra.mxu0 %v558
        %v647 = vpop.f32.mrf.mxu0
        %v648 = vadd.f32 0.0, %v647
        %v649 = vpop.f32.mrf.mxu0
        %v650 = vadd.f32 0.0, %v649
        %651 = vmatmul.bf16.gmra.mxu0 %v559
        %v652 = vpop.f32.mrf.mxu0
        %v653 = vadd.f32 0.0, %v652
        %v654 = vpop.f32.mrf.mxu0
        %v655 = vadd.f32 0.0, %v654
        %656 = vmatmul.bf16.gmra.mxu0 %v560
        %v657 = vpop.f32.mrf.mxu0
        %v658 = vadd.f32 0.0, %v657
        %v659 = vpop.f32.mrf.mxu0
        %v660 = vadd.f32 0.0, %v659
        %661 = vmatmul.bf16.gmra.mxu0 %v561
        %v662 = vpop.f32.mrf.mxu0
        %v663 = vadd.f32 0.0, %v662
        %v664 = vpop.f32.mrf.mxu0
        %v665 = vadd.f32 0.0, %v664
        %666 = vmatmul.bf16.gmra.mxu0 %v562
        %v667 = vpop.f32.mrf.mxu0
        %v668 = vadd.f32 0.0, %v667
        %v669 = vpop.f32.mrf.mxu0
        %v670 = vadd.f32 0.0, %v669
        %671 = vmatmul.bf16.gmra.mxu0 %v563
        %v672 = vpop.f32.mrf.mxu0
        %v673 = vadd.f32 0.0, %v672
        %v674 = vpop.f32.mrf.mxu0
        %v675 = vadd.f32 0.0, %v674
        %676 = vmatmul.bf16.gmra.mxu0 %v564
        %v677 = vpop.f32.mrf.mxu0
        %v678 = vadd.f32 0.0, %v677
        %v679 = vpop.f32.mrf.mxu0
        %v680 = vadd.f32 0.0, %v679
        %681 = vmatmul.bf16.gmra.mxu0 %v565
        %v682 = vpop.f32.mrf.mxu0
        %v683 = vadd.f32 0.0, %v682
        %v684 = vpop.f32.mrf.mxu0
        %v685 = vadd.f32 0.0, %v684
        %686 = vmatmul.bf16.gmra.mxu0 %v566
        %v687 = vpop.f32.mrf.mxu0
        %v688 = vadd.f32 0.0, %v687
        %v689 = vpop.f32.mrf.mxu0
        %v690 = vadd.f32 0.0, %v689
        %691 = vmatmul.bf16.gmra.mxu0 %v567
        %v692 = vpop.f32.mrf.mxu0
        %v693 = vadd.f32 0.0, %v692
        %v694 = vpop.f32.mrf.mxu0
        %v695 = vadd.f32 0.0, %v694
        %696 = vmatmul.bf16.gmra.mxu0 %v568
        %v697 = vpop.f32.mrf.mxu0
        %v698 = vadd.f32 0.0, %v697
        %v699 = vpop.f32.mrf.mxu0
        %v700 = vadd.f32 0.0, %v699
        %701 = vmatmul.bf16.gmra.mxu0 %v569
        %v702 = vpop.f32.mrf.mxu0
        %v703 = vadd.f32 0.0, %v702
        %v704 = vpop.f32.mrf.mxu0
        %v705 = vadd.f32 0.0, %v704
        %706 = vmatmul.bf16.gmra.mxu0 %v570
        %v707 = vpop.f32.mrf.mxu0
        %v708 = vadd.f32 0.0, %v707
        %v709 = vpop.f32.mrf.mxu0
        %v710 = vadd.f32 0.0, %v709
        %711 = vmatmul.bf16.gmra.mxu0 %v571
        %v712 = vpop.f32.mrf.mxu0
        %v713 = vadd.f32 0.0, %v712
        %v714 = vpop.f32.mrf.mxu0
        %v715 = vadd.f32 0.0, %v714
        %716 = vmatmul.bf16.gmra.mxu0 %v572
        %v717 = vpop.f32.mrf.mxu0
        %v718 = vadd.f32 0.0, %v717
        %v719 = vpop.f32.mrf.mxu0
        %v720 = vadd.f32 0.0, %v719
        %721 = vmatmul.bf16.gmra.mxu0 %v573
        %v722 = vpop.f32.mrf.mxu0
        %v723 = vadd.f32 0.0, %v722
        %v724 = vpop.f32.mrf.mxu0
        %v725 = vadd.f32 0.0, %v724
        %726 = vdwg.mxu0
        %v727 = vadd.f32 %v414, %v648
        %v728 = vadd.f32 %v415, %v650
        %v729 = vadd.f32 %v416, %v653
        %v730 = vadd.f32 %v417, %v655
        %v731 = vadd.f32 %v418, %v658
        %v732 = vadd.f32 %v419, %v660
        %v733 = vadd.f32 %v420, %v663
        %v734 = vadd.f32 %v421, %v665
        %v735 = vadd.f32 %v422, %v668
        %v736 = vadd.f32 %v423, %v670
        %v737 = vadd.f32 %v424, %v673
        %v738 = vadd.f32 %v425, %v675
        %v739 = vadd.f32 %v426, %v678
        %v740 = vadd.f32 %v427, %v680
        %v741 = vadd.f32 %v428, %v683
        %v742 = vadd.f32 %v429, %v685
        %v743 = vadd.f32 %v430, %v688
        %v744 = vadd.f32 %v431, %v690
        %v745 = vadd.f32 %v432, %v693
        %v746 = vadd.f32 %v433, %v695
        %v747 = vadd.f32 %v434, %v698
        %v748 = vadd.f32 %v435, %v700
        %v749 = vadd.f32 %v436, %v703
        %v750 = vadd.f32 %v437, %v705
        %v751 = vadd.f32 %v438, %v708
        %v752 = vadd.f32 %v439, %v710
        %v753 = vadd.f32 %v440, %v713
        %v754 = vadd.f32 %v441, %v715
        %v755 = vadd.f32 %v442, %v718
        %v756 = vadd.f32 %v443, %v720
        %v757 = vadd.f32 %v444, %v723
        %v758 = vadd.f32 %v445, %v725
        %759 = vst [vmem:[#allocation2] sm:$0xff] %v727
        %760 = vst [vmem:[#allocation2 + $0x8] sm:$0xff] %v728
        %761 = vst [vmem:[#allocation2 + $0x10] sm:$0xff] %v729
        %762 = vst [vmem:[#allocation2 + $0x18] sm:$0xff] %v730
        %763 = vst [vmem:[#allocation2 + $0x20] sm:$0xff] %v731
        %764 = vst [vmem:[#allocation2 + $0x28] sm:$0xff] %v732
        %765 = vst [vmem:[#allocation2 + $0x30] sm:$0xff] %v733
        %766 = vst [vmem:[#allocation2 + $0x38] sm:$0xff] %v734
        %767 = vst [vmem:[#allocation2 + $0x40] sm:$0xff] %v735
        %768 = vst [vmem:[#allocation2 + $0x48] sm:$0xff] %v736
        %769 = vst [vmem:[#allocation2 + $0x50] sm:$0xff] %v737
        %770 = vst [vmem:[#allocation2 + $0x58] sm:$0xff] %v738
        %771 = vst [vmem:[#allocation2 + $0x60] sm:$0xff] %v739
        %772 = vst [vmem:[#allocation2 + $0x68] sm:$0xff] %v740
        %773 = vst [vmem:[#allocation2 + $0x70] sm:$0xff] %v741
        %774 = vst [vmem:[#allocation2 + $0x78] sm:$0xff] %v742
        %775 = vst [vmem:[#allocation2 + $0x80] sm:$0xff] %v743
        %776 = vst [vmem:[#allocation2 + $0x88] sm:$0xff] %v744
        %777 = vst [vmem:[#allocation2 + $0x90] sm:$0xff] %v745
        %778 = vst [vmem:[#allocation2 + $0x98] sm:$0xff] %v746
        %779 = vst [vmem:[#allocation2 + $0xa0] sm:$0xff] %v747
        %780 = vst [vmem:[#allocation2 + $0xa8] sm:$0xff] %v748
        %781 = vst [vmem:[#allocation2 + $0xb0] sm:$0xff] %v749
        %782 = vst [vmem:[#allocation2 + $0xb8] sm:$0xff] %v750
        %783 = vst [vmem:[#allocation2 + $0xc0] sm:$0xff] %v751
        %784 = vst [vmem:[#allocation2 + $0xc8] sm:$0xff] %v752
        %785 = vst [vmem:[#allocation2 + $0xd0] sm:$0xff] %v753
        %786 = vst [vmem:[#allocation2 + $0xd8] sm:$0xff] %v754
        %787 = vst [vmem:[#allocation2 + $0xe0] sm:$0xff] %v755
        %788 = vst [vmem:[#allocation2 + $0xe8] sm:$0xff] %v756
        %789 = vst [vmem:[#allocation2 + $0xf0] sm:$0xff] %v757
        %790 = vst [vmem:[#allocation2 + $0xf8] sm:$0xff] %v758
        %p791 = scmp.eq.s32.totalorder %s20, 2
        // Predicated region
        $region74: #{_lambda_.37} parent=64 // pred_check
          %p792 = pneg %p791
        $region75: #{_lambda_.37} parent=64 // pred_check_branch
          %794 = sbr.rel (%p792) target = $region77
        $region76: #{_lambda_.37} parent=64 // pred_region
          %v795 = vld [vmem:[#allocation2] sm:$0xff]
          %v796 = vld [vmem:[#allocation2 + $0x8] sm:$0xff]
          %v797 = vld [vmem:[#allocation2 + $0x10] sm:$0xff]
          %v798 = vld [vmem:[#allocation2 + $0x18] sm:$0xff]
          %v799 = vld [vmem:[#allocation2 + $0x20] sm:$0xff]
          %v800 = vld [vmem:[#allocation2 + $0x28] sm:$0xff]
          %v801 = vld [vmem:[#allocation2 + $0x30] sm:$0xff]
          %v802 = vld [vmem:[#allocation2 + $0x38] sm:$0xff]
          %v803 = vld [vmem:[#allocation2 + $0x40] sm:$0xff]
          %v804 = vld [vmem:[#allocation2 + $0x48] sm:$0xff]
          %v805 = vld [vmem:[#allocation2 + $0x50] sm:$0xff]
          %v806 = vld [vmem:[#allocation2 + $0x58] sm:$0xff]
          %v807 = vld [vmem:[#allocation2 + $0x60] sm:$0xff]
          %v808 = vld [vmem:[#allocation2 + $0x68] sm:$0xff]
          %v809 = vld [vmem:[#allocation2 + $0x70] sm:$0xff]
          %v810 = vld [vmem:[#allocation2 + $0x78] sm:$0xff]
          %v811 = vld [vmem:[#allocation2 + $0x80] sm:$0xff]
          %v812 = vld [vmem:[#allocation2 + $0x88] sm:$0xff]
          %v813 = vld [vmem:[#allocation2 + $0x90] sm:$0xff]
          %v814 = vld [vmem:[#allocation2 + $0x98] sm:$0xff]
          %v815 = vld [vmem:[#allocation2 + $0xa0] sm:$0xff]
          %v816 = vld [vmem:[#allocation2 + $0xa8] sm:$0xff]
          %v817 = vld [vmem:[#allocation2 + $0xb0] sm:$0xff]
          %v818 = vld [vmem:[#allocation2 + $0xb8] sm:$0xff]
          %v819 = vld [vmem:[#allocation2 + $0xc0] sm:$0xff]
          %v820 = vld [vmem:[#allocation2 + $0xc8] sm:$0xff]
          %v821 = vld [vmem:[#allocation2 + $0xd0] sm:$0xff]
          %v822 = vld [vmem:[#allocation2 + $0xd8] sm:$0xff]
          %v823 = vld [vmem:[#allocation2 + $0xe0] sm:$0xff]
          %v824 = vld [vmem:[#allocation2 + $0xe8] sm:$0xff]
          %v825 = vld [vmem:[#allocation2 + $0xf0] sm:$0xff]
          %v826 = vld [vmem:[#allocation2 + $0xf8] sm:$0xff]
          %v827 = vpack.c.bf16 %v795, %v795
          %v828 = vpack.c.bf16 %v796, %v796
          %v829 = vpack.c.bf16 %v797, %v797
          %v830 = vpack.c.bf16 %v798, %v798
          %v831 = vpack.c.bf16 %v799, %v799
          %v832 = vpack.c.bf16 %v800, %v800
          %v833 = vpack.c.bf16 %v801, %v801
          %v834 = vpack.c.bf16 %v802, %v802
          %v835 = vpack.c.bf16 %v803, %v803
          %v836 = vpack.c.bf16 %v804, %v804
          %v837 = vpack.c.bf16 %v805, %v805
          %v838 = vpack.c.bf16 %v806, %v806
          %v839 = vpack.c.bf16 %v807, %v807
          %v840 = vpack.c.bf16 %v808, %v808
          %v841 = vpack.c.bf16 %v809, %v809
          %v842 = vpack.c.bf16 %v810, %v810
          %v843 = vpack.c.bf16 %v811, %v811
          %v844 = vpack.c.bf16 %v812, %v812
          %v845 = vpack.c.bf16 %v813, %v813
          %v846 = vpack.c.bf16 %v814, %v814
          %v847 = vpack.c.bf16 %v815, %v815
          %v848 = vpack.c.bf16 %v816, %v816
          %v849 = vpack.c.bf16 %v817, %v817
          %v850 = vpack.c.bf16 %v818, %v818
          %v851 = vpack.c.bf16 %v819, %v819
          %v852 = vpack.c.bf16 %v820, %v820
          %v853 = vpack.c.bf16 %v821, %v821
          %v854 = vpack.c.bf16 %v822, %v822
          %v855 = vpack.c.bf16 %v823, %v823
          %v856 = vpack.c.bf16 %v824, %v824
          %v857 = vpack.c.bf16 %v825, %v825
          %v858 = vpack.c.bf16 %v826, %v826
          %859 = vst [vmem:[%s376] sm:$0xf] %v827
          %860 = vst [vmem:[%s376 + $0x4] sm:$0xf] %v828
          %861 = vst [vmem:[%s376 + $0x8] sm:$0xf] %v829
          %862 = vst [vmem:[%s376 + $0xc] sm:$0xf] %v830
          %863 = vst [vmem:[%s376 + $0x10] sm:$0xf] %v831
          %864 = vst [vmem:[%s376 + $0x14] sm:$0xf] %v832
          %865 = vst [vmem:[%s376 + $0x18] sm:$0xf] %v833
          %866 = vst [vmem:[%s376 + $0x1c] sm:$0xf] %v834
          %867 = vst [vmem:[%s376 + $0x20] sm:$0xf] %v835
          %868 = vst [vmem:[%s376 + $0x24] sm:$0xf] %v836
          %869 = vst [vmem:[%s376 + $0x28] sm:$0xf] %v837
          %870 = vst [vmem:[%s376 + $0x2c] sm:$0xf] %v838
          %871 = vst [vmem:[%s376 + $0x30] sm:$0xf] %v839
          %872 = vst [vmem:[%s376 + $0x34] sm:$0xf] %v840
          %873 = vst [vmem:[%s376 + $0x38] sm:$0xf] %v841
          %874 = vst [vmem:[%s376 + $0x3c] sm:$0xf] %v842
          %875 = vst [vmem:[%s376 + $0x40] sm:$0xf] %v843
          %876 = vst [vmem:[%s376 + $0x44] sm:$0xf] %v844
          %877 = vst [vmem:[%s376 + $0x48] sm:$0xf] %v845
          %878 = vst [vmem:[%s376 + $0x4c] sm:$0xf] %v846
          %879 = vst [vmem:[%s376 + $0x50] sm:$0xf] %v847
          %880 = vst [vmem:[%s376 + $0x54] sm:$0xf] %v848
          %881 = vst [vmem:[%s376 + $0x58] sm:$0xf] %v849
          %882 = vst [vmem:[%s376 + $0x5c] sm:$0xf] %v850
          %883 = vst [vmem:[%s376 + $0x60] sm:$0xf] %v851
          %884 = vst [vmem:[%s376 + $0x64] sm:$0xf] %v852
          %885 = vst [vmem:[%s376 + $0x68] sm:$0xf] %v853
          %886 = vst [vmem:[%s376 + $0x6c] sm:$0xf] %v854
          %887 = vst [vmem:[%s376 + $0x70] sm:$0xf] %v855
          %888 = vst [vmem:[%s376 + $0x74] sm:$0xf] %v856
          %889 = vst [vmem:[%s376 + $0x78] sm:$0xf] %v857
          %890 = vst [vmem:[%s376 + $0x7c] sm:$0xf] %v858
        $region77: #{_lambda_.37} parent=64 // pred_fallthru
          _
        %s891 = smul.u32 32, %s18
        %p892 = scmp.lt.s32.totalorder %s891, 31
        %s893 = scalar_select %p892, %s891, 31
        %p894 = scmp.lt.s32.totalorder %s19, 0
        %s895 = scalar_select %p894, %s19, 0
        %s896 = sadd.s32 %s895, %s893
        %s897 = smul.addr %s896, 4
        %s898 = scalar_lea.vmem %s2, %s897
        // Predicated region
        $region78: #{_lambda_.37} parent=64 // pred_check
          %p899 = pneg %p108
        $region79: #{_lambda_.37} parent=64 // pred_check_branch
          %901 = sbr.rel (%p899) target = $region81
        $region80: #{_lambda_.37} parent=64 // pred_region
          %s902 = smul.u32 32, %s18
        $region81: #{_lambda_.37} parent=64 // pred_fallthru
          _
        // Predicated region
        $region82: #{_lambda_.37} parent=64 // pred_check
          %p903 = pneg %p108
        $region83: #{_lambda_.37} parent=64 // pred_check_branch
          %905 = sbr.rel (%p903) target = $region85
        $region84: #{_lambda_.37} parent=64 // pred_region
          %s906 = smul.u32 32, %s18
          %p907 = scmp.lt.s32.totalorder %s906, 31
          %s908 = scalar_select %p907, %s906, 31
          %p909 = scmp.lt.s32.totalorder %s19, 0
          %s910 = scalar_select %p909, %s19, 0
          %s911 = sadd.s32 %s910, %s908
          %s912 = smul.addr %s911, 4
          %s913 = scalar_lea.vmem %s2, %s912
        $region85: #{_lambda_.37} parent=64 // pred_fallthru
          _
      $region65: #{_lambda_.37} parent=5 // pred_fallthru
        _
      %p914 = scmp.le.s32.totalorder 2, %s8
      // Predicated region
      $region86: #{_lambda_.37} parent=5 // pred_check
        %p915 = pneg %p914
      $region87: #{_lambda_.37} parent=5 // pred_check_branch
        %917 = sbr.rel (%p915) target = $region89
      $region88: #{_lambda_.37} parent=5 // pred_region
        %s918 = ssub.s32 %s8, 2
      $region89: #{_lambda_.37} parent=5 // pred_fallthru
        _
    $region6: #{_lambda_.37} parent=1 // loop_footer
      %s12 = sadd.s32 1, %s8
    $region7: #{_lambda_.37} parent=1 // loop_footer_branch
      %7 = sbr.rel target = $region3
    $region8: #{_lambda_.37} parent=1 // loop_exit
      _

// kernel: _lambda_.42
$region0: #{_lambda_.42}
  #allocation0 [shape = 'u32[]', space=smem, size = 0x4, offset = 0x4, fixed_abs, tag = 'smem constant byte address 0x4 - core index']
  #allocation1 [shape = 'u32[72,128]{1,0:T(1,128)}', space=vmem, size = 0x9000, scoped, tag = 'internal scratch']
  %s0 = inlined_call_operand.vmem [shape: bf16[256,128], index: 0, kind: input, shape index: {}]
  %s1 = inlined_call_operand.vmem [shape: f32[1,128], index: 1, kind: input, shape index: {}]
  %s2 = inlined_call_operand.vmem [shape: f32[1,128], index: 2, kind: input, shape index: {}]
  %s3 = inlined_call_operand.vmem [shape: f32[1,128], index: 3, kind: input, shape index: {}]
  %s4 = inlined_call_operand.vmem [shape: f32[1,128], index: 4, kind: input, shape index: {}]
  %s5 = inlined_call_operand.vmem [shape: bf16[256,128], index: 5, kind: input, shape index: {}]
  %s6 = inlined_call_operand.vmem [shape: bf16[256,128], index: 6, kind: output, shape index: {}]
  %s7 = sld [smem:[#allocation0]]
  $region34: #{_lambda_.42} parent=0
    _
  %s9 = ssub.s32 1, %s7
  %s10 = scalar_select 0, %s9, %s7
  // Predicated region
  $region2: #{_lambda_.42} parent=0 // pred_check
    _
  $region3: #{_lambda_.42} parent=0 // pred_check_branch
    %12 = sbr.rel (0) target = $region5
  $region4: #{_lambda_.42} parent=0 // pred_region
    _
  $region5: #{_lambda_.42} parent=0 // pred_fallthru
    _
  // Predicated region
  $region6: #{_lambda_.42} parent=0 // pred_check
    _
  $region7: #{_lambda_.42} parent=0 // pred_check_branch
    %14 = sbr.rel (0) target = $region9
  $region8: #{_lambda_.42} parent=0 // pred_region
    _
  $region9: #{_lambda_.42} parent=0 // pred_fallthru
    _
  // Predicated region
  $region10: #{_lambda_.42} parent=0 // pred_check
    _
  $region11: #{_lambda_.42} parent=0 // pred_check_branch
    %16 = sbr.rel (0) target = $region13
  $region12: #{_lambda_.42} parent=0 // pred_region
    _
  $region13: #{_lambda_.42} parent=0 // pred_fallthru
    _
  // Predicated region
  $region14: #{_lambda_.42} parent=0 // pred_check
    _
  $region15: #{_lambda_.42} parent=0 // pred_check_branch
    %18 = sbr.rel (0) target = $region17
  $region16: #{_lambda_.42} parent=0 // pred_region
    _
  $region17: #{_lambda_.42} parent=0 // pred_fallthru
    _
  // Predicated region
  $region18: #{_lambda_.42} parent=0 // pred_check
    _
  $region19: #{_lambda_.42} parent=0 // pred_check_branch
    %20 = sbr.rel (0) target = $region21
  $region20: #{_lambda_.42} parent=0 // pred_region
    _
  $region21: #{_lambda_.42} parent=0 // pred_fallthru
    _
  // Predicated region
  $region22: #{_lambda_.42} parent=0 // pred_check
    _
  $region23: #{_lambda_.42} parent=0 // pred_check_branch
    %22 = sbr.rel (0) target = $region25
  $region24: #{_lambda_.42} parent=0 // pred_region
    _
  $region25: #{_lambda_.42} parent=0 // pred_fallthru
    _
  %v23 = vld [vmem:[%s1] sm:$0x1]
  %v24 = vmul.f32 %v23, 0.03125
  %v25 = vld [vmem:[%s2] sm:$0x1]
  %v26 = vmul.f32 %v25, 0.03125
  %v27 = vmul.f32 %v24, %v24
  %v28 = vsub.f32 %v26, %v27
  %v29 = vld [vmem:[%s3] sm:$0x1]
  %v30 = vadd.f32 %v28, 1e-05
  %v31 = vrsqrt.pop %v30
  %v32 = vmul.f32 %v31, %v30
  %v33 = vmul.f32 %v32, %v31
  %v34 = vmul.f32 0.5, %v33
  %v35 = vsub.f32 1.5, %v34
  %v36 = vmul.f32 %v31, %v35
  %vm37 = vweird.f32 %v30
  %vm38 = vweird.f32 %v31
  %vm39 = vmor %vm37, %vm38
  %v40 = vsel %vm39, %v31, %v36
  %v41 = vmul.f32 %v29, %v40
  %v42 = vld [vmem:[%s4] sm:$0x1]
  %v43 = vmul.f32 %v24, %v41
  %v44 = vsub.f32 %v42, %v43
  %v45 = vld [vmem:[%s0] sm:$0xf]
  %v46 = vld [vmem:[%s0 + $0x4] sm:$0xf]
  %v47 = vld [vmem:[%s0 + $0x8] sm:$0xf]
  %v48 = vld [vmem:[%s0 + $0xc] sm:$0xf]
  %v49 = vld [vmem:[%s0 + $0x10] sm:$0xf]
  %v50 = vld [vmem:[%s0 + $0x14] sm:$0xf]
  %v51 = vld [vmem:[%s0 + $0x18] sm:$0xf]
  %v52 = vld [vmem:[%s0 + $0x1c] sm:$0xf]
  %v53 = vld [vmem:[%s0 + $0x20] sm:$0xf]
  %v54 = vld [vmem:[%s0 + $0x24] sm:$0xf]
  %v55 = vld [vmem:[%s0 + $0x28] sm:$0xf]
  %v56 = vld [vmem:[%s0 + $0x2c] sm:$0xf]
  %v57 = vld [vmem:[%s0 + $0x30] sm:$0xf]
  %v58 = vld [vmem:[%s0 + $0x34] sm:$0xf]
  %v59 = vld [vmem:[%s0 + $0x38] sm:$0xf]
  %v60 = vld [vmem:[%s0 + $0x3c] sm:$0xf]
  %v61 = vld [vmem:[%s0 + $0x40] sm:$0xf]
  %v62 = vld [vmem:[%s0 + $0x44] sm:$0xf]
  %v63 = vld [vmem:[%s0 + $0x48] sm:$0xf]
  %v64 = vld [vmem:[%s0 + $0x4c] sm:$0xf]
  %v65 = vld [vmem:[%s0 + $0x50] sm:$0xf]
  %v66 = vld [vmem:[%s0 + $0x54] sm:$0xf]
  %v67 = vld [vmem:[%s0 + $0x58] sm:$0xf]
  %v68 = vld [vmem:[%s0 + $0x5c] sm:$0xf]
  %v69 = vld [vmem:[%s0 + $0x60] sm:$0xf]
  %v70 = vld [vmem:[%s0 + $0x64] sm:$0xf]
  %v71 = vld [vmem:[%s0 + $0x68] sm:$0xf]
  %v72 = vld [vmem:[%s0 + $0x6c] sm:$0xf]
  %v73 = vld [vmem:[%s0 + $0x70] sm:$0xf]
  %v74 = vld [vmem:[%s0 + $0x74] sm:$0xf]
  %v75 = vld [vmem:[%s0 + $0x78] sm:$0xf]
  %v76 = vld [vmem:[%s0 + $0x7c] sm:$0xf]
  %v77 = vunpack.c.l.bf16 %v45
  %v78 = vunpack.c.l.bf16 %v46
  %v79 = vunpack.c.l.bf16 %v47
  %v80 = vunpack.c.l.bf16 %v48
  %v81 = vunpack.c.l.bf16 %v49
  %v82 = vunpack.c.l.bf16 %v50
  %v83 = vunpack.c.l.bf16 %v51
  %v84 = vunpack.c.l.bf16 %v52
  %v85 = vunpack.c.l.bf16 %v53
  %v86 = vunpack.c.l.bf16 %v54
  %v87 = vunpack.c.l.bf16 %v55
  %v88 = vunpack.c.l.bf16 %v56
  %v89 = vunpack.c.l.bf16 %v57
  %v90 = vunpack.c.l.bf16 %v58
  %v91 = vunpack.c.l.bf16 %v59
  %v92 = vunpack.c.l.bf16 %v60
  %v93 = vunpack.c.l.bf16 %v61
  %v94 = vunpack.c.l.bf16 %v62
  %v95 = vunpack.c.l.bf16 %v63
  %v96 = vunpack.c.l.bf16 %v64
  %v97 = vunpack.c.l.bf16 %v65
  %v98 = vunpack.c.l.bf16 %v66
  %v99 = vunpack.c.l.bf16 %v67
  %v100 = vunpack.c.l.bf16 %v68
  %v101 = vunpack.c.l.bf16 %v69
  %v102 = vunpack.c.l.bf16 %v70
  %v103 = vunpack.c.l.bf16 %v71
  %v104 = vunpack.c.l.bf16 %v72
  %v105 = vunpack.c.l.bf16 %v73
  %v106 = vunpack.c.l.bf16 %v74
  %v107 = vunpack.c.l.bf16 %v75
  %v108 = vunpack.c.l.bf16 %v76
  %v110 = vperm.slane %v41, 0
  %v112 = vmul.f32 %v77, %v110
  %v113 = vmul.f32 %v78, %v110
  %v114 = vmul.f32 %v79, %v110
  %v115 = vmul.f32 %v80, %v110
  %v116 = vmul.f32 %v81, %v110
  %v117 = vmul.f32 %v82, %v110
  %v118 = vmul.f32 %v83, %v110
  %v119 = vmul.f32 %v84, %v110
  %v120 = vmul.f32 %v85, %v110
  %v121 = vmul.f32 %v86, %v110
  %v122 = vmul.f32 %v87, %v110
  %v123 = vmul.f32 %v88, %v110
  %v124 = vmul.f32 %v89, %v110
  %v125 = vmul.f32 %v90, %v110
  %v126 = vmul.f32 %v91, %v110
  %v127 = vmul.f32 %v92, %v110
  %v128 = vmul.f32 %v93, %v110
  %v129 = vmul.f32 %v94, %v110
  %v130 = vmul.f32 %v95, %v110
  %v131 = vmul.f32 %v96, %v110
  %v132 = vmul.f32 %v97, %v110
  %v133 = vmul.f32 %v98, %v110
  %v134 = vmul.f32 %v99, %v110
  %v135 = vmul.f32 %v100, %v110
  %v136 = vmul.f32 %v101, %v110
  %v137 = vmul.f32 %v102, %v110
  %v138 = vmul.f32 %v103, %v110
  %v139 = vmul.f32 %v104, %v110
  %v140 = vmul.f32 %v105, %v110
  %v141 = vmul.f32 %v106, %v110
  %v142 = vmul.f32 %v107, %v110
  %v143 = vmul.f32 %v108, %v110
  %v145 = vperm.slane %v44, 0
  %v147 = vadd.f32 %v112, %v145
  %v148 = vadd.f32 %v113, %v145
  %v149 = vadd.f32 %v114, %v145
  %v150 = vadd.f32 %v115, %v145
  %v151 = vadd.f32 %v116, %v145
  %v152 = vadd.f32 %v117, %v145
  %v153 = vadd.f32 %v118, %v145
  %v154 = vadd.f32 %v119, %v145
  %v155 = vadd.f32 %v120, %v145
  %v156 = vadd.f32 %v121, %v145
  %v157 = vadd.f32 %v122, %v145
  %v158 = vadd.f32 %v123, %v145
  %v159 = vadd.f32 %v124, %v145
  %v160 = vadd.f32 %v125, %v145
  %v161 = vadd.f32 %v126, %v145
  %v162 = vadd.f32 %v127, %v145
  %v163 = vadd.f32 %v128, %v145
  %v164 = vadd.f32 %v129, %v145
  %v165 = vadd.f32 %v130, %v145
  %v166 = vadd.f32 %v131, %v145
  %v167 = vadd.f32 %v132, %v145
  %v168 = vadd.f32 %v133, %v145
  %v169 = vadd.f32 %v134, %v145
  %v170 = vadd.f32 %v135, %v145
  %v171 = vadd.f32 %v136, %v145
  %v172 = vadd.f32 %v137, %v145
  %v173 = vadd.f32 %v138, %v145
  %v174 = vadd.f32 %v139, %v145
  %v175 = vadd.f32 %v140, %v145
  %v176 = vadd.f32 %v141, %v145
  %v177 = vadd.f32 %v142, %v145
  %v178 = vadd.f32 %v143, %v145
  %v179 = vld [vmem:[%s5] sm:$0xf]
  %v180 = vld [vmem:[%s5 + $0x4] sm:$0xf]
  %v181 = vld [vmem:[%s5 + $0x8] sm:$0xf]
  %v182 = vld [vmem:[%s5 + $0xc] sm:$0xf]
  %v183 = vld [vmem:[%s5 + $0x10] sm:$0xf]
  %v184 = vld [vmem:[%s5 + $0x14] sm:$0xf]
  %v185 = vld [vmem:[%s5 + $0x18] sm:$0xf]
  %v186 = vld [vmem:[%s5 + $0x1c] sm:$0xf]
  %v187 = vld [vmem:[%s5 + $0x20] sm:$0xf]
  %v188 = vld [vmem:[%s5 + $0x24] sm:$0xf]
  %v189 = vld [vmem:[%s5 + $0x28] sm:$0xf]
  %v190 = vld [vmem:[%s5 + $0x2c] sm:$0xf]
  %v191 = vld [vmem:[%s5 + $0x30] sm:$0xf]
  %v192 = vld [vmem:[%s5 + $0x34] sm:$0xf]
  %v193 = vld [vmem:[%s5 + $0x38] sm:$0xf]
  %v194 = vld [vmem:[%s5 + $0x3c] sm:$0xf]
  %v195 = vld [vmem:[%s5 + $0x40] sm:$0xf]
  %v196 = vld [vmem:[%s5 + $0x44] sm:$0xf]
  %v197 = vld [vmem:[%s5 + $0x48] sm:$0xf]
  %v198 = vld [vmem:[%s5 + $0x4c] sm:$0xf]
  %v199 = vld [vmem:[%s5 + $0x50] sm:$0xf]
  %v200 = vld [vmem:[%s5 + $0x54] sm:$0xf]
  %v201 = vld [vmem:[%s5 + $0x58] sm:$0xf]
  %v202 = vld [vmem:[%s5 + $0x5c] sm:$0xf]
  %v203 = vld [vmem:[%s5 + $0x60] sm:$0xf]
  %v204 = vld [vmem:[%s5 + $0x64] sm:$0xf]
  %v205 = vld [vmem:[%s5 + $0x68] sm:$0xf]
  %v206 = vld [vmem:[%s5 + $0x6c] sm:$0xf]
  %v207 = vld [vmem:[%s5 + $0x70] sm:$0xf]
  %v208 = vld [vmem:[%s5 + $0x74] sm:$0xf]
  %v209 = vld [vmem:[%s5 + $0x78] sm:$0xf]
  %v210 = vld [vmem:[%s5 + $0x7c] sm:$0xf]
  %v211 = vunpack.c.l.bf16 %v179
  %v212 = vunpack.c.l.bf16 %v180
  %v213 = vunpack.c.l.bf16 %v181
  %v214 = vunpack.c.l.bf16 %v182
  %v215 = vunpack.c.l.bf16 %v183
  %v216 = vunpack.c.l.bf16 %v184
  %v217 = vunpack.c.l.bf16 %v185
  %v218 = vunpack.c.l.bf16 %v186
  %v219 = vunpack.c.l.bf16 %v187
  %v220 = vunpack.c.l.bf16 %v188
  %v221 = vunpack.c.l.bf16 %v189
  %v222 = vunpack.c.l.bf16 %v190
  %v223 = vunpack.c.l.bf16 %v191
  %v224 = vunpack.c.l.bf16 %v192
  %v225 = vunpack.c.l.bf16 %v193
  %v226 = vunpack.c.l.bf16 %v194
  %v227 = vunpack.c.l.bf16 %v195
  %v228 = vunpack.c.l.bf16 %v196
  %v229 = vunpack.c.l.bf16 %v197
  %v230 = vunpack.c.l.bf16 %v198
  %v231 = vunpack.c.l.bf16 %v199
  %v232 = vunpack.c.l.bf16 %v200
  %v233 = vunpack.c.l.bf16 %v201
  %v234 = vunpack.c.l.bf16 %v202
  %v235 = vunpack.c.l.bf16 %v203
  %v236 = vunpack.c.l.bf16 %v204
  %v237 = vunpack.c.l.bf16 %v205
  %v238 = vunpack.c.l.bf16 %v206
  %v239 = vunpack.c.l.bf16 %v207
  %v240 = vunpack.c.l.bf16 %v208
  %v241 = vunpack.c.l.bf16 %v209
  %v242 = vunpack.c.l.bf16 %v210
  %v243 = vadd.f32 %v147, %v211
  %v244 = vadd.f32 %v148, %v212
  %v245 = vadd.f32 %v149, %v213
  %v246 = vadd.f32 %v150, %v214
  %v247 = vadd.f32 %v151, %v215
  %v248 = vadd.f32 %v152, %v216
  %v249 = vadd.f32 %v153, %v217
  %v250 = vadd.f32 %v154, %v218
  %v251 = vadd.f32 %v155, %v219
  %v252 = vadd.f32 %v156, %v220
  %v253 = vadd.f32 %v157, %v221
  %v254 = vadd.f32 %v158, %v222
  %v255 = vadd.f32 %v159, %v223
  %v256 = vadd.f32 %v160, %v224
  %v257 = vadd.f32 %v161, %v225
  %v258 = vadd.f32 %v162, %v226
  %v259 = vadd.f32 %v163, %v227
  %v260 = vadd.f32 %v164, %v228
  %v261 = vadd.f32 %v165, %v229
  %v262 = vadd.f32 %v166, %v230
  %v263 = vadd.f32 %v167, %v231
  %v264 = vadd.f32 %v168, %v232
  %v265 = vadd.f32 %v169, %v233
  %v266 = vadd.f32 %v170, %v234
  %v267 = vadd.f32 %v171, %v235
  %v268 = vadd.f32 %v172, %v236
  %v269 = vadd.f32 %v173, %v237
  %v270 = vadd.f32 %v174, %v238
  %v271 = vadd.f32 %v175, %v239
  %v272 = vadd.f32 %v176, %v240
  %v273 = vadd.f32 %v177, %v241
  %v274 = vadd.f32 %v178, %v242
  %v275 = vpack.c.bf16 %v243, %v243
  %v276 = vpack.c.bf16 %v244, %v244
  %v277 = vpack.c.bf16 %v245, %v245
  %v278 = vpack.c.bf16 %v246, %v246
  %v279 = vpack.c.bf16 %v247, %v247
  %v280 = vpack.c.bf16 %v248, %v248
  %v281 = vpack.c.bf16 %v249, %v249
  %v282 = vpack.c.bf16 %v250, %v250
  %v283 = vpack.c.bf16 %v251, %v251
  %v284 = vpack.c.bf16 %v252, %v252
  %v285 = vpack.c.bf16 %v253, %v253
  %v286 = vpack.c.bf16 %v254, %v254
  %v287 = vpack.c.bf16 %v255, %v255
  %v288 = vpack.c.bf16 %v256, %v256
  %v289 = vpack.c.bf16 %v257, %v257
  %v290 = vpack.c.bf16 %v258, %v258
  %v291 = vpack.c.bf16 %v259, %v259
  %v292 = vpack.c.bf16 %v260, %v260
  %v293 = vpack.c.bf16 %v261, %v261
  %v294 = vpack.c.bf16 %v262, %v262
  %v295 = vpack.c.bf16 %v263, %v263
  %v296 = vpack.c.bf16 %v264, %v264
  %v297 = vpack.c.bf16 %v265, %v265
  %v298 = vpack.c.bf16 %v266, %v266
  %v299 = vpack.c.bf16 %v267, %v267
  %v300 = vpack.c.bf16 %v268, %v268
  %v301 = vpack.c.bf16 %v269, %v269
  %v302 = vpack.c.bf16 %v270, %v270
  %v303 = vpack.c.bf16 %v271, %v271
  %v304 = vpack.c.bf16 %v272, %v272
  %v305 = vpack.c.bf16 %v273, %v273
  %v306 = vpack.c.bf16 %v274, %v274
  %307 = vst [vmem:[%s6] sm:$0xf] %v275
  %308 = vst [vmem:[%s6 + $0x4] sm:$0xf] %v276
  %309 = vst [vmem:[%s6 + $0x8] sm:$0xf] %v277
  %310 = vst [vmem:[%s6 + $0xc] sm:$0xf] %v278
  %311 = vst [vmem:[%s6 + $0x10] sm:$0xf] %v279
  %312 = vst [vmem:[%s6 + $0x14] sm:$0xf] %v280
  %313 = vst [vmem:[%s6 + $0x18] sm:$0xf] %v281
  %314 = vst [vmem:[%s6 + $0x1c] sm:$0xf] %v282
  %315 = vst [vmem:[%s6 + $0x20] sm:$0xf] %v283
  %316 = vst [vmem:[%s6 + $0x24] sm:$0xf] %v284
  %317 = vst [vmem:[%s6 + $0x28] sm:$0xf] %v285
  %318 = vst [vmem:[%s6 + $0x2c] sm:$0xf] %v286
  %319 = vst [vmem:[%s6 + $0x30] sm:$0xf] %v287
  %320 = vst [vmem:[%s6 + $0x34] sm:$0xf] %v288
  %321 = vst [vmem:[%s6 + $0x38] sm:$0xf] %v289
  %322 = vst [vmem:[%s6 + $0x3c] sm:$0xf] %v290
  %323 = vst [vmem:[%s6 + $0x40] sm:$0xf] %v291
  %324 = vst [vmem:[%s6 + $0x44] sm:$0xf] %v292
  %325 = vst [vmem:[%s6 + $0x48] sm:$0xf] %v293
  %326 = vst [vmem:[%s6 + $0x4c] sm:$0xf] %v294
  %327 = vst [vmem:[%s6 + $0x50] sm:$0xf] %v295
  %328 = vst [vmem:[%s6 + $0x54] sm:$0xf] %v296
  %329 = vst [vmem:[%s6 + $0x58] sm:$0xf] %v297
  %330 = vst [vmem:[%s6 + $0x5c] sm:$0xf] %v298
  %331 = vst [vmem:[%s6 + $0x60] sm:$0xf] %v299
  %332 = vst [vmem:[%s6 + $0x64] sm:$0xf] %v300
  %333 = vst [vmem:[%s6 + $0x68] sm:$0xf] %v301
  %334 = vst [vmem:[%s6 + $0x6c] sm:$0xf] %v302
  %335 = vst [vmem:[%s6 + $0x70] sm:$0xf] %v303
  %336 = vst [vmem:[%s6 + $0x74] sm:$0xf] %v304
  %337 = vst [vmem:[%s6 + $0x78] sm:$0xf] %v305
  %338 = vst [vmem:[%s6 + $0x7c] sm:$0xf] %v306
  // Predicated region
  $region26: #{_lambda_.42} parent=0 // pred_check
    _
  $region27: #{_lambda_.42} parent=0 // pred_check_branch
    %340 = sbr.rel (0) target = $region29
  $region28: #{_lambda_.42} parent=0 // pred_region
    _
  $region29: #{_lambda_.42} parent=0 // pred_fallthru
    _
  // Predicated region
  $region30: #{_lambda_.42} parent=0 // pred_check
    _
  $region31: #{_lambda_.42} parent=0 // pred_check_branch
    %342 = sbr.rel (0) target = $region33
  $region32: #{_lambda_.42} parent=0 // pred_region
    _
  $region33: #{_lambda_.42} parent=0 // pred_fallthru
    _

// kernel: _lambda_.55
$region0: #{_lambda_.55}
  #allocation0 [shape = 'u32[]', space=smem, size = 0x4, offset = 0x4, fixed_abs, tag = 'smem constant byte address 0x4 - core index']
  #allocation1 [shape = 'u32[72,128]{1,0:T(1,128)}', space=vmem, size = 0x9000, scoped, tag = 'internal scratch']
  #allocation2 [shape = 'f32[256,128]{1,0:T(8,128)}', space=vmem, size = 0x20000, scoped, tag = 'scratch operand']
  %s0 = inlined_call_operand.vmem [shape: bf16[512,512], index: 0, kind: input, shape index: {}]
  %s1 = inlined_call_operand.vmem [shape: bf16[512,128], index: 1, kind: input, shape index: {}]
  %s2 = inlined_call_operand.vmem [shape: f32[1,128], index: 2, kind: input, shape index: {}]
  %s3 = inlined_call_operand.vmem [shape: f32[512,128], index: 3, kind: output, shape index: {}]
  %s4 = sld [smem:[#allocation0]]
  $region53: #{_lambda_.55} parent=0
    _
  %s6 = ssub.s32 1, %s4
  %s7 = scalar_select 0, %s6, %s4
  loop: start=0, step=1, limit=4
  $region2: #{_lambda_.55} parent=0 // loop_pre_header
    _
  $region3: #{_lambda_.55} parent=0 // loop_header
    %s9 = sphi 0, %s13
    %p10 = scmp.ge.s32.totalorder %s9, 4
    %s16 = sphi 0, %s35
    %s17 = sphi 0, %s31
    %s18 = sphi 0, %s27
    %s19 = sphi 0, %s16
    %s20 = sphi 0, %s17
    %s21 = sphi 0, %s18
    %s22 = sphi 0, %s19
    %s23 = sphi 0, %s20
    %s24 = sphi 0, %s21
    %s40 = sphi 0, %s42
    %s43 = sphi 0, %s40
    %s44 = sphi 0, %s43
    %s60 = sphi 0, %s44
    %s68 = sphi 0, %s70
    %s71 = sphi 0, %s68
    %s72 = sphi 0, %s71
    %s88 = sphi 0, %s72
    %s94 = sphi 0, %s96
    %s97 = sphi 0, %s94
    %s98 = sphi 0, %s97
    %s114 = sphi 0, %s98
    %s122 = sphi 0, %s124
    %s125 = sphi 0, %s122
    %s126 = sphi 0, %s125
    %s142 = sphi 0, %s126
  $region4: #{_lambda_.55} parent=0 // loop_header_branch
    %12 = sbr.rel (%p10) target = $region8
  $region5: #{_lambda_.55} parent=0 // loop_body
    %s14 = ssub.s32 %s9, 1
    %s15 = ssub.s32 %s9, 2
    %s25 = sadd.s32 1, %s18
    %p26 = scmp.ge.s32.totalorder %s25, 1
    %s27 = scalar_select %p26, 0, %s25
    %s28 = sadd.s32 1, %s17
    %s29 = scalar_select %p26, %s28, %s17
    %p30 = scmp.ge.s32.totalorder %s29, 1
    %s31 = scalar_select %p30, 0, %s29
    %s32 = sadd.s32 1, %s16
    %s33 = scalar_select %p30, %s32, %s16
    %p34 = scmp.ge.s32.totalorder %s33, 2
    %s35 = scalar_select %p34, 0, %s33
    %s36 = ssub.s32 %s16, %s35
    %s37 = ssub.s32 %s18, %s27
    %s38 = sor.u32 %s36, %s37
    %p39 = scmp.eq.s32.totalorder %s38, 0
    %s41 = sadd.s32 %s40, 1
    %s42 = scalar_select %p39, %s40, %s41
    %p45 = pneg %p39
    %p46 = scmp.eq.s32.totalorder %s9, 1
    %p47 = por %p45, %p46
    %p48 = scmp.ne.s32.totalorder %s40, %s43
    %p49 = scmp.eq.s32.totalorder %s9, 0
    %p50 = por %p48, %p49
    %p51 = scmp.ne.s32.totalorder %s40, %s43
    %p52 = scmp.eq.s32.totalorder %s14, 1
    %p53 = por %p51, %p52
    %p54 = scmp.ne.s32.totalorder %s43, %s44
    %p55 = scmp.eq.s32.totalorder %s14, 0
    %p56 = por %p54, %p55
    %p57 = scmp.ne.s32.totalorder %s43, %s44
    %p58 = scmp.eq.s32.totalorder %s15, 1
    %p59 = por %p57, %p58
    %p61 = scmp.ne.s32.totalorder %s44, %s60
    %p62 = scmp.eq.s32.totalorder %s15, 0
    %p63 = por %p61, %p62
    %s64 = ssub.s32 %s18, %s27
    %s65 = ssub.s32 %s17, %s31
    %s66 = sor.u32 %s64, %s65
    %p67 = scmp.eq.s32.totalorder %s66, 0
    %s69 = sadd.s32 %s68, 1
    %s70 = scalar_select %p67, %s68, %s69
    %p73 = pneg %p67
    %p74 = scmp.eq.s32.totalorder %s9, 1
    %p75 = por %p73, %p74
    %p76 = scmp.ne.s32.totalorder %s68, %s71
    %p77 = scmp.eq.s32.totalorder %s9, 0
    %p78 = por %p76, %p77
    %p79 = scmp.ne.s32.totalorder %s68, %s71
    %p80 = scmp.eq.s32.totalorder %s14, 1
    %p81 = por %p79, %p80
    %p82 = scmp.ne.s32.totalorder %s71, %s72
    %p83 = scmp.eq.s32.totalorder %s14, 0
    %p84 = por %p82, %p83
    %p85 = scmp.ne.s32.totalorder %s71, %s72
    %p86 = scmp.eq.s32.totalorder %s15, 1
    %p87 = por %p85, %p86
    %p89 = scmp.ne.s32.totalorder %s72, %s88
    %p90 = scmp.eq.s32.totalorder %s15, 0
    %p91 = por %p89, %p90
    %s92 = ssub.s32 %s17, %s31
    %p93 = scmp.eq.s32.totalorder %s92, 0
    %s95 = sadd.s32 %s94, 1
    %s96 = scalar_select %p93, %s94, %s95
    %p99 = pneg %p93
    %p100 = scmp.eq.s32.totalorder %s9, 1
    %p101 = por %p99, %p100
    %p102 = scmp.ne.s32.totalorder %s94, %s97
    %p103 = scmp.eq.s32.totalorder %s9, 0
    %p104 = por %p102, %p103
    %p105 = scmp.ne.s32.totalorder %s94, %s97
    %p106 = scmp.eq.s32.totalorder %s14, 1
    %p107 = por %p105, %p106
    %p108 = scmp.ne.s32.totalorder %s97, %s98
    %p109 = scmp.eq.s32.totalorder %s14, 0
    %p110 = por %p108, %p109
    %p111 = scmp.ne.s32.totalorder %s97, %s98
    %p112 = scmp.eq.s32.totalorder %s15, 1
    %p113 = por %p111, %p112
    %p115 = scmp.ne.s32.totalorder %s98, %s114
    %p116 = scmp.eq.s32.totalorder %s15, 0
    %p117 = por %p115, %p116
    %s118 = ssub.s32 %s16, %s35
    %s119 = ssub.s32 %s17, %s31
    %s120 = sor.u32 %s118, %s119
    %p121 = scmp.eq.s32.totalorder %s120, 0
    %s123 = sadd.s32 %s122, 1
    %s124 = scalar_select %p121, %s122, %s123
    %p127 = pneg %p121
    %p128 = scmp.eq.s32.totalorder %s9, 1
    %p129 = por %p127, %p128
    %p130 = scmp.ne.s32.totalorder %s122, %s125
    %p131 = scmp.eq.s32.totalorder %s9, 0
    %p132 = por %p130, %p131
    %p133 = scmp.ne.s32.totalorder %s122, %s125
    %p134 = scmp.eq.s32.totalorder %s14, 1
    %p135 = por %p133, %p134
    %p136 = scmp.ne.s32.totalorder %s125, %s126
    %p137 = scmp.eq.s32.totalorder %s14, 0
    %p138 = por %p136, %p137
    %p139 = scmp.ne.s32.totalorder %s125, %s126
    %p140 = scmp.eq.s32.totalorder %s15, 1
    %p141 = por %p139, %p140
    %p143 = scmp.ne.s32.totalorder %s126, %s142
    %p144 = scmp.eq.s32.totalorder %s15, 0
    %p145 = por %p143, %p144
    %p146 = scmp.le.s32.totalorder 1, %s9
    %p147 = scmp.lt.s32.totalorder %s9, 3
    %p148 = pnand %p146, %p147
    %p149 = pneg %p148
    // Predicated region
    $region9: #{_lambda_.55} parent=5 // pred_check
      _
    $region10: #{_lambda_.55} parent=5 // pred_check_branch
      %151 = sbr.rel (%p148) target = $region12
    $region11: #{_lambda_.55} parent=5 // pred_region
      %s152 = ssub.s32 %s9, 1
      // Predicated region
      $region13: #{_lambda_.55} parent=11 // pred_check
        %p153 = pneg %p84
      $region14: #{_lambda_.55} parent=11 // pred_check_branch
        %155 = sbr.rel (%p153) target = $region16
      $region15: #{_lambda_.55} parent=11 // pred_region
        %s156 = smul.u32 64, %s21
        %p157 = scmp.lt.s32.totalorder %s156, 63
        %s158 = scalar_select %p157, %s156, 63
        %p159 = scmp.lt.s32.totalorder %s20, 0
        %s160 = scalar_select %p159, %s20, 0
        %s161 = sadd.s32 %s160, %s158
        %s162 = smul.addr %s161, 4
        %s163 = scalar_lea.vmem %s1, %s162
        %s164 = smul.u32 64, %s21
      $region16: #{_lambda_.55} parent=11 // pred_fallthru
        _
      // Predicated region
      $region17: #{_lambda_.55} parent=11 // pred_check
        %p165 = pneg %p110
      $region18: #{_lambda_.55} parent=11 // pred_check_branch
        %167 = sbr.rel (%p165) target = $region20
      $region19: #{_lambda_.55} parent=11 // pred_region
        %p168 = scmp.lt.s32.totalorder %s20, 0
        %s169 = scalar_select %p168, %s20, 0
        %s170 = scalar_lea.vmem %s2, %s169
      $region20: #{_lambda_.55} parent=11 // pred_fallthru
        _
    $region12: #{_lambda_.55} parent=5 // pred_fallthru
      _
    %p171 = scmp.lt.s32.totalorder %s9, 2
    // Predicated region
    $region21: #{_lambda_.55} parent=5 // pred_check
      %p172 = pneg %p171
    $region22: #{_lambda_.55} parent=5 // pred_check_branch
      %174 = sbr.rel (%p172) target = $region24
    $region23: #{_lambda_.55} parent=5 // pred_region
      // Predicated region
      $region25: #{_lambda_.55} parent=23 // pred_check
        %p175 = pneg %p50
      $region26: #{_lambda_.55} parent=23 // pred_check_branch
        %177 = sbr.rel (%p175) target = $region28
      $region27: #{_lambda_.55} parent=23 // pred_region
        %s178 = smul.u32 32, %s16
        %s179 = smul.u32 4, %s18
        %p180 = scmp.lt.s32.totalorder %s178, 63
        %s181 = scalar_select %p180, %s178, 63
        %p182 = scmp.lt.s32.totalorder %s179, 3
        %s183 = scalar_select %p182, %s179, 3
        %s184 = smul.addr %s181, 4
        %s185 = sadd.s32 %s183, %s184
        %s186 = smul.addr %s185, 4
        %s187 = scalar_lea.vmem %s0, %s186
        %s188 = smul.u32 32, %s16
        %s189 = smul.u32 4, %s18
      $region28: #{_lambda_.55} parent=23 // pred_fallthru
        _
    $region24: #{_lambda_.55} parent=5 // pred_fallthru
      _
    %p190 = scmp.le.s32.totalorder 1, %s9
    %p191 = scmp.lt.s32.totalorder %s9, 3
    %p192 = pnand %p190, %p191
    %p193 = pneg %p192
    // Predicated region
    $region29: #{_lambda_.55} parent=5 // pred_check
      _
    $region30: #{_lambda_.55} parent=5 // pred_check_branch
      %195 = sbr.rel (%p192) target = $region32
    $region31: #{_lambda_.55} parent=5 // pred_region
      %s196 = ssub.s32 %s9, 1
      %s197 = smul.u32 32, %s19
      %s198 = smul.u32 4, %s21
      %p199 = scmp.lt.s32.totalorder %s197, 63
      %s200 = scalar_select %p199, %s197, 63
      %p201 = scmp.lt.s32.totalorder %s198, 3
      %s202 = scalar_select %p201, %s198, 3
      %s203 = smul.addr %s200, 4
      %s204 = sadd.s32 %s202, %s203
      %s205 = smul.addr %s204, 4
      %s206 = scalar_lea.vmem %s0, %s205
      %p207 = pneg %p56
      %p208 = pneg %p53
      %s209 = smul.u32 64, %s21
      %p210 = scmp.lt.s32.totalorder %s209, 63
      %s211 = scalar_select %p210, %s209, 63
      %p212 = scmp.lt.s32.totalorder %s20, 0
      %s213 = scalar_select %p212, %s20, 0
      %s214 = sadd.s32 %s213, %s211
      %s215 = smul.addr %s214, 4
      %s216 = scalar_lea.vmem %s1, %s215
      %p217 = pneg %p84
      %p218 = pneg %p81
      %p219 = scmp.lt.s32.totalorder %s20, 0
      %s220 = scalar_select %p219, %s20, 0
      %s221 = scalar_lea.vmem %s2, %s220
      %p222 = pneg %p110
      %p223 = pneg %p107
      %p224 = pneg %p138
      %p225 = pneg %p135
      %s226 = smul.u32 32, %s19
      %p227 = scmp.lt.s32.totalorder %s226, 63
      %s228 = scalar_select %p227, %s226, 63
      %p229 = scmp.lt.s32.totalorder %s20, 0
      %s230 = scalar_select %p229, %s20, 0
      %s231 = sadd.s32 %s230, %s228
      %s232 = smul.addr %s231, 8
      %s233 = scalar_lea.vmem %s3, %s232
      %s234 = smul.u32 32, %s19
      %s235 = smul.u32 4, %s21
      %p236 = scmp.lt.s32.totalorder %s234, 63
      %s237 = scalar_select %p236, %s234, 63
      %p238 = scmp.lt.s32.totalorder %s235, 3
      %s239 = scalar_select %p238, %s235, 3
      %s240 = smul.addr %s237, 4
      %s241 = sadd.s32 %s239, %s240
      %s242 = smul.addr %s241, 4
      %s243 = scalar_lea.vmem %s0, %s242
      %s244 = smul.u32 32, %s19
      %s245 = smul.u32 4, %s21
      %s246 = smul.u32 64, %s21
      %p247 = scmp.lt.s32.totalorder %s246, 63
      %s248 = scalar_select %p247, %s246, 63
      %p249 = scmp.lt.s32.totalorder %s20, 0
      %s250 = scalar_select %p249, %s20, 0
      %s251 = sadd.s32 %s250, %s248
      %s252 = smul.addr %s251, 4
      %s253 = scalar_lea.vmem %s1, %s252
      %s254 = smul.u32 64, %s21
      %p255 = scmp.lt.s32.totalorder %s20, 0
      %s256 = scalar_select %p255, %s20, 0
      %s257 = scalar_lea.vmem %s2, %s256
      %s258 = smul.u32 32, %s19
      %p259 = scmp.lt.s32.totalorder %s258, 63
      %s260 = scalar_select %p259, %s258, 63
      %p261 = scmp.lt.s32.totalorder %s20, 0
      %s262 = scalar_select %p261, %s20, 0
      %s263 = sadd.s32 %s262, %s260
      %s264 = smul.addr %s263, 8
      %s265 = scalar_lea.vmem %s3, %s264
      %s266 = smul.u32 32, %s19
      %p267 = scmp.eq.s32.totalorder %s21, 0
      // Predicated region
      $region33: #{_lambda_.55} parent=31 // pred_check
        %p268 = pneg %p267
      $region34: #{_lambda_.55} parent=31 // pred_check_branch
        %270 = sbr.rel (%p268) target = $region36
      $region35: #{_lambda_.55} parent=31 // pred_region
        %271 = vst [vmem:[#allocation2] sm:$0xff] 0.0
        %272 = vst [vmem:[#allocation2 + $0x8] sm:$0xff] 0.0
        %273 = vst [vmem:[#allocation2 + $0x10] sm:$0xff] 0.0
        %274 = vst [vmem:[#allocation2 + $0x18] sm:$0xff] 0.0
        %275 = vst [vmem:[#allocation2 + $0x20] sm:$0xff] 0.0
        %276 = vst [vmem:[#allocation2 + $0x28] sm:$0xff] 0.0
        %277 = vst [vmem:[#allocation2 + $0x30] sm:$0xff] 0.0
        %278 = vst [vmem:[#allocation2 + $0x38] sm:$0xff] 0.0
        %279 = vst [vmem:[#allocation2 + $0x40] sm:$0xff] 0.0
        %280 = vst [vmem:[#allocation2 + $0x48] sm:$0xff] 0.0
        %281 = vst [vmem:[#allocation2 + $0x50] sm:$0xff] 0.0
        %282 = vst [vmem:[#allocation2 + $0x58] sm:$0xff] 0.0
        %283 = vst [vmem:[#allocation2 + $0x60] sm:$0xff] 0.0
        %284 = vst [vmem:[#allocation2 + $0x68] sm:$0xff] 0.0
        %285 = vst [vmem:[#allocation2 + $0x70] sm:$0xff] 0.0
        %286 = vst [vmem:[#allocation2 + $0x78] sm:$0xff] 0.0
        %287 = vst [vmem:[#allocation2 + $0x80] sm:$0xff] 0.0
        %288 = vst [vmem:[#allocation2 + $0x88] sm:$0xff] 0.0
        %289 = vst [vmem:[#allocation2 + $0x90] sm:$0xff] 0.0
        %290 = vst [vmem:[#allocation2 + $0x98] sm:$0xff] 0.0
        %291 = vst [vmem:[#allocation2 + $0xa0] sm:$0xff] 0.0
        %292 = vst [vmem:[#allocation2 + $0xa8] sm:$0xff] 0.0
        %293 = vst [vmem:[#allocation2 + $0xb0] sm:$0xff] 0.0
        %294 = vst [vmem:[#allocation2 + $0xb8] sm:$0xff] 0.0
        %295 = vst [vmem:[#allocation2 + $0xc0] sm:$0xff] 0.0
        %296 = vst [vmem:[#allocation2 + $0xc8] sm:$0xff] 0.0
        %297 = vst [vmem:[#allocation2 + $0xd0] sm:$0xff] 0.0
        %298 = vst [vmem:[#allocation2 + $0xd8] sm:$0xff] 0.0
        %299 = vst [vmem:[#allocation2 + $0xe0] sm:$0xff] 0.0
        %300 = vst [vmem:[#allocation2 + $0xe8] sm:$0xff] 0.0
        %301 = vst [vmem:[#allocation2 + $0xf0] sm:$0xff] 0.0
        %302 = vst [vmem:[#allocation2 + $0xf8] sm:$0xff] 0.0
      $region36: #{_lambda_.55} parent=31 // pred_fallthru
        _
      %v303 = vld [vmem:[#allocation2] sm:$0xff]
      %v304 = vld [vmem:[#allocation2 + $0x8] sm:$0xff]
      %v305 = vld [vmem:[#allocation2 + $0x10] sm:$0xff]
      %v306 = vld [vmem:[#allocation2 + $0x18] sm:$0xff]
      %v307 = vld [vmem:[#allocation2 + $0x20] sm:$0xff]
      %v308 = vld [vmem:[#allocation2 + $0x28] sm:$0xff]
      %v309 = vld [vmem:[#allocation2 + $0x30] sm:$0xff]
      %v310 = vld [vmem:[#allocation2 + $0x38] sm:$0xff]
      %v311 = vld [vmem:[#allocation2 + $0x40] sm:$0xff]
      %v312 = vld [vmem:[#allocation2 + $0x48] sm:$0xff]
      %v313 = vld [vmem:[#allocation2 + $0x50] sm:$0xff]
      %v314 = vld [vmem:[#allocation2 + $0x58] sm:$0xff]
      %v315 = vld [vmem:[#allocation2 + $0x60] sm:$0xff]
      %v316 = vld [vmem:[#allocation2 + $0x68] sm:$0xff]
      %v317 = vld [vmem:[#allocation2 + $0x70] sm:$0xff]
      %v318 = vld [vmem:[#allocation2 + $0x78] sm:$0xff]
      %v319 = vld [vmem:[#allocation2 + $0x80] sm:$0xff]
      %v320 = vld [vmem:[#allocation2 + $0x88] sm:$0xff]
      %v321 = vld [vmem:[#allocation2 + $0x90] sm:$0xff]
      %v322 = vld [vmem:[#allocation2 + $0x98] sm:$0xff]
      %v323 = vld [vmem:[#allocation2 + $0xa0] sm:$0xff]
      %v324 = vld [vmem:[#allocation2 + $0xa8] sm:$0xff]
      %v325 = vld [vmem:[#allocation2 + $0xb0] sm:$0xff]
      %v326 = vld [vmem:[#allocation2 + $0xb8] sm:$0xff]
      %v327 = vld [vmem:[#allocation2 + $0xc0] sm:$0xff]
      %v328 = vld [vmem:[#allocation2 + $0xc8] sm:$0xff]
      %v329 = vld [vmem:[#allocation2 + $0xd0] sm:$0xff]
      %v330 = vld [vmem:[#allocation2 + $0xd8] sm:$0xff]
      %v331 = vld [vmem:[#allocation2 + $0xe0] sm:$0xff]
      %v332 = vld [vmem:[#allocation2 + $0xe8] sm:$0xff]
      %v333 = vld [vmem:[#allocation2 + $0xf0] sm:$0xff]
      %v334 = vld [vmem:[#allocation2 + $0xf8] sm:$0xff]
      %v335 = vld [vmem:[%s243] sm:$0xff]
      %v336 = vld [vmem:[%s243 + $0x8] sm:$0xff]
      %v337 = vld [vmem:[%s243 + $0x10] sm:$0xff]
      %v338 = vld [vmem:[%s243 + $0x18] sm:$0xff]
      %v339 = vld [vmem:[%s243 + $0x20] sm:$0xff]
      %v340 = vld [vmem:[%s243 + $0x28] sm:$0xff]
      %v341 = vld [vmem:[%s243 + $0x30] sm:$0xff]
      %v342 = vld [vmem:[%s243 + $0x38] sm:$0xff]
      %v343 = vld [vmem:[%s243 + $0x40] sm:$0xff]
      %v344 = vld [vmem:[%s243 + $0x48] sm:$0xff]
      %v345 = vld [vmem:[%s243 + $0x50] sm:$0xff]
      %v346 = vld [vmem:[%s243 + $0x58] sm:$0xff]
      %v347 = vld [vmem:[%s243 + $0x60] sm:$0xff]
      %v348 = vld [vmem:[%s243 + $0x68] sm:$0xff]
      %v349 = vld [vmem:[%s243 + $0x70] sm:$0xff]
      %v350 = vld [vmem:[%s243 + $0x78] sm:$0xff]
      %v351 = vld [vmem:[%s243 + $0x80] sm:$0xff]
      %v352 = vld [vmem:[%s243 + $0x88] sm:$0xff]
      %v353 = vld [vmem:[%s243 + $0x90] sm:$0xff]
      %v354 = vld [vmem:[%s243 + $0x98] sm:$0xff]
      %v355 = vld [vmem:[%s243 + $0xa0] sm:$0xff]
      %v356 = vld [vmem:[%s243 + $0xa8] sm:$0xff]
      %v357 = vld [vmem:[%s243 + $0xb0] sm:$0xff]
      %v358 = vld [vmem:[%s243 + $0xb8] sm:$0xff]
      %v359 = vld [vmem:[%s243 + $0xc0] sm:$0xff]
      %v360 = vld [vmem:[%s243 + $0xc8] sm:$0xff]
      %v361 = vld [vmem:[%s243 + $0xd0] sm:$0xff]
      %v362 = vld [vmem:[%s243 + $0xd8] sm:$0xff]
      %v363 = vld [vmem:[%s243 + $0xe0] sm:$0xff]
      %v364 = vld [vmem:[%s243 + $0xe8] sm:$0xff]
      %v365 = vld [vmem:[%s243 + $0xf0] sm:$0xff]
      %v366 = vld [vmem:[%s243 + $0xf8] sm:$0xff]
      %v367 = vld [vmem:[%s243 + $0x100] sm:$0xff]
      %v368 = vld [vmem:[%s243 + $0x108] sm:$0xff]
      %v369 = vld [vmem:[%s243 + $0x110] sm:$0xff]
      %v370 = vld [vmem:[%s243 + $0x118] sm:$0xff]
      %v371 = vld [vmem:[%s243 + $0x120] sm:$0xff]
      %v372 = vld [vmem:[%s243 + $0x128] sm:$0xff]
      %v373 = vld [vmem:[%s243 + $0x130] sm:$0xff]
      %v374 = vld [vmem:[%s243 + $0x138] sm:$0xff]
      %v375 = vld [vmem:[%s243 + $0x140] sm:$0xff]
      %v376 = vld [vmem:[%s243 + $0x148] sm:$0xff]
      %v377 = vld [vmem:[%s243 + $0x150] sm:$0xff]
      %v378 = vld [vmem:[%s243 + $0x158] sm:$0xff]
      %v379 = vld [vmem:[%s243 + $0x160] sm:$0xff]
      %v380 = vld [vmem:[%s243 + $0x168] sm:$0xff]
      %v381 = vld [vmem:[%s243 + $0x170] sm:$0xff]
      %v382 = vld [vmem:[%s243 + $0x178] sm:$0xff]
      %v383 = vld [vmem:[%s243 + $0x180] sm:$0xff]
      %v384 = vld [vmem:[%s243 + $0x188] sm:$0xff]
      %v385 = vld [vmem:[%s243 + $0x190] sm:$0xff]
      %v386 = vld [vmem:[%s243 + $0x198] sm:$0xff]
      %v387 = vld [vmem:[%s243 + $0x1a0] sm:$0xff]
      %v388 = vld [vmem:[%s243 + $0x1a8] sm:$0xff]
      %v389 = vld [vmem:[%s243 + $0x1b0] sm:$0xff]
      %v390 = vld [vmem:[%s243 + $0x1b8] sm:$0xff]
      %v391 = vld [vmem:[%s243 + $0x1c0] sm:$0xff]
      %v392 = vld [vmem:[%s243 + $0x1c8] sm:$0xff]
      %v393 = vld [vmem:[%s243 + $0x1d0] sm:$0xff]
      %v394 = vld [vmem:[%s243 + $0x1d8] sm:$0xff]
      %v395 = vld [vmem:[%s243 + $0x1e0] sm:$0xff]
      %v396 = vld [vmem:[%s243 + $0x1e8] sm:$0xff]
      %v397 = vld [vmem:[%s243 + $0x1f0] sm:$0xff]
      %v398 = vld [vmem:[%s243 + $0x1f8] sm:$0xff]
      %v399 = vld [vmem:[%s253] sm:$0xf]
      %v400 = vld [vmem:[%s253 + $0x4] sm:$0xf]
      %v401 = vld [vmem:[%s253 + $0x8] sm:$0xf]
      %v402 = vld [vmem:[%s253 + $0xc] sm:$0xf]
      %v403 = vld [vmem:[%s253 + $0x10] sm:$0xf]
      %v404 = vld [vmem:[%s253 + $0x14] sm:$0xf]
      %v405 = vld [vmem:[%s253 + $0x18] sm:$0xf]
      %v406 = vld [vmem:[%s253 + $0x1c] sm:$0xf]
      %v407 = vld [vmem:[%s253 + $0x20] sm:$0xf]
      %v408 = vld [vmem:[%s253 + $0x24] sm:$0xf]
      %v409 = vld [vmem:[%s253 + $0x28] sm:$0xf]
      %v410 = vld [vmem:[%s253 + $0x2c] sm:$0xf]
      %v411 = vld [vmem:[%s253 + $0x30] sm:$0xf]
      %v412 = vld [vmem:[%s253 + $0x34] sm:$0xf]
      %v413 = vld [vmem:[%s253 + $0x38] sm:$0xf]
      %v414 = vld [vmem:[%s253 + $0x3c] sm:$0xf]
      %v415 = vld [vmem:[%s253 + $0x40] sm:$0xf]
      %v416 = vld [vmem:[%s253 + $0x44] sm:$0xf]
      %v417 = vld [vmem:[%s253 + $0x48] sm:$0xf]
      %v418 = vld [vmem:[%s253 + $0x4c] sm:$0xf]
      %v419 = vld [vmem:[%s253 + $0x50] sm:$0xf]
      %v420 = vld [vmem:[%s253 + $0x54] sm:$0xf]
      %v421 = vld [vmem:[%s253 + $0x58] sm:$0xf]
      %v422 = vld [vmem:[%s253 + $0x5c] sm:$0xf]
      %v423 = vld [vmem:[%s253 + $0x60] sm:$0xf]
      %v424 = vld [vmem:[%s253 + $0x64] sm:$0xf]
      %v425 = vld [vmem:[%s253 + $0x68] sm:$0xf]
      %v426 = vld [vmem:[%s253 + $0x6c] sm:$0xf]
      %v427 = vld [vmem:[%s253 + $0x70] sm:$0xf]
      %v428 = vld [vmem:[%s253 + $0x74] sm:$0xf]
      %v429 = vld [vmem:[%s253 + $0x78] sm:$0xf]
      %v430 = vld [vmem:[%s253 + $0x7c] sm:$0xf]
      %v431 = vld [vmem:[%s253 + $0x80] sm:$0xf]
      %v432 = vld [vmem:[%s253 + $0x84] sm:$0xf]
      %v433 = vld [vmem:[%s253 + $0x88] sm:$0xf]
      %v434 = vld [vmem:[%s253 + $0x8c] sm:$0xf]
      %v435 = vld [vmem:[%s253 + $0x90] sm:$0xf]
      %v436 = vld [vmem:[%s253 + $0x94] sm:$0xf]
      %v437 = vld [vmem:[%s253 + $0x98] sm:$0xf]
      %v438 = vld [vmem:[%s253 + $0x9c] sm:$0xf]
      %v439 = vld [vmem:[%s253 + $0xa0] sm:$0xf]
      %v440 = vld [vmem:[%s253 + $0xa4] sm:$0xf]
      %v441 = vld [vmem:[%s253 + $0xa8] sm:$0xf]
      %v442 = vld [vmem:[%s253 + $0xac] sm:$0xf]
      %v443 = vld [vmem:[%s253 + $0xb0] sm:$0xf]
      %v444 = vld [vmem:[%s253 + $0xb4] sm:$0xf]
      %v445 = vld [vmem:[%s253 + $0xb8] sm:$0xf]
      %v446 = vld [vmem:[%s253 + $0xbc] sm:$0xf]
      %v447 = vld [vmem:[%s253 + $0xc0] sm:$0xf]
      %v448 = vld [vmem:[%s253 + $0xc4] sm:$0xf]
      %v449 = vld [vmem:[%s253 + $0xc8] sm:$0xf]
      %v450 = vld [vmem:[%s253 + $0xcc] sm:$0xf]
      %v451 = vld [vmem:[%s253 + $0xd0] sm:$0xf]
      %v452 = vld [vmem:[%s253 + $0xd4] sm:$0xf]
      %v453 = vld [vmem:[%s253 + $0xd8] sm:$0xf]
      %v454 = vld [vmem:[%s253 + $0xdc] sm:$0xf]
      %v455 = vld [vmem:[%s253 + $0xe0] sm:$0xf]
      %v456 = vld [vmem:[%s253 + $0xe4] sm:$0xf]
      %v457 = vld [vmem:[%s253 + $0xe8] sm:$0xf]
      %v458 = vld [vmem:[%s253 + $0xec] sm:$0xf]
      %v459 = vld [vmem:[%s253 + $0xf0] sm:$0xf]
      %v460 = vld [vmem:[%s253 + $0xf4] sm:$0xf]
      %v461 = vld [vmem:[%s253 + $0xf8] sm:$0xf]
      %v462 = vld [vmem:[%s253 + $0xfc] sm:$0xf]
      %v527 = vunpack.c.l.b16 %v335
      %v528 = vunpack.c.h.b16 %v335
      %v529 = vunpack.c.l.b16 %v336
      %v530 = vunpack.c.h.b16 %v336
      %v531 = vunpack.c.l.b16 %v337
      %v532 = vunpack.c.h.b16 %v337
      %v533 = vunpack.c.l.b16 %v338
      %v534 = vunpack.c.h.b16 %v338
      %v535 = vunpack.c.l.b16 %v339
      %v536 = vunpack.c.h.b16 %v339
      %v537 = vunpack.c.l.b16 %v340
      %v538 = vunpack.c.h.b16 %v340
      %v539 = vunpack.c.l.b16 %v341
      %v540 = vunpack.c.h.b16 %v341
      %v541 = vunpack.c.l.b16 %v342
      %v542 = vunpack.c.h.b16 %v342
      %v543 = vunpack.c.l.b16 %v343
      %v544 = vunpack.c.h.b16 %v343
      %v545 = vunpack.c.l.b16 %v344
      %v546 = vunpack.c.h.b16 %v344
      %v547 = vunpack.c.l.b16 %v345
      %v548 = vunpack.c.h.b16 %v345
      %v549 = vunpack.c.l.b16 %v346
      %v550 = vunpack.c.h.b16 %v346
      %v551 = vunpack.c.l.b16 %v347
      %v552 = vunpack.c.h.b16 %v347
      %v553 = vunpack.c.l.b16 %v348
      %v554 = vunpack.c.h.b16 %v348
      %v555 = vunpack.c.l.b16 %v349
      %v556 = vunpack.c.h.b16 %v349
      %v557 = vunpack.c.l.b16 %v350
      %v558 = vunpack.c.h.b16 %v350
      %v559 = vunpack.c.l.b16 %v351
      %v560 = vunpack.c.h.b16 %v351
      %v561 = vunpack.c.l.b16 %v352
      %v562 = vunpack.c.h.b16 %v352
      %v563 = vunpack.c.l.b16 %v353
      %v564 = vunpack.c.h.b16 %v353
      %v565 = vunpack.c.l.b16 %v354
      %v566 = vunpack.c.h.b16 %v354
      %v567 = vunpack.c.l.b16 %v355
      %v568 = vunpack.c.h.b16 %v355
      %v569 = vunpack.c.l.b16 %v356
      %v570 = vunpack.c.h.b16 %v356
      %v571 = vunpack.c.l.b16 %v357
      %v572 = vunpack.c.h.b16 %v357
      %v573 = vunpack.c.l.b16 %v358
      %v574 = vunpack.c.h.b16 %v358
      %v575 = vunpack.c.l.b16 %v359
      %v576 = vunpack.c.h.b16 %v359
      %v577 = vunpack.c.l.b16 %v360
      %v578 = vunpack.c.h.b16 %v360
      %v579 = vunpack.c.l.b16 %v361
      %v580 = vunpack.c.h.b16 %v361
      %v581 = vunpack.c.l.b16 %v362
      %v582 = vunpack.c.h.b16 %v362
      %v583 = vunpack.c.l.b16 %v363
      %v584 = vunpack.c.h.b16 %v363
      %v585 = vunpack.c.l.b16 %v364
      %v586 = vunpack.c.h.b16 %v364
      %v587 = vunpack.c.l.b16 %v365
      %v588 = vunpack.c.h.b16 %v365
      %v589 = vunpack.c.l.b16 %v366
      %v590 = vunpack.c.h.b16 %v366
      %v591 = vunpack.c.l.b16 %v367
      %v592 = vunpack.c.h.b16 %v367
      %v593 = vunpack.c.l.b16 %v368
      %v594 = vunpack.c.h.b16 %v368
      %v595 = vunpack.c.l.b16 %v369
      %v596 = vunpack.c.h.b16 %v369
      %v597 = vunpack.c.l.b16 %v370
      %v598 = vunpack.c.h.b16 %v370
      %v599 = vunpack.c.l.b16 %v371
      %v600 = vunpack.c.h.b16 %v371
      %v601 = vunpack.c.l.b16 %v372
      %v602 = vunpack.c.h.b16 %v372
      %v603 = vunpack.c.l.b16 %v373
      %v604 = vunpack.c.h.b16 %v373
      %v605 = vunpack.c.l.b16 %v374
      %v606 = vunpack.c.h.b16 %v374
      %v607 = vunpack.c.l.b16 %v375
      %v608 = vunpack.c.h.b16 %v375
      %v609 = vunpack.c.l.b16 %v376
      %v610 = vunpack.c.h.b16 %v376
      %v611 = vunpack.c.l.b16 %v377
      %v612 = vunpack.c.h.b16 %v377
      %v613 = vunpack.c.l.b16 %v378
      %v614 = vunpack.c.h.b16 %v378
      %v615 = vunpack.c.l.b16 %v379
      %v616 = vunpack.c.h.b16 %v379
      %v617 = vunpack.c.l.b16 %v380
      %v618 = vunpack.c.h.b16 %v380
      %v619 = vunpack.c.l.b16 %v381
      %v620 = vunpack.c.h.b16 %v381
      %v621 = vunpack.c.l.b16 %v382
      %v622 = vunpack.c.h.b16 %v382
      %v623 = vunpack.c.l.b16 %v383
      %v624 = vunpack.c.h.b16 %v383
      %v625 = vunpack.c.l.b16 %v384
      %v626 = vunpack.c.h.b16 %v384
      %v627 = vunpack.c.l.b16 %v385
      %v628 = vunpack.c.h.b16 %v385
      %v629 = vunpack.c.l.b16 %v386
      %v630 = vunpack.c.h.b16 %v386
      %v631 = vunpack.c.l.b16 %v387
      %v632 = vunpack.c.h.b16 %v387
      %v633 = vunpack.c.l.b16 %v388
      %v634 = vunpack.c.h.b16 %v388
      %v635 = vunpack.c.l.b16 %v389
      %v636 = vunpack.c.h.b16 %v389
      %v637 = vunpack.c.l.b16 %v390
      %v638 = vunpack.c.h.b16 %v390
      %v639 = vunpack.c.l.b16 %v391
      %v640 = vunpack.c.h.b16 %v391
      %v641 = vunpack.c.l.b16 %v392
      %v642 = vunpack.c.h.b16 %v392
      %v643 = vunpack.c.l.b16 %v393
      %v644 = vunpack.c.h.b16 %v393
      %v645 = vunpack.c.l.b16 %v394
      %v646 = vunpack.c.h.b16 %v394
      %v647 = vunpack.c.l.b16 %v395
      %v648 = vunpack.c.h.b16 %v395
      %v649 = vunpack.c.l.b16 %v396
      %v650 = vunpack.c.h.b16 %v396
      %v651 = vunpack.c.l.b16 %v397
      %v652 = vunpack.c.h.b16 %v397
      %v653 = vunpack.c.l.b16 %v398
      %v654 = vunpack.c.h.b16 %v398
      %v655 = vpack.c.b16 %v531, %v527
      %v656 = vpack.c.b16 %v532, %v528
      %v657 = vpack.c.b16 %v533, %v529
      %v658 = vpack.c.b16 %v534, %v530
      %v659 = vpack.c.b16 %v539, %v535
      %v660 = vpack.c.b16 %v540, %v536
      %v661 = vpack.c.b16 %v541, %v537
      %v662 = vpack.c.b16 %v542, %v538
      %v663 = vpack.c.b16 %v547, %v543
      %v664 = vpack.c.b16 %v548, %v544
      %v665 = vpack.c.b16 %v549, %v545
      %v666 = vpack.c.b16 %v550, %v546
      %v667 = vpack.c.b16 %v555, %v551
      %v668 = vpack.c.b16 %v556, %v552
      %v669 = vpack.c.b16 %v557, %v553
      %v670 = vpack.c.b16 %v558, %v554
      %v671 = vpack.c.b16 %v563, %v559
      %v672 = vpack.c.b16 %v564, %v560
      %v673 = vpack.c.b16 %v565, %v561
      %v674 = vpack.c.b16 %v566, %v562
      %v675 = vpack.c.b16 %v571, %v567
      %v676 = vpack.c.b16 %v572, %v568
      %v677 = vpack.c.b16 %v573, %v569
      %v678 = vpack.c.b16 %v574, %v570
      %v679 = vpack.c.b16 %v579, %v575
      %v680 = vpack.c.b16 %v580, %v576
      %v681 = vpack.c.b16 %v581, %v577
      %v682 = vpack.c.b16 %v582, %v578
      %v683 = vpack.c.b16 %v587, %v583
      %v684 = vpack.c.b16 %v588, %v584
      %v685 = vpack.c.b16 %v589, %v585
      %v686 = vpack.c.b16 %v590, %v586
      %v687 = vpack.c.b16 %v595, %v591
      %v688 = vpack.c.b16 %v596, %v592
      %v689 = vpack.c.b16 %v597, %v593
      %v690 = vpack.c.b16 %v598, %v594
      %v691 = vpack.c.b16 %v603, %v599
      %v692 = vpack.c.b16 %v604, %v600
      %v693 = vpack.c.b16 %v605, %v601
      %v694 = vpack.c.b16 %v606, %v602
      %v695 = vpack.c.b16 %v611, %v607
      %v696 = vpack.c.b16 %v612, %v608
      %v697 = vpack.c.b16 %v613, %v609
      %v698 = vpack.c.b16 %v614, %v610
      %v699 = vpack.c.b16 %v619, %v615
      %v700 = vpack.c.b16 %v620, %v616
      %v701 = vpack.c.b16 %v621, %v617
      %v702 = vpack.c.b16 %v622, %v618
      %v703 = vpack.c.b16 %v627, %v623
      %v704 = vpack.c.b16 %v628, %v624
      %v705 = vpack.c.b16 %v629, %v625
      %v706 = vpack.c.b16 %v630, %v626
      %v707 = vpack.c.b16 %v635, %v631
      %v708 = vpack.c.b16 %v636, %v632
      %v709 = vpack.c.b16 %v637, %v633
      %v710 = vpack.c.b16 %v638, %v634
      %v711 = vpack.c.b16 %v643, %v639
      %v712 = vpack.c.b16 %v644, %v640
      %v713 = vpack.c.b16 %v645, %v641
      %v714 = vpack.c.b16 %v646, %v642
      %v715 = vpack.c.b16 %v651, %v647
      %v716 = vpack.c.b16 %v652, %v648
      %v717 = vpack.c.b16 %v653, %v649
      %v718 = vpack.c.b16 %v654, %v650
      %v847 = vunpack.c.l.b16 %v399
      %v848 = vunpack.c.l.b16 %v400
      %v849 = vunpack.c.l.b16 %v401
      %v850 = vunpack.c.l.b16 %v402
      %v851 = vunpack.c.l.b16 %v403
      %v852 = vunpack.c.l.b16 %v404
      %v853 = vunpack.c.l.b16 %v405
      %v854 = vunpack.c.l.b16 %v406
      %v855 = vunpack.c.l.b16 %v407
      %v856 = vunpack.c.l.b16 %v408
      %v857 = vunpack.c.l.b16 %v409
      %v858 = vunpack.c.l.b16 %v410
      %v859 = vunpack.c.l.b16 %v411
      %v860 = vunpack.c.l.b16 %v412
      %v861 = vunpack.c.l.b16 %v413
      %v862 = vunpack.c.l.b16 %v414
      %v863 = vunpack.c.l.b16 %v415
      %v864 = vunpack.c.l.b16 %v416
      %v865 = vunpack.c.l.b16 %v417
      %v866 = vunpack.c.l.b16 %v418
      %v867 = vunpack.c.l.b16 %v419
      %v868 = vunpack.c.l.b16 %v420
      %v869 = vunpack.c.l.b16 %v421
      %v870 = vunpack.c.l.b16 %v422
      %v871 = vunpack.c.l.b16 %v423
      %v872 = vunpack.c.l.b16 %v424
      %v873 = vunpack.c.l.b16 %v425
      %v874 = vunpack.c.l.b16 %v426
      %v875 = vunpack.c.l.b16 %v427
      %v876 = vunpack.c.l.b16 %v428
      %v877 = vunpack.c.l.b16 %v429
      %v878 = vunpack.c.l.b16 %v430
      %v879 = vunpack.c.l.b16 %v431
      %v880 = vunpack.c.l.b16 %v432
      %v881 = vunpack.c.l.b16 %v433
      %v882 = vunpack.c.l.b16 %v434
      %v883 = vunpack.c.l.b16 %v435
      %v884 = vunpack.c.l.b16 %v436
      %v885 = vunpack.c.l.b16 %v437
      %v886 = vunpack.c.l.b16 %v438
      %v887 = vunpack.c.l.b16 %v439
      %v888 = vunpack.c.l.b16 %v440
      %v889 = vunpack.c.l.b16 %v441
      %v890 = vunpack.c.l.b16 %v442
      %v891 = vunpack.c.l.b16 %v443
      %v892 = vunpack.c.l.b16 %v444
      %v893 = vunpack.c.l.b16 %v445
      %v894 = vunpack.c.l.b16 %v446
      %v895 = vunpack.c.l.b16 %v447
      %v896 = vunpack.c.l.b16 %v448
      %v897 = vunpack.c.l.b16 %v449
      %v898 = vunpack.c.l.b16 %v450
      %v899 = vunpack.c.l.b16 %v451
      %v900 = vunpack.c.l.b16 %v452
      %v901 = vunpack.c.l.b16 %v453
      %v902 = vunpack.c.l.b16 %v454
      %v903 = vunpack.c.l.b16 %v455
      %v904 = vunpack.c.l.b16 %v456
      %v905 = vunpack.c.l.b16 %v457
      %v906 = vunpack.c.l.b16 %v458
      %v907 = vunpack.c.l.b16 %v459
      %v908 = vunpack.c.l.b16 %v460
      %v909 = vunpack.c.l.b16 %v461
      %v910 = vunpack.c.l.b16 %v462
      %v911 = vpack.c.b16 %v848, %v847
      %v912 = vpack.c.b16 %v850, %v849
      %v913 = vpack.c.b16 %v852, %v851
      %v914 = vpack.c.b16 %v854, %v853
      %v915 = vpack.c.b16 %v856, %v855
      %v916 = vpack.c.b16 %v858, %v857
      %v917 = vpack.c.b16 %v860, %v859
      %v918 = vpack.c.b16 %v862, %v861
      %v919 = vpack.c.b16 %v864, %v863
      %v920 = vpack.c.b16 %v866, %v865
      %v921 = vpack.c.b16 %v868, %v867
      %v922 = vpack.c.b16 %v870, %v869
      %v923 = vpack.c.b16 %v872, %v871
      %v924 = vpack.c.b16 %v874, %v873
      %v925 = vpack.c.b16 %v876, %v875
      %v926 = vpack.c.b16 %v878, %v877
      %v927 = vpack.c.b16 %v880, %v879
      %v928 = vpack.c.b16 %v882, %v881
      %v929 = vpack.c.b16 %v884, %v883
      %v930 = vpack.c.b16 %v886, %v885
      %v931 = vpack.c.b16 %v888, %v887
      %v932 = vpack.c.b16 %v890, %v889
      %v933 = vpack.c.b16 %v892, %v891
      %v934 = vpack.c.b16 %v894, %v893
      %v935 = vpack.c.b16 %v896, %v895
      %v936 = vpack.c.b16 %v898, %v897
      %v937 = vpack.c.b16 %v900, %v899
      %v938 = vpack.c.b16 %v902, %v901
      %v939 = vpack.c.b16 %v904, %v903
      %v940 = vpack.c.b16 %v906, %v905
      %v941 = vpack.c.b16 %v908, %v907
      %v942 = vpack.c.b16 %v910, %v909
      %975 = vmatpush.bf16.msra.mxu0 %v918
      %976 = vmatpush.bf16.msra.mxu0 %v917
      %977 = vmatpush.bf16.msra.mxu0 %v916
      %978 = vmatpush.bf16.msra.mxu0 %v915
      %979 = vmatpush.bf16.msra.mxu0 %v914
      %980 = vmatpush.bf16.msra.mxu0 %v913
      %981 = vmatpush.bf16.msra.mxu0 %v912
      %982 = vmatpush.bf16.msra.mxu0 %v911
      %983 = vmatmul.bf16.gmra.mxu0 %v655
      %v984 = vpop.f32.mrf.mxu0
      %v985 = vadd.f32 0.0, %v984
      %v986 = vpop.f32.mrf.mxu0
      %v987 = vadd.f32 0.0, %v986
      %988 = vmatmul.bf16.gmra.mxu0 %v659
      %v989 = vpop.f32.mrf.mxu0
      %v990 = vadd.f32 0.0, %v989
      %v991 = vpop.f32.mrf.mxu0
      %v992 = vadd.f32 0.0, %v991
      %993 = vmatmul.bf16.gmra.mxu0 %v663
      %v994 = vpop.f32.mrf.mxu0
      %v995 = vadd.f32 0.0, %v994
      %v996 = vpop.f32.mrf.mxu0
      %v997 = vadd.f32 0.0, %v996
      %998 = vmatmul.bf16.gmra.mxu0 %v667
      %v999 = vpop.f32.mrf.mxu0
      %v1000 = vadd.f32 0.0, %v999
      %v1001 = vpop.f32.mrf.mxu0
      %v1002 = vadd.f32 0.0, %v1001
      %1003 = vmatmul.bf16.gmra.mxu0 %v671
      %v1004 = vpop.f32.mrf.mxu0
      %v1005 = vadd.f32 0.0, %v1004
      %v1006 = vpop.f32.mrf.mxu0
      %v1007 = vadd.f32 0.0, %v1006
      %1008 = vmatmul.bf16.gmra.mxu0 %v675
      %v1009 = vpop.f32.mrf.mxu0
      %v1010 = vadd.f32 0.0, %v1009
      %v1011 = vpop.f32.mrf.mxu0
      %v1012 = vadd.f32 0.0, %v1011
      %1013 = vmatmul.bf16.gmra.mxu0 %v679
      %v1014 = vpop.f32.mrf.mxu0
      %v1015 = vadd.f32 0.0, %v1014
      %v1016 = vpop.f32.mrf.mxu0
      %v1017 = vadd.f32 0.0, %v1016
      %1018 = vmatmul.bf16.gmra.mxu0 %v683
      %v1019 = vpop.f32.mrf.mxu0
      %v1020 = vadd.f32 0.0, %v1019
      %v1021 = vpop.f32.mrf.mxu0
      %v1022 = vadd.f32 0.0, %v1021
      %1023 = vmatmul.bf16.gmra.mxu0 %v687
      %v1024 = vpop.f32.mrf.mxu0
      %v1025 = vadd.f32 0.0, %v1024
      %v1026 = vpop.f32.mrf.mxu0
      %v1027 = vadd.f32 0.0, %v1026
      %1028 = vmatmul.bf16.gmra.mxu0 %v691
      %v1029 = vpop.f32.mrf.mxu0
      %v1030 = vadd.f32 0.0, %v1029
      %v1031 = vpop.f32.mrf.mxu0
      %v1032 = vadd.f32 0.0, %v1031
      %1033 = vmatmul.bf16.gmra.mxu0 %v695
      %v1034 = vpop.f32.mrf.mxu0
      %v1035 = vadd.f32 0.0, %v1034
      %v1036 = vpop.f32.mrf.mxu0
      %v1037 = vadd.f32 0.0, %v1036
      %1038 = vmatmul.bf16.gmra.mxu0 %v699
      %v1039 = vpop.f32.mrf.mxu0
      %v1040 = vadd.f32 0.0, %v1039
      %v1041 = vpop.f32.mrf.mxu0
      %v1042 = vadd.f32 0.0, %v1041
      %1043 = vmatmul.bf16.gmra.mxu0 %v703
      %v1044 = vpop.f32.mrf.mxu0
      %v1045 = vadd.f32 0.0, %v1044
      %v1046 = vpop.f32.mrf.mxu0
      %v1047 = vadd.f32 0.0, %v1046
      %1048 = vmatmul.bf16.gmra.mxu0 %v707
      %v1049 = vpop.f32.mrf.mxu0
      %v1050 = vadd.f32 0.0, %v1049
      %v1051 = vpop.f32.mrf.mxu0
      %v1052 = vadd.f32 0.0, %v1051
      %1053 = vmatmul.bf16.gmra.mxu0 %v711
      %v1054 = vpop.f32.mrf.mxu0
      %v1055 = vadd.f32 0.0, %v1054
      %v1056 = vpop.f32.mrf.mxu0
      %v1057 = vadd.f32 0.0, %v1056
      %1058 = vmatmul.bf16.gmra.mxu0 %v715
      %v1059 = vpop.f32.mrf.mxu0
      %v1060 = vadd.f32 0.0, %v1059
      %v1061 = vpop.f32.mrf.mxu0
      %v1062 = vadd.f32 0.0, %v1061
      %1063 = vdwg.mxu0
      %1064 = vmatpush.bf16.msra.mxu0 %v926
      %1065 = vmatpush.bf16.msra.mxu0 %v925
      %1066 = vmatpush.bf16.msra.mxu0 %v924
      %1067 = vmatpush.bf16.msra.mxu0 %v923
      %1068 = vmatpush.bf16.msra.mxu0 %v922
      %1069 = vmatpush.bf16.msra.mxu0 %v921
      %1070 = vmatpush.bf16.msra.mxu0 %v920
      %1071 = vmatpush.bf16.msra.mxu0 %v919
      %1072 = vmatmul.bf16.gmra.mxu0 %v656
      %v1073 = vpop.f32.mrf.mxu0
      %v1074 = vadd.f32 %v985, %v1073
      %v1075 = vpop.f32.mrf.mxu0
      %v1076 = vadd.f32 %v987, %v1075
      %1077 = vmatmul.bf16.gmra.mxu0 %v660
      %v1078 = vpop.f32.mrf.mxu0
      %v1079 = vadd.f32 %v990, %v1078
      %v1080 = vpop.f32.mrf.mxu0
      %v1081 = vadd.f32 %v992, %v1080
      %1082 = vmatmul.bf16.gmra.mxu0 %v664
      %v1083 = vpop.f32.mrf.mxu0
      %v1084 = vadd.f32 %v995, %v1083
      %v1085 = vpop.f32.mrf.mxu0
      %v1086 = vadd.f32 %v997, %v1085
      %1087 = vmatmul.bf16.gmra.mxu0 %v668
      %v1088 = vpop.f32.mrf.mxu0
      %v1089 = vadd.f32 %v1000, %v1088
      %v1090 = vpop.f32.mrf.mxu0
      %v1091 = vadd.f32 %v1002, %v1090
      %1092 = vmatmul.bf16.gmra.mxu0 %v672
      %v1093 = vpop.f32.mrf.mxu0
      %v1094 = vadd.f32 %v1005, %v1093
      %v1095 = vpop.f32.mrf.mxu0
      %v1096 = vadd.f32 %v1007, %v1095
      %1097 = vmatmul.bf16.gmra.mxu0 %v676
      %v1098 = vpop.f32.mrf.mxu0
      %v1099 = vadd.f32 %v1010, %v1098
      %v1100 = vpop.f32.mrf.mxu0
      %v1101 = vadd.f32 %v1012, %v1100
      %1102 = vmatmul.bf16.gmra.mxu0 %v680
      %v1103 = vpop.f32.mrf.mxu0
      %v1104 = vadd.f32 %v1015, %v1103
      %v1105 = vpop.f32.mrf.mxu0
      %v1106 = vadd.f32 %v1017, %v1105
      %1107 = vmatmul.bf16.gmra.mxu0 %v684
      %v1108 = vpop.f32.mrf.mxu0
      %v1109 = vadd.f32 %v1020, %v1108
      %v1110 = vpop.f32.mrf.mxu0
      %v1111 = vadd.f32 %v1022, %v1110
      %1112 = vmatmul.bf16.gmra.mxu0 %v688
      %v1113 = vpop.f32.mrf.mxu0
      %v1114 = vadd.f32 %v1025, %v1113
      %v1115 = vpop.f32.mrf.mxu0
      %v1116 = vadd.f32 %v1027, %v1115
      %1117 = vmatmul.bf16.gmra.mxu0 %v692
      %v1118 = vpop.f32.mrf.mxu0
      %v1119 = vadd.f32 %v1030, %v1118
      %v1120 = vpop.f32.mrf.mxu0
      %v1121 = vadd.f32 %v1032, %v1120
      %1122 = vmatmul.bf16.gmra.mxu0 %v696
      %v1123 = vpop.f32.mrf.mxu0
      %v1124 = vadd.f32 %v1035, %v1123
      %v1125 = vpop.f32.mrf.mxu0
      %v1126 = vadd.f32 %v1037, %v1125
      %1127 = vmatmul.bf16.gmra.mxu0 %v700
      %v1128 = vpop.f32.mrf.mxu0
      %v1129 = vadd.f32 %v1040, %v1128
      %v1130 = vpop.f32.mrf.mxu0
      %v1131 = vadd.f32 %v1042, %v1130
      %1132 = vmatmul.bf16.gmra.mxu0 %v704
      %v1133 = vpop.f32.mrf.mxu0
      %v1134 = vadd.f32 %v1045, %v1133
      %v1135 = vpop.f32.mrf.mxu0
      %v1136 = vadd.f32 %v1047, %v1135
      %1137 = vmatmul.bf16.gmra.mxu0 %v708
      %v1138 = vpop.f32.mrf.mxu0
      %v1139 = vadd.f32 %v1050, %v1138
      %v1140 = vpop.f32.mrf.mxu0
      %v1141 = vadd.f32 %v1052, %v1140
      %1142 = vmatmul.bf16.gmra.mxu0 %v712
      %v1143 = vpop.f32.mrf.mxu0
      %v1144 = vadd.f32 %v1055, %v1143
      %v1145 = vpop.f32.mrf.mxu0
      %v1146 = vadd.f32 %v1057, %v1145
      %1147 = vmatmul.bf16.gmra.mxu0 %v716
      %v1148 = vpop.f32.mrf.mxu0
      %v1149 = vadd.f32 %v1060, %v1148
      %v1150 = vpop.f32.mrf.mxu0
      %v1151 = vadd.f32 %v1062, %v1150
      %1152 = vdwg.mxu0
      %1153 = vmatpush.bf16.msra.mxu0 %v934
      %1154 = vmatpush.bf16.msra.mxu0 %v933
      %1155 = vmatpush.bf16.msra.mxu0 %v932
      %1156 = vmatpush.bf16.msra.mxu0 %v931
      %1157 = vmatpush.bf16.msra.mxu0 %v930
      %1158 = vmatpush.bf16.msra.mxu0 %v929
      %1159 = vmatpush.bf16.msra.mxu0 %v928
      %1160 = vmatpush.bf16.msra.mxu0 %v927
      %1161 = vmatmul.bf16.gmra.mxu0 %v657
      %v1162 = vpop.f32.mrf.mxu0
      %v1163 = vadd.f32 %v1074, %v1162
      %v1164 = vpop.f32.mrf.mxu0
      %v1165 = vadd.f32 %v1076, %v1164
      %1166 = vmatmul.bf16.gmra.mxu0 %v661
      %v1167 = vpop.f32.mrf.mxu0
      %v1168 = vadd.f32 %v1079, %v1167
      %v1169 = vpop.f32.mrf.mxu0
      %v1170 = vadd.f32 %v1081, %v1169
      %1171 = vmatmul.bf16.gmra.mxu0 %v665
      %v1172 = vpop.f32.mrf.mxu0
      %v1173 = vadd.f32 %v1084, %v1172
      %v1174 = vpop.f32.mrf.mxu0
      %v1175 = vadd.f32 %v1086, %v1174
      %1176 = vmatmul.bf16.gmra.mxu0 %v669
      %v1177 = vpop.f32.mrf.mxu0
      %v1178 = vadd.f32 %v1089, %v1177
      %v1179 = vpop.f32.mrf.mxu0
      %v1180 = vadd.f32 %v1091, %v1179
      %1181 = vmatmul.bf16.gmra.mxu0 %v673
      %v1182 = vpop.f32.mrf.mxu0
      %v1183 = vadd.f32 %v1094, %v1182
      %v1184 = vpop.f32.mrf.mxu0
      %v1185 = vadd.f32 %v1096, %v1184
      %1186 = vmatmul.bf16.gmra.mxu0 %v677
      %v1187 = vpop.f32.mrf.mxu0
      %v1188 = vadd.f32 %v1099, %v1187
      %v1189 = vpop.f32.mrf.mxu0
      %v1190 = vadd.f32 %v1101, %v1189
      %1191 = vmatmul.bf16.gmra.mxu0 %v681
      %v1192 = vpop.f32.mrf.mxu0
      %v1193 = vadd.f32 %v1104, %v1192
      %v1194 = vpop.f32.mrf.mxu0
      %v1195 = vadd.f32 %v1106, %v1194
      %1196 = vmatmul.bf16.gmra.mxu0 %v685
      %v1197 = vpop.f32.mrf.mxu0
      %v1198 = vadd.f32 %v1109, %v1197
      %v1199 = vpop.f32.mrf.mxu0
      %v1200 = vadd.f32 %v1111, %v1199
      %1201 = vmatmul.bf16.gmra.mxu0 %v689
      %v1202 = vpop.f32.mrf.mxu0
      %v1203 = vadd.f32 %v1114, %v1202
      %v1204 = vpop.f32.mrf.mxu0
      %v1205 = vadd.f32 %v1116, %v1204
      %1206 = vmatmul.bf16.gmra.mxu0 %v693
      %v1207 = vpop.f32.mrf.mxu0
      %v1208 = vadd.f32 %v1119, %v1207
      %v1209 = vpop.f32.mrf.mxu0
      %v1210 = vadd.f32 %v1121, %v1209
      %1211 = vmatmul.bf16.gmra.mxu0 %v697
      %v1212 = vpop.f32.mrf.mxu0
      %v1213 = vadd.f32 %v1124, %v1212
      %v1214 = vpop.f32.mrf.mxu0
      %v1215 = vadd.f32 %v1126, %v1214
      %1216 = vmatmul.bf16.gmra.mxu0 %v701
      %v1217 = vpop.f32.mrf.mxu0
      %v1218 = vadd.f32 %v1129, %v1217
      %v1219 = vpop.f32.mrf.mxu0
      %v1220 = vadd.f32 %v1131, %v1219
      %1221 = vmatmul.bf16.gmra.mxu0 %v705
      %v1222 = vpop.f32.mrf.mxu0
      %v1223 = vadd.f32 %v1134, %v1222
      %v1224 = vpop.f32.mrf.mxu0
      %v1225 = vadd.f32 %v1136, %v1224
      %1226 = vmatmul.bf16.gmra.mxu0 %v709
      %v1227 = vpop.f32.mrf.mxu0
      %v1228 = vadd.f32 %v1139, %v1227
      %v1229 = vpop.f32.mrf.mxu0
      %v1230 = vadd.f32 %v1141, %v1229
      %1231 = vmatmul.bf16.gmra.mxu0 %v713
      %v1232 = vpop.f32.mrf.mxu0
      %v1233 = vadd.f32 %v1144, %v1232
      %v1234 = vpop.f32.mrf.mxu0
      %v1235 = vadd.f32 %v1146, %v1234
      %1236 = vmatmul.bf16.gmra.mxu0 %v717
      %v1237 = vpop.f32.mrf.mxu0
      %v1238 = vadd.f32 %v1149, %v1237
      %v1239 = vpop.f32.mrf.mxu0
      %v1240 = vadd.f32 %v1151, %v1239
      %1241 = vdwg.mxu0
      %1242 = vmatpush.bf16.msra.mxu0 %v942
      %1243 = vmatpush.bf16.msra.mxu0 %v941
      %1244 = vmatpush.bf16.msra.mxu0 %v940
      %1245 = vmatpush.bf16.msra.mxu0 %v939
      %1246 = vmatpush.bf16.msra.mxu0 %v938
      %1247 = vmatpush.bf16.msra.mxu0 %v937
      %1248 = vmatpush.bf16.msra.mxu0 %v936
      %1249 = vmatpush.bf16.msra.mxu0 %v935
      %1250 = vmatmul.bf16.gmra.mxu0 %v658
      %v1251 = vpop.f32.mrf.mxu0
      %v1252 = vadd.f32 %v1163, %v1251
      %v1253 = vpop.f32.mrf.mxu0
      %v1254 = vadd.f32 %v1165, %v1253
      %1255 = vmatmul.bf16.gmra.mxu0 %v662
      %v1256 = vpop.f32.mrf.mxu0
      %v1257 = vadd.f32 %v1168, %v1256
      %v1258 = vpop.f32.mrf.mxu0
      %v1259 = vadd.f32 %v1170, %v1258
      %1260 = vmatmul.bf16.gmra.mxu0 %v666
      %v1261 = vpop.f32.mrf.mxu0
      %v1262 = vadd.f32 %v1173, %v1261
      %v1263 = vpop.f32.mrf.mxu0
      %v1264 = vadd.f32 %v1175, %v1263
      %1265 = vmatmul.bf16.gmra.mxu0 %v670
      %v1266 = vpop.f32.mrf.mxu0
      %v1267 = vadd.f32 %v1178, %v1266
      %v1268 = vpop.f32.mrf.mxu0
      %v1269 = vadd.f32 %v1180, %v1268
      %1270 = vmatmul.bf16.gmra.mxu0 %v674
      %v1271 = vpop.f32.mrf.mxu0
      %v1272 = vadd.f32 %v1183, %v1271
      %v1273 = vpop.f32.mrf.mxu0
      %v1274 = vadd.f32 %v1185, %v1273
      %1275 = vmatmul.bf16.gmra.mxu0 %v678
      %v1276 = vpop.f32.mrf.mxu0
      %v1277 = vadd.f32 %v1188, %v1276
      %v1278 = vpop.f32.mrf.mxu0
      %v1279 = vadd.f32 %v1190, %v1278
      %1280 = vmatmul.bf16.gmra.mxu0 %v682
      %v1281 = vpop.f32.mrf.mxu0
      %v1282 = vadd.f32 %v1193, %v1281
      %v1283 = vpop.f32.mrf.mxu0
      %v1284 = vadd.f32 %v1195, %v1283
      %1285 = vmatmul.bf16.gmra.mxu0 %v686
      %v1286 = vpop.f32.mrf.mxu0
      %v1287 = vadd.f32 %v1198, %v1286
      %v1288 = vpop.f32.mrf.mxu0
      %v1289 = vadd.f32 %v1200, %v1288
      %1290 = vmatmul.bf16.gmra.mxu0 %v690
      %v1291 = vpop.f32.mrf.mxu0
      %v1292 = vadd.f32 %v1203, %v1291
      %v1293 = vpop.f32.mrf.mxu0
      %v1294 = vadd.f32 %v1205, %v1293
      %1295 = vmatmul.bf16.gmra.mxu0 %v694
      %v1296 = vpop.f32.mrf.mxu0
      %v1297 = vadd.f32 %v1208, %v1296
      %v1298 = vpop.f32.mrf.mxu0
      %v1299 = vadd.f32 %v1210, %v1298
      %1300 = vmatmul.bf16.gmra.mxu0 %v698
      %v1301 = vpop.f32.mrf.mxu0
      %v1302 = vadd.f32 %v1213, %v1301
      %v1303 = vpop.f32.mrf.mxu0
      %v1304 = vadd.f32 %v1215, %v1303
      %1305 = vmatmul.bf16.gmra.mxu0 %v702
      %v1306 = vpop.f32.mrf.mxu0
      %v1307 = vadd.f32 %v1218, %v1306
      %v1308 = vpop.f32.mrf.mxu0
      %v1309 = vadd.f32 %v1220, %v1308
      %1310 = vmatmul.bf16.gmra.mxu0 %v706
      %v1311 = vpop.f32.mrf.mxu0
      %v1312 = vadd.f32 %v1223, %v1311
      %v1313 = vpop.f32.mrf.mxu0
      %v1314 = vadd.f32 %v1225, %v1313
      %1315 = vmatmul.bf16.gmra.mxu0 %v710
      %v1316 = vpop.f32.mrf.mxu0
      %v1317 = vadd.f32 %v1228, %v1316
      %v1318 = vpop.f32.mrf.mxu0
      %v1319 = vadd.f32 %v1230, %v1318
      %1320 = vmatmul.bf16.gmra.mxu0 %v714
      %v1321 = vpop.f32.mrf.mxu0
      %v1322 = vadd.f32 %v1233, %v1321
      %v1323 = vpop.f32.mrf.mxu0
      %v1324 = vadd.f32 %v1235, %v1323
      %1325 = vmatmul.bf16.gmra.mxu0 %v718
      %v1326 = vpop.f32.mrf.mxu0
      %v1327 = vadd.f32 %v1238, %v1326
      %v1328 = vpop.f32.mrf.mxu0
      %v1329 = vadd.f32 %v1240, %v1328
      %1330 = vdwg.mxu0
      %v1331 = vadd.f32 %v303, %v1252
      %v1332 = vadd.f32 %v304, %v1254
      %v1333 = vadd.f32 %v305, %v1257
      %v1334 = vadd.f32 %v306, %v1259
      %v1335 = vadd.f32 %v307, %v1262
      %v1336 = vadd.f32 %v308, %v1264
      %v1337 = vadd.f32 %v309, %v1267
      %v1338 = vadd.f32 %v310, %v1269
      %v1339 = vadd.f32 %v311, %v1272
      %v1340 = vadd.f32 %v312, %v1274
      %v1341 = vadd.f32 %v313, %v1277
      %v1342 = vadd.f32 %v314, %v1279
      %v1343 = vadd.f32 %v315, %v1282
      %v1344 = vadd.f32 %v316, %v1284
      %v1345 = vadd.f32 %v317, %v1287
      %v1346 = vadd.f32 %v318, %v1289
      %v1347 = vadd.f32 %v319, %v1292
      %v1348 = vadd.f32 %v320, %v1294
      %v1349 = vadd.f32 %v321, %v1297
      %v1350 = vadd.f32 %v322, %v1299
      %v1351 = vadd.f32 %v323, %v1302
      %v1352 = vadd.f32 %v324, %v1304
      %v1353 = vadd.f32 %v325, %v1307
      %v1354 = vadd.f32 %v326, %v1309
      %v1355 = vadd.f32 %v327, %v1312
      %v1356 = vadd.f32 %v328, %v1314
      %v1357 = vadd.f32 %v329, %v1317
      %v1358 = vadd.f32 %v330, %v1319
      %v1359 = vadd.f32 %v331, %v1322
      %v1360 = vadd.f32 %v332, %v1324
      %v1361 = vadd.f32 %v333, %v1327
      %v1362 = vadd.f32 %v334, %v1329
      %1363 = vst [vmem:[#allocation2] sm:$0xff] %v1331
      %1364 = vst [vmem:[#allocation2 + $0x8] sm:$0xff] %v1332
      %1365 = vst [vmem:[#allocation2 + $0x10] sm:$0xff] %v1333
      %1366 = vst [vmem:[#allocation2 + $0x18] sm:$0xff] %v1334
      %1367 = vst [vmem:[#allocation2 + $0x20] sm:$0xff] %v1335
      %1368 = vst [vmem:[#allocation2 + $0x28] sm:$0xff] %v1336
      %1369 = vst [vmem:[#allocation2 + $0x30] sm:$0xff] %v1337
      %1370 = vst [vmem:[#allocation2 + $0x38] sm:$0xff] %v1338
      %1371 = vst [vmem:[#allocation2 + $0x40] sm:$0xff] %v1339
      %1372 = vst [vmem:[#allocation2 + $0x48] sm:$0xff] %v1340
      %1373 = vst [vmem:[#allocation2 + $0x50] sm:$0xff] %v1341
      %1374 = vst [vmem:[#allocation2 + $0x58] sm:$0xff] %v1342
      %1375 = vst [vmem:[#allocation2 + $0x60] sm:$0xff] %v1343
      %1376 = vst [vmem:[#allocation2 + $0x68] sm:$0xff] %v1344
      %1377 = vst [vmem:[#allocation2 + $0x70] sm:$0xff] %v1345
      %1378 = vst [vmem:[#allocation2 + $0x78] sm:$0xff] %v1346
      %1379 = vst [vmem:[#allocation2 + $0x80] sm:$0xff] %v1347
      %1380 = vst [vmem:[#allocation2 + $0x88] sm:$0xff] %v1348
      %1381 = vst [vmem:[#allocation2 + $0x90] sm:$0xff] %v1349
      %1382 = vst [vmem:[#allocation2 + $0x98] sm:$0xff] %v1350
      %1383 = vst [vmem:[#allocation2 + $0xa0] sm:$0xff] %v1351
      %1384 = vst [vmem:[#allocation2 + $0xa8] sm:$0xff] %v1352
      %1385 = vst [vmem:[#allocation2 + $0xb0] sm:$0xff] %v1353
      %1386 = vst [vmem:[#allocation2 + $0xb8] sm:$0xff] %v1354
      %1387 = vst [vmem:[#allocation2 + $0xc0] sm:$0xff] %v1355
      %1388 = vst [vmem:[#allocation2 + $0xc8] sm:$0xff] %v1356
      %1389 = vst [vmem:[#allocation2 + $0xd0] sm:$0xff] %v1357
      %1390 = vst [vmem:[#allocation2 + $0xd8] sm:$0xff] %v1358
      %1391 = vst [vmem:[#allocation2 + $0xe0] sm:$0xff] %v1359
      %1392 = vst [vmem:[#allocation2 + $0xe8] sm:$0xff] %v1360
      %1393 = vst [vmem:[#allocation2 + $0xf0] sm:$0xff] %v1361
      %1394 = vst [vmem:[#allocation2 + $0xf8] sm:$0xff] %v1362
      // Predicated region
      $region37: #{_lambda_.55} parent=31 // pred_check
        %p1395 = pneg %p267
      $region38: #{_lambda_.55} parent=31 // pred_check_branch
        %1397 = sbr.rel (%p1395) target = $region40
      $region39: #{_lambda_.55} parent=31 // pred_region
        %v1398 = vld [vmem:[#allocation2] sm:$0xff]
        %v1399 = vld [vmem:[#allocation2 + $0x8] sm:$0xff]
        %v1400 = vld [vmem:[#allocation2 + $0x10] sm:$0xff]
        %v1401 = vld [vmem:[#allocation2 + $0x18] sm:$0xff]
        %v1402 = vld [vmem:[#allocation2 + $0x20] sm:$0xff]
        %v1403 = vld [vmem:[#allocation2 + $0x28] sm:$0xff]
        %v1404 = vld [vmem:[#allocation2 + $0x30] sm:$0xff]
        %v1405 = vld [vmem:[#allocation2 + $0x38] sm:$0xff]
        %v1406 = vld [vmem:[#allocation2 + $0x40] sm:$0xff]
        %v1407 = vld [vmem:[#allocation2 + $0x48] sm:$0xff]
        %v1408 = vld [vmem:[#allocation2 + $0x50] sm:$0xff]
        %v1409 = vld [vmem:[#allocation2 + $0x58] sm:$0xff]
        %v1410 = vld [vmem:[#allocation2 + $0x60] sm:$0xff]
        %v1411 = vld [vmem:[#allocation2 + $0x68] sm:$0xff]
        %v1412 = vld [vmem:[#allocation2 + $0x70] sm:$0xff]
        %v1413 = vld [vmem:[#allocation2 + $0x78] sm:$0xff]
        %v1414 = vld [vmem:[#allocation2 + $0x80] sm:$0xff]
        %v1415 = vld [vmem:[#allocation2 + $0x88] sm:$0xff]
        %v1416 = vld [vmem:[#allocation2 + $0x90] sm:$0xff]
        %v1417 = vld [vmem:[#allocation2 + $0x98] sm:$0xff]
        %v1418 = vld [vmem:[#allocation2 + $0xa0] sm:$0xff]
        %v1419 = vld [vmem:[#allocation2 + $0xa8] sm:$0xff]
        %v1420 = vld [vmem:[#allocation2 + $0xb0] sm:$0xff]
        %v1421 = vld [vmem:[#allocation2 + $0xb8] sm:$0xff]
        %v1422 = vld [vmem:[#allocation2 + $0xc0] sm:$0xff]
        %v1423 = vld [vmem:[#allocation2 + $0xc8] sm:$0xff]
        %v1424 = vld [vmem:[#allocation2 + $0xd0] sm:$0xff]
        %v1425 = vld [vmem:[#allocation2 + $0xd8] sm:$0xff]
        %v1426 = vld [vmem:[#allocation2 + $0xe0] sm:$0xff]
        %v1427 = vld [vmem:[#allocation2 + $0xe8] sm:$0xff]
        %v1428 = vld [vmem:[#allocation2 + $0xf0] sm:$0xff]
        %v1429 = vld [vmem:[#allocation2 + $0xf8] sm:$0xff]
        %v1430 = vld [vmem:[%s257] sm:$0x1]
        %v1432 = vperm.slane %v1430, 0
        %v1434 = vadd.f32 %v1398, %v1432
        %v1435 = vadd.f32 %v1399, %v1432
        %v1436 = vadd.f32 %v1400, %v1432
        %v1437 = vadd.f32 %v1401, %v1432
        %v1438 = vadd.f32 %v1402, %v1432
        %v1439 = vadd.f32 %v1403, %v1432
        %v1440 = vadd.f32 %v1404, %v1432
        %v1441 = vadd.f32 %v1405, %v1432
        %v1442 = vadd.f32 %v1406, %v1432
        %v1443 = vadd.f32 %v1407, %v1432
        %v1444 = vadd.f32 %v1408, %v1432
        %v1445 = vadd.f32 %v1409, %v1432
        %v1446 = vadd.f32 %v1410, %v1432
        %v1447 = vadd.f32 %v1411, %v1432
        %v1448 = vadd.f32 %v1412, %v1432
        %v1449 = vadd.f32 %v1413, %v1432
        %v1450 = vadd.f32 %v1414, %v1432
        %v1451 = vadd.f32 %v1415, %v1432
        %v1452 = vadd.f32 %v1416, %v1432
        %v1453 = vadd.f32 %v1417, %v1432
        %v1454 = vadd.f32 %v1418, %v1432
        %v1455 = vadd.f32 %v1419, %v1432
        %v1456 = vadd.f32 %v1420, %v1432
        %v1457 = vadd.f32 %v1421, %v1432
        %v1458 = vadd.f32 %v1422, %v1432
        %v1459 = vadd.f32 %v1423, %v1432
        %v1460 = vadd.f32 %v1424, %v1432
        %v1461 = vadd.f32 %v1425, %v1432
        %v1462 = vadd.f32 %v1426, %v1432
        %v1463 = vadd.f32 %v1427, %v1432
        %v1464 = vadd.f32 %v1428, %v1432
        %v1465 = vadd.f32 %v1429, %v1432
        %v1466 = vtanh.pop %v1434
        %v1467 = vtanh.pop %v1435
        %v1468 = vtanh.pop %v1436
        %v1469 = vtanh.pop %v1437
        %v1470 = vtanh.pop %v1438
        %v1471 = vtanh.pop %v1439
        %v1472 = vtanh.pop %v1440
        %v1473 = vtanh.pop %v1441
        %v1474 = vtanh.pop %v1442
        %v1475 = vtanh.pop %v1443
        %v1476 = vtanh.pop %v1444
        %v1477 = vtanh.pop %v1445
        %v1478 = vtanh.pop %v1446
        %v1479 = vtanh.pop %v1447
        %v1480 = vtanh.pop %v1448
        %v1481 = vtanh.pop %v1449
        %v1482 = vtanh.pop %v1450
        %v1483 = vtanh.pop %v1451
        %v1484 = vtanh.pop %v1452
        %v1485 = vtanh.pop %v1453
        %v1486 = vtanh.pop %v1454
        %v1487 = vtanh.pop %v1455
        %v1488 = vtanh.pop %v1456
        %v1489 = vtanh.pop %v1457
        %v1490 = vtanh.pop %v1458
        %v1491 = vtanh.pop %v1459
        %v1492 = vtanh.pop %v1460
        %v1493 = vtanh.pop %v1461
        %v1494 = vtanh.pop %v1462
        %v1495 = vtanh.pop %v1463
        %v1496 = vtanh.pop %v1464
        %v1497 = vtanh.pop %v1465
        %1498 = vst [vmem:[%s265] sm:$0xff] %v1466
        %1499 = vst [vmem:[%s265 + $0x8] sm:$0xff] %v1467
        %1500 = vst [vmem:[%s265 + $0x10] sm:$0xff] %v1468
        %1501 = vst [vmem:[%s265 + $0x18] sm:$0xff] %v1469
        %1502 = vst [vmem:[%s265 + $0x20] sm:$0xff] %v1470
        %1503 = vst [vmem:[%s265 + $0x28] sm:$0xff] %v1471
        %1504 = vst [vmem:[%s265 + $0x30] sm:$0xff] %v1472
        %1505 = vst [vmem:[%s265 + $0x38] sm:$0xff] %v1473
        %1506 = vst [vmem:[%s265 + $0x40] sm:$0xff] %v1474
        %1507 = vst [vmem:[%s265 + $0x48] sm:$0xff] %v1475
        %1508 = vst [vmem:[%s265 + $0x50] sm:$0xff] %v1476
        %1509 = vst [vmem:[%s265 + $0x58] sm:$0xff] %v1477
        %1510 = vst [vmem:[%s265 + $0x60] sm:$0xff] %v1478
        %1511 = vst [vmem:[%s265 + $0x68] sm:$0xff] %v1479
        %1512 = vst [vmem:[%s265 + $0x70] sm:$0xff] %v1480
        %1513 = vst [vmem:[%s265 + $0x78] sm:$0xff] %v1481
        %1514 = vst [vmem:[%s265 + $0x80] sm:$0xff] %v1482
        %1515 = vst [vmem:[%s265 + $0x88] sm:$0xff] %v1483
        %1516 = vst [vmem:[%s265 + $0x90] sm:$0xff] %v1484
        %1517 = vst [vmem:[%s265 + $0x98] sm:$0xff] %v1485
        %1518 = vst [vmem:[%s265 + $0xa0] sm:$0xff] %v1486
        %1519 = vst [vmem:[%s265 + $0xa8] sm:$0xff] %v1487
        %1520 = vst [vmem:[%s265 + $0xb0] sm:$0xff] %v1488
        %1521 = vst [vmem:[%s265 + $0xb8] sm:$0xff] %v1489
        %1522 = vst [vmem:[%s265 + $0xc0] sm:$0xff] %v1490
        %1523 = vst [vmem:[%s265 + $0xc8] sm:$0xff] %v1491
        %1524 = vst [vmem:[%s265 + $0xd0] sm:$0xff] %v1492
        %1525 = vst [vmem:[%s265 + $0xd8] sm:$0xff] %v1493
        %1526 = vst [vmem:[%s265 + $0xe0] sm:$0xff] %v1494
        %1527 = vst [vmem:[%s265 + $0xe8] sm:$0xff] %v1495
        %1528 = vst [vmem:[%s265 + $0xf0] sm:$0xff] %v1496
        %1529 = vst [vmem:[%s265 + $0xf8] sm:$0xff] %v1497
      $region40: #{_lambda_.55} parent=31 // pred_fallthru
        _
      %s1530 = smul.u32 32, %s19
      %p1531 = scmp.lt.s32.totalorder %s1530, 63
      %s1532 = scalar_select %p1531, %s1530, 63
      %p1533 = scmp.lt.s32.totalorder %s20, 0
      %s1534 = scalar_select %p1533, %s20, 0
      %s1535 = sadd.s32 %s1534, %s1532
      %s1536 = smul.addr %s1535, 8
      %s1537 = scalar_lea.vmem %s3, %s1536
      // Predicated region
      $region41: #{_lambda_.55} parent=31 // pred_check
        %p1538 = pneg %p135
      $region42: #{_lambda_.55} parent=31 // pred_check_branch
        %1540 = sbr.rel (%p1538) target = $region44
      $region43: #{_lambda_.55} parent=31 // pred_region
        %s1541 = smul.u32 32, %s19
      $region44: #{_lambda_.55} parent=31 // pred_fallthru
        _
    $region32: #{_lambda_.55} parent=5 // pred_fallthru
      _
    %p1542 = scmp.le.s32.totalorder 2, %s9
    // Predicated region
    $region45: #{_lambda_.55} parent=5 // pred_check
      %p1543 = pneg %p1542
    $region46: #{_lambda_.55} parent=5 // pred_check_branch
      %1545 = sbr.rel (%p1543) target = $region48
    $region47: #{_lambda_.55} parent=5 // pred_region
      %s1546 = ssub.s32 %s9, 2
      // Predicated region
      $region49: #{_lambda_.55} parent=47 // pred_check
        %p1547 = pneg %p141
      $region50: #{_lambda_.55} parent=47 // pred_check_branch
        %1549 = sbr.rel (%p1547) target = $region52
      $region51: #{_lambda_.55} parent=47 // pred_region
        %s1550 = smul.u32 32, %s22
        %p1551 = scmp.lt.s32.totalorder %s1550, 63
        %s1552 = scalar_select %p1551, %s1550, 63
        %p1553 = scmp.lt.s32.totalorder %s23, 0
        %s1554 = scalar_select %p1553, %s23, 0
        %s1555 = sadd.s32 %s1554, %s1552
        %s1556 = smul.addr %s1555, 8
        %s1557 = scalar_lea.vmem %s3, %s1556
      $region52: #{_lambda_.55} parent=47 // pred_fallthru
        _
    $region48: #{_lambda_.55} parent=5 // pred_fallthru
      _
  $region6: #{_lambda_.55} parent=0 // loop_footer
    %s13 = sadd.s32 1, %s9
  $region7: #{_lambda_.55} parent=0 // loop_footer_branch
    %8 = sbr.rel target = $region3
  $region8: #{_lambda_.55} parent=0 // loop_exit
    _

</llo_original>
